<compile_context>
chip_gen: v7x
topology: tpu7x:2x2x1
jax: 0.10.0
libtpu: 0.0.40
codegen_flags: <defaults>
</compile_context>

<pallas_src>
import functools

import jax
import jax.numpy as jnp
from jax.experimental import pallas as pl
from jax.experimental.pallas import tpu as pltpu

EPS = 1e-5        # nn.BatchNorm2d default
LANES = 128


def _round_up(x, m):
    return (x + m - 1) // m * m


# ---------------------------------------------------------------------------
# Pallas kernels
# ---------------------------------------------------------------------------
def _conv3x3_acc(src_ref, w_ref, h, w):
    """3x3 'same' conv of a spatially padded (h+2, w+2, Cin_p) ref expressed
    as 9 accumulated MXU matmuls. Returns a float32 (h*w, Cout_p) result."""
    cout_p = w_ref.shape[-1]
    acc = jnp.zeros((h * w, cout_p), jnp.float32)
    for ky in range(3):                      # static 9-way unroll
        for kx in range(3):
            patch = src_ref[ky:ky + h, kx:kx + w, :].reshape(h * w, -1)
            acc = acc + jnp.dot(patch, w_ref[ky, kx],
                                preferred_element_type=jnp.float32)
    return acc


def _conv_stats_kernel(xpad_ref, w_ref, z_ref, stats_ref):
    # xpad_ref: (h+2, w+2, cin_p)   w_ref: (3, 3, cin_p, cout_p)
    # z_ref:    (h, w, cout_p)      stats_ref: (2, cout_p) f32  [sum, sumsq]
    h, w, _ = z_ref.shape
    acc = _conv3x3_acc(xpad_ref, w_ref, h, w)
    z_ref[...] = acc.reshape(h, w, -1).astype(z_ref.dtype)
    stats_ref[0:1, :] = jnp.sum(acc, axis=0, keepdims=True)
    stats_ref[1:2, :] = jnp.sum(acc * acc, axis=0, keepdims=True)


def _bn_relu_conv_stats_kernel(z1_ref, sc_ref, sh_ref, w_ref,
                               z2_ref, stats_ref, apad_ref):
    # Folded BN1 (+ReLU), then conv2 (+ per-tile partial stats).
    # z1_ref: (h, w, c_p)  sc/sh_ref: (1, c_p) f32  w_ref: (3, 3, c_p, c_p)
    # apad_ref: VMEM scratch (h+2, w+2, c_p) for the zero-padded activation.
    h, w, _ = z1_ref.shape
    a = z1_ref[...].astype(jnp.float32) * sc_ref[...] + sh_ref[...]
    a = jnp.maximum(a, 0.0)
    apad_ref[...] = jnp.zeros_like(apad_ref)          # halo == conv zero-pad
    apad_ref[1:h + 1, 1:w + 1, :] = a.astype(apad_ref.dtype)
    acc = _conv3x3_acc(apad_ref, w_ref, h, w)
    z2_ref[...] = acc.reshape(h, w, -1).astype(z2_ref.dtype)
    stats_ref[0:1, :] = jnp.sum(acc, axis=0, keepdims=True)
    stats_ref[1:2, :] = jnp.sum(acc * acc, axis=0, keepdims=True)


def _bn_add_relu_kernel(z2_ref, idn_ref, sc_ref, sh_ref, o_ref):
    # Folded BN2 + residual skip + ReLU (single fused elementwise pass).
    y = z2_ref[...].astype(jnp.float32) * sc_ref[...] + sh_ref[...]
    y = y + idn_ref[...].astype(jnp.float32)
    o_ref[...] = jnp.maximum(y, 0.0)


# ---------------------------------------------------------------------------
# Wrapper
# ---------------------------------------------------------------------------
def _fold_bn_params(stats, count, gamma, beta, cp):
    """(per-tile sum, sumsq) -> per-channel scale/shift with
    scale = gamma * rsqrt(var + eps), shift = beta - mean * scale (f32)."""
    s = jnp.sum(stats.astype(jnp.float32), axis=0)      # (2, cp)
    mean = s[0] / count
    var = jnp.maximum(s[1] / count - mean * mean, 0.0)  # biased batch variance
    g = jnp.pad(gamma.astype(jnp.float32), (0, cp - gamma.shape[0]))
    b = jnp.pad(beta.astype(jnp.float32), (0, cp - beta.shape[0]))
    scale = g * jax.lax.rsqrt(var + EPS)
    shift = b - mean * scale
    return scale.reshape(1, cp), shift.reshape(1, cp)


def simple_block(x_nchw, params, *, compute_dtype=jnp.bfloat16):
    """Forward pass of SimpleBlock. x_nchw: (N, C, H, W) float32 -> same."""
    w1, b1, g1, bt1, w2, b2, g2, bt2 = params
    del b1, b2  # bias before training-mode BN is cancelled by mean subtraction
    n, c, h, w = x_nchw.shape
    cout = w1.shape[0]
    assert c == cout, "residual add requires in_channels == out_channels"
    cp = _round_up(max(c, LANES), LANES)   # lane-dense channel padding
    count = n * h * w                      # BN reduces over N, H, W

    # Layout glue (plain JAX): NCHW -> NHWC, channel pad, 1-pixel spatial pad.
    x_nhwc = jnp.transpose(x_nchw, (0, 2, 3, 1))
    x_cpad = jnp.pad(x_nhwc, ((0, 0), (0, 0), (0, 0), (0, cp - c)))      # f32
    x_spad = jnp.pad(x_cpad, ((0, 0), (1, 1), (1, 1), (0, 0))).astype(compute_dtype)

    def prep_w(w_pt):
        # PyTorch (Cout, Cin, 3, 3) -> (3, 3, Cin_p, Cout_p), zero padded.
        wt = jnp.transpose(w_pt, (2, 3, 1, 0))
        wt = jnp.pad(wt, ((0, 0), (0, 0),
                          (0, cp - wt.shape[2]), (0, cp - wt.shape[3])))
        return wt.astype(compute_dtype)

    w1m, w2m = prep_w(w1), prep_w(w2)

    grid = (n,)   # one tile of M = H*W output rows per grid step
    cparams = pltpu.CompilerParams(
        dimension_semantics=("parallel",),
        vmem_limit_bytes=32 * 1024 * 1024,
    )

    act_spec = pl.BlockSpec((None, h, w, cp), lambda i: (i, 0, 0, 0))
    pad_spec = pl.BlockSpec((None, h + 2, w + 2, cp), lambda i: (i, 0, 0, 0))
    stat_spec = pl.BlockSpec((None, 2, cp), lambda i: (i, 0, 0))
    wgt_spec = pl.BlockSpec((3, 3, cp, cp), lambda i: (0, 0, 0, 0))  # resident
    vec_spec = pl.BlockSpec((1, cp), lambda i: (0, 0))

    # Pass 1: conv1 + per-tile BN1 partial statistics.
    z1, stats1 = pl.pallas_call(
        _conv_stats_kernel,
        grid=grid,
        in_specs=[pad_spec, wgt_spec],
        out_specs=[act_spec, stat_spec],
        out_shape=[jax.ShapeDtypeStruct((n, h, w, cp), compute_dtype),
                   jax.ShapeDtypeStruct((n, 2, cp), jnp.float32)],
        compiler_params=cparams,
    )(x_spad, w1m)

    scale1, shift1 = _fold_bn_params(stats1, count, g1, bt1, cp)

    # Pass 2: folded BN1 + ReLU + conv2 + per-tile BN2 partial statistics.
    z2, stats2 = pl.pallas_call(
        _bn_relu_conv_stats_kernel,
        grid=grid,
        in_specs=[act_spec, vec_spec, vec_spec, wgt_spec],
        out_specs=[act_spec, stat_spec],
        out_shape=[jax.ShapeDtypeStruct((n, h, w, cp), compute_dtype),
                   jax.ShapeDtypeStruct((n, 2, cp), jnp.float32)],
        scratch_shapes=[pltpu.VMEM((h + 2, w + 2, cp), compute_dtype)],
        compiler_params=cparams,
    )(z1, scale1, shift1, w2m)

    scale2, shift2 = _fold_bn_params(stats2, count, g2, bt2, cp)

    # Pass 3: folded BN2 + residual add + ReLU.
    y = pl.pallas_call(
        _bn_add_relu_kernel,
        grid=grid,
        in_specs=[act_spec, act_spec, vec_spec, vec_spec],
        out_specs=act_spec,
        out_shape=jax.ShapeDtypeStruct((n, h, w, cp), jnp.float32),
        compiler_params=cparams,
    )(z2, x_cpad, scale2, shift2)

    return jnp.transpose(y[..., :c], (0, 3, 1, 2))     # NHWC -> NCHW


# ---------------------------------------------------------------------------
# Pure-JAX reference (for verification)
# ---------------------------------------------------------------------------
def simple_block_ref(x, params):
    w1, b1, g1, bt1, w2, b2, g2, bt2 = params

    def conv(xx, ww, bb):
        y = jax.lax.conv_general_dilated(
            xx, ww, window_strides=(1, 1), padding=((1, 1), (1, 1)),
            dimension_numbers=("NCHW", "OIHW", "NCHW"))
        return y + bb[None, :, None, None]

    def bn(xx, gg, bb):
        mean = xx.mean(axis=(0, 2, 3), keepdims=True)
        var = ((xx - mean) ** 2).mean(axis=(0, 2, 3), keepdims=True)
        return ((xx - mean) / jnp.sqrt(var + EPS)
                * gg[None, :, None, None] + bb[None, :, None, None])

    out = jax.nn.relu(bn(conv(x, w1, b1), g1, bt1))
    out = bn(conv(out, w2, b2), g2, bt2) + x
    return jax.nn.relu(out)


# ---------------------------------------------------------------------------
if __name__ == "__main__":
    N, C, H, W = 2, 4, 16, 16
    CIN = COUT = C

    key = jax.random.PRNGKey(0)
    ks = jax.random.split(key, 9)
    params = (
        0.1 * jax.random.normal(ks[0], (COUT, CIN, 3, 3), jnp.float32),   # conv1.weight
        0.1 * jax.random.normal(ks[1], (COUT,), jnp.float32),             # conv1.bias
        1.0 + 0.1 * jax.random.normal(ks[2], (COUT,), jnp.float32),       # bn1.weight
        0.1 * jax.random.normal(ks[3], (COUT,), jnp.float32),             # bn1.bias
        0.1 * jax.random.normal(ks[4], (COUT, COUT, 3, 3), jnp.float32),  # conv2.weight
        0.1 * jax.random.normal(ks[5], (COUT,), jnp.float32),             # conv2.bias
        1.0 + 0.1 * jax.random.normal(ks[6], (COUT,), jnp.float32),       # bn2.weight
        0.1 * jax.random.normal(ks[7], (COUT,), jnp.float32),             # bn2.bias
    )
    x = jax.random.normal(ks[8], (N, C, H, W), jnp.float32)

    ref = jax.block_until_ready(simple_block_ref(x, params))

    # f32 MXU-operand path: tight check against the f32 reference.
    fwd_f32 = jax.jit(functools.partial(simple_block, compute_dtype=jnp.float32))
    out_f32 = jax.block_until_ready(fwd_f32(x, params))
    assert out_f32.shape == (N, COUT, H, W) and out_f32.dtype == jnp.float32
    err_f32 = float(jnp.max(jnp.abs(out_f32 - ref)))
    assert err_f32 < 1e-4, err_f32

    # bf16 MXU-operand path (f32 accumulation / BN stats): looser tolerance
    # since operand rounding (~2^-9 relative) propagates through two convs.
    fwd_bf16 = jax.jit(functools.partial(simple_block, compute_dtype=jnp.bfloat16))
    out_bf16 = jax.block_until_ready(fwd_bf16(x, params))
    err_bf16 = float(jnp.max(jnp.abs(out_bf16 - ref)))
    assert err_bf16 < 1e-1, err_bf16

    print("KERNEL_OK")
</pallas_src>

<mosaic_0001>
module attributes {stable_mosaic.version = 11 : i64} {
  func.func @_conv_stats_kernel(%arg0: i32, %arg1: memref<1x18x18x128xf32, #tpu.memory_space<vmem>>, %arg2: memref<3x3x128x128xf32, #tpu.memory_space<vmem>>, %arg3: memref<1x16x16x128xf32, #tpu.memory_space<vmem>>, %arg4: memref<1x2x128xf32, #tpu.memory_space<vmem>>) attributes {dimension_semantics = [#tpu.dimension_semantics<parallel>], iteration_bounds = array<i64: 2>, scalar_prefetch = 0 : i64, scratch_operands = 0 : i64, tpu.core_type = #tpu.core_type<tc>, window_params = [{transform_indices = @transform_0, window_bounds = array<i64: 1, 18, 18, 128>}, {pipeline_mode = #tpu.pipeline_mode<synchronous>, transform_indices = @transform_1, window_bounds = array<i64: 3, 3, 128, 128>}, {transform_indices = @transform_2, window_bounds = array<i64: 1, 16, 16, 128>}, {transform_indices = @transform_3, window_bounds = array<i64: 1, 2, 128>}]} {
    %cst = arith.constant 0.000000e+00 : f32
    %0 = vector.broadcast %cst : f32 to vector<256x128xf32>
    %c0 = arith.constant 0 : index
    %c0_0 = arith.constant 0 : index
    %c0_1 = arith.constant 0 : index
    %c0_2 = arith.constant 0 : index
    %1 = vector.load %arg1[%c0, %c0_0, %c0_1, %c0_2] : memref<1x18x18x128xf32, #tpu.memory_space<vmem>>, vector<1x16x16x128xf32>
    %2 = vector.shape_cast %1 : vector<1x16x16x128xf32> to vector<16x16x128xf32>
    %3 = vector.shape_cast %2 : vector<16x16x128xf32> to vector<256x128xf32>
    %c0_3 = arith.constant 0 : index
    %c0_4 = arith.constant 0 : index
    %c0_5 = arith.constant 0 : index
    %c0_6 = arith.constant 0 : index
    %4 = vector.load %arg2[%c0_3, %c0_4, %c0_5, %c0_6] : memref<3x3x128x128xf32, #tpu.memory_space<vmem>>, vector<1x1x128x128xf32>
    %5 = vector.shape_cast %4 : vector<1x1x128x128xf32> to vector<128x128xf32>
    %cst_7 = arith.constant dense<0.000000e+00> : vector<256x128xf32>
    %6 = tpu.matmul %3, %5, %cst_7 {dimension_numbers = #tpu.dot_dimension_numbers<[1], [0], [0], [1], [0, 0, 1, 1], [], []>} : vector<256x128xf32>, vector<128x128xf32>, vector<256x128xf32> -> vector<256x128xf32>
    %7 = arith.addf %0, %6 : vector<256x128xf32>
    %c0_8 = arith.constant 0 : index
    %c0_9 = arith.constant 0 : index
    %c1 = arith.constant 1 : index
    %c0_10 = arith.constant 0 : index
    %8 = vector.load %arg1[%c0_8, %c0_9, %c1, %c0_10] : memref<1x18x18x128xf32, #tpu.memory_space<vmem>>, vector<1x16x16x128xf32>
    %9 = vector.shape_cast %8 : vector<1x16x16x128xf32> to vector<16x16x128xf32>
    %10 = vector.shape_cast %9 : vector<16x16x128xf32> to vector<256x128xf32>
    %c0_11 = arith.constant 0 : index
    %c1_12 = arith.constant 1 : index
    %c0_13 = arith.constant 0 : index
    %c0_14 = arith.constant 0 : index
    %11 = vector.load %arg2[%c0_11, %c1_12, %c0_13, %c0_14] : memref<3x3x128x128xf32, #tpu.memory_space<vmem>>, vector<1x1x128x128xf32>
    %12 = vector.shape_cast %11 : vector<1x1x128x128xf32> to vector<128x128xf32>
    %cst_15 = arith.constant dense<0.000000e+00> : vector<256x128xf32>
    %13 = tpu.matmul %10, %12, %cst_15 {dimension_numbers = #tpu.dot_dimension_numbers<[1], [0], [0], [1], [0, 0, 1, 1], [], []>} : vector<256x128xf32>, vector<128x128xf32>, vector<256x128xf32> -> vector<256x128xf32>
    %14 = arith.addf %7, %13 : vector<256x128xf32>
    %c0_16 = arith.constant 0 : index
    %c0_17 = arith.constant 0 : index
    %c2 = arith.constant 2 : index
    %c0_18 = arith.constant 0 : index
    %15 = vector.load %arg1[%c0_16, %c0_17, %c2, %c0_18] : memref<1x18x18x128xf32, #tpu.memory_space<vmem>>, vector<1x16x16x128xf32>
    %16 = vector.shape_cast %15 : vector<1x16x16x128xf32> to vector<16x16x128xf32>
    %17 = vector.shape_cast %16 : vector<16x16x128xf32> to vector<256x128xf32>
    %c0_19 = arith.constant 0 : index
    %c2_20 = arith.constant 2 : index
    %c0_21 = arith.constant 0 : index
    %c0_22 = arith.constant 0 : index
    %18 = vector.load %arg2[%c0_19, %c2_20, %c0_21, %c0_22] : memref<3x3x128x128xf32, #tpu.memory_space<vmem>>, vector<1x1x128x128xf32>
    %19 = vector.shape_cast %18 : vector<1x1x128x128xf32> to vector<128x128xf32>
    %cst_23 = arith.constant dense<0.000000e+00> : vector<256x128xf32>
    %20 = tpu.matmul %17, %19, %cst_23 {dimension_numbers = #tpu.dot_dimension_numbers<[1], [0], [0], [1], [0, 0, 1, 1], [], []>} : vector<256x128xf32>, vector<128x128xf32>, vector<256x128xf32> -> vector<256x128xf32>
    %21 = arith.addf %14, %20 : vector<256x128xf32>
    %c0_24 = arith.constant 0 : index
    %c1_25 = arith.constant 1 : index
    %c0_26 = arith.constant 0 : index
    %c0_27 = arith.constant 0 : index
    %22 = vector.load %arg1[%c0_24, %c1_25, %c0_26, %c0_27] : memref<1x18x18x128xf32, #tpu.memory_space<vmem>>, vector<1x16x16x128xf32>
    %23 = vector.shape_cast %22 : vector<1x16x16x128xf32> to vector<16x16x128xf32>
    %24 = vector.shape_cast %23 : vector<16x16x128xf32> to vector<256x128xf32>
    %c1_28 = arith.constant 1 : index
    %c0_29 = arith.constant 0 : index
    %c0_30 = arith.constant 0 : index
    %c0_31 = arith.constant 0 : index
    %25 = vector.load %arg2[%c1_28, %c0_29, %c0_30, %c0_31] : memref<3x3x128x128xf32, #tpu.memory_space<vmem>>, vector<1x1x128x128xf32>
    %26 = vector.shape_cast %25 : vector<1x1x128x128xf32> to vector<128x128xf32>
    %cst_32 = arith.constant dense<0.000000e+00> : vector<256x128xf32>
    %27 = tpu.matmul %24, %26, %cst_32 {dimension_numbers = #tpu.dot_dimension_numbers<[1], [0], [0], [1], [0, 0, 1, 1], [], []>} : vector<256x128xf32>, vector<128x128xf32>, vector<256x128xf32> -> vector<256x128xf32>
    %28 = arith.addf %21, %27 : vector<256x128xf32>
    %c0_33 = arith.constant 0 : index
    %c1_34 = arith.constant 1 : index
    %c1_35 = arith.constant 1 : index
    %c0_36 = arith.constant 0 : index
    %29 = vector.load %arg1[%c0_33, %c1_34, %c1_35, %c0_36] : memref<1x18x18x128xf32, #tpu.memory_space<vmem>>, vector<1x16x16x128xf32>
    %30 = vector.shape_cast %29 : vector<1x16x16x128xf32> to vector<16x16x128xf32>
    %31 = vector.shape_cast %30 : vector<16x16x128xf32> to vector<256x128xf32>
    %c1_37 = arith.constant 1 : index
    %c1_38 = arith.constant 1 : index
    %c0_39 = arith.constant 0 : index
    %c0_40 = arith.constant 0 : index
    %32 = vector.load %arg2[%c1_37, %c1_38, %c0_39, %c0_40] : memref<3x3x128x128xf32, #tpu.memory_space<vmem>>, vector<1x1x128x128xf32>
    %33 = vector.shape_cast %32 : vector<1x1x128x128xf32> to vector<128x128xf32>
    %cst_41 = arith.constant dense<0.000000e+00> : vector<256x128xf32>
    %34 = tpu.matmul %31, %33, %cst_41 {dimension_numbers = #tpu.dot_dimension_numbers<[1], [0], [0], [1], [0, 0, 1, 1], [], []>} : vector<256x128xf32>, vector<128x128xf32>, vector<256x128xf32> -> vector<256x128xf32>
    %35 = arith.addf %28, %34 : vector<256x128xf32>
    %c0_42 = arith.constant 0 : index
    %c1_43 = arith.constant 1 : index
    %c2_44 = arith.constant 2 : index
    %c0_45 = arith.constant 0 : index
    %36 = vector.load %arg1[%c0_42, %c1_43, %c2_44, %c0_45] : memref<1x18x18x128xf32, #tpu.memory_space<vmem>>, vector<1x16x16x128xf32>
    %37 = vector.shape_cast %36 : vector<1x16x16x128xf32> to vector<16x16x128xf32>
    %38 = vector.shape_cast %37 : vector<16x16x128xf32> to vector<256x128xf32>
    %c1_46 = arith.constant 1 : index
    %c2_47 = arith.constant 2 : index
    %c0_48 = arith.constant 0 : index
    %c0_49 = arith.constant 0 : index
    %39 = vector.load %arg2[%c1_46, %c2_47, %c0_48, %c0_49] : memref<3x3x128x128xf32, #tpu.memory_space<vmem>>, vector<1x1x128x128xf32>
    %40 = vector.shape_cast %39 : vector<1x1x128x128xf32> to vector<128x128xf32>
    %cst_50 = arith.constant dense<0.000000e+00> : vector<256x128xf32>
    %41 = tpu.matmul %38, %40, %cst_50 {dimension_numbers = #tpu.dot_dimension_numbers<[1], [0], [0], [1], [0, 0, 1, 1], [], []>} : vector<256x128xf32>, vector<128x128xf32>, vector<256x128xf32> -> vector<256x128xf32>
    %42 = arith.addf %35, %41 : vector<256x128xf32>
    %c0_51 = arith.constant 0 : index
    %c2_52 = arith.constant 2 : index
    %c0_53 = arith.constant 0 : index
    %c0_54 = arith.constant 0 : index
    %43 = vector.load %arg1[%c0_51, %c2_52, %c0_53, %c0_54] : memref<1x18x18x128xf32, #tpu.memory_space<vmem>>, vector<1x16x16x128xf32>
    %44 = vector.shape_cast %43 : vector<1x16x16x128xf32> to vector<16x16x128xf32>
    %45 = vector.shape_cast %44 : vector<16x16x128xf32> to vector<256x128xf32>
    %c2_55 = arith.constant 2 : index
    %c0_56 = arith.constant 0 : index
    %c0_57 = arith.constant 0 : index
    %c0_58 = arith.constant 0 : index
    %46 = vector.load %arg2[%c2_55, %c0_56, %c0_57, %c0_58] : memref<3x3x128x128xf32, #tpu.memory_space<vmem>>, vector<1x1x128x128xf32>
    %47 = vector.shape_cast %46 : vector<1x1x128x128xf32> to vector<128x128xf32>
    %cst_59 = arith.constant dense<0.000000e+00> : vector<256x128xf32>
    %48 = tpu.matmul %45, %47, %cst_59 {dimension_numbers = #tpu.dot_dimension_numbers<[1], [0], [0], [1], [0, 0, 1, 1], [], []>} : vector<256x128xf32>, vector<128x128xf32>, vector<256x128xf32> -> vector<256x128xf32>
    %49 = arith.addf %42, %48 : vector<256x128xf32>
    %c0_60 = arith.constant 0 : index
    %c2_61 = arith.constant 2 : index
    %c1_62 = arith.constant 1 : index
    %c0_63 = arith.constant 0 : index
    %50 = vector.load %arg1[%c0_60, %c2_61, %c1_62, %c0_63] : memref<1x18x18x128xf32, #tpu.memory_space<vmem>>, vector<1x16x16x128xf32>
    %51 = vector.shape_cast %50 : vector<1x16x16x128xf32> to vector<16x16x128xf32>
    %52 = vector.shape_cast %51 : vector<16x16x128xf32> to vector<256x128xf32>
    %c2_64 = arith.constant 2 : index
    %c1_65 = arith.constant 1 : index
    %c0_66 = arith.constant 0 : index
    %c0_67 = arith.constant 0 : index
    %53 = vector.load %arg2[%c2_64, %c1_65, %c0_66, %c0_67] : memref<3x3x128x128xf32, #tpu.memory_space<vmem>>, vector<1x1x128x128xf32>
    %54 = vector.shape_cast %53 : vector<1x1x128x128xf32> to vector<128x128xf32>
    %cst_68 = arith.constant dense<0.000000e+00> : vector<256x128xf32>
    %55 = tpu.matmul %52, %54, %cst_68 {dimension_numbers = #tpu.dot_dimension_numbers<[1], [0], [0], [1], [0, 0, 1, 1], [], []>} : vector<256x128xf32>, vector<128x128xf32>, vector<256x128xf32> -> vector<256x128xf32>
    %56 = arith.addf %49, %55 : vector<256x128xf32>
    %c0_69 = arith.constant 0 : index
    %c2_70 = arith.constant 2 : index
    %c2_71 = arith.constant 2 : index
    %c0_72 = arith.constant 0 : index
    %57 = vector.load %arg1[%c0_69, %c2_70, %c2_71, %c0_72] : memref<1x18x18x128xf32, #tpu.memory_space<vmem>>, vector<1x16x16x128xf32>
    %58 = vector.shape_cast %57 : vector<1x16x16x128xf32> to vector<16x16x128xf32>
    %59 = vector.shape_cast %58 : vector<16x16x128xf32> to vector<256x128xf32>
    %c2_73 = arith.constant 2 : index
    %c2_74 = arith.constant 2 : index
    %c0_75 = arith.constant 0 : index
    %c0_76 = arith.constant 0 : index
    %60 = vector.load %arg2[%c2_73, %c2_74, %c0_75, %c0_76] : memref<3x3x128x128xf32, #tpu.memory_space<vmem>>, vector<1x1x128x128xf32>
    %61 = vector.shape_cast %60 : vector<1x1x128x128xf32> to vector<128x128xf32>
    %cst_77 = arith.constant dense<0.000000e+00> : vector<256x128xf32>
    %62 = tpu.matmul %59, %61, %cst_77 {dimension_numbers = #tpu.dot_dimension_numbers<[1], [0], [0], [1], [0, 0, 1, 1], [], []>} : vector<256x128xf32>, vector<128x128xf32>, vector<256x128xf32> -> vector<256x128xf32>
    %63 = arith.addf %56, %62 : vector<256x128xf32>
    %64 = vector.shape_cast %63 : vector<256x128xf32> to vector<16x16x128xf32>
    %c0_78 = arith.constant 0 : index
    %c0_79 = arith.constant 0 : index
    %c0_80 = arith.constant 0 : index
    %c0_81 = arith.constant 0 : index
    %65 = vector.load %arg3[%c0_78, %c0_79, %c0_80, %c0_81] : memref<1x16x16x128xf32, #tpu.memory_space<vmem>>, vector<1x16x16x128xf32>
    %66 = vector.shape_cast %65 : vector<1x16x16x128xf32> to vector<16x16x128xf32>
    %67 = vector.shape_cast %64 : vector<16x16x128xf32> to vector<1x16x16x128xf32>
    tpu.vector_store %arg3[%c0_78, %c0_79, %c0_80, %c0_81], %67 {strides = array<i32>} : memref<1x16x16x128xf32, #tpu.memory_space<vmem>>, vector<1x16x16x128xf32>,
    %cst_82 = arith.constant dense<0.000000e+00> : vector<128xf32>
    %68 = vector.multi_reduction <add>, %63, %cst_82 [0] : vector<256x128xf32> to vector<128xf32>
    %69 = vector.shape_cast %68 : vector<128xf32> to vector<1x128xf32>
    %c0_83 = arith.constant 0 : index
    %c0_84 = arith.constant 0 : index
    %c0_85 = arith.constant 0 : index
    %70 = vector.load %arg4[%c0_83, %c0_84, %c0_85] : memref<1x2x128xf32, #tpu.memory_space<vmem>>, vector<1x1x128xf32>
    %71 = vector.shape_cast %70 : vector<1x1x128xf32> to vector<1x128xf32>
    %72 = vector.shape_cast %69 : vector<1x128xf32> to vector<1x1x128xf32>
    tpu.vector_store %arg4[%c0_83, %c0_84, %c0_85], %72 {strides = array<i32>} : memref<1x2x128xf32, #tpu.memory_space<vmem>>, vector<1x1x128xf32>,
    %73 = arith.mulf %63, %63 : vector<256x128xf32>
    %cst_86 = arith.constant dense<0.000000e+00> : vector<128xf32>
    %74 = vector.multi_reduction <add>, %73, %cst_86 [0] : vector<256x128xf32> to vector<128xf32>
    %75 = vector.shape_cast %74 : vector<128xf32> to vector<1x128xf32>
    %c0_87 = arith.constant 0 : index
    %c1_88 = arith.constant 1 : index
    %c0_89 = arith.constant 0 : index
    %76 = vector.load %arg4[%c0_87, %c1_88, %c0_89] : memref<1x2x128xf32, #tpu.memory_space<vmem>>, vector<1x1x128xf32>
    %77 = vector.shape_cast %76 : vector<1x1x128xf32> to vector<1x128xf32>
    %78 = vector.shape_cast %75 : vector<1x128xf32> to vector<1x1x128xf32>
    tpu.vector_store %arg4[%c0_87, %c1_88, %c0_89], %78 {strides = array<i32>} : memref<1x2x128xf32, #tpu.memory_space<vmem>>, vector<1x1x128xf32>,
    return
  }
  func.func @transform_0(%arg0: i32) -> (i32, i32, i32, i32) {
    %c0_i32 = arith.constant 0 : i32
    %c0_i32_0 = arith.constant 0 : i32
    %c0_i32_1 = arith.constant 0 : i32
    %c0_i32_2 = arith.constant 0 : i32
    return %arg0, %c0_i32, %c0_i32_0, %c0_i32_1 : i32, i32, i32, i32
  }
  func.func @transform_1(%arg0: i32) -> (i32, i32, i32, i32) {
    %c0_i32 = arith.constant 0 : i32
    %c0_i32_0 = arith.constant 0 : i32
    %c0_i32_1 = arith.constant 0 : i32
    %c0_i32_2 = arith.constant 0 : i32
    %c0_i32_3 = arith.constant 0 : i32
    return %c0_i32, %c0_i32_0, %c0_i32_1, %c0_i32_2 : i32, i32, i32, i32
  }
  func.func @transform_2(%arg0: i32) -> (i32, i32, i32, i32) {
    %c0_i32 = arith.constant 0 : i32
    %c0_i32_0 = arith.constant 0 : i32
    %c0_i32_1 = arith.constant 0 : i32
    %c0_i32_2 = arith.constant 0 : i32
    return %arg0, %c0_i32, %c0_i32_0, %c0_i32_1 : i32, i32, i32, i32
  }
  func.func @transform_3(%arg0: i32) -> (i32, i32, i32) {
    %c0_i32 = arith.constant 0 : i32
    %c0_i32_0 = arith.constant 0 : i32
    %c0_i32_1 = arith.constant 0 : i32
    return %arg0, %c0_i32, %c0_i32_0 : i32, i32, i32
  }
}

module attributes {stable_mosaic.version = 11 : i64} {
  func.func @_bn_relu_conv_stats_kernel(%arg0: i32, %arg1: memref<1x16x16x128xf32, #tpu.memory_space<vmem>>, %arg2: memref<1x128xf32, #tpu.memory_space<vmem>>, %arg3: memref<1x128xf32, #tpu.memory_space<vmem>>, %arg4: memref<3x3x128x128xf32, #tpu.memory_space<vmem>>, %arg5: memref<1x16x16x128xf32, #tpu.memory_space<vmem>>, %arg6: memref<1x2x128xf32, #tpu.memory_space<vmem>>, %arg7: memref<18x18x128xf32, #tpu.memory_space<vmem>>) attributes {dimension_semantics = [#tpu.dimension_semantics<parallel>], iteration_bounds = array<i64: 2>, scalar_prefetch = 0 : i64, scratch_operands = 1 : i64, tpu.core_type = #tpu.core_type<tc>, window_params = [{transform_indices = @transform_0, window_bounds = array<i64: 1, 16, 16, 128>}, {pipeline_mode = #tpu.pipeline_mode<synchronous>, transform_indices = @transform_1, window_bounds = array<i64: 1, 128>}, {pipeline_mode = #tpu.pipeline_mode<synchronous>, transform_indices = @transform_2, window_bounds = array<i64: 1, 128>}, {pipeline_mode = #tpu.pipeline_mode<synchronous>, transform_indices = @transform_3, window_bounds = array<i64: 3, 3, 128, 128>}, {transform_indices = @transform_4, window_bounds = array<i64: 1, 16, 16, 128>}, {transform_indices = @transform_5, window_bounds = array<i64: 1, 2, 128>}]} {
    %c0 = arith.constant 0 : index
    %c0_0 = arith.constant 0 : index
    %c0_1 = arith.constant 0 : index
    %c0_2 = arith.constant 0 : index
    %0 = vector.load %arg1[%c0, %c0_0, %c0_1, %c0_2] : memref<1x16x16x128xf32, #tpu.memory_space<vmem>>, vector<1x16x16x128xf32>
    %1 = vector.shape_cast %0 : vector<1x16x16x128xf32> to vector<16x16x128xf32>
    %c0_3 = arith.constant 0 : index
    %c0_4 = arith.constant 0 : index
    %2 = vector.load %arg2[%c0_3, %c0_4] : memref<1x128xf32, #tpu.memory_space<vmem>>, vector<1x128xf32>
    %3 = vector.shape_cast %2 : vector<1x128xf32> to vector<1x1x128xf32>
    %4 = vector.broadcast %3 : vector<1x1x128xf32> to vector<16x16x128xf32>
    %5 = arith.mulf %1, %4 : vector<16x16x128xf32>
    %c0_5 = arith.constant 0 : index
    %c0_6 = arith.constant 0 : index
    %6 = vector.load %arg3[%c0_5, %c0_6] : memref<1x128xf32, #tpu.memory_space<vmem>>, vector<1x128xf32>
    %7 = vector.shape_cast %6 : vector<1x128xf32> to vector<1x1x128xf32>
    %8 = vector.broadcast %7 : vector<1x1x128xf32> to vector<16x16x128xf32>
    %9 = arith.addf %5, %8 : vector<16x16x128xf32>
    %cst = arith.constant 0.000000e+00 : f32
    %10 = vector.broadcast %cst : f32 to vector<16x16x128xf32>
    %11 = arith.maximumf %9, %10 : vector<16x16x128xf32>
    %cst_7 = arith.constant 0.000000e+00 : f32
    %12 = vector.broadcast %cst_7 : f32 to vector<18x18x128xf32>
    %c0_8 = arith.constant 0 : index
    %c0_9 = arith.constant 0 : index
    %c0_10 = arith.constant 0 : index
    %13 = vector.load %arg7[%c0_8, %c0_9, %c0_10] : memref<18x18x128xf32, #tpu.memory_space<vmem>>, vector<18x18x128xf32>
    tpu.vector_store %arg7[%c0_8, %c0_9, %c0_10], %12 {strides = array<i32>} : memref<18x18x128xf32, #tpu.memory_space<vmem>>, vector<18x18x128xf32>,
    %c1 = arith.constant 1 : index
    %c1_11 = arith.constant 1 : index
    %c0_12 = arith.constant 0 : index
    %14 = vector.load %arg7[%c1, %c1_11, %c0_12] : memref<18x18x128xf32, #tpu.memory_space<vmem>>, vector<16x16x128xf32>
    tpu.vector_store %arg7[%c1, %c1_11, %c0_12], %11 {strides = array<i32>} : memref<18x18x128xf32, #tpu.memory_space<vmem>>, vector<16x16x128xf32>,
    %cst_13 = arith.constant 0.000000e+00 : f32
    %15 = vector.broadcast %cst_13 : f32 to vector<256x128xf32>
    %c0_14 = arith.constant 0 : index
    %c0_15 = arith.constant 0 : index
    %c0_16 = arith.constant 0 : index
    %16 = vector.load %arg7[%c0_14, %c0_15, %c0_16] : memref<18x18x128xf32, #tpu.memory_space<vmem>>, vector<16x16x128xf32>
    %17 = vector.shape_cast %16 : vector<16x16x128xf32> to vector<256x128xf32>
    %c0_17 = arith.constant 0 : index
    %c0_18 = arith.constant 0 : index
    %c0_19 = arith.constant 0 : index
    %c0_20 = arith.constant 0 : index
    %18 = vector.load %arg4[%c0_17, %c0_18, %c0_19, %c0_20] : memref<3x3x128x128xf32, #tpu.memory_space<vmem>>, vector<1x1x128x128xf32>
    %19 = vector.shape_cast %18 : vector<1x1x128x128xf32> to vector<128x128xf32>
    %cst_21 = arith.constant dense<0.000000e+00> : vector<256x128xf32>
    %20 = tpu.matmul %17, %19, %cst_21 {dimension_numbers = #tpu.dot_dimension_numbers<[1], [0], [0], [1], [0, 0, 1, 1], [], []>} : vector<256x128xf32>, vector<128x128xf32>, vector<256x128xf32> -> vector<256x128xf32>
    %21 = arith.addf %15, %20 : vector<256x128xf32>
    %c0_22 = arith.constant 0 : index
    %c1_23 = arith.constant 1 : index
    %c0_24 = arith.constant 0 : index
    %22 = vector.load %arg7[%c0_22, %c1_23, %c0_24] : memref<18x18x128xf32, #tpu.memory_space<vmem>>, vector<16x16x128xf32>
    %23 = vector.shape_cast %22 : vector<16x16x128xf32> to vector<256x128xf32>
    %c0_25 = arith.constant 0 : index
    %c1_26 = arith.constant 1 : index
    %c0_27 = arith.constant 0 : index
    %c0_28 = arith.constant 0 : index
    %24 = vector.load %arg4[%c0_25, %c1_26, %c0_27, %c0_28] : memref<3x3x128x128xf32, #tpu.memory_space<vmem>>, vector<1x1x128x128xf32>
    %25 = vector.shape_cast %24 : vector<1x1x128x128xf32> to vector<128x128xf32>
    %cst_29 = arith.constant dense<0.000000e+00> : vector<256x128xf32>
    %26 = tpu.matmul %23, %25, %cst_29 {dimension_numbers = #tpu.dot_dimension_numbers<[1], [0], [0], [1], [0, 0, 1, 1], [], []>} : vector<256x128xf32>, vector<128x128xf32>, vector<256x128xf32> -> vector<256x128xf32>
    %27 = arith.addf %21, %26 : vector<256x128xf32>
    %c0_30 = arith.constant 0 : index
    %c2 = arith.constant 2 : index
    %c0_31 = arith.constant 0 : index
    %28 = vector.load %arg7[%c0_30, %c2, %c0_31] : memref<18x18x128xf32, #tpu.memory_space<vmem>>, vector<16x16x128xf32>
    %29 = vector.shape_cast %28 : vector<16x16x128xf32> to vector<256x128xf32>
    %c0_32 = arith.constant 0 : index
    %c2_33 = arith.constant 2 : index
    %c0_34 = arith.constant 0 : index
    %c0_35 = arith.constant 0 : index
    %30 = vector.load %arg4[%c0_32, %c2_33, %c0_34, %c0_35] : memref<3x3x128x128xf32, #tpu.memory_space<vmem>>, vector<1x1x128x128xf32>
    %31 = vector.shape_cast %30 : vector<1x1x128x128xf32> to vector<128x128xf32>
    %cst_36 = arith.constant dense<0.000000e+00> : vector<256x128xf32>
    %32 = tpu.matmul %29, %31, %cst_36 {dimension_numbers = #tpu.dot_dimension_numbers<[1], [0], [0], [1], [0, 0, 1, 1], [], []>} : vector<256x128xf32>, vector<128x128xf32>, vector<256x128xf32> -> vector<256x128xf32>
    %33 = arith.addf %27, %32 : vector<256x128xf32>
    %c1_37 = arith.constant 1 : index
    %c0_38 = arith.constant 0 : index
    %c0_39 = arith.constant 0 : index
    %34 = vector.load %arg7[%c1_37, %c0_38, %c0_39] : memref<18x18x128xf32, #tpu.memory_space<vmem>>, vector<16x16x128xf32>
    %35 = vector.shape_cast %34 : vector<16x16x128xf32> to vector<256x128xf32>
    %c1_40 = arith.constant 1 : index
    %c0_41 = arith.constant 0 : index
    %c0_42 = arith.constant 0 : index
    %c0_43 = arith.constant 0 : index
    %36 = vector.load %arg4[%c1_40, %c0_41, %c0_42, %c0_43] : memref<3x3x128x128xf32, #tpu.memory_space<vmem>>, vector<1x1x128x128xf32>
    %37 = vector.shape_cast %36 : vector<1x1x128x128xf32> to vector<128x128xf32>
    %cst_44 = arith.constant dense<0.000000e+00> : vector<256x128xf32>
    %38 = tpu.matmul %35, %37, %cst_44 {dimension_numbers = #tpu.dot_dimension_numbers<[1], [0], [0], [1], [0, 0, 1, 1], [], []>} : vector<256x128xf32>, vector<128x128xf32>, vector<256x128xf32> -> vector<256x128xf32>
    %39 = arith.addf %33, %38 : vector<256x128xf32>
    %c1_45 = arith.constant 1 : index
    %c1_46 = arith.constant 1 : index
    %c0_47 = arith.constant 0 : index
    %40 = vector.load %arg7[%c1_45, %c1_46, %c0_47] : memref<18x18x128xf32, #tpu.memory_space<vmem>>, vector<16x16x128xf32>
    %41 = vector.shape_cast %40 : vector<16x16x128xf32> to vector<256x128xf32>
    %c1_48 = arith.constant 1 : index
    %c1_49 = arith.constant 1 : index
    %c0_50 = arith.constant 0 : index
    %c0_51 = arith.constant 0 : index
    %42 = vector.load %arg4[%c1_48, %c1_49, %c0_50, %c0_51] : memref<3x3x128x128xf32, #tpu.memory_space<vmem>>, vector<1x1x128x128xf32>
    %43 = vector.shape_cast %42 : vector<1x1x128x128xf32> to vector<128x128xf32>
    %cst_52 = arith.constant dense<0.000000e+00> : vector<256x128xf32>
    %44 = tpu.matmul %41, %43, %cst_52 {dimension_numbers = #tpu.dot_dimension_numbers<[1], [0], [0], [1], [0, 0, 1, 1], [], []>} : vector<256x128xf32>, vector<128x128xf32>, vector<256x128xf32> -> vector<256x128xf32>
    %45 = arith.addf %39, %44 : vector<256x128xf32>
    %c1_53 = arith.constant 1 : index
    %c2_54 = arith.constant 2 : index
    %c0_55 = arith.constant 0 : index
    %46 = vector.load %arg7[%c1_53, %c2_54, %c0_55] : memref<18x18x128xf32, #tpu.memory_space<vmem>>, vector<16x16x128xf32>
    %47 = vector.shape_cast %46 : vector<16x16x128xf32> to vector<256x128xf32>
    %c1_56 = arith.constant 1 : index
    %c2_57 = arith.constant 2 : index
    %c0_58 = arith.constant 0 : index
    %c0_59 = arith.constant 0 : index
    %48 = vector.load %arg4[%c1_56, %c2_57, %c0_58, %c0_59] : memref<3x3x128x128xf32, #tpu.memory_space<vmem>>, vector<1x1x128x128xf32>
    %49 = vector.shape_cast %48 : vector<1x1x128x128xf32> to vector<128x128xf32>
    %cst_60 = arith.constant dense<0.000000e+00> : vector<256x128xf32>
    %50 = tpu.matmul %47, %49, %cst_60 {dimension_numbers = #tpu.dot_dimension_numbers<[1], [0], [0], [1], [0, 0, 1, 1], [], []>} : vector<256x128xf32>, vector<128x128xf32>, vector<256x128xf32> -> vector<256x128xf32>
    %51 = arith.addf %45, %50 : vector<256x128xf32>
    %c2_61 = arith.constant 2 : index
    %c0_62 = arith.constant 0 : index
    %c0_63 = arith.constant 0 : index
    %52 = vector.load %arg7[%c2_61, %c0_62, %c0_63] : memref<18x18x128xf32, #tpu.memory_space<vmem>>, vector<16x16x128xf32>
    %53 = vector.shape_cast %52 : vector<16x16x128xf32> to vector<256x128xf32>
    %c2_64 = arith.constant 2 : index
    %c0_65 = arith.constant 0 : index
    %c0_66 = arith.constant 0 : index
    %c0_67 = arith.constant 0 : index
    %54 = vector.load %arg4[%c2_64, %c0_65, %c0_66, %c0_67] : memref<3x3x128x128xf32, #tpu.memory_space<vmem>>, vector<1x1x128x128xf32>
    %55 = vector.shape_cast %54 : vector<1x1x128x128xf32> to vector<128x128xf32>
    %cst_68 = arith.constant dense<0.000000e+00> : vector<256x128xf32>
    %56 = tpu.matmul %53, %55, %cst_68 {dimension_numbers = #tpu.dot_dimension_numbers<[1], [0], [0], [1], [0, 0, 1, 1], [], []>} : vector<256x128xf32>, vector<128x128xf32>, vector<256x128xf32> -> vector<256x128xf32>
    %57 = arith.addf %51, %56 : vector<256x128xf32>
    %c2_69 = arith.constant 2 : index
    %c1_70 = arith.constant 1 : index
    %c0_71 = arith.constant 0 : index
    %58 = vector.load %arg7[%c2_69, %c1_70, %c0_71] : memref<18x18x128xf32, #tpu.memory_space<vmem>>, vector<16x16x128xf32>
    %59 = vector.shape_cast %58 : vector<16x16x128xf32> to vector<256x128xf32>
    %c2_72 = arith.constant 2 : index
    %c1_73 = arith.constant 1 : index
    %c0_74 = arith.constant 0 : index
    %c0_75 = arith.constant 0 : index
    %60 = vector.load %arg4[%c2_72, %c1_73, %c0_74, %c0_75] : memref<3x3x128x128xf32, #tpu.memory_space<vmem>>, vector<1x1x128x128xf32>
    %61 = vector.shape_cast %60 : vector<1x1x128x128xf32> to vector<128x128xf32>
    %cst_76 = arith.constant dense<0.000000e+00> : vector<256x128xf32>
    %62 = tpu.matmul %59, %61, %cst_76 {dimension_numbers = #tpu.dot_dimension_numbers<[1], [0], [0], [1], [0, 0, 1, 1], [], []>} : vector<256x128xf32>, vector<128x128xf32>, vector<256x128xf32> -> vector<256x128xf32>
    %63 = arith.addf %57, %62 : vector<256x128xf32>
    %c2_77 = arith.constant 2 : index
    %c2_78 = arith.constant 2 : index
    %c0_79 = arith.constant 0 : index
    %64 = vector.load %arg7[%c2_77, %c2_78, %c0_79] : memref<18x18x128xf32, #tpu.memory_space<vmem>>, vector<16x16x128xf32>
    %65 = vector.shape_cast %64 : vector<16x16x128xf32> to vector<256x128xf32>
    %c2_80 = arith.constant 2 : index
    %c2_81 = arith.constant 2 : index
    %c0_82 = arith.constant 0 : index
    %c0_83 = arith.constant 0 : index
    %66 = vector.load %arg4[%c2_80, %c2_81, %c0_82, %c0_83] : memref<3x3x128x128xf32, #tpu.memory_space<vmem>>, vector<1x1x128x128xf32>
    %67 = vector.shape_cast %66 : vector<1x1x128x128xf32> to vector<128x128xf32>
    %cst_84 = arith.constant dense<0.000000e+00> : vector<256x128xf32>
    %68 = tpu.matmul %65, %67, %cst_84 {dimension_numbers = #tpu.dot_dimension_numbers<[1], [0], [0], [1], [0, 0, 1, 1], [], []>} : vector<256x128xf32>, vector<128x128xf32>, vector<256x128xf32> -> vector<256x128xf32>
    %69 = arith.addf %63, %68 : vector<256x128xf32>
    %70 = vector.shape_cast %69 : vector<256x128xf32> to vector<16x16x128xf32>
    %c0_85 = arith.constant 0 : index
    %c0_86 = arith.constant 0 : index
    %c0_87 = arith.constant 0 : index
    %c0_88 = arith.constant 0 : index
    %71 = vector.load %arg5[%c0_85, %c0_86, %c0_87, %c0_88] : memref<1x16x16x128xf32, #tpu.memory_space<vmem>>, vector<1x16x16x128xf32>
    %72 = vector.shape_cast %71 : vector<1x16x16x128xf32> to vector<16x16x128xf32>
    %73 = vector.shape_cast %70 : vector<16x16x128xf32> to vector<1x16x16x128xf32>
    tpu.vector_store %arg5[%c0_85, %c0_86, %c0_87, %c0_88], %73 {strides = array<i32>} : memref<1x16x16x128xf32, #tpu.memory_space<vmem>>, vector<1x16x16x128xf32>,
    %cst_89 = arith.constant dense<0.000000e+00> : vector<128xf32>
    %74 = vector.multi_reduction <add>, %69, %cst_89 [0] : vector<256x128xf32> to vector<128xf32>
    %75 = vector.shape_cast %74 : vector<128xf32> to vector<1x128xf32>
    %c0_90 = arith.constant 0 : index
    %c0_91 = arith.constant 0 : index
    %c0_92 = arith.constant 0 : index
    %76 = vector.load %arg6[%c0_90, %c0_91, %c0_92] : memref<1x2x128xf32, #tpu.memory_space<vmem>>, vector<1x1x128xf32>
    %77 = vector.shape_cast %76 : vector<1x1x128xf32> to vector<1x128xf32>
    %78 = vector.shape_cast %75 : vector<1x128xf32> to vector<1x1x128xf32>
    tpu.vector_store %arg6[%c0_90, %c0_91, %c0_92], %78 {strides = array<i32>} : memref<1x2x128xf32, #tpu.memory_space<vmem>>, vector<1x1x128xf32>,
    %79 = arith.mulf %69, %69 : vector<256x128xf32>
    %cst_93 = arith.constant dense<0.000000e+00> : vector<128xf32>
    %80 = vector.multi_reduction <add>, %79, %cst_93 [0] : vector<256x128xf32> to vector<128xf32>
    %81 = vector.shape_cast %80 : vector<128xf32> to vector<1x128xf32>
    %c0_94 = arith.constant 0 : index
    %c1_95 = arith.constant 1 : index
    %c0_96 = arith.constant 0 : index
    %82 = vector.load %arg6[%c0_94, %c1_95, %c0_96] : memref<1x2x128xf32, #tpu.memory_space<vmem>>, vector<1x1x128xf32>
    %83 = vector.shape_cast %82 : vector<1x1x128xf32> to vector<1x128xf32>
    %84 = vector.shape_cast %81 : vector<1x128xf32> to vector<1x1x128xf32>
    tpu.vector_store %arg6[%c0_94, %c1_95, %c0_96], %84 {strides = array<i32>} : memref<1x2x128xf32, #tpu.memory_space<vmem>>, vector<1x1x128xf32>,
    return
  }
  func.func @transform_0(%arg0: i32) -> (i32, i32, i32, i32) {
    %c0_i32 = arith.constant 0 : i32
    %c0_i32_0 = arith.constant 0 : i32
    %c0_i32_1 = arith.constant 0 : i32
    %c0_i32_2 = arith.constant 0 : i32
    return %arg0, %c0_i32, %c0_i32_0, %c0_i32_1 : i32, i32, i32, i32
  }
  func.func @transform_1(%arg0: i32) -> (i32, i32) {
    %c0_i32 = arith.constant 0 : i32
    %c0_i32_0 = arith.constant 0 : i32
    %c0_i32_1 = arith.constant 0 : i32
    return %c0_i32, %c0_i32_0 : i32, i32
  }
  func.func @transform_2(%arg0: i32) -> (i32, i32) {
    %c0_i32 = arith.constant 0 : i32
    %c0_i32_0 = arith.constant 0 : i32
    %c0_i32_1 = arith.constant 0 : i32
    return %c0_i32, %c0_i32_0 : i32, i32
  }
  func.func @transform_3(%arg0: i32) -> (i32, i32, i32, i32) {
    %c0_i32 = arith.constant 0 : i32
    %c0_i32_0 = arith.constant 0 : i32
    %c0_i32_1 = arith.constant 0 : i32
    %c0_i32_2 = arith.constant 0 : i32
    %c0_i32_3 = arith.constant 0 : i32
    return %c0_i32, %c0_i32_0, %c0_i32_1, %c0_i32_2 : i32, i32, i32, i32
  }
  func.func @transform_4(%arg0: i32) -> (i32, i32, i32, i32) {
    %c0_i32 = arith.constant 0 : i32
    %c0_i32_0 = arith.constant 0 : i32
    %c0_i32_1 = arith.constant 0 : i32
    %c0_i32_2 = arith.constant 0 : i32
    return %arg0, %c0_i32, %c0_i32_0, %c0_i32_1 : i32, i32, i32, i32
  }
  func.func @transform_5(%arg0: i32) -> (i32, i32, i32) {
    %c0_i32 = arith.constant 0 : i32
    %c0_i32_0 = arith.constant 0 : i32
    %c0_i32_1 = arith.constant 0 : i32
    return %arg0, %c0_i32, %c0_i32_0 : i32, i32, i32
  }
}

module attributes {stable_mosaic.version = 11 : i64} {
  func.func @_bn_add_relu_kernel(%arg0: i32, %arg1: memref<1x16x16x128xf32, #tpu.memory_space<vmem>>, %arg2: memref<1x16x16x128xf32, #tpu.memory_space<vmem>>, %arg3: memref<1x128xf32, #tpu.memory_space<vmem>>, %arg4: memref<1x128xf32, #tpu.memory_space<vmem>>, %arg5: memref<1x16x16x128xf32, #tpu.memory_space<vmem>>) attributes {dimension_semantics = [#tpu.dimension_semantics<parallel>], iteration_bounds = array<i64: 2>, scalar_prefetch = 0 : i64, scratch_operands = 0 : i64, tpu.core_type = #tpu.core_type<tc>, window_params = [{transform_indices = @transform_0, window_bounds = array<i64: 1, 16, 16, 128>}, {transform_indices = @transform_1, window_bounds = array<i64: 1, 16, 16, 128>}, {pipeline_mode = #tpu.pipeline_mode<synchronous>, transform_indices = @transform_2, window_bounds = array<i64: 1, 128>}, {pipeline_mode = #tpu.pipeline_mode<synchronous>, transform_indices = @transform_3, window_bounds = array<i64: 1, 128>}, {transform_indices = @transform_4, window_bounds = array<i64: 1, 16, 16, 128>}]} {
    %c0 = arith.constant 0 : index
    %c0_0 = arith.constant 0 : index
    %c0_1 = arith.constant 0 : index
    %c0_2 = arith.constant 0 : index
    %0 = vector.load %arg1[%c0, %c0_0, %c0_1, %c0_2] : memref<1x16x16x128xf32, #tpu.memory_space<vmem>>, vector<1x16x16x128xf32>
    %1 = vector.shape_cast %0 : vector<1x16x16x128xf32> to vector<16x16x128xf32>
    %c0_3 = arith.constant 0 : index
    %c0_4 = arith.constant 0 : index
    %2 = vector.load %arg3[%c0_3, %c0_4] : memref<1x128xf32, #tpu.memory_space<vmem>>, vector<1x128xf32>
    %3 = vector.shape_cast %2 : vector<1x128xf32> to vector<1x1x128xf32>
    %4 = vector.broadcast %3 : vector<1x1x128xf32> to vector<16x16x128xf32>
    %5 = arith.mulf %1, %4 : vector<16x16x128xf32>
    %c0_5 = arith.constant 0 : index
    %c0_6 = arith.constant 0 : index
    %6 = vector.load %arg4[%c0_5, %c0_6] : memref<1x128xf32, #tpu.memory_space<vmem>>, vector<1x128xf32>
    %7 = vector.shape_cast %6 : vector<1x128xf32> to vector<1x1x128xf32>
    %8 = vector.broadcast %7 : vector<1x1x128xf32> to vector<16x16x128xf32>
    %9 = arith.addf %5, %8 : vector<16x16x128xf32>
    %c0_7 = arith.constant 0 : index
    %c0_8 = arith.constant 0 : index
    %c0_9 = arith.constant 0 : index
    %c0_10 = arith.constant 0 : index
    %10 = vector.load %arg2[%c0_7, %c0_8, %c0_9, %c0_10] : memref<1x16x16x128xf32, #tpu.memory_space<vmem>>, vector<1x16x16x128xf32>
    %11 = vector.shape_cast %10 : vector<1x16x16x128xf32> to vector<16x16x128xf32>
    %12 = arith.addf %9, %11 : vector<16x16x128xf32>
    %cst = arith.constant 0.000000e+00 : f32
    %13 = vector.broadcast %cst : f32 to vector<16x16x128xf32>
    %14 = arith.maximumf %12, %13 : vector<16x16x128xf32>
    %c0_11 = arith.constant 0 : index
    %c0_12 = arith.constant 0 : index
    %c0_13 = arith.constant 0 : index
    %c0_14 = arith.constant 0 : index
    %15 = vector.load %arg5[%c0_11, %c0_12, %c0_13, %c0_14] : memref<1x16x16x128xf32, #tpu.memory_space<vmem>>, vector<1x16x16x128xf32>
    %16 = vector.shape_cast %15 : vector<1x16x16x128xf32> to vector<16x16x128xf32>
    %17 = vector.shape_cast %14 : vector<16x16x128xf32> to vector<1x16x16x128xf32>
    tpu.vector_store %arg5[%c0_11, %c0_12, %c0_13, %c0_14], %17 {strides = array<i32>} : memref<1x16x16x128xf32, #tpu.memory_space<vmem>>, vector<1x16x16x128xf32>,
    return
  }
  func.func @transform_0(%arg0: i32) -> (i32, i32, i32, i32) {
    %c0_i32 = arith.constant 0 : i32
    %c0_i32_0 = arith.constant 0 : i32
    %c0_i32_1 = arith.constant 0 : i32
    %c0_i32_2 = arith.constant 0 : i32
    return %arg0, %c0_i32, %c0_i32_0, %c0_i32_1 : i32, i32, i32, i32
  }
  func.func @transform_1(%arg0: i32) -> (i32, i32, i32, i32) {
    %c0_i32 = arith.constant 0 : i32
    %c0_i32_0 = arith.constant 0 : i32
    %c0_i32_1 = arith.constant 0 : i32
    %c0_i32_2 = arith.constant 0 : i32
    return %arg0, %c0_i32, %c0_i32_0, %c0_i32_1 : i32, i32, i32, i32
  }
  func.func @transform_2(%arg0: i32) -> (i32, i32) {
    %c0_i32 = arith.constant 0 : i32
    %c0_i32_0 = arith.constant 0 : i32
    %c0_i32_1 = arith.constant 0 : i32
    return %c0_i32, %c0_i32_0 : i32, i32
  }
  func.func @transform_3(%arg0: i32) -> (i32, i32) {
    %c0_i32 = arith.constant 0 : i32
    %c0_i32_0 = arith.constant 0 : i32
    %c0_i32_1 = arith.constant 0 : i32
    return %c0_i32, %c0_i32_0 : i32, i32
  }
  func.func @transform_4(%arg0: i32) -> (i32, i32, i32, i32) {
    %c0_i32 = arith.constant 0 : i32
    %c0_i32_0 = arith.constant 0 : i32
    %c0_i32_1 = arith.constant 0 : i32
    %c0_i32_2 = arith.constant 0 : i32
    return %arg0, %c0_i32, %c0_i32_0, %c0_i32_1 : i32, i32, i32, i32
  }
}

</mosaic_0001>

<llo_original>
// kernel: simple_block.5
$region0: #{simple_block.5}
  #allocation0 [shape = 'u32[]', space=smem, size = 0x4, offset = 0x4, fixed_abs, tag = 'smem constant byte address 0x4 - core index']
  #allocation1 [shape = 'u32[144,128]{1,0:T(1,128)}', space=vmem, size = 0x12000, scoped, tag = 'internal scratch']
  %s0 = inlined_call_operand.vmem [shape: f32[2,16,16,128], index: 0, kind: input, shape index: {}]
  %s1 = inlined_call_operand.vmem [shape: f32[2,16,16,128], index: 1, kind: input, shape index: {}]
  %s2 = inlined_call_operand.vmem [shape: f32[1,128], index: 2, kind: input, shape index: {}]
  %s3 = inlined_call_operand.vmem [shape: f32[1,128], index: 3, kind: input, shape index: {}]
  %s4 = inlined_call_operand.vmem [shape: f32[2,16,16,128], index: 4, kind: output, shape index: {}]
  %s5 = sld [smem:[#allocation0]]
  $region49: #{simple_block.5} parent=0
    _
  %s7 = ssub.s32 1, %s5
  %s8 = scalar_select 0, %s7, %s5
  loop: start=0, step=1, limit=4
  $region2: #{simple_block.5} parent=0 // loop_pre_header
    _
  $region3: #{simple_block.5} parent=0 // loop_header
    %s10 = sphi 0, %s14
    %p11 = scmp.ge.s32.totalorder %s10, 4
    %s20 = sphi 0, %s22
    %s23 = sphi 0, %s20
    %s24 = sphi 0, %s23
    %s40 = sphi 0, %s24
    %s46 = sphi 0, %s48
    %s49 = sphi 0, %s46
    %s50 = sphi 0, %s49
    %s66 = sphi 0, %s50
    %s70 = sphi 0, %s70
    %s72 = sphi 0, %s70
    %s73 = sphi 0, %s72
    %s87 = sphi 0, %s73
    %s91 = sphi 0, %s91
    %s93 = sphi 0, %s91
    %s94 = sphi 0, %s93
    %s108 = sphi 0, %s94
    %s114 = sphi 0, %s116
    %s117 = sphi 0, %s114
    %s118 = sphi 0, %s117
    %s134 = sphi 0, %s118
  $region4: #{simple_block.5} parent=0 // loop_header_branch
    %13 = sbr.rel (%p11) target = $region8
  $region5: #{simple_block.5} parent=0 // loop_body
    %s15 = ssub.s32 %s10, 1
    %s16 = ssub.s32 %s10, 2
    %s17 = sadd.s32 %s10, 1
    %s18 = ssub.s32 %s10, %s17
    %p19 = scmp.eq.s32.totalorder %s18, 0
    %s21 = sadd.s32 %s20, 1
    %s22 = scalar_select %p19, %s20, %s21
    %p25 = pneg %p19
    %p26 = scmp.eq.s32.totalorder %s10, 1
    %p27 = por %p25, %p26
    %p28 = scmp.ne.s32.totalorder %s20, %s23
    %p29 = scmp.eq.s32.totalorder %s10, 0
    %p30 = por %p28, %p29
    %p31 = scmp.ne.s32.totalorder %s20, %s23
    %p32 = scmp.eq.s32.totalorder %s15, 1
    %p33 = por %p31, %p32
    %p34 = scmp.ne.s32.totalorder %s23, %s24
    %p35 = scmp.eq.s32.totalorder %s15, 0
    %p36 = por %p34, %p35
    %p37 = scmp.ne.s32.totalorder %s23, %s24
    %p38 = scmp.eq.s32.totalorder %s16, 1
    %p39 = por %p37, %p38
    %p41 = scmp.ne.s32.totalorder %s24, %s40
    %p42 = scmp.eq.s32.totalorder %s16, 0
    %p43 = por %p41, %p42
    %s44 = ssub.s32 %s10, %s17
    %p45 = scmp.eq.s32.totalorder %s44, 0
    %s47 = sadd.s32 %s46, 1
    %s48 = scalar_select %p45, %s46, %s47
    %p51 = pneg %p45
    %p52 = scmp.eq.s32.totalorder %s10, 1
    %p53 = por %p51, %p52
    %p54 = scmp.ne.s32.totalorder %s46, %s49
    %p55 = scmp.eq.s32.totalorder %s10, 0
    %p56 = por %p54, %p55
    %p57 = scmp.ne.s32.totalorder %s46, %s49
    %p58 = scmp.eq.s32.totalorder %s15, 1
    %p59 = por %p57, %p58
    %p60 = scmp.ne.s32.totalorder %s49, %s50
    %p61 = scmp.eq.s32.totalorder %s15, 0
    %p62 = por %p60, %p61
    %p63 = scmp.ne.s32.totalorder %s49, %s50
    %p64 = scmp.eq.s32.totalorder %s16, 1
    %p65 = por %p63, %p64
    %p67 = scmp.ne.s32.totalorder %s50, %s66
    %p68 = scmp.eq.s32.totalorder %s16, 0
    %p69 = por %p67, %p68
    %s71 = sadd.s32 %s70, 1
    %p74 = scmp.eq.s32.totalorder %s10, 1
    %p75 = scmp.ne.s32.totalorder %s70, %s72
    %p76 = scmp.eq.s32.totalorder %s10, 0
    %p77 = por %p75, %p76
    %p78 = scmp.ne.s32.totalorder %s70, %s72
    %p79 = scmp.eq.s32.totalorder %s15, 1
    %p80 = por %p78, %p79
    %p81 = scmp.ne.s32.totalorder %s72, %s73
    %p82 = scmp.eq.s32.totalorder %s15, 0
    %p83 = por %p81, %p82
    %p84 = scmp.ne.s32.totalorder %s72, %s73
    %p85 = scmp.eq.s32.totalorder %s16, 1
    %p86 = por %p84, %p85
    %p88 = scmp.ne.s32.totalorder %s73, %s87
    %p89 = scmp.eq.s32.totalorder %s16, 0
    %p90 = por %p88, %p89
    %s92 = sadd.s32 %s91, 1
    %p95 = scmp.eq.s32.totalorder %s10, 1
    %p96 = scmp.ne.s32.totalorder %s91, %s93
    %p97 = scmp.eq.s32.totalorder %s10, 0
    %p98 = por %p96, %p97
    %p99 = scmp.ne.s32.totalorder %s91, %s93
    %p100 = scmp.eq.s32.totalorder %s15, 1
    %p101 = por %p99, %p100
    %p102 = scmp.ne.s32.totalorder %s93, %s94
    %p103 = scmp.eq.s32.totalorder %s15, 0
    %p104 = por %p102, %p103
    %p105 = scmp.ne.s32.totalorder %s93, %s94
    %p106 = scmp.eq.s32.totalorder %s16, 1
    %p107 = por %p105, %p106
    %p109 = scmp.ne.s32.totalorder %s94, %s108
    %p110 = scmp.eq.s32.totalorder %s16, 0
    %p111 = por %p109, %p110
    %s112 = ssub.s32 %s10, %s17
    %p113 = scmp.eq.s32.totalorder %s112, 0
    %s115 = sadd.s32 %s114, 1
    %s116 = scalar_select %p113, %s114, %s115
    %p119 = pneg %p113
    %p120 = scmp.eq.s32.totalorder %s10, 1
    %p121 = por %p119, %p120
    %p122 = scmp.ne.s32.totalorder %s114, %s117
    %p123 = scmp.eq.s32.totalorder %s10, 0
    %p124 = por %p122, %p123
    %p125 = scmp.ne.s32.totalorder %s114, %s117
    %p126 = scmp.eq.s32.totalorder %s15, 1
    %p127 = por %p125, %p126
    %p128 = scmp.ne.s32.totalorder %s117, %s118
    %p129 = scmp.eq.s32.totalorder %s15, 0
    %p130 = por %p128, %p129
    %p131 = scmp.ne.s32.totalorder %s117, %s118
    %p132 = scmp.eq.s32.totalorder %s16, 1
    %p133 = por %p131, %p132
    %p135 = scmp.ne.s32.totalorder %s118, %s134
    %p136 = scmp.eq.s32.totalorder %s16, 0
    %p137 = por %p135, %p136
    %p138 = scmp.le.s32.totalorder 1, %s10
    %p139 = scmp.lt.s32.totalorder %s10, 3
    %p140 = pnand %p138, %p139
    %p141 = pneg %p140
    // Predicated region
    $region9: #{simple_block.5} parent=5 // pred_check
      _
    $region10: #{simple_block.5} parent=5 // pred_check_branch
      %143 = sbr.rel (%p140) target = $region12
    $region11: #{simple_block.5} parent=5 // pred_region
      %s144 = ssub.s32 %s10, 1
      // Predicated region
      $region13: #{simple_block.5} parent=11 // pred_check
        %p145 = pneg %p83
      $region14: #{simple_block.5} parent=11 // pred_check_branch
        %147 = sbr.rel (%p145) target = $region16
      $region15: #{simple_block.5} parent=11 // pred_region
        _
      $region16: #{simple_block.5} parent=11 // pred_fallthru
        _
      // Predicated region
      $region17: #{simple_block.5} parent=11 // pred_check
        %p148 = pneg %p104
      $region18: #{simple_block.5} parent=11 // pred_check_branch
        %150 = sbr.rel (%p148) target = $region20
      $region19: #{simple_block.5} parent=11 // pred_region
        _
      $region20: #{simple_block.5} parent=11 // pred_fallthru
        _
    $region12: #{simple_block.5} parent=5 // pred_fallthru
      _
    %p151 = scmp.lt.s32.totalorder %s10, 2
    // Predicated region
    $region21: #{simple_block.5} parent=5 // pred_check
      %p152 = pneg %p151
    $region22: #{simple_block.5} parent=5 // pred_check_branch
      %154 = sbr.rel (%p152) target = $region24
    $region23: #{simple_block.5} parent=5 // pred_region
      // Predicated region
      $region25: #{simple_block.5} parent=23 // pred_check
        %p155 = pneg %p30
      $region26: #{simple_block.5} parent=23 // pred_check_branch
        %157 = sbr.rel (%p155) target = $region28
      $region27: #{simple_block.5} parent=23 // pred_region
        %p158 = scmp.lt.s32.totalorder %s10, 1
        %s159 = scalar_select %p158, %s10, 1
        %s160 = smul.addr %s159, 32
        %s161 = smul.addr %s160, 8
        %s162 = scalar_lea.vmem %s0, %s161
      $region28: #{simple_block.5} parent=23 // pred_fallthru
        _
      // Predicated region
      $region29: #{simple_block.5} parent=23 // pred_check
        %p163 = pneg %p56
      $region30: #{simple_block.5} parent=23 // pred_check_branch
        %165 = sbr.rel (%p163) target = $region32
      $region31: #{simple_block.5} parent=23 // pred_region
        %p166 = scmp.lt.s32.totalorder %s10, 1
        %s167 = scalar_select %p166, %s10, 1
        %s168 = smul.addr %s167, 32
        %s169 = smul.addr %s168, 8
        %s170 = scalar_lea.vmem %s1, %s169
      $region32: #{simple_block.5} parent=23 // pred_fallthru
        _
    $region24: #{simple_block.5} parent=5 // pred_fallthru
      _
    %p171 = scmp.le.s32.totalorder 1, %s10
    %p172 = scmp.lt.s32.totalorder %s10, 3
    %p173 = pnand %p171, %p172
    %p174 = pneg %p173
    // Predicated region
    $region33: #{simple_block.5} parent=5 // pred_check
      _
    $region34: #{simple_block.5} parent=5 // pred_check_branch
      %176 = sbr.rel (%p173) target = $region36
    $region35: #{simple_block.5} parent=5 // pred_region
      %s177 = ssub.s32 %s10, 1
      %p178 = scmp.lt.s32.totalorder %s15, 1
      %s179 = scalar_select %p178, %s15, 1
      %s180 = smul.addr %s179, 32
      %s181 = smul.addr %s180, 8
      %s182 = scalar_lea.vmem %s0, %s181
      %p183 = pneg %p36
      %p184 = pneg %p33
      %p185 = scmp.lt.s32.totalorder %s15, 1
      %s186 = scalar_select %p185, %s15, 1
      %s187 = smul.addr %s186, 32
      %s188 = smul.addr %s187, 8
      %s189 = scalar_lea.vmem %s1, %s188
      %p190 = pneg %p62
      %p191 = pneg %p59
      %p192 = pneg %p83
      %p193 = pneg %p80
      %p194 = pneg %p104
      %p195 = pneg %p101
      %p196 = pneg %p130
      %p197 = pneg %p127
      %p198 = scmp.lt.s32.totalorder %s15, 1
      %s199 = scalar_select %p198, %s15, 1
      %s200 = smul.addr %s199, 32
      %s201 = smul.addr %s200, 8
      %s202 = scalar_lea.vmem %s4, %s201
      %p203 = scmp.lt.s32.totalorder %s15, 1
      %s204 = scalar_select %p203, %s15, 1
      %s205 = smul.addr %s204, 32
      %s206 = smul.addr %s205, 8
      %s207 = scalar_lea.vmem %s0, %s206
      %p208 = scmp.lt.s32.totalorder %s15, 1
      %s209 = scalar_select %p208, %s15, 1
      %s210 = smul.addr %s209, 32
      %s211 = smul.addr %s210, 8
      %s212 = scalar_lea.vmem %s1, %s211
      %p213 = scmp.lt.s32.totalorder %s15, 1
      %s214 = scalar_select %p213, %s15, 1
      %s215 = smul.addr %s214, 32
      %s216 = smul.addr %s215, 8
      %s217 = scalar_lea.vmem %s4, %s216
      %v218 = vld [vmem:[%s207] sm:$0xff]
      %v219 = vld [vmem:[%s207 + $0x8] sm:$0xff]
      %v220 = vld [vmem:[%s207 + $0x10] sm:$0xff]
      %v221 = vld [vmem:[%s207 + $0x18] sm:$0xff]
      %v222 = vld [vmem:[%s207 + $0x20] sm:$0xff]
      %v223 = vld [vmem:[%s207 + $0x28] sm:$0xff]
      %v224 = vld [vmem:[%s207 + $0x30] sm:$0xff]
      %v225 = vld [vmem:[%s207 + $0x38] sm:$0xff]
      %v226 = vld [vmem:[%s207 + $0x40] sm:$0xff]
      %v227 = vld [vmem:[%s207 + $0x48] sm:$0xff]
      %v228 = vld [vmem:[%s207 + $0x50] sm:$0xff]
      %v229 = vld [vmem:[%s207 + $0x58] sm:$0xff]
      %v230 = vld [vmem:[%s207 + $0x60] sm:$0xff]
      %v231 = vld [vmem:[%s207 + $0x68] sm:$0xff]
      %v232 = vld [vmem:[%s207 + $0x70] sm:$0xff]
      %v233 = vld [vmem:[%s207 + $0x78] sm:$0xff]
      %v234 = vld [vmem:[%s207 + $0x80] sm:$0xff]
      %v235 = vld [vmem:[%s207 + $0x88] sm:$0xff]
      %v236 = vld [vmem:[%s207 + $0x90] sm:$0xff]
      %v237 = vld [vmem:[%s207 + $0x98] sm:$0xff]
      %v238 = vld [vmem:[%s207 + $0xa0] sm:$0xff]
      %v239 = vld [vmem:[%s207 + $0xa8] sm:$0xff]
      %v240 = vld [vmem:[%s207 + $0xb0] sm:$0xff]
      %v241 = vld [vmem:[%s207 + $0xb8] sm:$0xff]
      %v242 = vld [vmem:[%s207 + $0xc0] sm:$0xff]
      %v243 = vld [vmem:[%s207 + $0xc8] sm:$0xff]
      %v244 = vld [vmem:[%s207 + $0xd0] sm:$0xff]
      %v245 = vld [vmem:[%s207 + $0xd8] sm:$0xff]
      %v246 = vld [vmem:[%s207 + $0xe0] sm:$0xff]
      %v247 = vld [vmem:[%s207 + $0xe8] sm:$0xff]
      %v248 = vld [vmem:[%s207 + $0xf0] sm:$0xff]
      %v249 = vld [vmem:[%s207 + $0xf8] sm:$0xff]
      %v250 = vld [vmem:[%s2] sm:$0x1]
      %v252 = vlaneseq
      %v253 = vshrl.u32 %v252, 7
      %v254 = vsub.s32 0, %v253
      %v255 = vrot.slane %v250, %v254
      %v257 = vmul.f32 %v218, %v255
      %v258 = vmul.f32 %v219, %v255
      %v259 = vmul.f32 %v220, %v255
      %v260 = vmul.f32 %v221, %v255
      %v261 = vmul.f32 %v222, %v255
      %v262 = vmul.f32 %v223, %v255
      %v263 = vmul.f32 %v224, %v255
      %v264 = vmul.f32 %v225, %v255
      %v265 = vmul.f32 %v226, %v255
      %v266 = vmul.f32 %v227, %v255
      %v267 = vmul.f32 %v228, %v255
      %v268 = vmul.f32 %v229, %v255
      %v269 = vmul.f32 %v230, %v255
      %v270 = vmul.f32 %v231, %v255
      %v271 = vmul.f32 %v232, %v255
      %v272 = vmul.f32 %v233, %v255
      %v273 = vmul.f32 %v234, %v255
      %v274 = vmul.f32 %v235, %v255
      %v275 = vmul.f32 %v236, %v255
      %v276 = vmul.f32 %v237, %v255
      %v277 = vmul.f32 %v238, %v255
      %v278 = vmul.f32 %v239, %v255
      %v279 = vmul.f32 %v240, %v255
      %v280 = vmul.f32 %v241, %v255
      %v281 = vmul.f32 %v242, %v255
      %v282 = vmul.f32 %v243, %v255
      %v283 = vmul.f32 %v244, %v255
      %v284 = vmul.f32 %v245, %v255
      %v285 = vmul.f32 %v246, %v255
      %v286 = vmul.f32 %v247, %v255
      %v287 = vmul.f32 %v248, %v255
      %v288 = vmul.f32 %v249, %v255
      %v289 = vld [vmem:[%s3] sm:$0x1]
      %v291 = vlaneseq
      %v292 = vshrl.u32 %v291, 7
      %v293 = vsub.s32 0, %v292
      %v294 = vrot.slane %v289, %v293
      %v296 = vadd.f32 %v257, %v294
      %v297 = vadd.f32 %v258, %v294
      %v298 = vadd.f32 %v259, %v294
      %v299 = vadd.f32 %v260, %v294
      %v300 = vadd.f32 %v261, %v294
      %v301 = vadd.f32 %v262, %v294
      %v302 = vadd.f32 %v263, %v294
      %v303 = vadd.f32 %v264, %v294
      %v304 = vadd.f32 %v265, %v294
      %v305 = vadd.f32 %v266, %v294
      %v306 = vadd.f32 %v267, %v294
      %v307 = vadd.f32 %v268, %v294
      %v308 = vadd.f32 %v269, %v294
      %v309 = vadd.f32 %v270, %v294
      %v310 = vadd.f32 %v271, %v294
      %v311 = vadd.f32 %v272, %v294
      %v312 = vadd.f32 %v273, %v294
      %v313 = vadd.f32 %v274, %v294
      %v314 = vadd.f32 %v275, %v294
      %v315 = vadd.f32 %v276, %v294
      %v316 = vadd.f32 %v277, %v294
      %v317 = vadd.f32 %v278, %v294
      %v318 = vadd.f32 %v279, %v294
      %v319 = vadd.f32 %v280, %v294
      %v320 = vadd.f32 %v281, %v294
      %v321 = vadd.f32 %v282, %v294
      %v322 = vadd.f32 %v283, %v294
      %v323 = vadd.f32 %v284, %v294
      %v324 = vadd.f32 %v285, %v294
      %v325 = vadd.f32 %v286, %v294
      %v326 = vadd.f32 %v287, %v294
      %v327 = vadd.f32 %v288, %v294
      %v328 = vld [vmem:[%s212] sm:$0xff]
      %v329 = vld [vmem:[%s212 + $0x8] sm:$0xff]
      %v330 = vld [vmem:[%s212 + $0x10] sm:$0xff]
      %v331 = vld [vmem:[%s212 + $0x18] sm:$0xff]
      %v332 = vld [vmem:[%s212 + $0x20] sm:$0xff]
      %v333 = vld [vmem:[%s212 + $0x28] sm:$0xff]
      %v334 = vld [vmem:[%s212 + $0x30] sm:$0xff]
      %v335 = vld [vmem:[%s212 + $0x38] sm:$0xff]
      %v336 = vld [vmem:[%s212 + $0x40] sm:$0xff]
      %v337 = vld [vmem:[%s212 + $0x48] sm:$0xff]
      %v338 = vld [vmem:[%s212 + $0x50] sm:$0xff]
      %v339 = vld [vmem:[%s212 + $0x58] sm:$0xff]
      %v340 = vld [vmem:[%s212 + $0x60] sm:$0xff]
      %v341 = vld [vmem:[%s212 + $0x68] sm:$0xff]
      %v342 = vld [vmem:[%s212 + $0x70] sm:$0xff]
      %v343 = vld [vmem:[%s212 + $0x78] sm:$0xff]
      %v344 = vld [vmem:[%s212 + $0x80] sm:$0xff]
      %v345 = vld [vmem:[%s212 + $0x88] sm:$0xff]
      %v346 = vld [vmem:[%s212 + $0x90] sm:$0xff]
      %v347 = vld [vmem:[%s212 + $0x98] sm:$0xff]
      %v348 = vld [vmem:[%s212 + $0xa0] sm:$0xff]
      %v349 = vld [vmem:[%s212 + $0xa8] sm:$0xff]
      %v350 = vld [vmem:[%s212 + $0xb0] sm:$0xff]
      %v351 = vld [vmem:[%s212 + $0xb8] sm:$0xff]
      %v352 = vld [vmem:[%s212 + $0xc0] sm:$0xff]
      %v353 = vld [vmem:[%s212 + $0xc8] sm:$0xff]
      %v354 = vld [vmem:[%s212 + $0xd0] sm:$0xff]
      %v355 = vld [vmem:[%s212 + $0xd8] sm:$0xff]
      %v356 = vld [vmem:[%s212 + $0xe0] sm:$0xff]
      %v357 = vld [vmem:[%s212 + $0xe8] sm:$0xff]
      %v358 = vld [vmem:[%s212 + $0xf0] sm:$0xff]
      %v359 = vld [vmem:[%s212 + $0xf8] sm:$0xff]
      %v360 = vadd.f32 %v296, %v328
      %v361 = vadd.f32 %v297, %v329
      %v362 = vadd.f32 %v298, %v330
      %v363 = vadd.f32 %v299, %v331
      %v364 = vadd.f32 %v300, %v332
      %v365 = vadd.f32 %v301, %v333
      %v366 = vadd.f32 %v302, %v334
      %v367 = vadd.f32 %v303, %v335
      %v368 = vadd.f32 %v304, %v336
      %v369 = vadd.f32 %v305, %v337
      %v370 = vadd.f32 %v306, %v338
      %v371 = vadd.f32 %v307, %v339
      %v372 = vadd.f32 %v308, %v340
      %v373 = vadd.f32 %v309, %v341
      %v374 = vadd.f32 %v310, %v342
      %v375 = vadd.f32 %v311, %v343
      %v376 = vadd.f32 %v312, %v344
      %v377 = vadd.f32 %v313, %v345
      %v378 = vadd.f32 %v314, %v346
      %v379 = vadd.f32 %v315, %v347
      %v380 = vadd.f32 %v316, %v348
      %v381 = vadd.f32 %v317, %v349
      %v382 = vadd.f32 %v318, %v350
      %v383 = vadd.f32 %v319, %v351
      %v384 = vadd.f32 %v320, %v352
      %v385 = vadd.f32 %v321, %v353
      %v386 = vadd.f32 %v322, %v354
      %v387 = vadd.f32 %v323, %v355
      %v388 = vadd.f32 %v324, %v356
      %v389 = vadd.f32 %v325, %v357
      %v390 = vadd.f32 %v326, %v358
      %v391 = vadd.f32 %v327, %v359
      %v392 = vmax.f32 %v360, 0.0
      %v393 = vmax.f32 %v361, 0.0
      %v394 = vmax.f32 %v362, 0.0
      %v395 = vmax.f32 %v363, 0.0
      %v396 = vmax.f32 %v364, 0.0
      %v397 = vmax.f32 %v365, 0.0
      %v398 = vmax.f32 %v366, 0.0
      %v399 = vmax.f32 %v367, 0.0
      %v400 = vmax.f32 %v368, 0.0
      %v401 = vmax.f32 %v369, 0.0
      %v402 = vmax.f32 %v370, 0.0
      %v403 = vmax.f32 %v371, 0.0
      %v404 = vmax.f32 %v372, 0.0
      %v405 = vmax.f32 %v373, 0.0
      %v406 = vmax.f32 %v374, 0.0
      %v407 = vmax.f32 %v375, 0.0
      %v408 = vmax.f32 %v376, 0.0
      %v409 = vmax.f32 %v377, 0.0
      %v410 = vmax.f32 %v378, 0.0
      %v411 = vmax.f32 %v379, 0.0
      %v412 = vmax.f32 %v380, 0.0
      %v413 = vmax.f32 %v381, 0.0
      %v414 = vmax.f32 %v382, 0.0
      %v415 = vmax.f32 %v383, 0.0
      %v416 = vmax.f32 %v384, 0.0
      %v417 = vmax.f32 %v385, 0.0
      %v418 = vmax.f32 %v386, 0.0
      %v419 = vmax.f32 %v387, 0.0
      %v420 = vmax.f32 %v388, 0.0
      %v421 = vmax.f32 %v389, 0.0
      %v422 = vmax.f32 %v390, 0.0
      %v423 = vmax.f32 %v391, 0.0
      %424 = vst [vmem:[%s217] sm:$0xff] %v392
      %425 = vst [vmem:[%s217 + $0x8] sm:$0xff] %v393
      %426 = vst [vmem:[%s217 + $0x10] sm:$0xff] %v394
      %427 = vst [vmem:[%s217 + $0x18] sm:$0xff] %v395
      %428 = vst [vmem:[%s217 + $0x20] sm:$0xff] %v396
      %429 = vst [vmem:[%s217 + $0x28] sm:$0xff] %v397
      %430 = vst [vmem:[%s217 + $0x30] sm:$0xff] %v398
      %431 = vst [vmem:[%s217 + $0x38] sm:$0xff] %v399
      %432 = vst [vmem:[%s217 + $0x40] sm:$0xff] %v400
      %433 = vst [vmem:[%s217 + $0x48] sm:$0xff] %v401
      %434 = vst [vmem:[%s217 + $0x50] sm:$0xff] %v402
      %435 = vst [vmem:[%s217 + $0x58] sm:$0xff] %v403
      %436 = vst [vmem:[%s217 + $0x60] sm:$0xff] %v404
      %437 = vst [vmem:[%s217 + $0x68] sm:$0xff] %v405
      %438 = vst [vmem:[%s217 + $0x70] sm:$0xff] %v406
      %439 = vst [vmem:[%s217 + $0x78] sm:$0xff] %v407
      %440 = vst [vmem:[%s217 + $0x80] sm:$0xff] %v408
      %441 = vst [vmem:[%s217 + $0x88] sm:$0xff] %v409
      %442 = vst [vmem:[%s217 + $0x90] sm:$0xff] %v410
      %443 = vst [vmem:[%s217 + $0x98] sm:$0xff] %v411
      %444 = vst [vmem:[%s217 + $0xa0] sm:$0xff] %v412
      %445 = vst [vmem:[%s217 + $0xa8] sm:$0xff] %v413
      %446 = vst [vmem:[%s217 + $0xb0] sm:$0xff] %v414
      %447 = vst [vmem:[%s217 + $0xb8] sm:$0xff] %v415
      %448 = vst [vmem:[%s217 + $0xc0] sm:$0xff] %v416
      %449 = vst [vmem:[%s217 + $0xc8] sm:$0xff] %v417
      %450 = vst [vmem:[%s217 + $0xd0] sm:$0xff] %v418
      %451 = vst [vmem:[%s217 + $0xd8] sm:$0xff] %v419
      %452 = vst [vmem:[%s217 + $0xe0] sm:$0xff] %v420
      %453 = vst [vmem:[%s217 + $0xe8] sm:$0xff] %v421
      %454 = vst [vmem:[%s217 + $0xf0] sm:$0xff] %v422
      %455 = vst [vmem:[%s217 + $0xf8] sm:$0xff] %v423
      %p456 = scmp.lt.s32.totalorder %s15, 1
      %s457 = scalar_select %p456, %s15, 1
      %s458 = smul.addr %s457, 32
      %s459 = smul.addr %s458, 8
      %s460 = scalar_lea.vmem %s4, %s459
      // Predicated region
      $region37: #{simple_block.5} parent=35 // pred_check
        %p461 = pneg %p127
      $region38: #{simple_block.5} parent=35 // pred_check_branch
        %463 = sbr.rel (%p461) target = $region40
      $region39: #{simple_block.5} parent=35 // pred_region
        _
      $region40: #{simple_block.5} parent=35 // pred_fallthru
        _
    $region36: #{simple_block.5} parent=5 // pred_fallthru
      _
    %p464 = scmp.le.s32.totalorder 2, %s10
    // Predicated region
    $region41: #{simple_block.5} parent=5 // pred_check
      %p465 = pneg %p464
    $region42: #{simple_block.5} parent=5 // pred_check_branch
      %467 = sbr.rel (%p465) target = $region44
    $region43: #{simple_block.5} parent=5 // pred_region
      %s468 = ssub.s32 %s10, 2
      // Predicated region
      $region45: #{simple_block.5} parent=43 // pred_check
        %p469 = pneg %p133
      $region46: #{simple_block.5} parent=43 // pred_check_branch
        %471 = sbr.rel (%p469) target = $region48
      $region47: #{simple_block.5} parent=43 // pred_region
        %p472 = scmp.lt.s32.totalorder %s16, 1
        %s473 = scalar_select %p472, %s16, 1
        %s474 = smul.addr %s473, 32
        %s475 = smul.addr %s474, 8
        %s476 = scalar_lea.vmem %s4, %s475
      $region48: #{simple_block.5} parent=43 // pred_fallthru
        _
    $region44: #{simple_block.5} parent=5 // pred_fallthru
      _
  $region6: #{simple_block.5} parent=0 // loop_footer
    %s14 = sadd.s32 1, %s10
  $region7: #{simple_block.5} parent=0 // loop_footer_branch
    %9 = sbr.rel target = $region3
  $region8: #{simple_block.5} parent=0 // loop_exit
    _

// kernel: simple_block.3
$region0: #{simple_block.3}
  #allocation0 [shape = 'u32[]', space=smem, size = 0x4, offset = 0x4, fixed_abs, tag = 'smem constant byte address 0x4 - core index']
  #allocation1 [shape = 'u32[144,128]{1,0:T(1,128)}', space=vmem, size = 0x12000, scoped, tag = 'internal scratch']
  %s0 = inlined_call_operand.vmem [shape: f32[2,18,18,128], index: 0, kind: input, shape index: {}]
  %s1 = inlined_call_operand.vmem [shape: f32[3,3,128,128], index: 1, kind: input, shape index: {}]
  %s2 = inlined_call_operand.vmem [shape: f32[2,16,16,128], index: 2, kind: output, shape index: {0}]
  %s3 = inlined_call_operand.vmem [shape: f32[2,2,128], index: 3, kind: output, shape index: {1}]
  %4 = xla_tuple %s2, %s3
  %s5 = sld [smem:[#allocation0]]
  $region49: #{simple_block.3} parent=0
    _
  %s7 = ssub.s32 1, %s5
  %s8 = scalar_select 0, %s7, %s5
  loop: start=0, step=1, limit=4
  $region2: #{simple_block.3} parent=0 // loop_pre_header
    _
  $region3: #{simple_block.3} parent=0 // loop_header
    %s10 = sphi 0, %s14
    %p11 = scmp.ge.s32.totalorder %s10, 4
    %s20 = sphi 0, %s22
    %s23 = sphi 0, %s20
    %s24 = sphi 0, %s23
    %s40 = sphi 0, %s24
    %s44 = sphi 0, %s44
    %s46 = sphi 0, %s44
    %s47 = sphi 0, %s46
    %s61 = sphi 0, %s47
    %s67 = sphi 0, %s69
    %s70 = sphi 0, %s67
    %s71 = sphi 0, %s70
    %s87 = sphi 0, %s71
    %s93 = sphi 0, %s95
    %s96 = sphi 0, %s93
    %s97 = sphi 0, %s96
    %s113 = sphi 0, %s97
  $region4: #{simple_block.3} parent=0 // loop_header_branch
    %13 = sbr.rel (%p11) target = $region8
  $region5: #{simple_block.3} parent=0 // loop_body
    %s15 = ssub.s32 %s10, 1
    %s16 = ssub.s32 %s10, 2
    %s17 = sadd.s32 %s10, 1
    %s18 = ssub.s32 %s10, %s17
    %p19 = scmp.eq.s32.totalorder %s18, 0
    %s21 = sadd.s32 %s20, 1
    %s22 = scalar_select %p19, %s20, %s21
    %p25 = pneg %p19
    %p26 = scmp.eq.s32.totalorder %s10, 1
    %p27 = por %p25, %p26
    %p28 = scmp.ne.s32.totalorder %s20, %s23
    %p29 = scmp.eq.s32.totalorder %s10, 0
    %p30 = por %p28, %p29
    %p31 = scmp.ne.s32.totalorder %s20, %s23
    %p32 = scmp.eq.s32.totalorder %s15, 1
    %p33 = por %p31, %p32
    %p34 = scmp.ne.s32.totalorder %s23, %s24
    %p35 = scmp.eq.s32.totalorder %s15, 0
    %p36 = por %p34, %p35
    %p37 = scmp.ne.s32.totalorder %s23, %s24
    %p38 = scmp.eq.s32.totalorder %s16, 1
    %p39 = por %p37, %p38
    %p41 = scmp.ne.s32.totalorder %s24, %s40
    %p42 = scmp.eq.s32.totalorder %s16, 0
    %p43 = por %p41, %p42
    %s45 = sadd.s32 %s44, 1
    %p48 = scmp.eq.s32.totalorder %s10, 1
    %p49 = scmp.ne.s32.totalorder %s44, %s46
    %p50 = scmp.eq.s32.totalorder %s10, 0
    %p51 = por %p49, %p50
    %p52 = scmp.ne.s32.totalorder %s44, %s46
    %p53 = scmp.eq.s32.totalorder %s15, 1
    %p54 = por %p52, %p53
    %p55 = scmp.ne.s32.totalorder %s46, %s47
    %p56 = scmp.eq.s32.totalorder %s15, 0
    %p57 = por %p55, %p56
    %p58 = scmp.ne.s32.totalorder %s46, %s47
    %p59 = scmp.eq.s32.totalorder %s16, 1
    %p60 = por %p58, %p59
    %p62 = scmp.ne.s32.totalorder %s47, %s61
    %p63 = scmp.eq.s32.totalorder %s16, 0
    %p64 = por %p62, %p63
    %s65 = ssub.s32 %s10, %s17
    %p66 = scmp.eq.s32.totalorder %s65, 0
    %s68 = sadd.s32 %s67, 1
    %s69 = scalar_select %p66, %s67, %s68
    %p72 = pneg %p66
    %p73 = scmp.eq.s32.totalorder %s10, 1
    %p74 = por %p72, %p73
    %p75 = scmp.ne.s32.totalorder %s67, %s70
    %p76 = scmp.eq.s32.totalorder %s10, 0
    %p77 = por %p75, %p76
    %p78 = scmp.ne.s32.totalorder %s67, %s70
    %p79 = scmp.eq.s32.totalorder %s15, 1
    %p80 = por %p78, %p79
    %p81 = scmp.ne.s32.totalorder %s70, %s71
    %p82 = scmp.eq.s32.totalorder %s15, 0
    %p83 = por %p81, %p82
    %p84 = scmp.ne.s32.totalorder %s70, %s71
    %p85 = scmp.eq.s32.totalorder %s16, 1
    %p86 = por %p84, %p85
    %p88 = scmp.ne.s32.totalorder %s71, %s87
    %p89 = scmp.eq.s32.totalorder %s16, 0
    %p90 = por %p88, %p89
    %s91 = ssub.s32 %s10, %s17
    %p92 = scmp.eq.s32.totalorder %s91, 0
    %s94 = sadd.s32 %s93, 1
    %s95 = scalar_select %p92, %s93, %s94
    %p98 = pneg %p92
    %p99 = scmp.eq.s32.totalorder %s10, 1
    %p100 = por %p98, %p99
    %p101 = scmp.ne.s32.totalorder %s93, %s96
    %p102 = scmp.eq.s32.totalorder %s10, 0
    %p103 = por %p101, %p102
    %p104 = scmp.ne.s32.totalorder %s93, %s96
    %p105 = scmp.eq.s32.totalorder %s15, 1
    %p106 = por %p104, %p105
    %p107 = scmp.ne.s32.totalorder %s96, %s97
    %p108 = scmp.eq.s32.totalorder %s15, 0
    %p109 = por %p107, %p108
    %p110 = scmp.ne.s32.totalorder %s96, %s97
    %p111 = scmp.eq.s32.totalorder %s16, 1
    %p112 = por %p110, %p111
    %p114 = scmp.ne.s32.totalorder %s97, %s113
    %p115 = scmp.eq.s32.totalorder %s16, 0
    %p116 = por %p114, %p115
    %p117 = scmp.le.s32.totalorder 1, %s10
    %p118 = scmp.lt.s32.totalorder %s10, 3
    %p119 = pnand %p117, %p118
    %p120 = pneg %p119
    // Predicated region
    $region9: #{simple_block.3} parent=5 // pred_check
      _
    $region10: #{simple_block.3} parent=5 // pred_check_branch
      %122 = sbr.rel (%p119) target = $region12
    $region11: #{simple_block.3} parent=5 // pred_region
      %s123 = ssub.s32 %s10, 1
      // Predicated region
      $region13: #{simple_block.3} parent=11 // pred_check
        %p124 = pneg %p57
      $region14: #{simple_block.3} parent=11 // pred_check_branch
        %126 = sbr.rel (%p124) target = $region16
      $region15: #{simple_block.3} parent=11 // pred_region
        _
      $region16: #{simple_block.3} parent=11 // pred_fallthru
        _
    $region12: #{simple_block.3} parent=5 // pred_fallthru
      _
    %p127 = scmp.lt.s32.totalorder %s10, 2
    // Predicated region
    $region17: #{simple_block.3} parent=5 // pred_check
      %p128 = pneg %p127
    $region18: #{simple_block.3} parent=5 // pred_check_branch
      %130 = sbr.rel (%p128) target = $region20
    $region19: #{simple_block.3} parent=5 // pred_region
      // Predicated region
      $region21: #{simple_block.3} parent=19 // pred_check
        %p131 = pneg %p30
      $region22: #{simple_block.3} parent=19 // pred_check_branch
        %133 = sbr.rel (%p131) target = $region24
      $region23: #{simple_block.3} parent=19 // pred_region
        %p134 = scmp.lt.s32.totalorder %s10, 1
        %s135 = scalar_select %p134, %s10, 1
        %s136 = smul.addr %s135, 54
        %s137 = smul.addr %s136, 8
        %s138 = scalar_lea.vmem %s0, %s137
      $region24: #{simple_block.3} parent=19 // pred_fallthru
        _
    $region20: #{simple_block.3} parent=5 // pred_fallthru
      _
    %p139 = scmp.le.s32.totalorder 1, %s10
    %p140 = scmp.lt.s32.totalorder %s10, 3
    %p141 = pnand %p139, %p140
    %p142 = pneg %p141
    // Predicated region
    $region25: #{simple_block.3} parent=5 // pred_check
      _
    $region26: #{simple_block.3} parent=5 // pred_check_branch
      %144 = sbr.rel (%p141) target = $region28
    $region27: #{simple_block.3} parent=5 // pred_region
      %s145 = ssub.s32 %s10, 1
      %p146 = scmp.lt.s32.totalorder %s15, 1
      %s147 = scalar_select %p146, %s15, 1
      %s148 = smul.addr %s147, 54
      %s149 = smul.addr %s148, 8
      %s150 = scalar_lea.vmem %s0, %s149
      %p151 = pneg %p36
      %p152 = pneg %p33
      %p153 = pneg %p57
      %p154 = pneg %p54
      %p155 = pneg %p83
      %p156 = pneg %p80
      %p157 = scmp.lt.s32.totalorder %s15, 1
      %s158 = scalar_select %p157, %s15, 1
      %s159 = smul.addr %s158, 32
      %s160 = smul.addr %s159, 8
      %s161 = scalar_lea.vmem %s2, %s160
      %p162 = pneg %p109
      %p163 = pneg %p106
      %p164 = scmp.lt.s32.totalorder %s15, 1
      %s165 = scalar_select %p164, %s15, 1
      %s166 = smul.addr %s165, 2
      %s167 = scalar_lea.vmem %s3, %s166
      %p168 = scmp.lt.s32.totalorder %s15, 1
      %s169 = scalar_select %p168, %s15, 1
      %s170 = smul.addr %s169, 54
      %s171 = smul.addr %s170, 8
      %s172 = scalar_lea.vmem %s0, %s171
      %p173 = scmp.lt.s32.totalorder %s15, 1
      %s174 = scalar_select %p173, %s15, 1
      %s175 = smul.addr %s174, 32
      %s176 = smul.addr %s175, 8
      %s177 = scalar_lea.vmem %s2, %s176
      %p178 = scmp.lt.s32.totalorder %s15, 1
      %s179 = scalar_select %p178, %s15, 1
      %s180 = smul.addr %s179, 2
      %s181 = scalar_lea.vmem %s3, %s180
      %v182 = vld [vmem:[%s172] sm:$0xff]
      %v183 = vld [vmem:[%s172 + $0x8] sm:$0xff]
      %v184 = vld [vmem:[%s172 + $0x18] sm:$0xff]
      %v185 = vld [vmem:[%s172 + $0x20] sm:$0xff]
      %v186 = vld [vmem:[%s172 + $0x30] sm:$0xff]
      %v187 = vld [vmem:[%s172 + $0x38] sm:$0xff]
      %v188 = vld [vmem:[%s172 + $0x48] sm:$0xff]
      %v189 = vld [vmem:[%s172 + $0x50] sm:$0xff]
      %v190 = vld [vmem:[%s172 + $0x60] sm:$0xff]
      %v191 = vld [vmem:[%s172 + $0x68] sm:$0xff]
      %v192 = vld [vmem:[%s172 + $0x78] sm:$0xff]
      %v193 = vld [vmem:[%s172 + $0x80] sm:$0xff]
      %v194 = vld [vmem:[%s172 + $0x90] sm:$0xff]
      %v195 = vld [vmem:[%s172 + $0x98] sm:$0xff]
      %v196 = vld [vmem:[%s172 + $0xa8] sm:$0xff]
      %v197 = vld [vmem:[%s172 + $0xb0] sm:$0xff]
      %v198 = vld [vmem:[%s172 + $0xc0] sm:$0xff]
      %v199 = vld [vmem:[%s172 + $0xc8] sm:$0xff]
      %v200 = vld [vmem:[%s172 + $0xd8] sm:$0xff]
      %v201 = vld [vmem:[%s172 + $0xe0] sm:$0xff]
      %v202 = vld [vmem:[%s172 + $0xf0] sm:$0xff]
      %v203 = vld [vmem:[%s172 + $0xf8] sm:$0xff]
      %v204 = vld [vmem:[%s172 + $0x108] sm:$0xff]
      %v205 = vld [vmem:[%s172 + $0x110] sm:$0xff]
      %v206 = vld [vmem:[%s172 + $0x120] sm:$0xff]
      %v207 = vld [vmem:[%s172 + $0x128] sm:$0xff]
      %v208 = vld [vmem:[%s172 + $0x138] sm:$0xff]
      %v209 = vld [vmem:[%s172 + $0x140] sm:$0xff]
      %v210 = vld [vmem:[%s172 + $0x150] sm:$0xff]
      %v211 = vld [vmem:[%s172 + $0x158] sm:$0xff]
      %v212 = vld [vmem:[%s172 + $0x168] sm:$0xff]
      %v213 = vld [vmem:[%s172 + $0x170] sm:$0xff]
      %v214 = vld [vmem:[%s1] sm:$0xff]
      %v215 = vld [vmem:[%s1 + $0x8] sm:$0xff]
      %v216 = vld [vmem:[%s1 + $0x10] sm:$0xff]
      %v217 = vld [vmem:[%s1 + $0x18] sm:$0xff]
      %v218 = vld [vmem:[%s1 + $0x20] sm:$0xff]
      %v219 = vld [vmem:[%s1 + $0x28] sm:$0xff]
      %v220 = vld [vmem:[%s1 + $0x30] sm:$0xff]
      %v221 = vld [vmem:[%s1 + $0x38] sm:$0xff]
      %v222 = vld [vmem:[%s1 + $0x40] sm:$0xff]
      %v223 = vld [vmem:[%s1 + $0x48] sm:$0xff]
      %v224 = vld [vmem:[%s1 + $0x50] sm:$0xff]
      %v225 = vld [vmem:[%s1 + $0x58] sm:$0xff]
      %v226 = vld [vmem:[%s1 + $0x60] sm:$0xff]
      %v227 = vld [vmem:[%s1 + $0x68] sm:$0xff]
      %v228 = vld [vmem:[%s1 + $0x70] sm:$0xff]
      %v229 = vld [vmem:[%s1 + $0x78] sm:$0xff]
      %v230 = vld [vmem:[%s172 + $0x1] sm:$0xff]
      %v231 = vld [vmem:[%s172 + $0x9] sm:$0xff]
      %v232 = vld [vmem:[%s172 + $0x19] sm:$0xff]
      %v233 = vld [vmem:[%s172 + $0x21] sm:$0xff]
      %v234 = vld [vmem:[%s172 + $0x31] sm:$0xff]
      %v235 = vld [vmem:[%s172 + $0x39] sm:$0xff]
      %v236 = vld [vmem:[%s172 + $0x49] sm:$0xff]
      %v237 = vld [vmem:[%s172 + $0x51] sm:$0xff]
      %v238 = vld [vmem:[%s172 + $0x61] sm:$0xff]
      %v239 = vld [vmem:[%s172 + $0x69] sm:$0xff]
      %v240 = vld [vmem:[%s172 + $0x79] sm:$0xff]
      %v241 = vld [vmem:[%s172 + $0x81] sm:$0xff]
      %v242 = vld [vmem:[%s172 + $0x91] sm:$0xff]
      %v243 = vld [vmem:[%s172 + $0x99] sm:$0xff]
      %v244 = vld [vmem:[%s172 + $0xa9] sm:$0xff]
      %v245 = vld [vmem:[%s172 + $0xb1] sm:$0xff]
      %v246 = vld [vmem:[%s172 + $0xc1] sm:$0xff]
      %v247 = vld [vmem:[%s172 + $0xc9] sm:$0xff]
      %v248 = vld [vmem:[%s172 + $0xd9] sm:$0xff]
      %v249 = vld [vmem:[%s172 + $0xe1] sm:$0xff]
      %v250 = vld [vmem:[%s172 + $0xf1] sm:$0xff]
      %v251 = vld [vmem:[%s172 + $0xf9] sm:$0xff]
      %v252 = vld [vmem:[%s172 + $0x109] sm:$0xff]
      %v253 = vld [vmem:[%s172 + $0x111] sm:$0xff]
      %v254 = vld [vmem:[%s172 + $0x121] sm:$0xff]
      %v255 = vld [vmem:[%s172 + $0x129] sm:$0xff]
      %v256 = vld [vmem:[%s172 + $0x139] sm:$0xff]
      %v257 = vld [vmem:[%s172 + $0x141] sm:$0xff]
      %v258 = vld [vmem:[%s172 + $0x151] sm:$0xff]
      %v259 = vld [vmem:[%s172 + $0x159] sm:$0xff]
      %v260 = vld [vmem:[%s172 + $0x169] sm:$0xff]
      %v261 = vld [vmem:[%s172 + $0x171] sm:$0xff]
      %s262 = scalar_lea.vmem %s1, 128
      %v263 = vld [vmem:[%s262] sm:$0xff]
      %v264 = vld [vmem:[%s262 + $0x8] sm:$0xff]
      %v265 = vld [vmem:[%s262 + $0x10] sm:$0xff]
      %v266 = vld [vmem:[%s262 + $0x18] sm:$0xff]
      %v267 = vld [vmem:[%s262 + $0x20] sm:$0xff]
      %v268 = vld [vmem:[%s262 + $0x28] sm:$0xff]
      %v269 = vld [vmem:[%s262 + $0x30] sm:$0xff]
      %v270 = vld [vmem:[%s262 + $0x38] sm:$0xff]
      %v271 = vld [vmem:[%s262 + $0x40] sm:$0xff]
      %v272 = vld [vmem:[%s262 + $0x48] sm:$0xff]
      %v273 = vld [vmem:[%s262 + $0x50] sm:$0xff]
      %v274 = vld [vmem:[%s262 + $0x58] sm:$0xff]
      %v275 = vld [vmem:[%s262 + $0x60] sm:$0xff]
      %v276 = vld [vmem:[%s262 + $0x68] sm:$0xff]
      %v277 = vld [vmem:[%s262 + $0x70] sm:$0xff]
      %v278 = vld [vmem:[%s262 + $0x78] sm:$0xff]
      %279 = vmatprep.subr.mxu0 0.0
      %280 = vmatpush1.msra.mxu0 %v263
      %281 = vmatprep.subr.mxu0 0.0
      %282 = vmatpush1.msra.mxu0 %v264
      %283 = vmatprep.subr.mxu0 0.0
      %284 = vmatpush1.msra.mxu0 %v265
      %285 = vmatprep.subr.mxu0 0.0
      %286 = vmatpush1.msra.mxu0 %v266
      %287 = vmatprep.subr.mxu0 0.0
      %288 = vmatpush1.msra.mxu0 %v267
      %289 = vmatprep.subr.mxu0 0.0
      %290 = vmatpush1.msra.mxu0 %v268
      %291 = vmatprep.subr.mxu0 0.0
      %292 = vmatpush1.msra.mxu0 %v269
      %293 = vmatprep.subr.mxu0 0.0
      %294 = vmatpush1.msra.mxu0 %v270
      %295 = vmatprep.subr.mxu0 0.0
      %296 = vmatpush1.msra.mxu0 %v271
      %297 = vmatprep.subr.mxu0 0.0
      %298 = vmatpush1.msra.mxu0 %v272
      %299 = vmatprep.subr.mxu0 0.0
      %300 = vmatpush1.msra.mxu0 %v273
      %301 = vmatprep.subr.mxu0 0.0
      %302 = vmatpush1.msra.mxu0 %v274
      %303 = vmatprep.subr.mxu0 0.0
      %304 = vmatpush1.msra.mxu0 %v275
      %305 = vmatprep.subr.mxu0 0.0
      %306 = vmatpush1.msra.mxu0 %v276
      %307 = vmatprep.subr.mxu0 0.0
      %308 = vmatpush1.msra.mxu0 %v277
      %309 = vmatprep.subr.mxu0 0.0
      %310 = vmatpush1.msra.mxu0 %v278
      %311 = vmatprep.subr.mxu0 0.0
      %312 = vmatpush1.msra.mxu0 0.0
      %313 = vmatprep.subr.mxu0 0.0
      %314 = vmatpush1.msra.mxu0 0.0
      %315 = vmatprep.subr.mxu0 0.0
      %316 = vmatpush1.msra.mxu0 0.0
      %317 = vmatprep.subr.mxu0 0.0
      %318 = vmatpush1.msra.mxu0 0.0
      %319 = vmatprep.subr.mxu0 0.0
      %320 = vmatpush1.msra.mxu0 0.0
      %321 = vmatprep.subr.mxu0 0.0
      %322 = vmatpush1.msra.mxu0 0.0
      %323 = vmatprep.subr.mxu0 0.0
      %324 = vmatpush1.msra.mxu0 0.0
      %325 = vmatprep.subr.mxu0 0.0
      %326 = vmatpush1.msra.mxu0 0.0
      %327 = vmatprep.subr.mxu0 0.0
      %328 = vmatpush1.msra.mxu0 0.0
      %329 = vmatprep.subr.mxu0 0.0
      %330 = vmatpush1.msra.mxu0 0.0
      %331 = vmatprep.subr.mxu0 0.0
      %332 = vmatpush1.msra.mxu0 0.0
      %333 = vmatprep.subr.mxu0 0.0
      %334 = vmatpush1.msra.mxu0 0.0
      %335 = vmatprep.subr.mxu0 0.0
      %336 = vmatpush1.msra.mxu0 0.0
      %337 = vmatprep.subr.mxu0 0.0
      %338 = vmatpush1.msra.mxu0 0.0
      %339 = vmatprep.subr.mxu0 0.0
      %340 = vmatpush1.msra.mxu0 0.0
      %341 = vmatprep.subr.mxu0 0.0
      %342 = vmatpush1.msra.mxu0 0.0
      %343 = vmatprep.mubr.f32.mxu0 0.0
      %344 = vmatmul.mubr.f32.gmra.mrb[0].mxu0 %v230
      %v345 = vpop.f32.mrb[0].mxu0
      %v346 = vadd.f32 0.0, %v345
      %v347 = vpop.f32.mrb[0].mxu0
      %348 = vmatprep.mubr.f32.mxu0 0.0
      %349 = vmatmul.mubr.f32.gmra.mrb[0].mxu0 %v231
      %v350 = vpop.f32.mrb[0].mxu0
      %v351 = vadd.f32 0.0, %v350
      %v352 = vpop.f32.mrb[0].mxu0
      %353 = vmatprep.mubr.f32.mxu0 0.0
      %354 = vmatmul.mubr.f32.gmra.mrb[0].mxu0 %v232
      %v355 = vpop.f32.mrb[0].mxu0
      %v356 = vadd.f32 0.0, %v355
      %v357 = vpop.f32.mrb[0].mxu0
      %358 = vmatprep.mubr.f32.mxu0 0.0
      %359 = vmatmul.mubr.f32.gmra.mrb[0].mxu0 %v233
      %v360 = vpop.f32.mrb[0].mxu0
      %v361 = vadd.f32 0.0, %v360
      %v362 = vpop.f32.mrb[0].mxu0
      %363 = vmatprep.mubr.f32.mxu0 0.0
      %364 = vmatmul.mubr.f32.gmra.mrb[0].mxu0 %v234
      %v365 = vpop.f32.mrb[0].mxu0
      %v366 = vadd.f32 0.0, %v365
      %v367 = vpop.f32.mrb[0].mxu0
      %368 = vmatprep.mubr.f32.mxu0 0.0
      %369 = vmatmul.mubr.f32.gmra.mrb[0].mxu0 %v235
      %v370 = vpop.f32.mrb[0].mxu0
      %v371 = vadd.f32 0.0, %v370
      %v372 = vpop.f32.mrb[0].mxu0
      %373 = vmatprep.mubr.f32.mxu0 0.0
      %374 = vmatmul.mubr.f32.gmra.mrb[0].mxu0 %v236
      %v375 = vpop.f32.mrb[0].mxu0
      %v376 = vadd.f32 0.0, %v375
      %v377 = vpop.f32.mrb[0].mxu0
      %378 = vmatprep.mubr.f32.mxu0 0.0
      %379 = vmatmul.mubr.f32.gmra.mrb[0].mxu0 %v237
      %v380 = vpop.f32.mrb[0].mxu0
      %v381 = vadd.f32 0.0, %v380
      %v382 = vpop.f32.mrb[0].mxu0
      %383 = vmatprep.mubr.f32.mxu0 0.0
      %384 = vmatmul.mubr.f32.gmra.mrb[0].mxu0 %v238
      %v385 = vpop.f32.mrb[0].mxu0
      %v386 = vadd.f32 0.0, %v385
      %v387 = vpop.f32.mrb[0].mxu0
      %388 = vmatprep.mubr.f32.mxu0 0.0
      %389 = vmatmul.mubr.f32.gmra.mrb[0].mxu0 %v239
      %v390 = vpop.f32.mrb[0].mxu0
      %v391 = vadd.f32 0.0, %v390
      %v392 = vpop.f32.mrb[0].mxu0
      %393 = vmatprep.mubr.f32.mxu0 0.0
      %394 = vmatmul.mubr.f32.gmra.mrb[0].mxu0 %v240
      %v395 = vpop.f32.mrb[0].mxu0
      %v396 = vadd.f32 0.0, %v395
      %v397 = vpop.f32.mrb[0].mxu0
      %398 = vmatprep.mubr.f32.mxu0 0.0
      %399 = vmatmul.mubr.f32.gmra.mrb[0].mxu0 %v241
      %v400 = vpop.f32.mrb[0].mxu0
      %v401 = vadd.f32 0.0, %v400
      %v402 = vpop.f32.mrb[0].mxu0
      %403 = vmatprep.mubr.f32.mxu0 0.0
      %404 = vmatmul.mubr.f32.gmra.mrb[0].mxu0 %v242
      %v405 = vpop.f32.mrb[0].mxu0
      %v406 = vadd.f32 0.0, %v405
      %v407 = vpop.f32.mrb[0].mxu0
      %408 = vmatprep.mubr.f32.mxu0 0.0
      %409 = vmatmul.mubr.f32.gmra.mrb[0].mxu0 %v243
      %v410 = vpop.f32.mrb[0].mxu0
      %v411 = vadd.f32 0.0, %v410
      %v412 = vpop.f32.mrb[0].mxu0
      %413 = vmatprep.mubr.f32.mxu0 0.0
      %414 = vmatmul.mubr.f32.gmra.mrb[0].mxu0 %v244
      %v415 = vpop.f32.mrb[0].mxu0
      %v416 = vadd.f32 0.0, %v415
      %v417 = vpop.f32.mrb[0].mxu0
      %418 = vmatprep.mubr.f32.mxu0 0.0
      %419 = vmatmul.mubr.f32.gmra.mrb[0].mxu0 %v245
      %v420 = vpop.f32.mrb[0].mxu0
      %v421 = vadd.f32 0.0, %v420
      %v422 = vpop.f32.mrb[0].mxu0
      %423 = vmatprep.mubr.f32.mxu0 0.0
      %424 = vmatmul.mubr.f32.gmra.mrb[0].mxu0 %v246
      %v425 = vpop.f32.mrb[0].mxu0
      %v426 = vadd.f32 0.0, %v425
      %v427 = vpop.f32.mrb[0].mxu0
      %428 = vmatprep.mubr.f32.mxu0 0.0
      %429 = vmatmul.mubr.f32.gmra.mrb[0].mxu0 %v247
      %v430 = vpop.f32.mrb[0].mxu0
      %v431 = vadd.f32 0.0, %v430
      %v432 = vpop.f32.mrb[0].mxu0
      %433 = vmatprep.mubr.f32.mxu0 0.0
      %434 = vmatmul.mubr.f32.gmra.mrb[0].mxu0 %v248
      %v435 = vpop.f32.mrb[0].mxu0
      %v436 = vadd.f32 0.0, %v435
      %v437 = vpop.f32.mrb[0].mxu0
      %438 = vmatprep.mubr.f32.mxu0 0.0
      %439 = vmatmul.mubr.f32.gmra.mrb[0].mxu0 %v249
      %v440 = vpop.f32.mrb[0].mxu0
      %v441 = vadd.f32 0.0, %v440
      %v442 = vpop.f32.mrb[0].mxu0
      %443 = vmatprep.mubr.f32.mxu0 0.0
      %444 = vmatmul.mubr.f32.gmra.mrb[0].mxu0 %v250
      %v445 = vpop.f32.mrb[0].mxu0
      %v446 = vadd.f32 0.0, %v445
      %v447 = vpop.f32.mrb[0].mxu0
      %448 = vmatprep.mubr.f32.mxu0 0.0
      %449 = vmatmul.mubr.f32.gmra.mrb[0].mxu0 %v251
      %v450 = vpop.f32.mrb[0].mxu0
      %v451 = vadd.f32 0.0, %v450
      %v452 = vpop.f32.mrb[0].mxu0
      %453 = vmatprep.mubr.f32.mxu0 0.0
      %454 = vmatmul.mubr.f32.gmra.mrb[0].mxu0 %v252
      %v455 = vpop.f32.mrb[0].mxu0
      %v456 = vadd.f32 0.0, %v455
      %v457 = vpop.f32.mrb[0].mxu0
      %458 = vmatprep.mubr.f32.mxu0 0.0
      %459 = vmatmul.mubr.f32.gmra.mrb[0].mxu0 %v253
      %v460 = vpop.f32.mrb[0].mxu0
      %v461 = vadd.f32 0.0, %v460
      %v462 = vpop.f32.mrb[0].mxu0
      %463 = vmatprep.mubr.f32.mxu0 0.0
      %464 = vmatmul.mubr.f32.gmra.mrb[0].mxu0 %v254
      %v465 = vpop.f32.mrb[0].mxu0
      %v466 = vadd.f32 0.0, %v465
      %v467 = vpop.f32.mrb[0].mxu0
      %468 = vmatprep.mubr.f32.mxu0 0.0
      %469 = vmatmul.mubr.f32.gmra.mrb[0].mxu0 %v255
      %v470 = vpop.f32.mrb[0].mxu0
      %v471 = vadd.f32 0.0, %v470
      %v472 = vpop.f32.mrb[0].mxu0
      %473 = vmatprep.mubr.f32.mxu0 0.0
      %474 = vmatmul.mubr.f32.gmra.mrb[0].mxu0 %v256
      %v475 = vpop.f32.mrb[0].mxu0
      %v476 = vadd.f32 0.0, %v475
      %v477 = vpop.f32.mrb[0].mxu0
      %478 = vmatprep.mubr.f32.mxu0 0.0
      %479 = vmatmul.mubr.f32.gmra.mrb[0].mxu0 %v257
      %v480 = vpop.f32.mrb[0].mxu0
      %v481 = vadd.f32 0.0, %v480
      %v482 = vpop.f32.mrb[0].mxu0
      %483 = vmatprep.mubr.f32.mxu0 0.0
      %484 = vmatmul.mubr.f32.gmra.mrb[0].mxu0 %v258
      %v485 = vpop.f32.mrb[0].mxu0
      %v486 = vadd.f32 0.0, %v485
      %v487 = vpop.f32.mrb[0].mxu0
      %488 = vmatprep.mubr.f32.mxu0 0.0
      %489 = vmatmul.mubr.f32.gmra.mrb[0].mxu0 %v259
      %v490 = vpop.f32.mrb[0].mxu0
      %v491 = vadd.f32 0.0, %v490
      %v492 = vpop.f32.mrb[0].mxu0
      %493 = vmatprep.mubr.f32.mxu0 0.0
      %494 = vmatmul.mubr.f32.gmra.mrb[0].mxu0 %v260
      %v495 = vpop.f32.mrb[0].mxu0
      %v496 = vadd.f32 0.0, %v495
      %v497 = vpop.f32.mrb[0].mxu0
      %498 = vmatprep.mubr.f32.mxu0 0.0
      %499 = vmatmul.mubr.f32.gmra.mrb[0].mxu0 %v261
      %v500 = vpop.f32.mrb[0].mxu0
      %v501 = vadd.f32 0.0, %v500
      %v502 = vpop.f32.mrb[0].mxu0
      %503 = vdwg.mxu0
      %504 = vmatprep.subr.mxu0 0.0
      %505 = vmatpush1.msra.mxu0 %v214
      %506 = vmatprep.subr.mxu0 0.0
      %507 = vmatpush1.msra.mxu0 %v215
      %508 = vmatprep.subr.mxu0 0.0
      %509 = vmatpush1.msra.mxu0 %v216
      %510 = vmatprep.subr.mxu0 0.0
      %511 = vmatpush1.msra.mxu0 %v217
      %512 = vmatprep.subr.mxu0 0.0
      %513 = vmatpush1.msra.mxu0 %v218
      %514 = vmatprep.subr.mxu0 0.0
      %515 = vmatpush1.msra.mxu0 %v219
      %516 = vmatprep.subr.mxu0 0.0
      %517 = vmatpush1.msra.mxu0 %v220
      %518 = vmatprep.subr.mxu0 0.0
      %519 = vmatpush1.msra.mxu0 %v221
      %520 = vmatprep.subr.mxu0 0.0
      %521 = vmatpush1.msra.mxu0 %v222
      %522 = vmatprep.subr.mxu0 0.0
      %523 = vmatpush1.msra.mxu0 %v223
      %524 = vmatprep.subr.mxu0 0.0
      %525 = vmatpush1.msra.mxu0 %v224
      %526 = vmatprep.subr.mxu0 0.0
      %527 = vmatpush1.msra.mxu0 %v225
      %528 = vmatprep.subr.mxu0 0.0
      %529 = vmatpush1.msra.mxu0 %v226
      %530 = vmatprep.subr.mxu0 0.0
      %531 = vmatpush1.msra.mxu0 %v227
      %532 = vmatprep.subr.mxu0 0.0
      %533 = vmatpush1.msra.mxu0 %v228
      %534 = vmatprep.subr.mxu0 0.0
      %535 = vmatpush1.msra.mxu0 %v229
      %536 = vmatprep.subr.mxu0 0.0
      %537 = vmatpush1.msra.mxu0 0.0
      %538 = vmatprep.subr.mxu0 0.0
      %539 = vmatpush1.msra.mxu0 0.0
      %540 = vmatprep.subr.mxu0 0.0
      %541 = vmatpush1.msra.mxu0 0.0
      %542 = vmatprep.subr.mxu0 0.0
      %543 = vmatpush1.msra.mxu0 0.0
      %544 = vmatprep.subr.mxu0 0.0
      %545 = vmatpush1.msra.mxu0 0.0
      %546 = vmatprep.subr.mxu0 0.0
      %547 = vmatpush1.msra.mxu0 0.0
      %548 = vmatprep.subr.mxu0 0.0
      %549 = vmatpush1.msra.mxu0 0.0
      %550 = vmatprep.subr.mxu0 0.0
      %551 = vmatpush1.msra.mxu0 0.0
      %552 = vmatprep.subr.mxu0 0.0
      %553 = vmatpush1.msra.mxu0 0.0
      %554 = vmatprep.subr.mxu0 0.0
      %555 = vmatpush1.msra.mxu0 0.0
      %556 = vmatprep.subr.mxu0 0.0
      %557 = vmatpush1.msra.mxu0 0.0
      %558 = vmatprep.subr.mxu0 0.0
      %559 = vmatpush1.msra.mxu0 0.0
      %560 = vmatprep.subr.mxu0 0.0
      %561 = vmatpush1.msra.mxu0 0.0
      %562 = vmatprep.subr.mxu0 0.0
      %563 = vmatpush1.msra.mxu0 0.0
      %564 = vmatprep.subr.mxu0 0.0
      %565 = vmatpush1.msra.mxu0 0.0
      %566 = vmatprep.subr.mxu0 0.0
      %567 = vmatpush1.msra.mxu0 0.0
      %568 = vmatprep.mubr.f32.mxu0 0.0
      %569 = vmatmul.mubr.f32.gmra.mrb[0].mxu0 %v182
      %v570 = vpop.f32.mrb[0].mxu0
      %v571 = vadd.f32 %v346, %v570
      %v572 = vpop.f32.mrb[0].mxu0
      %573 = vmatprep.mubr.f32.mxu0 0.0
      %574 = vmatmul.mubr.f32.gmra.mrb[0].mxu0 %v183
      %v575 = vpop.f32.mrb[0].mxu0
      %v576 = vadd.f32 %v351, %v575
      %v577 = vpop.f32.mrb[0].mxu0
      %578 = vmatprep.mubr.f32.mxu0 0.0
      %579 = vmatmul.mubr.f32.gmra.mrb[0].mxu0 %v184
      %v580 = vpop.f32.mrb[0].mxu0
      %v581 = vadd.f32 %v356, %v580
      %v582 = vpop.f32.mrb[0].mxu0
      %583 = vmatprep.mubr.f32.mxu0 0.0
      %584 = vmatmul.mubr.f32.gmra.mrb[0].mxu0 %v185
      %v585 = vpop.f32.mrb[0].mxu0
      %v586 = vadd.f32 %v361, %v585
      %v587 = vpop.f32.mrb[0].mxu0
      %588 = vmatprep.mubr.f32.mxu0 0.0
      %589 = vmatmul.mubr.f32.gmra.mrb[0].mxu0 %v186
      %v590 = vpop.f32.mrb[0].mxu0
      %v591 = vadd.f32 %v366, %v590
      %v592 = vpop.f32.mrb[0].mxu0
      %593 = vmatprep.mubr.f32.mxu0 0.0
      %594 = vmatmul.mubr.f32.gmra.mrb[0].mxu0 %v187
      %v595 = vpop.f32.mrb[0].mxu0
      %v596 = vadd.f32 %v371, %v595
      %v597 = vpop.f32.mrb[0].mxu0
      %598 = vmatprep.mubr.f32.mxu0 0.0
      %599 = vmatmul.mubr.f32.gmra.mrb[0].mxu0 %v188
      %v600 = vpop.f32.mrb[0].mxu0
      %v601 = vadd.f32 %v376, %v600
      %v602 = vpop.f32.mrb[0].mxu0
      %603 = vmatprep.mubr.f32.mxu0 0.0
      %604 = vmatmul.mubr.f32.gmra.mrb[0].mxu0 %v189
      %v605 = vpop.f32.mrb[0].mxu0
      %v606 = vadd.f32 %v381, %v605
      %v607 = vpop.f32.mrb[0].mxu0
      %608 = vmatprep.mubr.f32.mxu0 0.0
      %609 = vmatmul.mubr.f32.gmra.mrb[0].mxu0 %v190
      %v610 = vpop.f32.mrb[0].mxu0
      %v611 = vadd.f32 %v386, %v610
      %v612 = vpop.f32.mrb[0].mxu0
      %613 = vmatprep.mubr.f32.mxu0 0.0
      %614 = vmatmul.mubr.f32.gmra.mrb[0].mxu0 %v191
      %v615 = vpop.f32.mrb[0].mxu0
      %v616 = vadd.f32 %v391, %v615
      %v617 = vpop.f32.mrb[0].mxu0
      %618 = vmatprep.mubr.f32.mxu0 0.0
      %619 = vmatmul.mubr.f32.gmra.mrb[0].mxu0 %v192
      %v620 = vpop.f32.mrb[0].mxu0
      %v621 = vadd.f32 %v396, %v620
      %v622 = vpop.f32.mrb[0].mxu0
      %623 = vmatprep.mubr.f32.mxu0 0.0
      %624 = vmatmul.mubr.f32.gmra.mrb[0].mxu0 %v193
      %v625 = vpop.f32.mrb[0].mxu0
      %v626 = vadd.f32 %v401, %v625
      %v627 = vpop.f32.mrb[0].mxu0
      %628 = vmatprep.mubr.f32.mxu0 0.0
      %629 = vmatmul.mubr.f32.gmra.mrb[0].mxu0 %v194
      %v630 = vpop.f32.mrb[0].mxu0
      %v631 = vadd.f32 %v406, %v630
      %v632 = vpop.f32.mrb[0].mxu0
      %633 = vmatprep.mubr.f32.mxu0 0.0
      %634 = vmatmul.mubr.f32.gmra.mrb[0].mxu0 %v195
      %v635 = vpop.f32.mrb[0].mxu0
      %v636 = vadd.f32 %v411, %v635
      %v637 = vpop.f32.mrb[0].mxu0
      %638 = vmatprep.mubr.f32.mxu0 0.0
      %639 = vmatmul.mubr.f32.gmra.mrb[0].mxu0 %v196
      %v640 = vpop.f32.mrb[0].mxu0
      %v641 = vadd.f32 %v416, %v640
      %v642 = vpop.f32.mrb[0].mxu0
      %643 = vmatprep.mubr.f32.mxu0 0.0
      %644 = vmatmul.mubr.f32.gmra.mrb[0].mxu0 %v197
      %v645 = vpop.f32.mrb[0].mxu0
      %v646 = vadd.f32 %v421, %v645
      %v647 = vpop.f32.mrb[0].mxu0
      %648 = vmatprep.mubr.f32.mxu0 0.0
      %649 = vmatmul.mubr.f32.gmra.mrb[0].mxu0 %v198
      %v650 = vpop.f32.mrb[0].mxu0
      %v651 = vadd.f32 %v426, %v650
      %v652 = vpop.f32.mrb[0].mxu0
      %653 = vmatprep.mubr.f32.mxu0 0.0
      %654 = vmatmul.mubr.f32.gmra.mrb[0].mxu0 %v199
      %v655 = vpop.f32.mrb[0].mxu0
      %v656 = vadd.f32 %v431, %v655
      %v657 = vpop.f32.mrb[0].mxu0
      %658 = vmatprep.mubr.f32.mxu0 0.0
      %659 = vmatmul.mubr.f32.gmra.mrb[0].mxu0 %v200
      %v660 = vpop.f32.mrb[0].mxu0
      %v661 = vadd.f32 %v436, %v660
      %v662 = vpop.f32.mrb[0].mxu0
      %663 = vmatprep.mubr.f32.mxu0 0.0
      %664 = vmatmul.mubr.f32.gmra.mrb[0].mxu0 %v201
      %v665 = vpop.f32.mrb[0].mxu0
      %v666 = vadd.f32 %v441, %v665
      %v667 = vpop.f32.mrb[0].mxu0
      %668 = vmatprep.mubr.f32.mxu0 0.0
      %669 = vmatmul.mubr.f32.gmra.mrb[0].mxu0 %v202
      %v670 = vpop.f32.mrb[0].mxu0
      %v671 = vadd.f32 %v446, %v670
      %v672 = vpop.f32.mrb[0].mxu0
      %673 = vmatprep.mubr.f32.mxu0 0.0
      %674 = vmatmul.mubr.f32.gmra.mrb[0].mxu0 %v203
      %v675 = vpop.f32.mrb[0].mxu0
      %v676 = vadd.f32 %v451, %v675
      %v677 = vpop.f32.mrb[0].mxu0
      %678 = vmatprep.mubr.f32.mxu0 0.0
      %679 = vmatmul.mubr.f32.gmra.mrb[0].mxu0 %v204
      %v680 = vpop.f32.mrb[0].mxu0
      %v681 = vadd.f32 %v456, %v680
      %v682 = vpop.f32.mrb[0].mxu0
      %683 = vmatprep.mubr.f32.mxu0 0.0
      %684 = vmatmul.mubr.f32.gmra.mrb[0].mxu0 %v205
      %v685 = vpop.f32.mrb[0].mxu0
      %v686 = vadd.f32 %v461, %v685
      %v687 = vpop.f32.mrb[0].mxu0
      %688 = vmatprep.mubr.f32.mxu0 0.0
      %689 = vmatmul.mubr.f32.gmra.mrb[0].mxu0 %v206
      %v690 = vpop.f32.mrb[0].mxu0
      %v691 = vadd.f32 %v466, %v690
      %v692 = vpop.f32.mrb[0].mxu0
      %693 = vmatprep.mubr.f32.mxu0 0.0
      %694 = vmatmul.mubr.f32.gmra.mrb[0].mxu0 %v207
      %v695 = vpop.f32.mrb[0].mxu0
      %v696 = vadd.f32 %v471, %v695
      %v697 = vpop.f32.mrb[0].mxu0
      %698 = vmatprep.mubr.f32.mxu0 0.0
      %699 = vmatmul.mubr.f32.gmra.mrb[0].mxu0 %v208
      %v700 = vpop.f32.mrb[0].mxu0
      %v701 = vadd.f32 %v476, %v700
      %v702 = vpop.f32.mrb[0].mxu0
      %703 = vmatprep.mubr.f32.mxu0 0.0
      %704 = vmatmul.mubr.f32.gmra.mrb[0].mxu0 %v209
      %v705 = vpop.f32.mrb[0].mxu0
      %v706 = vadd.f32 %v481, %v705
      %v707 = vpop.f32.mrb[0].mxu0
      %708 = vmatprep.mubr.f32.mxu0 0.0
      %709 = vmatmul.mubr.f32.gmra.mrb[0].mxu0 %v210
      %v710 = vpop.f32.mrb[0].mxu0
      %v711 = vadd.f32 %v486, %v710
      %v712 = vpop.f32.mrb[0].mxu0
      %713 = vmatprep.mubr.f32.mxu0 0.0
      %714 = vmatmul.mubr.f32.gmra.mrb[0].mxu0 %v211
      %v715 = vpop.f32.mrb[0].mxu0
      %v716 = vadd.f32 %v491, %v715
      %v717 = vpop.f32.mrb[0].mxu0
      %718 = vmatprep.mubr.f32.mxu0 0.0
      %719 = vmatmul.mubr.f32.gmra.mrb[0].mxu0 %v212
      %v720 = vpop.f32.mrb[0].mxu0
      %v721 = vadd.f32 %v496, %v720
      %v722 = vpop.f32.mrb[0].mxu0
      %723 = vmatprep.mubr.f32.mxu0 0.0
      %724 = vmatmul.mubr.f32.gmra.mrb[0].mxu0 %v213
      %v725 = vpop.f32.mrb[0].mxu0
      %v726 = vadd.f32 %v501, %v725
      %v727 = vpop.f32.mrb[0].mxu0
      %728 = vdwg.mxu0
      %v729 = vld [vmem:[%s172 + $0x2] sm:$0xff]
      %v730 = vld [vmem:[%s172 + $0xa] sm:$0xff]
      %v731 = vld [vmem:[%s172 + $0x1a] sm:$0xff]
      %v732 = vld [vmem:[%s172 + $0x22] sm:$0xff]
      %v733 = vld [vmem:[%s172 + $0x32] sm:$0xff]
      %v734 = vld [vmem:[%s172 + $0x3a] sm:$0xff]
      %v735 = vld [vmem:[%s172 + $0x4a] sm:$0xff]
      %v736 = vld [vmem:[%s172 + $0x52] sm:$0xff]
      %v737 = vld [vmem:[%s172 + $0x62] sm:$0xff]
      %v738 = vld [vmem:[%s172 + $0x6a] sm:$0xff]
      %v739 = vld [vmem:[%s172 + $0x7a] sm:$0xff]
      %v740 = vld [vmem:[%s172 + $0x82] sm:$0xff]
      %v741 = vld [vmem:[%s172 + $0x92] sm:$0xff]
      %v742 = vld [vmem:[%s172 + $0x9a] sm:$0xff]
      %v743 = vld [vmem:[%s172 + $0xaa] sm:$0xff]
      %v744 = vld [vmem:[%s172 + $0xb2] sm:$0xff]
      %v745 = vld [vmem:[%s172 + $0xc2] sm:$0xff]
      %v746 = vld [vmem:[%s172 + $0xca] sm:$0xff]
      %v747 = vld [vmem:[%s172 + $0xda] sm:$0xff]
      %v748 = vld [vmem:[%s172 + $0xe2] sm:$0xff]
      %v749 = vld [vmem:[%s172 + $0xf2] sm:$0xff]
      %v750 = vld [vmem:[%s172 + $0xfa] sm:$0xff]
      %v751 = vld [vmem:[%s172 + $0x10a] sm:$0xff]
      %v752 = vld [vmem:[%s172 + $0x112] sm:$0xff]
      %v753 = vld [vmem:[%s172 + $0x122] sm:$0xff]
      %v754 = vld [vmem:[%s172 + $0x12a] sm:$0xff]
      %v755 = vld [vmem:[%s172 + $0x13a] sm:$0xff]
      %v756 = vld [vmem:[%s172 + $0x142] sm:$0xff]
      %v757 = vld [vmem:[%s172 + $0x152] sm:$0xff]
      %v758 = vld [vmem:[%s172 + $0x15a] sm:$0xff]
      %v759 = vld [vmem:[%s172 + $0x16a] sm:$0xff]
      %v760 = vld [vmem:[%s172 + $0x172] sm:$0xff]
      %s761 = scalar_lea.vmem %s1, 256
      %v762 = vld [vmem:[%s761] sm:$0xff]
      %v763 = vld [vmem:[%s761 + $0x8] sm:$0xff]
      %v764 = vld [vmem:[%s761 + $0x10] sm:$0xff]
      %v765 = vld [vmem:[%s761 + $0x18] sm:$0xff]
      %v766 = vld [vmem:[%s761 + $0x20] sm:$0xff]
      %v767 = vld [vmem:[%s761 + $0x28] sm:$0xff]
      %v768 = vld [vmem:[%s761 + $0x30] sm:$0xff]
      %v769 = vld [vmem:[%s761 + $0x38] sm:$0xff]
      %v770 = vld [vmem:[%s761 + $0x40] sm:$0xff]
      %v771 = vld [vmem:[%s761 + $0x48] sm:$0xff]
      %v772 = vld [vmem:[%s761 + $0x50] sm:$0xff]
      %v773 = vld [vmem:[%s761 + $0x58] sm:$0xff]
      %v774 = vld [vmem:[%s761 + $0x60] sm:$0xff]
      %v775 = vld [vmem:[%s761 + $0x68] sm:$0xff]
      %v776 = vld [vmem:[%s761 + $0x70] sm:$0xff]
      %v777 = vld [vmem:[%s761 + $0x78] sm:$0xff]
      %778 = vmatprep.subr.mxu0 0.0
      %779 = vmatpush1.msra.mxu0 %v762
      %780 = vmatprep.subr.mxu0 0.0
      %781 = vmatpush1.msra.mxu0 %v763
      %782 = vmatprep.subr.mxu0 0.0
      %783 = vmatpush1.msra.mxu0 %v764
      %784 = vmatprep.subr.mxu0 0.0
      %785 = vmatpush1.msra.mxu0 %v765
      %786 = vmatprep.subr.mxu0 0.0
      %787 = vmatpush1.msra.mxu0 %v766
      %788 = vmatprep.subr.mxu0 0.0
      %789 = vmatpush1.msra.mxu0 %v767
      %790 = vmatprep.subr.mxu0 0.0
      %791 = vmatpush1.msra.mxu0 %v768
      %792 = vmatprep.subr.mxu0 0.0
      %793 = vmatpush1.msra.mxu0 %v769
      %794 = vmatprep.subr.mxu0 0.0
      %795 = vmatpush1.msra.mxu0 %v770
      %796 = vmatprep.subr.mxu0 0.0
      %797 = vmatpush1.msra.mxu0 %v771
      %798 = vmatprep.subr.mxu0 0.0
      %799 = vmatpush1.msra.mxu0 %v772
      %800 = vmatprep.subr.mxu0 0.0
      %801 = vmatpush1.msra.mxu0 %v773
      %802 = vmatprep.subr.mxu0 0.0
      %803 = vmatpush1.msra.mxu0 %v774
      %804 = vmatprep.subr.mxu0 0.0
      %805 = vmatpush1.msra.mxu0 %v775
      %806 = vmatprep.subr.mxu0 0.0
      %807 = vmatpush1.msra.mxu0 %v776
      %808 = vmatprep.subr.mxu0 0.0
      %809 = vmatpush1.msra.mxu0 %v777
      %810 = vmatprep.subr.mxu0 0.0
      %811 = vmatpush1.msra.mxu0 0.0
      %812 = vmatprep.subr.mxu0 0.0
      %813 = vmatpush1.msra.mxu0 0.0
      %814 = vmatprep.subr.mxu0 0.0
      %815 = vmatpush1.msra.mxu0 0.0
      %816 = vmatprep.subr.mxu0 0.0
      %817 = vmatpush1.msra.mxu0 0.0
      %818 = vmatprep.subr.mxu0 0.0
      %819 = vmatpush1.msra.mxu0 0.0
      %820 = vmatprep.subr.mxu0 0.0
      %821 = vmatpush1.msra.mxu0 0.0
      %822 = vmatprep.subr.mxu0 0.0
      %823 = vmatpush1.msra.mxu0 0.0
      %824 = vmatprep.subr.mxu0 0.0
      %825 = vmatpush1.msra.mxu0 0.0
      %826 = vmatprep.subr.mxu0 0.0
      %827 = vmatpush1.msra.mxu0 0.0
      %828 = vmatprep.subr.mxu0 0.0
      %829 = vmatpush1.msra.mxu0 0.0
      %830 = vmatprep.subr.mxu0 0.0
      %831 = vmatpush1.msra.mxu0 0.0
      %832 = vmatprep.subr.mxu0 0.0
      %833 = vmatpush1.msra.mxu0 0.0
      %834 = vmatprep.subr.mxu0 0.0
      %835 = vmatpush1.msra.mxu0 0.0
      %836 = vmatprep.subr.mxu0 0.0
      %837 = vmatpush1.msra.mxu0 0.0
      %838 = vmatprep.subr.mxu0 0.0
      %839 = vmatpush1.msra.mxu0 0.0
      %840 = vmatprep.subr.mxu0 0.0
      %841 = vmatpush1.msra.mxu0 0.0
      %842 = vmatprep.mubr.f32.mxu0 0.0
      %843 = vmatmul.mubr.f32.gmra.mrb[0].mxu0 %v729
      %v844 = vpop.f32.mrb[0].mxu0
      %v845 = vadd.f32 0.0, %v844
      %v846 = vpop.f32.mrb[0].mxu0
      %847 = vmatprep.mubr.f32.mxu0 0.0
      %848 = vmatmul.mubr.f32.gmra.mrb[0].mxu0 %v730
      %v849 = vpop.f32.mrb[0].mxu0
      %v850 = vadd.f32 0.0, %v849
      %v851 = vpop.f32.mrb[0].mxu0
      %852 = vmatprep.mubr.f32.mxu0 0.0
      %853 = vmatmul.mubr.f32.gmra.mrb[0].mxu0 %v731
      %v854 = vpop.f32.mrb[0].mxu0
      %v855 = vadd.f32 0.0, %v854
      %v856 = vpop.f32.mrb[0].mxu0
      %857 = vmatprep.mubr.f32.mxu0 0.0
      %858 = vmatmul.mubr.f32.gmra.mrb[0].mxu0 %v732
      %v859 = vpop.f32.mrb[0].mxu0
      %v860 = vadd.f32 0.0, %v859
      %v861 = vpop.f32.mrb[0].mxu0
      %862 = vmatprep.mubr.f32.mxu0 0.0
      %863 = vmatmul.mubr.f32.gmra.mrb[0].mxu0 %v733
      %v864 = vpop.f32.mrb[0].mxu0
      %v865 = vadd.f32 0.0, %v864
      %v866 = vpop.f32.mrb[0].mxu0
      %867 = vmatprep.mubr.f32.mxu0 0.0
      %868 = vmatmul.mubr.f32.gmra.mrb[0].mxu0 %v734
      %v869 = vpop.f32.mrb[0].mxu0
      %v870 = vadd.f32 0.0, %v869
      %v871 = vpop.f32.mrb[0].mxu0
      %872 = vmatprep.mubr.f32.mxu0 0.0
      %873 = vmatmul.mubr.f32.gmra.mrb[0].mxu0 %v735
      %v874 = vpop.f32.mrb[0].mxu0
      %v875 = vadd.f32 0.0, %v874
      %v876 = vpop.f32.mrb[0].mxu0
      %877 = vmatprep.mubr.f32.mxu0 0.0
      %878 = vmatmul.mubr.f32.gmra.mrb[0].mxu0 %v736
      %v879 = vpop.f32.mrb[0].mxu0
      %v880 = vadd.f32 0.0, %v879
      %v881 = vpop.f32.mrb[0].mxu0
      %882 = vmatprep.mubr.f32.mxu0 0.0
      %883 = vmatmul.mubr.f32.gmra.mrb[0].mxu0 %v737
      %v884 = vpop.f32.mrb[0].mxu0
      %v885 = vadd.f32 0.0, %v884
      %v886 = vpop.f32.mrb[0].mxu0
      %887 = vmatprep.mubr.f32.mxu0 0.0
      %888 = vmatmul.mubr.f32.gmra.mrb[0].mxu0 %v738
      %v889 = vpop.f32.mrb[0].mxu0
      %v890 = vadd.f32 0.0, %v889
      %v891 = vpop.f32.mrb[0].mxu0
      %892 = vmatprep.mubr.f32.mxu0 0.0
      %893 = vmatmul.mubr.f32.gmra.mrb[0].mxu0 %v739
      %v894 = vpop.f32.mrb[0].mxu0
      %v895 = vadd.f32 0.0, %v894
      %v896 = vpop.f32.mrb[0].mxu0
      %897 = vmatprep.mubr.f32.mxu0 0.0
      %898 = vmatmul.mubr.f32.gmra.mrb[0].mxu0 %v740
      %v899 = vpop.f32.mrb[0].mxu0
      %v900 = vadd.f32 0.0, %v899
      %v901 = vpop.f32.mrb[0].mxu0
      %902 = vmatprep.mubr.f32.mxu0 0.0
      %903 = vmatmul.mubr.f32.gmra.mrb[0].mxu0 %v741
      %v904 = vpop.f32.mrb[0].mxu0
      %v905 = vadd.f32 0.0, %v904
      %v906 = vpop.f32.mrb[0].mxu0
      %907 = vmatprep.mubr.f32.mxu0 0.0
      %908 = vmatmul.mubr.f32.gmra.mrb[0].mxu0 %v742
      %v909 = vpop.f32.mrb[0].mxu0
      %v910 = vadd.f32 0.0, %v909
      %v911 = vpop.f32.mrb[0].mxu0
      %912 = vmatprep.mubr.f32.mxu0 0.0
      %913 = vmatmul.mubr.f32.gmra.mrb[0].mxu0 %v743
      %v914 = vpop.f32.mrb[0].mxu0
      %v915 = vadd.f32 0.0, %v914
      %v916 = vpop.f32.mrb[0].mxu0
      %917 = vmatprep.mubr.f32.mxu0 0.0
      %918 = vmatmul.mubr.f32.gmra.mrb[0].mxu0 %v744
      %v919 = vpop.f32.mrb[0].mxu0
      %v920 = vadd.f32 0.0, %v919
      %v921 = vpop.f32.mrb[0].mxu0
      %922 = vmatprep.mubr.f32.mxu0 0.0
      %923 = vmatmul.mubr.f32.gmra.mrb[0].mxu0 %v745
      %v924 = vpop.f32.mrb[0].mxu0
      %v925 = vadd.f32 0.0, %v924
      %v926 = vpop.f32.mrb[0].mxu0
      %927 = vmatprep.mubr.f32.mxu0 0.0
      %928 = vmatmul.mubr.f32.gmra.mrb[0].mxu0 %v746
      %v929 = vpop.f32.mrb[0].mxu0
      %v930 = vadd.f32 0.0, %v929
      %v931 = vpop.f32.mrb[0].mxu0
      %932 = vmatprep.mubr.f32.mxu0 0.0
      %933 = vmatmul.mubr.f32.gmra.mrb[0].mxu0 %v747
      %v934 = vpop.f32.mrb[0].mxu0
      %v935 = vadd.f32 0.0, %v934
      %v936 = vpop.f32.mrb[0].mxu0
      %937 = vmatprep.mubr.f32.mxu0 0.0
      %938 = vmatmul.mubr.f32.gmra.mrb[0].mxu0 %v748
      %v939 = vpop.f32.mrb[0].mxu0
      %v940 = vadd.f32 0.0, %v939
      %v941 = vpop.f32.mrb[0].mxu0
      %942 = vmatprep.mubr.f32.mxu0 0.0
      %943 = vmatmul.mubr.f32.gmra.mrb[0].mxu0 %v749
      %v944 = vpop.f32.mrb[0].mxu0
      %v945 = vadd.f32 0.0, %v944
      %v946 = vpop.f32.mrb[0].mxu0
      %947 = vmatprep.mubr.f32.mxu0 0.0
      %948 = vmatmul.mubr.f32.gmra.mrb[0].mxu0 %v750
      %v949 = vpop.f32.mrb[0].mxu0
      %v950 = vadd.f32 0.0, %v949
      %v951 = vpop.f32.mrb[0].mxu0
      %952 = vmatprep.mubr.f32.mxu0 0.0
      %953 = vmatmul.mubr.f32.gmra.mrb[0].mxu0 %v751
      %v954 = vpop.f32.mrb[0].mxu0
      %v955 = vadd.f32 0.0, %v954
      %v956 = vpop.f32.mrb[0].mxu0
      %957 = vmatprep.mubr.f32.mxu0 0.0
      %958 = vmatmul.mubr.f32.gmra.mrb[0].mxu0 %v752
      %v959 = vpop.f32.mrb[0].mxu0
      %v960 = vadd.f32 0.0, %v959
      %v961 = vpop.f32.mrb[0].mxu0
      %962 = vmatprep.mubr.f32.mxu0 0.0
      %963 = vmatmul.mubr.f32.gmra.mrb[0].mxu0 %v753
      %v964 = vpop.f32.mrb[0].mxu0
      %v965 = vadd.f32 0.0, %v964
      %v966 = vpop.f32.mrb[0].mxu0
      %967 = vmatprep.mubr.f32.mxu0 0.0
      %968 = vmatmul.mubr.f32.gmra.mrb[0].mxu0 %v754
      %v969 = vpop.f32.mrb[0].mxu0
      %v970 = vadd.f32 0.0, %v969
      %v971 = vpop.f32.mrb[0].mxu0
      %972 = vmatprep.mubr.f32.mxu0 0.0
      %973 = vmatmul.mubr.f32.gmra.mrb[0].mxu0 %v755
      %v974 = vpop.f32.mrb[0].mxu0
      %v975 = vadd.f32 0.0, %v974
      %v976 = vpop.f32.mrb[0].mxu0
      %977 = vmatprep.mubr.f32.mxu0 0.0
      %978 = vmatmul.mubr.f32.gmra.mrb[0].mxu0 %v756
      %v979 = vpop.f32.mrb[0].mxu0
      %v980 = vadd.f32 0.0, %v979
      %v981 = vpop.f32.mrb[0].mxu0
      %982 = vmatprep.mubr.f32.mxu0 0.0
      %983 = vmatmul.mubr.f32.gmra.mrb[0].mxu0 %v757
      %v984 = vpop.f32.mrb[0].mxu0
      %v985 = vadd.f32 0.0, %v984
      %v986 = vpop.f32.mrb[0].mxu0
      %987 = vmatprep.mubr.f32.mxu0 0.0
      %988 = vmatmul.mubr.f32.gmra.mrb[0].mxu0 %v758
      %v989 = vpop.f32.mrb[0].mxu0
      %v990 = vadd.f32 0.0, %v989
      %v991 = vpop.f32.mrb[0].mxu0
      %992 = vmatprep.mubr.f32.mxu0 0.0
      %993 = vmatmul.mubr.f32.gmra.mrb[0].mxu0 %v759
      %v994 = vpop.f32.mrb[0].mxu0
      %v995 = vadd.f32 0.0, %v994
      %v996 = vpop.f32.mrb[0].mxu0
      %997 = vmatprep.mubr.f32.mxu0 0.0
      %998 = vmatmul.mubr.f32.gmra.mrb[0].mxu0 %v760
      %v999 = vpop.f32.mrb[0].mxu0
      %v1000 = vadd.f32 0.0, %v999
      %v1001 = vpop.f32.mrb[0].mxu0
      %1002 = vdwg.mxu0
      %v1003 = vadd.f32 %v571, %v845
      %v1004 = vadd.f32 %v576, %v850
      %v1005 = vadd.f32 %v581, %v855
      %v1006 = vadd.f32 %v586, %v860
      %v1007 = vadd.f32 %v591, %v865
      %v1008 = vadd.f32 %v596, %v870
      %v1009 = vadd.f32 %v601, %v875
      %v1010 = vadd.f32 %v606, %v880
      %v1011 = vadd.f32 %v611, %v885
      %v1012 = vadd.f32 %v616, %v890
      %v1013 = vadd.f32 %v621, %v895
      %v1014 = vadd.f32 %v626, %v900
      %v1015 = vadd.f32 %v631, %v905
      %v1016 = vadd.f32 %v636, %v910
      %v1017 = vadd.f32 %v641, %v915
      %v1018 = vadd.f32 %v646, %v920
      %v1019 = vadd.f32 %v651, %v925
      %v1020 = vadd.f32 %v656, %v930
      %v1021 = vadd.f32 %v661, %v935
      %v1022 = vadd.f32 %v666, %v940
      %v1023 = vadd.f32 %v671, %v945
      %v1024 = vadd.f32 %v676, %v950
      %v1025 = vadd.f32 %v681, %v955
      %v1026 = vadd.f32 %v686, %v960
      %v1027 = vadd.f32 %v691, %v965
      %v1028 = vadd.f32 %v696, %v970
      %v1029 = vadd.f32 %v701, %v975
      %v1030 = vadd.f32 %v706, %v980
      %v1031 = vadd.f32 %v711, %v985
      %v1032 = vadd.f32 %v716, %v990
      %v1033 = vadd.f32 %v721, %v995
      %v1034 = vadd.f32 %v726, %v1000
      %s1035 = scalar_lea.vmem %s172, 24
      %v1036 = vld [vmem:[%s1035] sm:$0xff]
      %v1037 = vld [vmem:[%s1035 + $0x8] sm:$0xff]
      %v1038 = vld [vmem:[%s1035 + $0x18] sm:$0xff]
      %v1039 = vld [vmem:[%s1035 + $0x20] sm:$0xff]
      %v1040 = vld [vmem:[%s1035 + $0x30] sm:$0xff]
      %v1041 = vld [vmem:[%s1035 + $0x38] sm:$0xff]
      %v1042 = vld [vmem:[%s1035 + $0x48] sm:$0xff]
      %v1043 = vld [vmem:[%s1035 + $0x50] sm:$0xff]
      %v1044 = vld [vmem:[%s1035 + $0x60] sm:$0xff]
      %v1045 = vld [vmem:[%s1035 + $0x68] sm:$0xff]
      %v1046 = vld [vmem:[%s1035 + $0x78] sm:$0xff]
      %v1047 = vld [vmem:[%s1035 + $0x80] sm:$0xff]
      %v1048 = vld [vmem:[%s1035 + $0x90] sm:$0xff]
      %v1049 = vld [vmem:[%s1035 + $0x98] sm:$0xff]
      %v1050 = vld [vmem:[%s1035 + $0xa8] sm:$0xff]
      %v1051 = vld [vmem:[%s1035 + $0xb0] sm:$0xff]
      %v1052 = vld [vmem:[%s1035 + $0xc0] sm:$0xff]
      %v1053 = vld [vmem:[%s1035 + $0xc8] sm:$0xff]
      %v1054 = vld [vmem:[%s1035 + $0xd8] sm:$0xff]
      %v1055 = vld [vmem:[%s1035 + $0xe0] sm:$0xff]
      %v1056 = vld [vmem:[%s1035 + $0xf0] sm:$0xff]
      %v1057 = vld [vmem:[%s1035 + $0xf8] sm:$0xff]
      %v1058 = vld [vmem:[%s1035 + $0x108] sm:$0xff]
      %v1059 = vld [vmem:[%s1035 + $0x110] sm:$0xff]
      %v1060 = vld [vmem:[%s1035 + $0x120] sm:$0xff]
      %v1061 = vld [vmem:[%s1035 + $0x128] sm:$0xff]
      %v1062 = vld [vmem:[%s1035 + $0x138] sm:$0xff]
      %v1063 = vld [vmem:[%s1035 + $0x140] sm:$0xff]
      %v1064 = vld [vmem:[%s1035 + $0x150] sm:$0xff]
      %v1065 = vld [vmem:[%s1035 + $0x158] sm:$0xff]
      %v1066 = vld [vmem:[%s1035 + $0x168] sm:$0xff]
      %v1067 = vld [vmem:[%s1035 + $0x170] sm:$0xff]
      %s1068 = scalar_lea.vmem %s1, 384
      %v1069 = vld [vmem:[%s1068] sm:$0xff]
      %v1070 = vld [vmem:[%s1068 + $0x8] sm:$0xff]
      %v1071 = vld [vmem:[%s1068 + $0x10] sm:$0xff]
      %v1072 = vld [vmem:[%s1068 + $0x18] sm:$0xff]
      %v1073 = vld [vmem:[%s1068 + $0x20] sm:$0xff]
      %v1074 = vld [vmem:[%s1068 + $0x28] sm:$0xff]
      %v1075 = vld [vmem:[%s1068 + $0x30] sm:$0xff]
      %v1076 = vld [vmem:[%s1068 + $0x38] sm:$0xff]
      %v1077 = vld [vmem:[%s1068 + $0x40] sm:$0xff]
      %v1078 = vld [vmem:[%s1068 + $0x48] sm:$0xff]
      %v1079 = vld [vmem:[%s1068 + $0x50] sm:$0xff]
      %v1080 = vld [vmem:[%s1068 + $0x58] sm:$0xff]
      %v1081 = vld [vmem:[%s1068 + $0x60] sm:$0xff]
      %v1082 = vld [vmem:[%s1068 + $0x68] sm:$0xff]
      %v1083 = vld [vmem:[%s1068 + $0x70] sm:$0xff]
      %v1084 = vld [vmem:[%s1068 + $0x78] sm:$0xff]
      %1085 = vmatprep.subr.mxu0 0.0
      %1086 = vmatpush1.msra.mxu0 %v1069
      %1087 = vmatprep.subr.mxu0 0.0
      %1088 = vmatpush1.msra.mxu0 %v1070
      %1089 = vmatprep.subr.mxu0 0.0
      %1090 = vmatpush1.msra.mxu0 %v1071
      %1091 = vmatprep.subr.mxu0 0.0
      %1092 = vmatpush1.msra.mxu0 %v1072
      %1093 = vmatprep.subr.mxu0 0.0
      %1094 = vmatpush1.msra.mxu0 %v1073
      %1095 = vmatprep.subr.mxu0 0.0
      %1096 = vmatpush1.msra.mxu0 %v1074
      %1097 = vmatprep.subr.mxu0 0.0
      %1098 = vmatpush1.msra.mxu0 %v1075
      %1099 = vmatprep.subr.mxu0 0.0
      %1100 = vmatpush1.msra.mxu0 %v1076
      %1101 = vmatprep.subr.mxu0 0.0
      %1102 = vmatpush1.msra.mxu0 %v1077
      %1103 = vmatprep.subr.mxu0 0.0
      %1104 = vmatpush1.msra.mxu0 %v1078
      %1105 = vmatprep.subr.mxu0 0.0
      %1106 = vmatpush1.msra.mxu0 %v1079
      %1107 = vmatprep.subr.mxu0 0.0
      %1108 = vmatpush1.msra.mxu0 %v1080
      %1109 = vmatprep.subr.mxu0 0.0
      %1110 = vmatpush1.msra.mxu0 %v1081
      %1111 = vmatprep.subr.mxu0 0.0
      %1112 = vmatpush1.msra.mxu0 %v1082
      %1113 = vmatprep.subr.mxu0 0.0
      %1114 = vmatpush1.msra.mxu0 %v1083
      %1115 = vmatprep.subr.mxu0 0.0
      %1116 = vmatpush1.msra.mxu0 %v1084
      %1117 = vmatprep.subr.mxu0 0.0
      %1118 = vmatpush1.msra.mxu0 0.0
      %1119 = vmatprep.subr.mxu0 0.0
      %1120 = vmatpush1.msra.mxu0 0.0
      %1121 = vmatprep.subr.mxu0 0.0
      %1122 = vmatpush1.msra.mxu0 0.0
      %1123 = vmatprep.subr.mxu0 0.0
      %1124 = vmatpush1.msra.mxu0 0.0
      %1125 = vmatprep.subr.mxu0 0.0
      %1126 = vmatpush1.msra.mxu0 0.0
      %1127 = vmatprep.subr.mxu0 0.0
      %1128 = vmatpush1.msra.mxu0 0.0
      %1129 = vmatprep.subr.mxu0 0.0
      %1130 = vmatpush1.msra.mxu0 0.0
      %1131 = vmatprep.subr.mxu0 0.0
      %1132 = vmatpush1.msra.mxu0 0.0
      %1133 = vmatprep.subr.mxu0 0.0
      %1134 = vmatpush1.msra.mxu0 0.0
      %1135 = vmatprep.subr.mxu0 0.0
      %1136 = vmatpush1.msra.mxu0 0.0
      %1137 = vmatprep.subr.mxu0 0.0
      %1138 = vmatpush1.msra.mxu0 0.0
      %1139 = vmatprep.subr.mxu0 0.0
      %1140 = vmatpush1.msra.mxu0 0.0
      %1141 = vmatprep.subr.mxu0 0.0
      %1142 = vmatpush1.msra.mxu0 0.0
      %1143 = vmatprep.subr.mxu0 0.0
      %1144 = vmatpush1.msra.mxu0 0.0
      %1145 = vmatprep.subr.mxu0 0.0
      %1146 = vmatpush1.msra.mxu0 0.0
      %1147 = vmatprep.subr.mxu0 0.0
      %1148 = vmatpush1.msra.mxu0 0.0
      %1149 = vmatprep.mubr.f32.mxu0 0.0
      %1150 = vmatmul.mubr.f32.gmra.mrb[0].mxu0 %v1036
      %v1151 = vpop.f32.mrb[0].mxu0
      %v1152 = vadd.f32 0.0, %v1151
      %v1153 = vpop.f32.mrb[0].mxu0
      %1154 = vmatprep.mubr.f32.mxu0 0.0
      %1155 = vmatmul.mubr.f32.gmra.mrb[0].mxu0 %v1037
      %v1156 = vpop.f32.mrb[0].mxu0
      %v1157 = vadd.f32 0.0, %v1156
      %v1158 = vpop.f32.mrb[0].mxu0
      %1159 = vmatprep.mubr.f32.mxu0 0.0
      %1160 = vmatmul.mubr.f32.gmra.mrb[0].mxu0 %v1038
      %v1161 = vpop.f32.mrb[0].mxu0
      %v1162 = vadd.f32 0.0, %v1161
      %v1163 = vpop.f32.mrb[0].mxu0
      %1164 = vmatprep.mubr.f32.mxu0 0.0
      %1165 = vmatmul.mubr.f32.gmra.mrb[0].mxu0 %v1039
      %v1166 = vpop.f32.mrb[0].mxu0
      %v1167 = vadd.f32 0.0, %v1166
      %v1168 = vpop.f32.mrb[0].mxu0
      %1169 = vmatprep.mubr.f32.mxu0 0.0
      %1170 = vmatmul.mubr.f32.gmra.mrb[0].mxu0 %v1040
      %v1171 = vpop.f32.mrb[0].mxu0
      %v1172 = vadd.f32 0.0, %v1171
      %v1173 = vpop.f32.mrb[0].mxu0
      %1174 = vmatprep.mubr.f32.mxu0 0.0
      %1175 = vmatmul.mubr.f32.gmra.mrb[0].mxu0 %v1041
      %v1176 = vpop.f32.mrb[0].mxu0
      %v1177 = vadd.f32 0.0, %v1176
      %v1178 = vpop.f32.mrb[0].mxu0
      %1179 = vmatprep.mubr.f32.mxu0 0.0
      %1180 = vmatmul.mubr.f32.gmra.mrb[0].mxu0 %v1042
      %v1181 = vpop.f32.mrb[0].mxu0
      %v1182 = vadd.f32 0.0, %v1181
      %v1183 = vpop.f32.mrb[0].mxu0
      %1184 = vmatprep.mubr.f32.mxu0 0.0
      %1185 = vmatmul.mubr.f32.gmra.mrb[0].mxu0 %v1043
      %v1186 = vpop.f32.mrb[0].mxu0
      %v1187 = vadd.f32 0.0, %v1186
      %v1188 = vpop.f32.mrb[0].mxu0
      %1189 = vmatprep.mubr.f32.mxu0 0.0
      %1190 = vmatmul.mubr.f32.gmra.mrb[0].mxu0 %v1044
      %v1191 = vpop.f32.mrb[0].mxu0
      %v1192 = vadd.f32 0.0, %v1191
      %v1193 = vpop.f32.mrb[0].mxu0
      %1194 = vmatprep.mubr.f32.mxu0 0.0
      %1195 = vmatmul.mubr.f32.gmra.mrb[0].mxu0 %v1045
      %v1196 = vpop.f32.mrb[0].mxu0
      %v1197 = vadd.f32 0.0, %v1196
      %v1198 = vpop.f32.mrb[0].mxu0
      %1199 = vmatprep.mubr.f32.mxu0 0.0
      %1200 = vmatmul.mubr.f32.gmra.mrb[0].mxu0 %v1046
      %v1201 = vpop.f32.mrb[0].mxu0
      %v1202 = vadd.f32 0.0, %v1201
      %v1203 = vpop.f32.mrb[0].mxu0
      %1204 = vmatprep.mubr.f32.mxu0 0.0
      %1205 = vmatmul.mubr.f32.gmra.mrb[0].mxu0 %v1047
      %v1206 = vpop.f32.mrb[0].mxu0
      %v1207 = vadd.f32 0.0, %v1206
      %v1208 = vpop.f32.mrb[0].mxu0
      %1209 = vmatprep.mubr.f32.mxu0 0.0
      %1210 = vmatmul.mubr.f32.gmra.mrb[0].mxu0 %v1048
      %v1211 = vpop.f32.mrb[0].mxu0
      %v1212 = vadd.f32 0.0, %v1211
      %v1213 = vpop.f32.mrb[0].mxu0
      %1214 = vmatprep.mubr.f32.mxu0 0.0
      %1215 = vmatmul.mubr.f32.gmra.mrb[0].mxu0 %v1049
      %v1216 = vpop.f32.mrb[0].mxu0
      %v1217 = vadd.f32 0.0, %v1216
      %v1218 = vpop.f32.mrb[0].mxu0
      %1219 = vmatprep.mubr.f32.mxu0 0.0
      %1220 = vmatmul.mubr.f32.gmra.mrb[0].mxu0 %v1050
      %v1221 = vpop.f32.mrb[0].mxu0
      %v1222 = vadd.f32 0.0, %v1221
      %v1223 = vpop.f32.mrb[0].mxu0
      %1224 = vmatprep.mubr.f32.mxu0 0.0
      %1225 = vmatmul.mubr.f32.gmra.mrb[0].mxu0 %v1051
      %v1226 = vpop.f32.mrb[0].mxu0
      %v1227 = vadd.f32 0.0, %v1226
      %v1228 = vpop.f32.mrb[0].mxu0
      %1229 = vmatprep.mubr.f32.mxu0 0.0
      %1230 = vmatmul.mubr.f32.gmra.mrb[0].mxu0 %v1052
      %v1231 = vpop.f32.mrb[0].mxu0
      %v1232 = vadd.f32 0.0, %v1231
      %v1233 = vpop.f32.mrb[0].mxu0
      %1234 = vmatprep.mubr.f32.mxu0 0.0
      %1235 = vmatmul.mubr.f32.gmra.mrb[0].mxu0 %v1053
      %v1236 = vpop.f32.mrb[0].mxu0
      %v1237 = vadd.f32 0.0, %v1236
      %v1238 = vpop.f32.mrb[0].mxu0
      %1239 = vmatprep.mubr.f32.mxu0 0.0
      %1240 = vmatmul.mubr.f32.gmra.mrb[0].mxu0 %v1054
      %v1241 = vpop.f32.mrb[0].mxu0
      %v1242 = vadd.f32 0.0, %v1241
      %v1243 = vpop.f32.mrb[0].mxu0
      %1244 = vmatprep.mubr.f32.mxu0 0.0
      %1245 = vmatmul.mubr.f32.gmra.mrb[0].mxu0 %v1055
      %v1246 = vpop.f32.mrb[0].mxu0
      %v1247 = vadd.f32 0.0, %v1246
      %v1248 = vpop.f32.mrb[0].mxu0
      %1249 = vmatprep.mubr.f32.mxu0 0.0
      %1250 = vmatmul.mubr.f32.gmra.mrb[0].mxu0 %v1056
      %v1251 = vpop.f32.mrb[0].mxu0
      %v1252 = vadd.f32 0.0, %v1251
      %v1253 = vpop.f32.mrb[0].mxu0
      %1254 = vmatprep.mubr.f32.mxu0 0.0
      %1255 = vmatmul.mubr.f32.gmra.mrb[0].mxu0 %v1057
      %v1256 = vpop.f32.mrb[0].mxu0
      %v1257 = vadd.f32 0.0, %v1256
      %v1258 = vpop.f32.mrb[0].mxu0
      %1259 = vmatprep.mubr.f32.mxu0 0.0
      %1260 = vmatmul.mubr.f32.gmra.mrb[0].mxu0 %v1058
      %v1261 = vpop.f32.mrb[0].mxu0
      %v1262 = vadd.f32 0.0, %v1261
      %v1263 = vpop.f32.mrb[0].mxu0
      %1264 = vmatprep.mubr.f32.mxu0 0.0
      %1265 = vmatmul.mubr.f32.gmra.mrb[0].mxu0 %v1059
      %v1266 = vpop.f32.mrb[0].mxu0
      %v1267 = vadd.f32 0.0, %v1266
      %v1268 = vpop.f32.mrb[0].mxu0
      %1269 = vmatprep.mubr.f32.mxu0 0.0
      %1270 = vmatmul.mubr.f32.gmra.mrb[0].mxu0 %v1060
      %v1271 = vpop.f32.mrb[0].mxu0
      %v1272 = vadd.f32 0.0, %v1271
      %v1273 = vpop.f32.mrb[0].mxu0
      %1274 = vmatprep.mubr.f32.mxu0 0.0
      %1275 = vmatmul.mubr.f32.gmra.mrb[0].mxu0 %v1061
      %v1276 = vpop.f32.mrb[0].mxu0
      %v1277 = vadd.f32 0.0, %v1276
      %v1278 = vpop.f32.mrb[0].mxu0
      %1279 = vmatprep.mubr.f32.mxu0 0.0
      %1280 = vmatmul.mubr.f32.gmra.mrb[0].mxu0 %v1062
      %v1281 = vpop.f32.mrb[0].mxu0
      %v1282 = vadd.f32 0.0, %v1281
      %v1283 = vpop.f32.mrb[0].mxu0
      %1284 = vmatprep.mubr.f32.mxu0 0.0
      %1285 = vmatmul.mubr.f32.gmra.mrb[0].mxu0 %v1063
      %v1286 = vpop.f32.mrb[0].mxu0
      %v1287 = vadd.f32 0.0, %v1286
      %v1288 = vpop.f32.mrb[0].mxu0
      %1289 = vmatprep.mubr.f32.mxu0 0.0
      %1290 = vmatmul.mubr.f32.gmra.mrb[0].mxu0 %v1064
      %v1291 = vpop.f32.mrb[0].mxu0
      %v1292 = vadd.f32 0.0, %v1291
      %v1293 = vpop.f32.mrb[0].mxu0
      %1294 = vmatprep.mubr.f32.mxu0 0.0
      %1295 = vmatmul.mubr.f32.gmra.mrb[0].mxu0 %v1065
      %v1296 = vpop.f32.mrb[0].mxu0
      %v1297 = vadd.f32 0.0, %v1296
      %v1298 = vpop.f32.mrb[0].mxu0
      %1299 = vmatprep.mubr.f32.mxu0 0.0
      %1300 = vmatmul.mubr.f32.gmra.mrb[0].mxu0 %v1066
      %v1301 = vpop.f32.mrb[0].mxu0
      %v1302 = vadd.f32 0.0, %v1301
      %v1303 = vpop.f32.mrb[0].mxu0
      %1304 = vmatprep.mubr.f32.mxu0 0.0
      %1305 = vmatmul.mubr.f32.gmra.mrb[0].mxu0 %v1067
      %v1306 = vpop.f32.mrb[0].mxu0
      %v1307 = vadd.f32 0.0, %v1306
      %v1308 = vpop.f32.mrb[0].mxu0
      %1309 = vdwg.mxu0
      %v1310 = vadd.f32 %v1003, %v1152
      %v1311 = vadd.f32 %v1004, %v1157
      %v1312 = vadd.f32 %v1005, %v1162
      %v1313 = vadd.f32 %v1006, %v1167
      %v1314 = vadd.f32 %v1007, %v1172
      %v1315 = vadd.f32 %v1008, %v1177
      %v1316 = vadd.f32 %v1009, %v1182
      %v1317 = vadd.f32 %v1010, %v1187
      %v1318 = vadd.f32 %v1011, %v1192
      %v1319 = vadd.f32 %v1012, %v1197
      %v1320 = vadd.f32 %v1013, %v1202
      %v1321 = vadd.f32 %v1014, %v1207
      %v1322 = vadd.f32 %v1015, %v1212
      %v1323 = vadd.f32 %v1016, %v1217
      %v1324 = vadd.f32 %v1017, %v1222
      %v1325 = vadd.f32 %v1018, %v1227
      %v1326 = vadd.f32 %v1019, %v1232
      %v1327 = vadd.f32 %v1020, %v1237
      %v1328 = vadd.f32 %v1021, %v1242
      %v1329 = vadd.f32 %v1022, %v1247
      %v1330 = vadd.f32 %v1023, %v1252
      %v1331 = vadd.f32 %v1024, %v1257
      %v1332 = vadd.f32 %v1025, %v1262
      %v1333 = vadd.f32 %v1026, %v1267
      %v1334 = vadd.f32 %v1027, %v1272
      %v1335 = vadd.f32 %v1028, %v1277
      %v1336 = vadd.f32 %v1029, %v1282
      %v1337 = vadd.f32 %v1030, %v1287
      %v1338 = vadd.f32 %v1031, %v1292
      %v1339 = vadd.f32 %v1032, %v1297
      %v1340 = vadd.f32 %v1033, %v1302
      %v1341 = vadd.f32 %v1034, %v1307
      %v1342 = vld [vmem:[%s1035 + $0x1] sm:$0xff]
      %v1343 = vld [vmem:[%s1035 + $0x9] sm:$0xff]
      %v1344 = vld [vmem:[%s1035 + $0x19] sm:$0xff]
      %v1345 = vld [vmem:[%s1035 + $0x21] sm:$0xff]
      %v1346 = vld [vmem:[%s1035 + $0x31] sm:$0xff]
      %v1347 = vld [vmem:[%s1035 + $0x39] sm:$0xff]
      %v1348 = vld [vmem:[%s1035 + $0x49] sm:$0xff]
      %v1349 = vld [vmem:[%s1035 + $0x51] sm:$0xff]
      %v1350 = vld [vmem:[%s1035 + $0x61] sm:$0xff]
      %v1351 = vld [vmem:[%s1035 + $0x69] sm:$0xff]
      %v1352 = vld [vmem:[%s1035 + $0x79] sm:$0xff]
      %v1353 = vld [vmem:[%s1035 + $0x81] sm:$0xff]
      %v1354 = vld [vmem:[%s1035 + $0x91] sm:$0xff]
      %v1355 = vld [vmem:[%s1035 + $0x99] sm:$0xff]
      %v1356 = vld [vmem:[%s1035 + $0xa9] sm:$0xff]
      %v1357 = vld [vmem:[%s1035 + $0xb1] sm:$0xff]
      %v1358 = vld [vmem:[%s1035 + $0xc1] sm:$0xff]
      %v1359 = vld [vmem:[%s1035 + $0xc9] sm:$0xff]
      %v1360 = vld [vmem:[%s1035 + $0xd9] sm:$0xff]
      %v1361 = vld [vmem:[%s1035 + $0xe1] sm:$0xff]
      %v1362 = vld [vmem:[%s1035 + $0xf1] sm:$0xff]
      %v1363 = vld [vmem:[%s1035 + $0xf9] sm:$0xff]
      %v1364 = vld [vmem:[%s1035 + $0x109] sm:$0xff]
      %v1365 = vld [vmem:[%s1035 + $0x111] sm:$0xff]
      %v1366 = vld [vmem:[%s1035 + $0x121] sm:$0xff]
      %v1367 = vld [vmem:[%s1035 + $0x129] sm:$0xff]
      %v1368 = vld [vmem:[%s1035 + $0x139] sm:$0xff]
      %v1369 = vld [vmem:[%s1035 + $0x141] sm:$0xff]
      %v1370 = vld [vmem:[%s1035 + $0x151] sm:$0xff]
      %v1371 = vld [vmem:[%s1035 + $0x159] sm:$0xff]
      %v1372 = vld [vmem:[%s1035 + $0x169] sm:$0xff]
      %v1373 = vld [vmem:[%s1035 + $0x171] sm:$0xff]
      %s1374 = scalar_lea.vmem %s1, 512
      %v1375 = vld [vmem:[%s1374] sm:$0xff]
      %v1376 = vld [vmem:[%s1374 + $0x8] sm:$0xff]
      %v1377 = vld [vmem:[%s1374 + $0x10] sm:$0xff]
      %v1378 = vld [vmem:[%s1374 + $0x18] sm:$0xff]
      %v1379 = vld [vmem:[%s1374 + $0x20] sm:$0xff]
      %v1380 = vld [vmem:[%s1374 + $0x28] sm:$0xff]
      %v1381 = vld [vmem:[%s1374 + $0x30] sm:$0xff]
      %v1382 = vld [vmem:[%s1374 + $0x38] sm:$0xff]
      %v1383 = vld [vmem:[%s1374 + $0x40] sm:$0xff]
      %v1384 = vld [vmem:[%s1374 + $0x48] sm:$0xff]
      %v1385 = vld [vmem:[%s1374 + $0x50] sm:$0xff]
      %v1386 = vld [vmem:[%s1374 + $0x58] sm:$0xff]
      %v1387 = vld [vmem:[%s1374 + $0x60] sm:$0xff]
      %v1388 = vld [vmem:[%s1374 + $0x68] sm:$0xff]
      %v1389 = vld [vmem:[%s1374 + $0x70] sm:$0xff]
      %v1390 = vld [vmem:[%s1374 + $0x78] sm:$0xff]
      %1391 = vmatprep.subr.mxu0 0.0
      %1392 = vmatpush1.msra.mxu0 %v1375
      %1393 = vmatprep.subr.mxu0 0.0
      %1394 = vmatpush1.msra.mxu0 %v1376
      %1395 = vmatprep.subr.mxu0 0.0
      %1396 = vmatpush1.msra.mxu0 %v1377
      %1397 = vmatprep.subr.mxu0 0.0
      %1398 = vmatpush1.msra.mxu0 %v1378
      %1399 = vmatprep.subr.mxu0 0.0
      %1400 = vmatpush1.msra.mxu0 %v1379
      %1401 = vmatprep.subr.mxu0 0.0
      %1402 = vmatpush1.msra.mxu0 %v1380
      %1403 = vmatprep.subr.mxu0 0.0
      %1404 = vmatpush1.msra.mxu0 %v1381
      %1405 = vmatprep.subr.mxu0 0.0
      %1406 = vmatpush1.msra.mxu0 %v1382
      %1407 = vmatprep.subr.mxu0 0.0
      %1408 = vmatpush1.msra.mxu0 %v1383
      %1409 = vmatprep.subr.mxu0 0.0
      %1410 = vmatpush1.msra.mxu0 %v1384
      %1411 = vmatprep.subr.mxu0 0.0
      %1412 = vmatpush1.msra.mxu0 %v1385
      %1413 = vmatprep.subr.mxu0 0.0
      %1414 = vmatpush1.msra.mxu0 %v1386
      %1415 = vmatprep.subr.mxu0 0.0
      %1416 = vmatpush1.msra.mxu0 %v1387
      %1417 = vmatprep.subr.mxu0 0.0
      %1418 = vmatpush1.msra.mxu0 %v1388
      %1419 = vmatprep.subr.mxu0 0.0
      %1420 = vmatpush1.msra.mxu0 %v1389
      %1421 = vmatprep.subr.mxu0 0.0
      %1422 = vmatpush1.msra.mxu0 %v1390
      %1423 = vmatprep.subr.mxu0 0.0
      %1424 = vmatpush1.msra.mxu0 0.0
      %1425 = vmatprep.subr.mxu0 0.0
      %1426 = vmatpush1.msra.mxu0 0.0
      %1427 = vmatprep.subr.mxu0 0.0
      %1428 = vmatpush1.msra.mxu0 0.0
      %1429 = vmatprep.subr.mxu0 0.0
      %1430 = vmatpush1.msra.mxu0 0.0
      %1431 = vmatprep.subr.mxu0 0.0
      %1432 = vmatpush1.msra.mxu0 0.0
      %1433 = vmatprep.subr.mxu0 0.0
      %1434 = vmatpush1.msra.mxu0 0.0
      %1435 = vmatprep.subr.mxu0 0.0
      %1436 = vmatpush1.msra.mxu0 0.0
      %1437 = vmatprep.subr.mxu0 0.0
      %1438 = vmatpush1.msra.mxu0 0.0
      %1439 = vmatprep.subr.mxu0 0.0
      %1440 = vmatpush1.msra.mxu0 0.0
      %1441 = vmatprep.subr.mxu0 0.0
      %1442 = vmatpush1.msra.mxu0 0.0
      %1443 = vmatprep.subr.mxu0 0.0
      %1444 = vmatpush1.msra.mxu0 0.0
      %1445 = vmatprep.subr.mxu0 0.0
      %1446 = vmatpush1.msra.mxu0 0.0
      %1447 = vmatprep.subr.mxu0 0.0
      %1448 = vmatpush1.msra.mxu0 0.0
      %1449 = vmatprep.subr.mxu0 0.0
      %1450 = vmatpush1.msra.mxu0 0.0
      %1451 = vmatprep.subr.mxu0 0.0
      %1452 = vmatpush1.msra.mxu0 0.0
      %1453 = vmatprep.subr.mxu0 0.0
      %1454 = vmatpush1.msra.mxu0 0.0
      %1455 = vmatprep.mubr.f32.mxu0 0.0
      %1456 = vmatmul.mubr.f32.gmra.mrb[0].mxu0 %v1342
      %v1457 = vpop.f32.mrb[0].mxu0
      %v1458 = vadd.f32 0.0, %v1457
      %v1459 = vpop.f32.mrb[0].mxu0
      %1460 = vmatprep.mubr.f32.mxu0 0.0
      %1461 = vmatmul.mubr.f32.gmra.mrb[0].mxu0 %v1343
      %v1462 = vpop.f32.mrb[0].mxu0
      %v1463 = vadd.f32 0.0, %v1462
      %v1464 = vpop.f32.mrb[0].mxu0
      %1465 = vmatprep.mubr.f32.mxu0 0.0
      %1466 = vmatmul.mubr.f32.gmra.mrb[0].mxu0 %v1344
      %v1467 = vpop.f32.mrb[0].mxu0
      %v1468 = vadd.f32 0.0, %v1467
      %v1469 = vpop.f32.mrb[0].mxu0
      %1470 = vmatprep.mubr.f32.mxu0 0.0
      %1471 = vmatmul.mubr.f32.gmra.mrb[0].mxu0 %v1345
      %v1472 = vpop.f32.mrb[0].mxu0
      %v1473 = vadd.f32 0.0, %v1472
      %v1474 = vpop.f32.mrb[0].mxu0
      %1475 = vmatprep.mubr.f32.mxu0 0.0
      %1476 = vmatmul.mubr.f32.gmra.mrb[0].mxu0 %v1346
      %v1477 = vpop.f32.mrb[0].mxu0
      %v1478 = vadd.f32 0.0, %v1477
      %v1479 = vpop.f32.mrb[0].mxu0
      %1480 = vmatprep.mubr.f32.mxu0 0.0
      %1481 = vmatmul.mubr.f32.gmra.mrb[0].mxu0 %v1347
      %v1482 = vpop.f32.mrb[0].mxu0
      %v1483 = vadd.f32 0.0, %v1482
      %v1484 = vpop.f32.mrb[0].mxu0
      %1485 = vmatprep.mubr.f32.mxu0 0.0
      %1486 = vmatmul.mubr.f32.gmra.mrb[0].mxu0 %v1348
      %v1487 = vpop.f32.mrb[0].mxu0
      %v1488 = vadd.f32 0.0, %v1487
      %v1489 = vpop.f32.mrb[0].mxu0
      %1490 = vmatprep.mubr.f32.mxu0 0.0
      %1491 = vmatmul.mubr.f32.gmra.mrb[0].mxu0 %v1349
      %v1492 = vpop.f32.mrb[0].mxu0
      %v1493 = vadd.f32 0.0, %v1492
      %v1494 = vpop.f32.mrb[0].mxu0
      %1495 = vmatprep.mubr.f32.mxu0 0.0
      %1496 = vmatmul.mubr.f32.gmra.mrb[0].mxu0 %v1350
      %v1497 = vpop.f32.mrb[0].mxu0
      %v1498 = vadd.f32 0.0, %v1497
      %v1499 = vpop.f32.mrb[0].mxu0
      %1500 = vmatprep.mubr.f32.mxu0 0.0
      %1501 = vmatmul.mubr.f32.gmra.mrb[0].mxu0 %v1351
      %v1502 = vpop.f32.mrb[0].mxu0
      %v1503 = vadd.f32 0.0, %v1502
      %v1504 = vpop.f32.mrb[0].mxu0
      %1505 = vmatprep.mubr.f32.mxu0 0.0
      %1506 = vmatmul.mubr.f32.gmra.mrb[0].mxu0 %v1352
      %v1507 = vpop.f32.mrb[0].mxu0
      %v1508 = vadd.f32 0.0, %v1507
      %v1509 = vpop.f32.mrb[0].mxu0
      %1510 = vmatprep.mubr.f32.mxu0 0.0
      %1511 = vmatmul.mubr.f32.gmra.mrb[0].mxu0 %v1353
      %v1512 = vpop.f32.mrb[0].mxu0
      %v1513 = vadd.f32 0.0, %v1512
      %v1514 = vpop.f32.mrb[0].mxu0
      %1515 = vmatprep.mubr.f32.mxu0 0.0
      %1516 = vmatmul.mubr.f32.gmra.mrb[0].mxu0 %v1354
      %v1517 = vpop.f32.mrb[0].mxu0
      %v1518 = vadd.f32 0.0, %v1517
      %v1519 = vpop.f32.mrb[0].mxu0
      %1520 = vmatprep.mubr.f32.mxu0 0.0
      %1521 = vmatmul.mubr.f32.gmra.mrb[0].mxu0 %v1355
      %v1522 = vpop.f32.mrb[0].mxu0
      %v1523 = vadd.f32 0.0, %v1522
      %v1524 = vpop.f32.mrb[0].mxu0
      %1525 = vmatprep.mubr.f32.mxu0 0.0
      %1526 = vmatmul.mubr.f32.gmra.mrb[0].mxu0 %v1356
      %v1527 = vpop.f32.mrb[0].mxu0
      %v1528 = vadd.f32 0.0, %v1527
      %v1529 = vpop.f32.mrb[0].mxu0
      %1530 = vmatprep.mubr.f32.mxu0 0.0
      %1531 = vmatmul.mubr.f32.gmra.mrb[0].mxu0 %v1357
      %v1532 = vpop.f32.mrb[0].mxu0
      %v1533 = vadd.f32 0.0, %v1532
      %v1534 = vpop.f32.mrb[0].mxu0
      %1535 = vmatprep.mubr.f32.mxu0 0.0
      %1536 = vmatmul.mubr.f32.gmra.mrb[0].mxu0 %v1358
      %v1537 = vpop.f32.mrb[0].mxu0
      %v1538 = vadd.f32 0.0, %v1537
      %v1539 = vpop.f32.mrb[0].mxu0
      %1540 = vmatprep.mubr.f32.mxu0 0.0
      %1541 = vmatmul.mubr.f32.gmra.mrb[0].mxu0 %v1359
      %v1542 = vpop.f32.mrb[0].mxu0
      %v1543 = vadd.f32 0.0, %v1542
      %v1544 = vpop.f32.mrb[0].mxu0
      %1545 = vmatprep.mubr.f32.mxu0 0.0
      %1546 = vmatmul.mubr.f32.gmra.mrb[0].mxu0 %v1360
      %v1547 = vpop.f32.mrb[0].mxu0
      %v1548 = vadd.f32 0.0, %v1547
      %v1549 = vpop.f32.mrb[0].mxu0
      %1550 = vmatprep.mubr.f32.mxu0 0.0
      %1551 = vmatmul.mubr.f32.gmra.mrb[0].mxu0 %v1361
      %v1552 = vpop.f32.mrb[0].mxu0
      %v1553 = vadd.f32 0.0, %v1552
      %v1554 = vpop.f32.mrb[0].mxu0
      %1555 = vmatprep.mubr.f32.mxu0 0.0
      %1556 = vmatmul.mubr.f32.gmra.mrb[0].mxu0 %v1362
      %v1557 = vpop.f32.mrb[0].mxu0
      %v1558 = vadd.f32 0.0, %v1557
      %v1559 = vpop.f32.mrb[0].mxu0
      %1560 = vmatprep.mubr.f32.mxu0 0.0
      %1561 = vmatmul.mubr.f32.gmra.mrb[0].mxu0 %v1363
      %v1562 = vpop.f32.mrb[0].mxu0
      %v1563 = vadd.f32 0.0, %v1562
      %v1564 = vpop.f32.mrb[0].mxu0
      %1565 = vmatprep.mubr.f32.mxu0 0.0
      %1566 = vmatmul.mubr.f32.gmra.mrb[0].mxu0 %v1364
      %v1567 = vpop.f32.mrb[0].mxu0
      %v1568 = vadd.f32 0.0, %v1567
      %v1569 = vpop.f32.mrb[0].mxu0
      %1570 = vmatprep.mubr.f32.mxu0 0.0
      %1571 = vmatmul.mubr.f32.gmra.mrb[0].mxu0 %v1365
      %v1572 = vpop.f32.mrb[0].mxu0
      %v1573 = vadd.f32 0.0, %v1572
      %v1574 = vpop.f32.mrb[0].mxu0
      %1575 = vmatprep.mubr.f32.mxu0 0.0
      %1576 = vmatmul.mubr.f32.gmra.mrb[0].mxu0 %v1366
      %v1577 = vpop.f32.mrb[0].mxu0
      %v1578 = vadd.f32 0.0, %v1577
      %v1579 = vpop.f32.mrb[0].mxu0
      %1580 = vmatprep.mubr.f32.mxu0 0.0
      %1581 = vmatmul.mubr.f32.gmra.mrb[0].mxu0 %v1367
      %v1582 = vpop.f32.mrb[0].mxu0
      %v1583 = vadd.f32 0.0, %v1582
      %v1584 = vpop.f32.mrb[0].mxu0
      %1585 = vmatprep.mubr.f32.mxu0 0.0
      %1586 = vmatmul.mubr.f32.gmra.mrb[0].mxu0 %v1368
      %v1587 = vpop.f32.mrb[0].mxu0
      %v1588 = vadd.f32 0.0, %v1587
      %v1589 = vpop.f32.mrb[0].mxu0
      %1590 = vmatprep.mubr.f32.mxu0 0.0
      %1591 = vmatmul.mubr.f32.gmra.mrb[0].mxu0 %v1369
      %v1592 = vpop.f32.mrb[0].mxu0
      %v1593 = vadd.f32 0.0, %v1592
      %v1594 = vpop.f32.mrb[0].mxu0
      %1595 = vmatprep.mubr.f32.mxu0 0.0
      %1596 = vmatmul.mubr.f32.gmra.mrb[0].mxu0 %v1370
      %v1597 = vpop.f32.mrb[0].mxu0
      %v1598 = vadd.f32 0.0, %v1597
      %v1599 = vpop.f32.mrb[0].mxu0
      %1600 = vmatprep.mubr.f32.mxu0 0.0
      %1601 = vmatmul.mubr.f32.gmra.mrb[0].mxu0 %v1371
      %v1602 = vpop.f32.mrb[0].mxu0
      %v1603 = vadd.f32 0.0, %v1602
      %v1604 = vpop.f32.mrb[0].mxu0
      %1605 = vmatprep.mubr.f32.mxu0 0.0
      %1606 = vmatmul.mubr.f32.gmra.mrb[0].mxu0 %v1372
      %v1607 = vpop.f32.mrb[0].mxu0
      %v1608 = vadd.f32 0.0, %v1607
      %v1609 = vpop.f32.mrb[0].mxu0
      %1610 = vmatprep.mubr.f32.mxu0 0.0
      %1611 = vmatmul.mubr.f32.gmra.mrb[0].mxu0 %v1373
      %v1612 = vpop.f32.mrb[0].mxu0
      %v1613 = vadd.f32 0.0, %v1612
      %v1614 = vpop.f32.mrb[0].mxu0
      %1615 = vdwg.mxu0
      %v1616 = vadd.f32 %v1310, %v1458
      %v1617 = vadd.f32 %v1311, %v1463
      %v1618 = vadd.f32 %v1312, %v1468
      %v1619 = vadd.f32 %v1313, %v1473
      %v1620 = vadd.f32 %v1314, %v1478
      %v1621 = vadd.f32 %v1315, %v1483
      %v1622 = vadd.f32 %v1316, %v1488
      %v1623 = vadd.f32 %v1317, %v1493
      %v1624 = vadd.f32 %v1318, %v1498
      %v1625 = vadd.f32 %v1319, %v1503
      %v1626 = vadd.f32 %v1320, %v1508
      %v1627 = vadd.f32 %v1321, %v1513
      %v1628 = vadd.f32 %v1322, %v1518
      %v1629 = vadd.f32 %v1323, %v1523
      %v1630 = vadd.f32 %v1324, %v1528
      %v1631 = vadd.f32 %v1325, %v1533
      %v1632 = vadd.f32 %v1326, %v1538
      %v1633 = vadd.f32 %v1327, %v1543
      %v1634 = vadd.f32 %v1328, %v1548
      %v1635 = vadd.f32 %v1329, %v1553
      %v1636 = vadd.f32 %v1330, %v1558
      %v1637 = vadd.f32 %v1331, %v1563
      %v1638 = vadd.f32 %v1332, %v1568
      %v1639 = vadd.f32 %v1333, %v1573
      %v1640 = vadd.f32 %v1334, %v1578
      %v1641 = vadd.f32 %v1335, %v1583
      %v1642 = vadd.f32 %v1336, %v1588
      %v1643 = vadd.f32 %v1337, %v1593
      %v1644 = vadd.f32 %v1338, %v1598
      %v1645 = vadd.f32 %v1339, %v1603
      %v1646 = vadd.f32 %v1340, %v1608
      %v1647 = vadd.f32 %v1341, %v1613
      %v1648 = vld [vmem:[%s1035 + $0x2] sm:$0xff]
      %v1649 = vld [vmem:[%s1035 + $0xa] sm:$0xff]
      %v1650 = vld [vmem:[%s1035 + $0x1a] sm:$0xff]
      %v1651 = vld [vmem:[%s1035 + $0x22] sm:$0xff]
      %v1652 = vld [vmem:[%s1035 + $0x32] sm:$0xff]
      %v1653 = vld [vmem:[%s1035 + $0x3a] sm:$0xff]
      %v1654 = vld [vmem:[%s1035 + $0x4a] sm:$0xff]
      %v1655 = vld [vmem:[%s1035 + $0x52] sm:$0xff]
      %v1656 = vld [vmem:[%s1035 + $0x62] sm:$0xff]
      %v1657 = vld [vmem:[%s1035 + $0x6a] sm:$0xff]
      %v1658 = vld [vmem:[%s1035 + $0x7a] sm:$0xff]
      %v1659 = vld [vmem:[%s1035 + $0x82] sm:$0xff]
      %v1660 = vld [vmem:[%s1035 + $0x92] sm:$0xff]
      %v1661 = vld [vmem:[%s1035 + $0x9a] sm:$0xff]
      %v1662 = vld [vmem:[%s1035 + $0xaa] sm:$0xff]
      %v1663 = vld [vmem:[%s1035 + $0xb2] sm:$0xff]
      %v1664 = vld [vmem:[%s1035 + $0xc2] sm:$0xff]
      %v1665 = vld [vmem:[%s1035 + $0xca] sm:$0xff]
      %v1666 = vld [vmem:[%s1035 + $0xda] sm:$0xff]
      %v1667 = vld [vmem:[%s1035 + $0xe2] sm:$0xff]
      %v1668 = vld [vmem:[%s1035 + $0xf2] sm:$0xff]
      %v1669 = vld [vmem:[%s1035 + $0xfa] sm:$0xff]
      %v1670 = vld [vmem:[%s1035 + $0x10a] sm:$0xff]
      %v1671 = vld [vmem:[%s1035 + $0x112] sm:$0xff]
      %v1672 = vld [vmem:[%s1035 + $0x122] sm:$0xff]
      %v1673 = vld [vmem:[%s1035 + $0x12a] sm:$0xff]
      %v1674 = vld [vmem:[%s1035 + $0x13a] sm:$0xff]
      %v1675 = vld [vmem:[%s1035 + $0x142] sm:$0xff]
      %v1676 = vld [vmem:[%s1035 + $0x152] sm:$0xff]
      %v1677 = vld [vmem:[%s1035 + $0x15a] sm:$0xff]
      %v1678 = vld [vmem:[%s1035 + $0x16a] sm:$0xff]
      %v1679 = vld [vmem:[%s1035 + $0x172] sm:$0xff]
      %s1680 = scalar_lea.vmem %s1, 640
      %v1681 = vld [vmem:[%s1680] sm:$0xff]
      %v1682 = vld [vmem:[%s1680 + $0x8] sm:$0xff]
      %v1683 = vld [vmem:[%s1680 + $0x10] sm:$0xff]
      %v1684 = vld [vmem:[%s1680 + $0x18] sm:$0xff]
      %v1685 = vld [vmem:[%s1680 + $0x20] sm:$0xff]
      %v1686 = vld [vmem:[%s1680 + $0x28] sm:$0xff]
      %v1687 = vld [vmem:[%s1680 + $0x30] sm:$0xff]
      %v1688 = vld [vmem:[%s1680 + $0x38] sm:$0xff]
      %v1689 = vld [vmem:[%s1680 + $0x40] sm:$0xff]
      %v1690 = vld [vmem:[%s1680 + $0x48] sm:$0xff]
      %v1691 = vld [vmem:[%s1680 + $0x50] sm:$0xff]
      %v1692 = vld [vmem:[%s1680 + $0x58] sm:$0xff]
      %v1693 = vld [vmem:[%s1680 + $0x60] sm:$0xff]
      %v1694 = vld [vmem:[%s1680 + $0x68] sm:$0xff]
      %v1695 = vld [vmem:[%s1680 + $0x70] sm:$0xff]
      %v1696 = vld [vmem:[%s1680 + $0x78] sm:$0xff]
      %1697 = vmatprep.subr.mxu0 0.0
      %1698 = vmatpush1.msra.mxu0 %v1681
      %1699 = vmatprep.subr.mxu0 0.0
      %1700 = vmatpush1.msra.mxu0 %v1682
      %1701 = vmatprep.subr.mxu0 0.0
      %1702 = vmatpush1.msra.mxu0 %v1683
      %1703 = vmatprep.subr.mxu0 0.0
      %1704 = vmatpush1.msra.mxu0 %v1684
      %1705 = vmatprep.subr.mxu0 0.0
      %1706 = vmatpush1.msra.mxu0 %v1685
      %1707 = vmatprep.subr.mxu0 0.0
      %1708 = vmatpush1.msra.mxu0 %v1686
      %1709 = vmatprep.subr.mxu0 0.0
      %1710 = vmatpush1.msra.mxu0 %v1687
      %1711 = vmatprep.subr.mxu0 0.0
      %1712 = vmatpush1.msra.mxu0 %v1688
      %1713 = vmatprep.subr.mxu0 0.0
      %1714 = vmatpush1.msra.mxu0 %v1689
      %1715 = vmatprep.subr.mxu0 0.0
      %1716 = vmatpush1.msra.mxu0 %v1690
      %1717 = vmatprep.subr.mxu0 0.0
      %1718 = vmatpush1.msra.mxu0 %v1691
      %1719 = vmatprep.subr.mxu0 0.0
      %1720 = vmatpush1.msra.mxu0 %v1692
      %1721 = vmatprep.subr.mxu0 0.0
      %1722 = vmatpush1.msra.mxu0 %v1693
      %1723 = vmatprep.subr.mxu0 0.0
      %1724 = vmatpush1.msra.mxu0 %v1694
      %1725 = vmatprep.subr.mxu0 0.0
      %1726 = vmatpush1.msra.mxu0 %v1695
      %1727 = vmatprep.subr.mxu0 0.0
      %1728 = vmatpush1.msra.mxu0 %v1696
      %1729 = vmatprep.subr.mxu0 0.0
      %1730 = vmatpush1.msra.mxu0 0.0
      %1731 = vmatprep.subr.mxu0 0.0
      %1732 = vmatpush1.msra.mxu0 0.0
      %1733 = vmatprep.subr.mxu0 0.0
      %1734 = vmatpush1.msra.mxu0 0.0
      %1735 = vmatprep.subr.mxu0 0.0
      %1736 = vmatpush1.msra.mxu0 0.0
      %1737 = vmatprep.subr.mxu0 0.0
      %1738 = vmatpush1.msra.mxu0 0.0
      %1739 = vmatprep.subr.mxu0 0.0
      %1740 = vmatpush1.msra.mxu0 0.0
      %1741 = vmatprep.subr.mxu0 0.0
      %1742 = vmatpush1.msra.mxu0 0.0
      %1743 = vmatprep.subr.mxu0 0.0
      %1744 = vmatpush1.msra.mxu0 0.0
      %1745 = vmatprep.subr.mxu0 0.0
      %1746 = vmatpush1.msra.mxu0 0.0
      %1747 = vmatprep.subr.mxu0 0.0
      %1748 = vmatpush1.msra.mxu0 0.0
      %1749 = vmatprep.subr.mxu0 0.0
      %1750 = vmatpush1.msra.mxu0 0.0
      %1751 = vmatprep.subr.mxu0 0.0
      %1752 = vmatpush1.msra.mxu0 0.0
      %1753 = vmatprep.subr.mxu0 0.0
      %1754 = vmatpush1.msra.mxu0 0.0
      %1755 = vmatprep.subr.mxu0 0.0
      %1756 = vmatpush1.msra.mxu0 0.0
      %1757 = vmatprep.subr.mxu0 0.0
      %1758 = vmatpush1.msra.mxu0 0.0
      %1759 = vmatprep.subr.mxu0 0.0
      %1760 = vmatpush1.msra.mxu0 0.0
      %1761 = vmatprep.mubr.f32.mxu0 0.0
      %1762 = vmatmul.mubr.f32.gmra.mrb[0].mxu0 %v1648
      %v1763 = vpop.f32.mrb[0].mxu0
      %v1764 = vadd.f32 0.0, %v1763
      %v1765 = vpop.f32.mrb[0].mxu0
      %1766 = vmatprep.mubr.f32.mxu0 0.0
      %1767 = vmatmul.mubr.f32.gmra.mrb[0].mxu0 %v1649
      %v1768 = vpop.f32.mrb[0].mxu0
      %v1769 = vadd.f32 0.0, %v1768
      %v1770 = vpop.f32.mrb[0].mxu0
      %1771 = vmatprep.mubr.f32.mxu0 0.0
      %1772 = vmatmul.mubr.f32.gmra.mrb[0].mxu0 %v1650
      %v1773 = vpop.f32.mrb[0].mxu0
      %v1774 = vadd.f32 0.0, %v1773
      %v1775 = vpop.f32.mrb[0].mxu0
      %1776 = vmatprep.mubr.f32.mxu0 0.0
      %1777 = vmatmul.mubr.f32.gmra.mrb[0].mxu0 %v1651
      %v1778 = vpop.f32.mrb[0].mxu0
      %v1779 = vadd.f32 0.0, %v1778
      %v1780 = vpop.f32.mrb[0].mxu0
      %1781 = vmatprep.mubr.f32.mxu0 0.0
      %1782 = vmatmul.mubr.f32.gmra.mrb[0].mxu0 %v1652
      %v1783 = vpop.f32.mrb[0].mxu0
      %v1784 = vadd.f32 0.0, %v1783
      %v1785 = vpop.f32.mrb[0].mxu0
      %1786 = vmatprep.mubr.f32.mxu0 0.0
      %1787 = vmatmul.mubr.f32.gmra.mrb[0].mxu0 %v1653
      %v1788 = vpop.f32.mrb[0].mxu0
      %v1789 = vadd.f32 0.0, %v1788
      %v1790 = vpop.f32.mrb[0].mxu0
      %1791 = vmatprep.mubr.f32.mxu0 0.0
      %1792 = vmatmul.mubr.f32.gmra.mrb[0].mxu0 %v1654
      %v1793 = vpop.f32.mrb[0].mxu0
      %v1794 = vadd.f32 0.0, %v1793
      %v1795 = vpop.f32.mrb[0].mxu0
      %1796 = vmatprep.mubr.f32.mxu0 0.0
      %1797 = vmatmul.mubr.f32.gmra.mrb[0].mxu0 %v1655
      %v1798 = vpop.f32.mrb[0].mxu0
      %v1799 = vadd.f32 0.0, %v1798
      %v1800 = vpop.f32.mrb[0].mxu0
      %1801 = vmatprep.mubr.f32.mxu0 0.0
      %1802 = vmatmul.mubr.f32.gmra.mrb[0].mxu0 %v1656
      %v1803 = vpop.f32.mrb[0].mxu0
      %v1804 = vadd.f32 0.0, %v1803
      %v1805 = vpop.f32.mrb[0].mxu0
      %1806 = vmatprep.mubr.f32.mxu0 0.0
      %1807 = vmatmul.mubr.f32.gmra.mrb[0].mxu0 %v1657
      %v1808 = vpop.f32.mrb[0].mxu0
      %v1809 = vadd.f32 0.0, %v1808
      %v1810 = vpop.f32.mrb[0].mxu0
      %1811 = vmatprep.mubr.f32.mxu0 0.0
      %1812 = vmatmul.mubr.f32.gmra.mrb[0].mxu0 %v1658
      %v1813 = vpop.f32.mrb[0].mxu0
      %v1814 = vadd.f32 0.0, %v1813
      %v1815 = vpop.f32.mrb[0].mxu0
      %1816 = vmatprep.mubr.f32.mxu0 0.0
      %1817 = vmatmul.mubr.f32.gmra.mrb[0].mxu0 %v1659
      %v1818 = vpop.f32.mrb[0].mxu0
      %v1819 = vadd.f32 0.0, %v1818
      %v1820 = vpop.f32.mrb[0].mxu0
      %1821 = vmatprep.mubr.f32.mxu0 0.0
      %1822 = vmatmul.mubr.f32.gmra.mrb[0].mxu0 %v1660
      %v1823 = vpop.f32.mrb[0].mxu0
      %v1824 = vadd.f32 0.0, %v1823
      %v1825 = vpop.f32.mrb[0].mxu0
      %1826 = vmatprep.mubr.f32.mxu0 0.0
      %1827 = vmatmul.mubr.f32.gmra.mrb[0].mxu0 %v1661
      %v1828 = vpop.f32.mrb[0].mxu0
      %v1829 = vadd.f32 0.0, %v1828
      %v1830 = vpop.f32.mrb[0].mxu0
      %1831 = vmatprep.mubr.f32.mxu0 0.0
      %1832 = vmatmul.mubr.f32.gmra.mrb[0].mxu0 %v1662
      %v1833 = vpop.f32.mrb[0].mxu0
      %v1834 = vadd.f32 0.0, %v1833
      %v1835 = vpop.f32.mrb[0].mxu0
      %1836 = vmatprep.mubr.f32.mxu0 0.0
      %1837 = vmatmul.mubr.f32.gmra.mrb[0].mxu0 %v1663
      %v1838 = vpop.f32.mrb[0].mxu0
      %v1839 = vadd.f32 0.0, %v1838
      %v1840 = vpop.f32.mrb[0].mxu0
      %1841 = vmatprep.mubr.f32.mxu0 0.0
      %1842 = vmatmul.mubr.f32.gmra.mrb[0].mxu0 %v1664
      %v1843 = vpop.f32.mrb[0].mxu0
      %v1844 = vadd.f32 0.0, %v1843
      %v1845 = vpop.f32.mrb[0].mxu0
      %1846 = vmatprep.mubr.f32.mxu0 0.0
      %1847 = vmatmul.mubr.f32.gmra.mrb[0].mxu0 %v1665
      %v1848 = vpop.f32.mrb[0].mxu0
      %v1849 = vadd.f32 0.0, %v1848
      %v1850 = vpop.f32.mrb[0].mxu0
      %1851 = vmatprep.mubr.f32.mxu0 0.0
      %1852 = vmatmul.mubr.f32.gmra.mrb[0].mxu0 %v1666
      %v1853 = vpop.f32.mrb[0].mxu0
      %v1854 = vadd.f32 0.0, %v1853
      %v1855 = vpop.f32.mrb[0].mxu0
      %1856 = vmatprep.mubr.f32.mxu0 0.0
      %1857 = vmatmul.mubr.f32.gmra.mrb[0].mxu0 %v1667
      %v1858 = vpop.f32.mrb[0].mxu0
      %v1859 = vadd.f32 0.0, %v1858
      %v1860 = vpop.f32.mrb[0].mxu0
      %1861 = vmatprep.mubr.f32.mxu0 0.0
      %1862 = vmatmul.mubr.f32.gmra.mrb[0].mxu0 %v1668
      %v1863 = vpop.f32.mrb[0].mxu0
      %v1864 = vadd.f32 0.0, %v1863
      %v1865 = vpop.f32.mrb[0].mxu0
      %1866 = vmatprep.mubr.f32.mxu0 0.0
      %1867 = vmatmul.mubr.f32.gmra.mrb[0].mxu0 %v1669
      %v1868 = vpop.f32.mrb[0].mxu0
      %v1869 = vadd.f32 0.0, %v1868
      %v1870 = vpop.f32.mrb[0].mxu0
      %1871 = vmatprep.mubr.f32.mxu0 0.0
      %1872 = vmatmul.mubr.f32.gmra.mrb[0].mxu0 %v1670
      %v1873 = vpop.f32.mrb[0].mxu0
      %v1874 = vadd.f32 0.0, %v1873
      %v1875 = vpop.f32.mrb[0].mxu0
      %1876 = vmatprep.mubr.f32.mxu0 0.0
      %1877 = vmatmul.mubr.f32.gmra.mrb[0].mxu0 %v1671
      %v1878 = vpop.f32.mrb[0].mxu0
      %v1879 = vadd.f32 0.0, %v1878
      %v1880 = vpop.f32.mrb[0].mxu0
      %1881 = vmatprep.mubr.f32.mxu0 0.0
      %1882 = vmatmul.mubr.f32.gmra.mrb[0].mxu0 %v1672
      %v1883 = vpop.f32.mrb[0].mxu0
      %v1884 = vadd.f32 0.0, %v1883
      %v1885 = vpop.f32.mrb[0].mxu0
      %1886 = vmatprep.mubr.f32.mxu0 0.0
      %1887 = vmatmul.mubr.f32.gmra.mrb[0].mxu0 %v1673
      %v1888 = vpop.f32.mrb[0].mxu0
      %v1889 = vadd.f32 0.0, %v1888
      %v1890 = vpop.f32.mrb[0].mxu0
      %1891 = vmatprep.mubr.f32.mxu0 0.0
      %1892 = vmatmul.mubr.f32.gmra.mrb[0].mxu0 %v1674
      %v1893 = vpop.f32.mrb[0].mxu0
      %v1894 = vadd.f32 0.0, %v1893
      %v1895 = vpop.f32.mrb[0].mxu0
      %1896 = vmatprep.mubr.f32.mxu0 0.0
      %1897 = vmatmul.mubr.f32.gmra.mrb[0].mxu0 %v1675
      %v1898 = vpop.f32.mrb[0].mxu0
      %v1899 = vadd.f32 0.0, %v1898
      %v1900 = vpop.f32.mrb[0].mxu0
      %1901 = vmatprep.mubr.f32.mxu0 0.0
      %1902 = vmatmul.mubr.f32.gmra.mrb[0].mxu0 %v1676
      %v1903 = vpop.f32.mrb[0].mxu0
      %v1904 = vadd.f32 0.0, %v1903
      %v1905 = vpop.f32.mrb[0].mxu0
      %1906 = vmatprep.mubr.f32.mxu0 0.0
      %1907 = vmatmul.mubr.f32.gmra.mrb[0].mxu0 %v1677
      %v1908 = vpop.f32.mrb[0].mxu0
      %v1909 = vadd.f32 0.0, %v1908
      %v1910 = vpop.f32.mrb[0].mxu0
      %1911 = vmatprep.mubr.f32.mxu0 0.0
      %1912 = vmatmul.mubr.f32.gmra.mrb[0].mxu0 %v1678
      %v1913 = vpop.f32.mrb[0].mxu0
      %v1914 = vadd.f32 0.0, %v1913
      %v1915 = vpop.f32.mrb[0].mxu0
      %1916 = vmatprep.mubr.f32.mxu0 0.0
      %1917 = vmatmul.mubr.f32.gmra.mrb[0].mxu0 %v1679
      %v1918 = vpop.f32.mrb[0].mxu0
      %v1919 = vadd.f32 0.0, %v1918
      %v1920 = vpop.f32.mrb[0].mxu0
      %1921 = vdwg.mxu0
      %v1922 = vadd.f32 %v1616, %v1764
      %v1923 = vadd.f32 %v1617, %v1769
      %v1924 = vadd.f32 %v1618, %v1774
      %v1925 = vadd.f32 %v1619, %v1779
      %v1926 = vadd.f32 %v1620, %v1784
      %v1927 = vadd.f32 %v1621, %v1789
      %v1928 = vadd.f32 %v1622, %v1794
      %v1929 = vadd.f32 %v1623, %v1799
      %v1930 = vadd.f32 %v1624, %v1804
      %v1931 = vadd.f32 %v1625, %v1809
      %v1932 = vadd.f32 %v1626, %v1814
      %v1933 = vadd.f32 %v1627, %v1819
      %v1934 = vadd.f32 %v1628, %v1824
      %v1935 = vadd.f32 %v1629, %v1829
      %v1936 = vadd.f32 %v1630, %v1834
      %v1937 = vadd.f32 %v1631, %v1839
      %v1938 = vadd.f32 %v1632, %v1844
      %v1939 = vadd.f32 %v1633, %v1849
      %v1940 = vadd.f32 %v1634, %v1854
      %v1941 = vadd.f32 %v1635, %v1859
      %v1942 = vadd.f32 %v1636, %v1864
      %v1943 = vadd.f32 %v1637, %v1869
      %v1944 = vadd.f32 %v1638, %v1874
      %v1945 = vadd.f32 %v1639, %v1879
      %v1946 = vadd.f32 %v1640, %v1884
      %v1947 = vadd.f32 %v1641, %v1889
      %v1948 = vadd.f32 %v1642, %v1894
      %v1949 = vadd.f32 %v1643, %v1899
      %v1950 = vadd.f32 %v1644, %v1904
      %v1951 = vadd.f32 %v1645, %v1909
      %v1952 = vadd.f32 %v1646, %v1914
      %v1953 = vadd.f32 %v1647, %v1919
      %s1954 = scalar_lea.vmem %s172, 48
      %v1955 = vld [vmem:[%s1954] sm:$0xff]
      %v1956 = vld [vmem:[%s1954 + $0x8] sm:$0xff]
      %v1957 = vld [vmem:[%s1954 + $0x18] sm:$0xff]
      %v1958 = vld [vmem:[%s1954 + $0x20] sm:$0xff]
      %v1959 = vld [vmem:[%s1954 + $0x30] sm:$0xff]
      %v1960 = vld [vmem:[%s1954 + $0x38] sm:$0xff]
      %v1961 = vld [vmem:[%s1954 + $0x48] sm:$0xff]
      %v1962 = vld [vmem:[%s1954 + $0x50] sm:$0xff]
      %v1963 = vld [vmem:[%s1954 + $0x60] sm:$0xff]
      %v1964 = vld [vmem:[%s1954 + $0x68] sm:$0xff]
      %v1965 = vld [vmem:[%s1954 + $0x78] sm:$0xff]
      %v1966 = vld [vmem:[%s1954 + $0x80] sm:$0xff]
      %v1967 = vld [vmem:[%s1954 + $0x90] sm:$0xff]
      %v1968 = vld [vmem:[%s1954 + $0x98] sm:$0xff]
      %v1969 = vld [vmem:[%s1954 + $0xa8] sm:$0xff]
      %v1970 = vld [vmem:[%s1954 + $0xb0] sm:$0xff]
      %v1971 = vld [vmem:[%s1954 + $0xc0] sm:$0xff]
      %v1972 = vld [vmem:[%s1954 + $0xc8] sm:$0xff]
      %v1973 = vld [vmem:[%s1954 + $0xd8] sm:$0xff]
      %v1974 = vld [vmem:[%s1954 + $0xe0] sm:$0xff]
      %v1975 = vld [vmem:[%s1954 + $0xf0] sm:$0xff]
      %v1976 = vld [vmem:[%s1954 + $0xf8] sm:$0xff]
      %v1977 = vld [vmem:[%s1954 + $0x108] sm:$0xff]
      %v1978 = vld [vmem:[%s1954 + $0x110] sm:$0xff]
      %v1979 = vld [vmem:[%s1954 + $0x120] sm:$0xff]
      %v1980 = vld [vmem:[%s1954 + $0x128] sm:$0xff]
      %v1981 = vld [vmem:[%s1954 + $0x138] sm:$0xff]
      %v1982 = vld [vmem:[%s1954 + $0x140] sm:$0xff]
      %v1983 = vld [vmem:[%s1954 + $0x150] sm:$0xff]
      %v1984 = vld [vmem:[%s1954 + $0x158] sm:$0xff]
      %v1985 = vld [vmem:[%s1954 + $0x168] sm:$0xff]
      %v1986 = vld [vmem:[%s1954 + $0x170] sm:$0xff]
      %s1987 = scalar_lea.vmem %s1, 768
      %v1988 = vld [vmem:[%s1987] sm:$0xff]
      %v1989 = vld [vmem:[%s1987 + $0x8] sm:$0xff]
      %v1990 = vld [vmem:[%s1987 + $0x10] sm:$0xff]
      %v1991 = vld [vmem:[%s1987 + $0x18] sm:$0xff]
      %v1992 = vld [vmem:[%s1987 + $0x20] sm:$0xff]
      %v1993 = vld [vmem:[%s1987 + $0x28] sm:$0xff]
      %v1994 = vld [vmem:[%s1987 + $0x30] sm:$0xff]
      %v1995 = vld [vmem:[%s1987 + $0x38] sm:$0xff]
      %v1996 = vld [vmem:[%s1987 + $0x40] sm:$0xff]
      %v1997 = vld [vmem:[%s1987 + $0x48] sm:$0xff]
      %v1998 = vld [vmem:[%s1987 + $0x50] sm:$0xff]
      %v1999 = vld [vmem:[%s1987 + $0x58] sm:$0xff]
      %v2000 = vld [vmem:[%s1987 + $0x60] sm:$0xff]
      %v2001 = vld [vmem:[%s1987 + $0x68] sm:$0xff]
      %v2002 = vld [vmem:[%s1987 + $0x70] sm:$0xff]
      %v2003 = vld [vmem:[%s1987 + $0x78] sm:$0xff]
      %2004 = vmatprep.subr.mxu0 0.0
      %2005 = vmatpush1.msra.mxu0 %v1988
      %2006 = vmatprep.subr.mxu0 0.0
      %2007 = vmatpush1.msra.mxu0 %v1989
      %2008 = vmatprep.subr.mxu0 0.0
      %2009 = vmatpush1.msra.mxu0 %v1990
      %2010 = vmatprep.subr.mxu0 0.0
      %2011 = vmatpush1.msra.mxu0 %v1991
      %2012 = vmatprep.subr.mxu0 0.0
      %2013 = vmatpush1.msra.mxu0 %v1992
      %2014 = vmatprep.subr.mxu0 0.0
      %2015 = vmatpush1.msra.mxu0 %v1993
      %2016 = vmatprep.subr.mxu0 0.0
      %2017 = vmatpush1.msra.mxu0 %v1994
      %2018 = vmatprep.subr.mxu0 0.0
      %2019 = vmatpush1.msra.mxu0 %v1995
      %2020 = vmatprep.subr.mxu0 0.0
      %2021 = vmatpush1.msra.mxu0 %v1996
      %2022 = vmatprep.subr.mxu0 0.0
      %2023 = vmatpush1.msra.mxu0 %v1997
      %2024 = vmatprep.subr.mxu0 0.0
      %2025 = vmatpush1.msra.mxu0 %v1998
      %2026 = vmatprep.subr.mxu0 0.0
      %2027 = vmatpush1.msra.mxu0 %v1999
      %2028 = vmatprep.subr.mxu0 0.0
      %2029 = vmatpush1.msra.mxu0 %v2000
      %2030 = vmatprep.subr.mxu0 0.0
      %2031 = vmatpush1.msra.mxu0 %v2001
      %2032 = vmatprep.subr.mxu0 0.0
      %2033 = vmatpush1.msra.mxu0 %v2002
      %2034 = vmatprep.subr.mxu0 0.0
      %2035 = vmatpush1.msra.mxu0 %v2003
      %2036 = vmatprep.subr.mxu0 0.0
      %2037 = vmatpush1.msra.mxu0 0.0
      %2038 = vmatprep.subr.mxu0 0.0
      %2039 = vmatpush1.msra.mxu0 0.0
      %2040 = vmatprep.subr.mxu0 0.0
      %2041 = vmatpush1.msra.mxu0 0.0
      %2042 = vmatprep.subr.mxu0 0.0
      %2043 = vmatpush1.msra.mxu0 0.0
      %2044 = vmatprep.subr.mxu0 0.0
      %2045 = vmatpush1.msra.mxu0 0.0
      %2046 = vmatprep.subr.mxu0 0.0
      %2047 = vmatpush1.msra.mxu0 0.0
      %2048 = vmatprep.subr.mxu0 0.0
      %2049 = vmatpush1.msra.mxu0 0.0
      %2050 = vmatprep.subr.mxu0 0.0
      %2051 = vmatpush1.msra.mxu0 0.0
      %2052 = vmatprep.subr.mxu0 0.0
      %2053 = vmatpush1.msra.mxu0 0.0
      %2054 = vmatprep.subr.mxu0 0.0
      %2055 = vmatpush1.msra.mxu0 0.0
      %2056 = vmatprep.subr.mxu0 0.0
      %2057 = vmatpush1.msra.mxu0 0.0
      %2058 = vmatprep.subr.mxu0 0.0
      %2059 = vmatpush1.msra.mxu0 0.0
      %2060 = vmatprep.subr.mxu0 0.0
      %2061 = vmatpush1.msra.mxu0 0.0
      %2062 = vmatprep.subr.mxu0 0.0
      %2063 = vmatpush1.msra.mxu0 0.0
      %2064 = vmatprep.subr.mxu0 0.0
      %2065 = vmatpush1.msra.mxu0 0.0
      %2066 = vmatprep.subr.mxu0 0.0
      %2067 = vmatpush1.msra.mxu0 0.0
      %2068 = vmatprep.mubr.f32.mxu0 0.0
      %2069 = vmatmul.mubr.f32.gmra.mrb[0].mxu0 %v1955
      %v2070 = vpop.f32.mrb[0].mxu0
      %v2071 = vadd.f32 0.0, %v2070
      %v2072 = vpop.f32.mrb[0].mxu0
      %2073 = vmatprep.mubr.f32.mxu0 0.0
      %2074 = vmatmul.mubr.f32.gmra.mrb[0].mxu0 %v1956
      %v2075 = vpop.f32.mrb[0].mxu0
      %v2076 = vadd.f32 0.0, %v2075
      %v2077 = vpop.f32.mrb[0].mxu0
      %2078 = vmatprep.mubr.f32.mxu0 0.0
      %2079 = vmatmul.mubr.f32.gmra.mrb[0].mxu0 %v1957
      %v2080 = vpop.f32.mrb[0].mxu0
      %v2081 = vadd.f32 0.0, %v2080
      %v2082 = vpop.f32.mrb[0].mxu0
      %2083 = vmatprep.mubr.f32.mxu0 0.0
      %2084 = vmatmul.mubr.f32.gmra.mrb[0].mxu0 %v1958
      %v2085 = vpop.f32.mrb[0].mxu0
      %v2086 = vadd.f32 0.0, %v2085
      %v2087 = vpop.f32.mrb[0].mxu0
      %2088 = vmatprep.mubr.f32.mxu0 0.0
      %2089 = vmatmul.mubr.f32.gmra.mrb[0].mxu0 %v1959
      %v2090 = vpop.f32.mrb[0].mxu0
      %v2091 = vadd.f32 0.0, %v2090
      %v2092 = vpop.f32.mrb[0].mxu0
      %2093 = vmatprep.mubr.f32.mxu0 0.0
      %2094 = vmatmul.mubr.f32.gmra.mrb[0].mxu0 %v1960
      %v2095 = vpop.f32.mrb[0].mxu0
      %v2096 = vadd.f32 0.0, %v2095
      %v2097 = vpop.f32.mrb[0].mxu0
      %2098 = vmatprep.mubr.f32.mxu0 0.0
      %2099 = vmatmul.mubr.f32.gmra.mrb[0].mxu0 %v1961
      %v2100 = vpop.f32.mrb[0].mxu0
      %v2101 = vadd.f32 0.0, %v2100
      %v2102 = vpop.f32.mrb[0].mxu0
      %2103 = vmatprep.mubr.f32.mxu0 0.0
      %2104 = vmatmul.mubr.f32.gmra.mrb[0].mxu0 %v1962
      %v2105 = vpop.f32.mrb[0].mxu0
      %v2106 = vadd.f32 0.0, %v2105
      %v2107 = vpop.f32.mrb[0].mxu0
      %2108 = vmatprep.mubr.f32.mxu0 0.0
      %2109 = vmatmul.mubr.f32.gmra.mrb[0].mxu0 %v1963
      %v2110 = vpop.f32.mrb[0].mxu0
      %v2111 = vadd.f32 0.0, %v2110
      %v2112 = vpop.f32.mrb[0].mxu0
      %2113 = vmatprep.mubr.f32.mxu0 0.0
      %2114 = vmatmul.mubr.f32.gmra.mrb[0].mxu0 %v1964
      %v2115 = vpop.f32.mrb[0].mxu0
      %v2116 = vadd.f32 0.0, %v2115
      %v2117 = vpop.f32.mrb[0].mxu0
      %2118 = vmatprep.mubr.f32.mxu0 0.0
      %2119 = vmatmul.mubr.f32.gmra.mrb[0].mxu0 %v1965
      %v2120 = vpop.f32.mrb[0].mxu0
      %v2121 = vadd.f32 0.0, %v2120
      %v2122 = vpop.f32.mrb[0].mxu0
      %2123 = vmatprep.mubr.f32.mxu0 0.0
      %2124 = vmatmul.mubr.f32.gmra.mrb[0].mxu0 %v1966
      %v2125 = vpop.f32.mrb[0].mxu0
      %v2126 = vadd.f32 0.0, %v2125
      %v2127 = vpop.f32.mrb[0].mxu0
      %2128 = vmatprep.mubr.f32.mxu0 0.0
      %2129 = vmatmul.mubr.f32.gmra.mrb[0].mxu0 %v1967
      %v2130 = vpop.f32.mrb[0].mxu0
      %v2131 = vadd.f32 0.0, %v2130
      %v2132 = vpop.f32.mrb[0].mxu0
      %2133 = vmatprep.mubr.f32.mxu0 0.0
      %2134 = vmatmul.mubr.f32.gmra.mrb[0].mxu0 %v1968
      %v2135 = vpop.f32.mrb[0].mxu0
      %v2136 = vadd.f32 0.0, %v2135
      %v2137 = vpop.f32.mrb[0].mxu0
      %2138 = vmatprep.mubr.f32.mxu0 0.0
      %2139 = vmatmul.mubr.f32.gmra.mrb[0].mxu0 %v1969
      %v2140 = vpop.f32.mrb[0].mxu0
      %v2141 = vadd.f32 0.0, %v2140
      %v2142 = vpop.f32.mrb[0].mxu0
      %2143 = vmatprep.mubr.f32.mxu0 0.0
      %2144 = vmatmul.mubr.f32.gmra.mrb[0].mxu0 %v1970
      %v2145 = vpop.f32.mrb[0].mxu0
      %v2146 = vadd.f32 0.0, %v2145
      %v2147 = vpop.f32.mrb[0].mxu0
      %2148 = vmatprep.mubr.f32.mxu0 0.0
      %2149 = vmatmul.mubr.f32.gmra.mrb[0].mxu0 %v1971
      %v2150 = vpop.f32.mrb[0].mxu0
      %v2151 = vadd.f32 0.0, %v2150
      %v2152 = vpop.f32.mrb[0].mxu0
      %2153 = vmatprep.mubr.f32.mxu0 0.0
      %2154 = vmatmul.mubr.f32.gmra.mrb[0].mxu0 %v1972
      %v2155 = vpop.f32.mrb[0].mxu0
      %v2156 = vadd.f32 0.0, %v2155
      %v2157 = vpop.f32.mrb[0].mxu0
      %2158 = vmatprep.mubr.f32.mxu0 0.0
      %2159 = vmatmul.mubr.f32.gmra.mrb[0].mxu0 %v1973
      %v2160 = vpop.f32.mrb[0].mxu0
      %v2161 = vadd.f32 0.0, %v2160
      %v2162 = vpop.f32.mrb[0].mxu0
      %2163 = vmatprep.mubr.f32.mxu0 0.0
      %2164 = vmatmul.mubr.f32.gmra.mrb[0].mxu0 %v1974
      %v2165 = vpop.f32.mrb[0].mxu0
      %v2166 = vadd.f32 0.0, %v2165
      %v2167 = vpop.f32.mrb[0].mxu0
      %2168 = vmatprep.mubr.f32.mxu0 0.0
      %2169 = vmatmul.mubr.f32.gmra.mrb[0].mxu0 %v1975
      %v2170 = vpop.f32.mrb[0].mxu0
      %v2171 = vadd.f32 0.0, %v2170
      %v2172 = vpop.f32.mrb[0].mxu0
      %2173 = vmatprep.mubr.f32.mxu0 0.0
      %2174 = vmatmul.mubr.f32.gmra.mrb[0].mxu0 %v1976
      %v2175 = vpop.f32.mrb[0].mxu0
      %v2176 = vadd.f32 0.0, %v2175
      %v2177 = vpop.f32.mrb[0].mxu0
      %2178 = vmatprep.mubr.f32.mxu0 0.0
      %2179 = vmatmul.mubr.f32.gmra.mrb[0].mxu0 %v1977
      %v2180 = vpop.f32.mrb[0].mxu0
      %v2181 = vadd.f32 0.0, %v2180
      %v2182 = vpop.f32.mrb[0].mxu0
      %2183 = vmatprep.mubr.f32.mxu0 0.0
      %2184 = vmatmul.mubr.f32.gmra.mrb[0].mxu0 %v1978
      %v2185 = vpop.f32.mrb[0].mxu0
      %v2186 = vadd.f32 0.0, %v2185
      %v2187 = vpop.f32.mrb[0].mxu0
      %2188 = vmatprep.mubr.f32.mxu0 0.0
      %2189 = vmatmul.mubr.f32.gmra.mrb[0].mxu0 %v1979
      %v2190 = vpop.f32.mrb[0].mxu0
      %v2191 = vadd.f32 0.0, %v2190
      %v2192 = vpop.f32.mrb[0].mxu0
      %2193 = vmatprep.mubr.f32.mxu0 0.0
      %2194 = vmatmul.mubr.f32.gmra.mrb[0].mxu0 %v1980
      %v2195 = vpop.f32.mrb[0].mxu0
      %v2196 = vadd.f32 0.0, %v2195
      %v2197 = vpop.f32.mrb[0].mxu0
      %2198 = vmatprep.mubr.f32.mxu0 0.0
      %2199 = vmatmul.mubr.f32.gmra.mrb[0].mxu0 %v1981
      %v2200 = vpop.f32.mrb[0].mxu0
      %v2201 = vadd.f32 0.0, %v2200
      %v2202 = vpop.f32.mrb[0].mxu0
      %2203 = vmatprep.mubr.f32.mxu0 0.0
      %2204 = vmatmul.mubr.f32.gmra.mrb[0].mxu0 %v1982
      %v2205 = vpop.f32.mrb[0].mxu0
      %v2206 = vadd.f32 0.0, %v2205
      %v2207 = vpop.f32.mrb[0].mxu0
      %2208 = vmatprep.mubr.f32.mxu0 0.0
      %2209 = vmatmul.mubr.f32.gmra.mrb[0].mxu0 %v1983
      %v2210 = vpop.f32.mrb[0].mxu0
      %v2211 = vadd.f32 0.0, %v2210
      %v2212 = vpop.f32.mrb[0].mxu0
      %2213 = vmatprep.mubr.f32.mxu0 0.0
      %2214 = vmatmul.mubr.f32.gmra.mrb[0].mxu0 %v1984
      %v2215 = vpop.f32.mrb[0].mxu0
      %v2216 = vadd.f32 0.0, %v2215
      %v2217 = vpop.f32.mrb[0].mxu0
      %2218 = vmatprep.mubr.f32.mxu0 0.0
      %2219 = vmatmul.mubr.f32.gmra.mrb[0].mxu0 %v1985
      %v2220 = vpop.f32.mrb[0].mxu0
      %v2221 = vadd.f32 0.0, %v2220
      %v2222 = vpop.f32.mrb[0].mxu0
      %2223 = vmatprep.mubr.f32.mxu0 0.0
      %2224 = vmatmul.mubr.f32.gmra.mrb[0].mxu0 %v1986
      %v2225 = vpop.f32.mrb[0].mxu0
      %v2226 = vadd.f32 0.0, %v2225
      %v2227 = vpop.f32.mrb[0].mxu0
      %2228 = vdwg.mxu0
      %v2229 = vadd.f32 %v1922, %v2071
      %v2230 = vadd.f32 %v1923, %v2076
      %v2231 = vadd.f32 %v1924, %v2081
      %v2232 = vadd.f32 %v1925, %v2086
      %v2233 = vadd.f32 %v1926, %v2091
      %v2234 = vadd.f32 %v1927, %v2096
      %v2235 = vadd.f32 %v1928, %v2101
      %v2236 = vadd.f32 %v1929, %v2106
      %v2237 = vadd.f32 %v1930, %v2111
      %v2238 = vadd.f32 %v1931, %v2116
      %v2239 = vadd.f32 %v1932, %v2121
      %v2240 = vadd.f32 %v1933, %v2126
      %v2241 = vadd.f32 %v1934, %v2131
      %v2242 = vadd.f32 %v1935, %v2136
      %v2243 = vadd.f32 %v1936, %v2141
      %v2244 = vadd.f32 %v1937, %v2146
      %v2245 = vadd.f32 %v1938, %v2151
      %v2246 = vadd.f32 %v1939, %v2156
      %v2247 = vadd.f32 %v1940, %v2161
      %v2248 = vadd.f32 %v1941, %v2166
      %v2249 = vadd.f32 %v1942, %v2171
      %v2250 = vadd.f32 %v1943, %v2176
      %v2251 = vadd.f32 %v1944, %v2181
      %v2252 = vadd.f32 %v1945, %v2186
      %v2253 = vadd.f32 %v1946, %v2191
      %v2254 = vadd.f32 %v1947, %v2196
      %v2255 = vadd.f32 %v1948, %v2201
      %v2256 = vadd.f32 %v1949, %v2206
      %v2257 = vadd.f32 %v1950, %v2211
      %v2258 = vadd.f32 %v1951, %v2216
      %v2259 = vadd.f32 %v1952, %v2221
      %v2260 = vadd.f32 %v1953, %v2226
      %v2261 = vld [vmem:[%s1954 + $0x1] sm:$0xff]
      %v2262 = vld [vmem:[%s1954 + $0x9] sm:$0xff]
      %v2263 = vld [vmem:[%s1954 + $0x19] sm:$0xff]
      %v2264 = vld [vmem:[%s1954 + $0x21] sm:$0xff]
      %v2265 = vld [vmem:[%s1954 + $0x31] sm:$0xff]
      %v2266 = vld [vmem:[%s1954 + $0x39] sm:$0xff]
      %v2267 = vld [vmem:[%s1954 + $0x49] sm:$0xff]
      %v2268 = vld [vmem:[%s1954 + $0x51] sm:$0xff]
      %v2269 = vld [vmem:[%s1954 + $0x61] sm:$0xff]
      %v2270 = vld [vmem:[%s1954 + $0x69] sm:$0xff]
      %v2271 = vld [vmem:[%s1954 + $0x79] sm:$0xff]
      %v2272 = vld [vmem:[%s1954 + $0x81] sm:$0xff]
      %v2273 = vld [vmem:[%s1954 + $0x91] sm:$0xff]
      %v2274 = vld [vmem:[%s1954 + $0x99] sm:$0xff]
      %v2275 = vld [vmem:[%s1954 + $0xa9] sm:$0xff]
      %v2276 = vld [vmem:[%s1954 + $0xb1] sm:$0xff]
      %v2277 = vld [vmem:[%s1954 + $0xc1] sm:$0xff]
      %v2278 = vld [vmem:[%s1954 + $0xc9] sm:$0xff]
      %v2279 = vld [vmem:[%s1954 + $0xd9] sm:$0xff]
      %v2280 = vld [vmem:[%s1954 + $0xe1] sm:$0xff]
      %v2281 = vld [vmem:[%s1954 + $0xf1] sm:$0xff]
      %v2282 = vld [vmem:[%s1954 + $0xf9] sm:$0xff]
      %v2283 = vld [vmem:[%s1954 + $0x109] sm:$0xff]
      %v2284 = vld [vmem:[%s1954 + $0x111] sm:$0xff]
      %v2285 = vld [vmem:[%s1954 + $0x121] sm:$0xff]
      %v2286 = vld [vmem:[%s1954 + $0x129] sm:$0xff]
      %v2287 = vld [vmem:[%s1954 + $0x139] sm:$0xff]
      %v2288 = vld [vmem:[%s1954 + $0x141] sm:$0xff]
      %v2289 = vld [vmem:[%s1954 + $0x151] sm:$0xff]
      %v2290 = vld [vmem:[%s1954 + $0x159] sm:$0xff]
      %v2291 = vld [vmem:[%s1954 + $0x169] sm:$0xff]
      %v2292 = vld [vmem:[%s1954 + $0x171] sm:$0xff]
      %s2293 = scalar_lea.vmem %s1, 896
      %v2294 = vld [vmem:[%s2293] sm:$0xff]
      %v2295 = vld [vmem:[%s2293 + $0x8] sm:$0xff]
      %v2296 = vld [vmem:[%s2293 + $0x10] sm:$0xff]
      %v2297 = vld [vmem:[%s2293 + $0x18] sm:$0xff]
      %v2298 = vld [vmem:[%s2293 + $0x20] sm:$0xff]
      %v2299 = vld [vmem:[%s2293 + $0x28] sm:$0xff]
      %v2300 = vld [vmem:[%s2293 + $0x30] sm:$0xff]
      %v2301 = vld [vmem:[%s2293 + $0x38] sm:$0xff]
      %v2302 = vld [vmem:[%s2293 + $0x40] sm:$0xff]
      %v2303 = vld [vmem:[%s2293 + $0x48] sm:$0xff]
      %v2304 = vld [vmem:[%s2293 + $0x50] sm:$0xff]
      %v2305 = vld [vmem:[%s2293 + $0x58] sm:$0xff]
      %v2306 = vld [vmem:[%s2293 + $0x60] sm:$0xff]
      %v2307 = vld [vmem:[%s2293 + $0x68] sm:$0xff]
      %v2308 = vld [vmem:[%s2293 + $0x70] sm:$0xff]
      %v2309 = vld [vmem:[%s2293 + $0x78] sm:$0xff]
      %2310 = vmatprep.subr.mxu0 0.0
      %2311 = vmatpush1.msra.mxu0 %v2294
      %2312 = vmatprep.subr.mxu0 0.0
      %2313 = vmatpush1.msra.mxu0 %v2295
      %2314 = vmatprep.subr.mxu0 0.0
      %2315 = vmatpush1.msra.mxu0 %v2296
      %2316 = vmatprep.subr.mxu0 0.0
      %2317 = vmatpush1.msra.mxu0 %v2297
      %2318 = vmatprep.subr.mxu0 0.0
      %2319 = vmatpush1.msra.mxu0 %v2298
      %2320 = vmatprep.subr.mxu0 0.0
      %2321 = vmatpush1.msra.mxu0 %v2299
      %2322 = vmatprep.subr.mxu0 0.0
      %2323 = vmatpush1.msra.mxu0 %v2300
      %2324 = vmatprep.subr.mxu0 0.0
      %2325 = vmatpush1.msra.mxu0 %v2301
      %2326 = vmatprep.subr.mxu0 0.0
      %2327 = vmatpush1.msra.mxu0 %v2302
      %2328 = vmatprep.subr.mxu0 0.0
      %2329 = vmatpush1.msra.mxu0 %v2303
      %2330 = vmatprep.subr.mxu0 0.0
      %2331 = vmatpush1.msra.mxu0 %v2304
      %2332 = vmatprep.subr.mxu0 0.0
      %2333 = vmatpush1.msra.mxu0 %v2305
      %2334 = vmatprep.subr.mxu0 0.0
      %2335 = vmatpush1.msra.mxu0 %v2306
      %2336 = vmatprep.subr.mxu0 0.0
      %2337 = vmatpush1.msra.mxu0 %v2307
      %2338 = vmatprep.subr.mxu0 0.0
      %2339 = vmatpush1.msra.mxu0 %v2308
      %2340 = vmatprep.subr.mxu0 0.0
      %2341 = vmatpush1.msra.mxu0 %v2309
      %2342 = vmatprep.subr.mxu0 0.0
      %2343 = vmatpush1.msra.mxu0 0.0
      %2344 = vmatprep.subr.mxu0 0.0
      %2345 = vmatpush1.msra.mxu0 0.0
      %2346 = vmatprep.subr.mxu0 0.0
      %2347 = vmatpush1.msra.mxu0 0.0
      %2348 = vmatprep.subr.mxu0 0.0
      %2349 = vmatpush1.msra.mxu0 0.0
      %2350 = vmatprep.subr.mxu0 0.0
      %2351 = vmatpush1.msra.mxu0 0.0
      %2352 = vmatprep.subr.mxu0 0.0
      %2353 = vmatpush1.msra.mxu0 0.0
      %2354 = vmatprep.subr.mxu0 0.0
      %2355 = vmatpush1.msra.mxu0 0.0
      %2356 = vmatprep.subr.mxu0 0.0
      %2357 = vmatpush1.msra.mxu0 0.0
      %2358 = vmatprep.subr.mxu0 0.0
      %2359 = vmatpush1.msra.mxu0 0.0
      %2360 = vmatprep.subr.mxu0 0.0
      %2361 = vmatpush1.msra.mxu0 0.0
      %2362 = vmatprep.subr.mxu0 0.0
      %2363 = vmatpush1.msra.mxu0 0.0
      %2364 = vmatprep.subr.mxu0 0.0
      %2365 = vmatpush1.msra.mxu0 0.0
      %2366 = vmatprep.subr.mxu0 0.0
      %2367 = vmatpush1.msra.mxu0 0.0
      %2368 = vmatprep.subr.mxu0 0.0
      %2369 = vmatpush1.msra.mxu0 0.0
      %2370 = vmatprep.subr.mxu0 0.0
      %2371 = vmatpush1.msra.mxu0 0.0
      %2372 = vmatprep.subr.mxu0 0.0
      %2373 = vmatpush1.msra.mxu0 0.0
      %2374 = vmatprep.mubr.f32.mxu0 0.0
      %2375 = vmatmul.mubr.f32.gmra.mrb[0].mxu0 %v2261
      %v2376 = vpop.f32.mrb[0].mxu0
      %v2377 = vadd.f32 0.0, %v2376
      %v2378 = vpop.f32.mrb[0].mxu0
      %2379 = vmatprep.mubr.f32.mxu0 0.0
      %2380 = vmatmul.mubr.f32.gmra.mrb[0].mxu0 %v2262
      %v2381 = vpop.f32.mrb[0].mxu0
      %v2382 = vadd.f32 0.0, %v2381
      %v2383 = vpop.f32.mrb[0].mxu0
      %2384 = vmatprep.mubr.f32.mxu0 0.0
      %2385 = vmatmul.mubr.f32.gmra.mrb[0].mxu0 %v2263
      %v2386 = vpop.f32.mrb[0].mxu0
      %v2387 = vadd.f32 0.0, %v2386
      %v2388 = vpop.f32.mrb[0].mxu0
      %2389 = vmatprep.mubr.f32.mxu0 0.0
      %2390 = vmatmul.mubr.f32.gmra.mrb[0].mxu0 %v2264
      %v2391 = vpop.f32.mrb[0].mxu0
      %v2392 = vadd.f32 0.0, %v2391
      %v2393 = vpop.f32.mrb[0].mxu0
      %2394 = vmatprep.mubr.f32.mxu0 0.0
      %2395 = vmatmul.mubr.f32.gmra.mrb[0].mxu0 %v2265
      %v2396 = vpop.f32.mrb[0].mxu0
      %v2397 = vadd.f32 0.0, %v2396
      %v2398 = vpop.f32.mrb[0].mxu0
      %2399 = vmatprep.mubr.f32.mxu0 0.0
      %2400 = vmatmul.mubr.f32.gmra.mrb[0].mxu0 %v2266
      %v2401 = vpop.f32.mrb[0].mxu0
      %v2402 = vadd.f32 0.0, %v2401
      %v2403 = vpop.f32.mrb[0].mxu0
      %2404 = vmatprep.mubr.f32.mxu0 0.0
      %2405 = vmatmul.mubr.f32.gmra.mrb[0].mxu0 %v2267
      %v2406 = vpop.f32.mrb[0].mxu0
      %v2407 = vadd.f32 0.0, %v2406
      %v2408 = vpop.f32.mrb[0].mxu0
      %2409 = vmatprep.mubr.f32.mxu0 0.0
      %2410 = vmatmul.mubr.f32.gmra.mrb[0].mxu0 %v2268
      %v2411 = vpop.f32.mrb[0].mxu0
      %v2412 = vadd.f32 0.0, %v2411
      %v2413 = vpop.f32.mrb[0].mxu0
      %2414 = vmatprep.mubr.f32.mxu0 0.0
      %2415 = vmatmul.mubr.f32.gmra.mrb[0].mxu0 %v2269
      %v2416 = vpop.f32.mrb[0].mxu0
      %v2417 = vadd.f32 0.0, %v2416
      %v2418 = vpop.f32.mrb[0].mxu0
      %2419 = vmatprep.mubr.f32.mxu0 0.0
      %2420 = vmatmul.mubr.f32.gmra.mrb[0].mxu0 %v2270
      %v2421 = vpop.f32.mrb[0].mxu0
      %v2422 = vadd.f32 0.0, %v2421
      %v2423 = vpop.f32.mrb[0].mxu0
      %2424 = vmatprep.mubr.f32.mxu0 0.0
      %2425 = vmatmul.mubr.f32.gmra.mrb[0].mxu0 %v2271
      %v2426 = vpop.f32.mrb[0].mxu0
      %v2427 = vadd.f32 0.0, %v2426
      %v2428 = vpop.f32.mrb[0].mxu0
      %2429 = vmatprep.mubr.f32.mxu0 0.0
      %2430 = vmatmul.mubr.f32.gmra.mrb[0].mxu0 %v2272
      %v2431 = vpop.f32.mrb[0].mxu0
      %v2432 = vadd.f32 0.0, %v2431
      %v2433 = vpop.f32.mrb[0].mxu0
      %2434 = vmatprep.mubr.f32.mxu0 0.0
      %2435 = vmatmul.mubr.f32.gmra.mrb[0].mxu0 %v2273
      %v2436 = vpop.f32.mrb[0].mxu0
      %v2437 = vadd.f32 0.0, %v2436
      %v2438 = vpop.f32.mrb[0].mxu0
      %2439 = vmatprep.mubr.f32.mxu0 0.0
      %2440 = vmatmul.mubr.f32.gmra.mrb[0].mxu0 %v2274
      %v2441 = vpop.f32.mrb[0].mxu0
      %v2442 = vadd.f32 0.0, %v2441
      %v2443 = vpop.f32.mrb[0].mxu0
      %2444 = vmatprep.mubr.f32.mxu0 0.0
      %2445 = vmatmul.mubr.f32.gmra.mrb[0].mxu0 %v2275
      %v2446 = vpop.f32.mrb[0].mxu0
      %v2447 = vadd.f32 0.0, %v2446
      %v2448 = vpop.f32.mrb[0].mxu0
      %2449 = vmatprep.mubr.f32.mxu0 0.0
      %2450 = vmatmul.mubr.f32.gmra.mrb[0].mxu0 %v2276
      %v2451 = vpop.f32.mrb[0].mxu0
      %v2452 = vadd.f32 0.0, %v2451
      %v2453 = vpop.f32.mrb[0].mxu0
      %2454 = vmatprep.mubr.f32.mxu0 0.0
      %2455 = vmatmul.mubr.f32.gmra.mrb[0].mxu0 %v2277
      %v2456 = vpop.f32.mrb[0].mxu0
      %v2457 = vadd.f32 0.0, %v2456
      %v2458 = vpop.f32.mrb[0].mxu0
      %2459 = vmatprep.mubr.f32.mxu0 0.0
      %2460 = vmatmul.mubr.f32.gmra.mrb[0].mxu0 %v2278
      %v2461 = vpop.f32.mrb[0].mxu0
      %v2462 = vadd.f32 0.0, %v2461
      %v2463 = vpop.f32.mrb[0].mxu0
      %2464 = vmatprep.mubr.f32.mxu0 0.0
      %2465 = vmatmul.mubr.f32.gmra.mrb[0].mxu0 %v2279
      %v2466 = vpop.f32.mrb[0].mxu0
      %v2467 = vadd.f32 0.0, %v2466
      %v2468 = vpop.f32.mrb[0].mxu0
      %2469 = vmatprep.mubr.f32.mxu0 0.0
      %2470 = vmatmul.mubr.f32.gmra.mrb[0].mxu0 %v2280
      %v2471 = vpop.f32.mrb[0].mxu0
      %v2472 = vadd.f32 0.0, %v2471
      %v2473 = vpop.f32.mrb[0].mxu0
      %2474 = vmatprep.mubr.f32.mxu0 0.0
      %2475 = vmatmul.mubr.f32.gmra.mrb[0].mxu0 %v2281
      %v2476 = vpop.f32.mrb[0].mxu0
      %v2477 = vadd.f32 0.0, %v2476
      %v2478 = vpop.f32.mrb[0].mxu0
      %2479 = vmatprep.mubr.f32.mxu0 0.0
      %2480 = vmatmul.mubr.f32.gmra.mrb[0].mxu0 %v2282
      %v2481 = vpop.f32.mrb[0].mxu0
      %v2482 = vadd.f32 0.0, %v2481
      %v2483 = vpop.f32.mrb[0].mxu0
      %2484 = vmatprep.mubr.f32.mxu0 0.0
      %2485 = vmatmul.mubr.f32.gmra.mrb[0].mxu0 %v2283
      %v2486 = vpop.f32.mrb[0].mxu0
      %v2487 = vadd.f32 0.0, %v2486
      %v2488 = vpop.f32.mrb[0].mxu0
      %2489 = vmatprep.mubr.f32.mxu0 0.0
      %2490 = vmatmul.mubr.f32.gmra.mrb[0].mxu0 %v2284
      %v2491 = vpop.f32.mrb[0].mxu0
      %v2492 = vadd.f32 0.0, %v2491
      %v2493 = vpop.f32.mrb[0].mxu0
      %2494 = vmatprep.mubr.f32.mxu0 0.0
      %2495 = vmatmul.mubr.f32.gmra.mrb[0].mxu0 %v2285
      %v2496 = vpop.f32.mrb[0].mxu0
      %v2497 = vadd.f32 0.0, %v2496
      %v2498 = vpop.f32.mrb[0].mxu0
      %2499 = vmatprep.mubr.f32.mxu0 0.0
      %2500 = vmatmul.mubr.f32.gmra.mrb[0].mxu0 %v2286
      %v2501 = vpop.f32.mrb[0].mxu0
      %v2502 = vadd.f32 0.0, %v2501
      %v2503 = vpop.f32.mrb[0].mxu0
      %2504 = vmatprep.mubr.f32.mxu0 0.0
      %2505 = vmatmul.mubr.f32.gmra.mrb[0].mxu0 %v2287
      %v2506 = vpop.f32.mrb[0].mxu0
      %v2507 = vadd.f32 0.0, %v2506
      %v2508 = vpop.f32.mrb[0].mxu0
      %2509 = vmatprep.mubr.f32.mxu0 0.0
      %2510 = vmatmul.mubr.f32.gmra.mrb[0].mxu0 %v2288
      %v2511 = vpop.f32.mrb[0].mxu0
      %v2512 = vadd.f32 0.0, %v2511
      %v2513 = vpop.f32.mrb[0].mxu0
      %2514 = vmatprep.mubr.f32.mxu0 0.0
      %2515 = vmatmul.mubr.f32.gmra.mrb[0].mxu0 %v2289
      %v2516 = vpop.f32.mrb[0].mxu0
      %v2517 = vadd.f32 0.0, %v2516
      %v2518 = vpop.f32.mrb[0].mxu0
      %2519 = vmatprep.mubr.f32.mxu0 0.0
      %2520 = vmatmul.mubr.f32.gmra.mrb[0].mxu0 %v2290
      %v2521 = vpop.f32.mrb[0].mxu0
      %v2522 = vadd.f32 0.0, %v2521
      %v2523 = vpop.f32.mrb[0].mxu0
      %2524 = vmatprep.mubr.f32.mxu0 0.0
      %2525 = vmatmul.mubr.f32.gmra.mrb[0].mxu0 %v2291
      %v2526 = vpop.f32.mrb[0].mxu0
      %v2527 = vadd.f32 0.0, %v2526
      %v2528 = vpop.f32.mrb[0].mxu0
      %2529 = vmatprep.mubr.f32.mxu0 0.0
      %2530 = vmatmul.mubr.f32.gmra.mrb[0].mxu0 %v2292
      %v2531 = vpop.f32.mrb[0].mxu0
      %v2532 = vadd.f32 0.0, %v2531
      %v2533 = vpop.f32.mrb[0].mxu0
      %2534 = vdwg.mxu0
      %v2535 = vadd.f32 %v2229, %v2377
      %v2536 = vadd.f32 %v2230, %v2382
      %v2537 = vadd.f32 %v2231, %v2387
      %v2538 = vadd.f32 %v2232, %v2392
      %v2539 = vadd.f32 %v2233, %v2397
      %v2540 = vadd.f32 %v2234, %v2402
      %v2541 = vadd.f32 %v2235, %v2407
      %v2542 = vadd.f32 %v2236, %v2412
      %v2543 = vadd.f32 %v2237, %v2417
      %v2544 = vadd.f32 %v2238, %v2422
      %v2545 = vadd.f32 %v2239, %v2427
      %v2546 = vadd.f32 %v2240, %v2432
      %v2547 = vadd.f32 %v2241, %v2437
      %v2548 = vadd.f32 %v2242, %v2442
      %v2549 = vadd.f32 %v2243, %v2447
      %v2550 = vadd.f32 %v2244, %v2452
      %v2551 = vadd.f32 %v2245, %v2457
      %v2552 = vadd.f32 %v2246, %v2462
      %v2553 = vadd.f32 %v2247, %v2467
      %v2554 = vadd.f32 %v2248, %v2472
      %v2555 = vadd.f32 %v2249, %v2477
      %v2556 = vadd.f32 %v2250, %v2482
      %v2557 = vadd.f32 %v2251, %v2487
      %v2558 = vadd.f32 %v2252, %v2492
      %v2559 = vadd.f32 %v2253, %v2497
      %v2560 = vadd.f32 %v2254, %v2502
      %v2561 = vadd.f32 %v2255, %v2507
      %v2562 = vadd.f32 %v2256, %v2512
      %v2563 = vadd.f32 %v2257, %v2517
      %v2564 = vadd.f32 %v2258, %v2522
      %v2565 = vadd.f32 %v2259, %v2527
      %v2566 = vadd.f32 %v2260, %v2532
      %v2567 = vld [vmem:[%s1954 + $0x2] sm:$0xff]
      %v2568 = vld [vmem:[%s1954 + $0xa] sm:$0xff]
      %v2569 = vld [vmem:[%s1954 + $0x1a] sm:$0xff]
      %v2570 = vld [vmem:[%s1954 + $0x22] sm:$0xff]
      %v2571 = vld [vmem:[%s1954 + $0x32] sm:$0xff]
      %v2572 = vld [vmem:[%s1954 + $0x3a] sm:$0xff]
      %v2573 = vld [vmem:[%s1954 + $0x4a] sm:$0xff]
      %v2574 = vld [vmem:[%s1954 + $0x52] sm:$0xff]
      %v2575 = vld [vmem:[%s1954 + $0x62] sm:$0xff]
      %v2576 = vld [vmem:[%s1954 + $0x6a] sm:$0xff]
      %v2577 = vld [vmem:[%s1954 + $0x7a] sm:$0xff]
      %v2578 = vld [vmem:[%s1954 + $0x82] sm:$0xff]
      %v2579 = vld [vmem:[%s1954 + $0x92] sm:$0xff]
      %v2580 = vld [vmem:[%s1954 + $0x9a] sm:$0xff]
      %v2581 = vld [vmem:[%s1954 + $0xaa] sm:$0xff]
      %v2582 = vld [vmem:[%s1954 + $0xb2] sm:$0xff]
      %v2583 = vld [vmem:[%s1954 + $0xc2] sm:$0xff]
      %v2584 = vld [vmem:[%s1954 + $0xca] sm:$0xff]
      %v2585 = vld [vmem:[%s1954 + $0xda] sm:$0xff]
      %v2586 = vld [vmem:[%s1954 + $0xe2] sm:$0xff]
      %v2587 = vld [vmem:[%s1954 + $0xf2] sm:$0xff]
      %v2588 = vld [vmem:[%s1954 + $0xfa] sm:$0xff]
      %v2589 = vld [vmem:[%s1954 + $0x10a] sm:$0xff]
      %v2590 = vld [vmem:[%s1954 + $0x112] sm:$0xff]
      %v2591 = vld [vmem:[%s1954 + $0x122] sm:$0xff]
      %v2592 = vld [vmem:[%s1954 + $0x12a] sm:$0xff]
      %v2593 = vld [vmem:[%s1954 + $0x13a] sm:$0xff]
      %v2594 = vld [vmem:[%s1954 + $0x142] sm:$0xff]
      %v2595 = vld [vmem:[%s1954 + $0x152] sm:$0xff]
      %v2596 = vld [vmem:[%s1954 + $0x15a] sm:$0xff]
      %v2597 = vld [vmem:[%s1954 + $0x16a] sm:$0xff]
      %v2598 = vld [vmem:[%s1954 + $0x172] sm:$0xff]
      %s2599 = scalar_lea.vmem %s1, 1024
      %v2600 = vld [vmem:[%s2599] sm:$0xff]
      %v2601 = vld [vmem:[%s2599 + $0x8] sm:$0xff]
      %v2602 = vld [vmem:[%s2599 + $0x10] sm:$0xff]
      %v2603 = vld [vmem:[%s2599 + $0x18] sm:$0xff]
      %v2604 = vld [vmem:[%s2599 + $0x20] sm:$0xff]
      %v2605 = vld [vmem:[%s2599 + $0x28] sm:$0xff]
      %v2606 = vld [vmem:[%s2599 + $0x30] sm:$0xff]
      %v2607 = vld [vmem:[%s2599 + $0x38] sm:$0xff]
      %v2608 = vld [vmem:[%s2599 + $0x40] sm:$0xff]
      %v2609 = vld [vmem:[%s2599 + $0x48] sm:$0xff]
      %v2610 = vld [vmem:[%s2599 + $0x50] sm:$0xff]
      %v2611 = vld [vmem:[%s2599 + $0x58] sm:$0xff]
      %v2612 = vld [vmem:[%s2599 + $0x60] sm:$0xff]
      %v2613 = vld [vmem:[%s2599 + $0x68] sm:$0xff]
      %v2614 = vld [vmem:[%s2599 + $0x70] sm:$0xff]
      %v2615 = vld [vmem:[%s2599 + $0x78] sm:$0xff]
      %2616 = vmatprep.subr.mxu0 0.0
      %2617 = vmatpush1.msra.mxu0 %v2600
      %2618 = vmatprep.subr.mxu0 0.0
      %2619 = vmatpush1.msra.mxu0 %v2601
      %2620 = vmatprep.subr.mxu0 0.0
      %2621 = vmatpush1.msra.mxu0 %v2602
      %2622 = vmatprep.subr.mxu0 0.0
      %2623 = vmatpush1.msra.mxu0 %v2603
      %2624 = vmatprep.subr.mxu0 0.0
      %2625 = vmatpush1.msra.mxu0 %v2604
      %2626 = vmatprep.subr.mxu0 0.0
      %2627 = vmatpush1.msra.mxu0 %v2605
      %2628 = vmatprep.subr.mxu0 0.0
      %2629 = vmatpush1.msra.mxu0 %v2606
      %2630 = vmatprep.subr.mxu0 0.0
      %2631 = vmatpush1.msra.mxu0 %v2607
      %2632 = vmatprep.subr.mxu0 0.0
      %2633 = vmatpush1.msra.mxu0 %v2608
      %2634 = vmatprep.subr.mxu0 0.0
      %2635 = vmatpush1.msra.mxu0 %v2609
      %2636 = vmatprep.subr.mxu0 0.0
      %2637 = vmatpush1.msra.mxu0 %v2610
      %2638 = vmatprep.subr.mxu0 0.0
      %2639 = vmatpush1.msra.mxu0 %v2611
      %2640 = vmatprep.subr.mxu0 0.0
      %2641 = vmatpush1.msra.mxu0 %v2612
      %2642 = vmatprep.subr.mxu0 0.0
      %2643 = vmatpush1.msra.mxu0 %v2613
      %2644 = vmatprep.subr.mxu0 0.0
      %2645 = vmatpush1.msra.mxu0 %v2614
      %2646 = vmatprep.subr.mxu0 0.0
      %2647 = vmatpush1.msra.mxu0 %v2615
      %2648 = vmatprep.subr.mxu0 0.0
      %2649 = vmatpush1.msra.mxu0 0.0
      %2650 = vmatprep.subr.mxu0 0.0
      %2651 = vmatpush1.msra.mxu0 0.0
      %2652 = vmatprep.subr.mxu0 0.0
      %2653 = vmatpush1.msra.mxu0 0.0
      %2654 = vmatprep.subr.mxu0 0.0
      %2655 = vmatpush1.msra.mxu0 0.0
      %2656 = vmatprep.subr.mxu0 0.0
      %2657 = vmatpush1.msra.mxu0 0.0
      %2658 = vmatprep.subr.mxu0 0.0
      %2659 = vmatpush1.msra.mxu0 0.0
      %2660 = vmatprep.subr.mxu0 0.0
      %2661 = vmatpush1.msra.mxu0 0.0
      %2662 = vmatprep.subr.mxu0 0.0
      %2663 = vmatpush1.msra.mxu0 0.0
      %2664 = vmatprep.subr.mxu0 0.0
      %2665 = vmatpush1.msra.mxu0 0.0
      %2666 = vmatprep.subr.mxu0 0.0
      %2667 = vmatpush1.msra.mxu0 0.0
      %2668 = vmatprep.subr.mxu0 0.0
      %2669 = vmatpush1.msra.mxu0 0.0
      %2670 = vmatprep.subr.mxu0 0.0
      %2671 = vmatpush1.msra.mxu0 0.0
      %2672 = vmatprep.subr.mxu0 0.0
      %2673 = vmatpush1.msra.mxu0 0.0
      %2674 = vmatprep.subr.mxu0 0.0
      %2675 = vmatpush1.msra.mxu0 0.0
      %2676 = vmatprep.subr.mxu0 0.0
      %2677 = vmatpush1.msra.mxu0 0.0
      %2678 = vmatprep.subr.mxu0 0.0
      %2679 = vmatpush1.msra.mxu0 0.0
      %2680 = vmatprep.mubr.f32.mxu0 0.0
      %2681 = vmatmul.mubr.f32.gmra.mrb[0].mxu0 %v2567
      %v2682 = vpop.f32.mrb[0].mxu0
      %v2683 = vadd.f32 0.0, %v2682
      %v2684 = vpop.f32.mrb[0].mxu0
      %2685 = vmatprep.mubr.f32.mxu0 0.0
      %2686 = vmatmul.mubr.f32.gmra.mrb[0].mxu0 %v2568
      %v2687 = vpop.f32.mrb[0].mxu0
      %v2688 = vadd.f32 0.0, %v2687
      %v2689 = vpop.f32.mrb[0].mxu0
      %2690 = vmatprep.mubr.f32.mxu0 0.0
      %2691 = vmatmul.mubr.f32.gmra.mrb[0].mxu0 %v2569
      %v2692 = vpop.f32.mrb[0].mxu0
      %v2693 = vadd.f32 0.0, %v2692
      %v2694 = vpop.f32.mrb[0].mxu0
      %2695 = vmatprep.mubr.f32.mxu0 0.0
      %2696 = vmatmul.mubr.f32.gmra.mrb[0].mxu0 %v2570
      %v2697 = vpop.f32.mrb[0].mxu0
      %v2698 = vadd.f32 0.0, %v2697
      %v2699 = vpop.f32.mrb[0].mxu0
      %2700 = vmatprep.mubr.f32.mxu0 0.0
      %2701 = vmatmul.mubr.f32.gmra.mrb[0].mxu0 %v2571
      %v2702 = vpop.f32.mrb[0].mxu0
      %v2703 = vadd.f32 0.0, %v2702
      %v2704 = vpop.f32.mrb[0].mxu0
      %2705 = vmatprep.mubr.f32.mxu0 0.0
      %2706 = vmatmul.mubr.f32.gmra.mrb[0].mxu0 %v2572
      %v2707 = vpop.f32.mrb[0].mxu0
      %v2708 = vadd.f32 0.0, %v2707
      %v2709 = vpop.f32.mrb[0].mxu0
      %2710 = vmatprep.mubr.f32.mxu0 0.0
      %2711 = vmatmul.mubr.f32.gmra.mrb[0].mxu0 %v2573
      %v2712 = vpop.f32.mrb[0].mxu0
      %v2713 = vadd.f32 0.0, %v2712
      %v2714 = vpop.f32.mrb[0].mxu0
      %2715 = vmatprep.mubr.f32.mxu0 0.0
      %2716 = vmatmul.mubr.f32.gmra.mrb[0].mxu0 %v2574
      %v2717 = vpop.f32.mrb[0].mxu0
      %v2718 = vadd.f32 0.0, %v2717
      %v2719 = vpop.f32.mrb[0].mxu0
      %2720 = vmatprep.mubr.f32.mxu0 0.0
      %2721 = vmatmul.mubr.f32.gmra.mrb[0].mxu0 %v2575
      %v2722 = vpop.f32.mrb[0].mxu0
      %v2723 = vadd.f32 0.0, %v2722
      %v2724 = vpop.f32.mrb[0].mxu0
      %2725 = vmatprep.mubr.f32.mxu0 0.0
      %2726 = vmatmul.mubr.f32.gmra.mrb[0].mxu0 %v2576
      %v2727 = vpop.f32.mrb[0].mxu0
      %v2728 = vadd.f32 0.0, %v2727
      %v2729 = vpop.f32.mrb[0].mxu0
      %2730 = vmatprep.mubr.f32.mxu0 0.0
      %2731 = vmatmul.mubr.f32.gmra.mrb[0].mxu0 %v2577
      %v2732 = vpop.f32.mrb[0].mxu0
      %v2733 = vadd.f32 0.0, %v2732
      %v2734 = vpop.f32.mrb[0].mxu0
      %2735 = vmatprep.mubr.f32.mxu0 0.0
      %2736 = vmatmul.mubr.f32.gmra.mrb[0].mxu0 %v2578
      %v2737 = vpop.f32.mrb[0].mxu0
      %v2738 = vadd.f32 0.0, %v2737
      %v2739 = vpop.f32.mrb[0].mxu0
      %2740 = vmatprep.mubr.f32.mxu0 0.0
      %2741 = vmatmul.mubr.f32.gmra.mrb[0].mxu0 %v2579
      %v2742 = vpop.f32.mrb[0].mxu0
      %v2743 = vadd.f32 0.0, %v2742
      %v2744 = vpop.f32.mrb[0].mxu0
      %2745 = vmatprep.mubr.f32.mxu0 0.0
      %2746 = vmatmul.mubr.f32.gmra.mrb[0].mxu0 %v2580
      %v2747 = vpop.f32.mrb[0].mxu0
      %v2748 = vadd.f32 0.0, %v2747
      %v2749 = vpop.f32.mrb[0].mxu0
      %2750 = vmatprep.mubr.f32.mxu0 0.0
      %2751 = vmatmul.mubr.f32.gmra.mrb[0].mxu0 %v2581
      %v2752 = vpop.f32.mrb[0].mxu0
      %v2753 = vadd.f32 0.0, %v2752
      %v2754 = vpop.f32.mrb[0].mxu0
      %2755 = vmatprep.mubr.f32.mxu0 0.0
      %2756 = vmatmul.mubr.f32.gmra.mrb[0].mxu0 %v2582
      %v2757 = vpop.f32.mrb[0].mxu0
      %v2758 = vadd.f32 0.0, %v2757
      %v2759 = vpop.f32.mrb[0].mxu0
      %2760 = vmatprep.mubr.f32.mxu0 0.0
      %2761 = vmatmul.mubr.f32.gmra.mrb[0].mxu0 %v2583
      %v2762 = vpop.f32.mrb[0].mxu0
      %v2763 = vadd.f32 0.0, %v2762
      %v2764 = vpop.f32.mrb[0].mxu0
      %2765 = vmatprep.mubr.f32.mxu0 0.0
      %2766 = vmatmul.mubr.f32.gmra.mrb[0].mxu0 %v2584
      %v2767 = vpop.f32.mrb[0].mxu0
      %v2768 = vadd.f32 0.0, %v2767
      %v2769 = vpop.f32.mrb[0].mxu0
      %2770 = vmatprep.mubr.f32.mxu0 0.0
      %2771 = vmatmul.mubr.f32.gmra.mrb[0].mxu0 %v2585
      %v2772 = vpop.f32.mrb[0].mxu0
      %v2773 = vadd.f32 0.0, %v2772
      %v2774 = vpop.f32.mrb[0].mxu0
      %2775 = vmatprep.mubr.f32.mxu0 0.0
      %2776 = vmatmul.mubr.f32.gmra.mrb[0].mxu0 %v2586
      %v2777 = vpop.f32.mrb[0].mxu0
      %v2778 = vadd.f32 0.0, %v2777
      %v2779 = vpop.f32.mrb[0].mxu0
      %2780 = vmatprep.mubr.f32.mxu0 0.0
      %2781 = vmatmul.mubr.f32.gmra.mrb[0].mxu0 %v2587
      %v2782 = vpop.f32.mrb[0].mxu0
      %v2783 = vadd.f32 0.0, %v2782
      %v2784 = vpop.f32.mrb[0].mxu0
      %2785 = vmatprep.mubr.f32.mxu0 0.0
      %2786 = vmatmul.mubr.f32.gmra.mrb[0].mxu0 %v2588
      %v2787 = vpop.f32.mrb[0].mxu0
      %v2788 = vadd.f32 0.0, %v2787
      %v2789 = vpop.f32.mrb[0].mxu0
      %2790 = vmatprep.mubr.f32.mxu0 0.0
      %2791 = vmatmul.mubr.f32.gmra.mrb[0].mxu0 %v2589
      %v2792 = vpop.f32.mrb[0].mxu0
      %v2793 = vadd.f32 0.0, %v2792
      %v2794 = vpop.f32.mrb[0].mxu0
      %2795 = vmatprep.mubr.f32.mxu0 0.0
      %2796 = vmatmul.mubr.f32.gmra.mrb[0].mxu0 %v2590
      %v2797 = vpop.f32.mrb[0].mxu0
      %v2798 = vadd.f32 0.0, %v2797
      %v2799 = vpop.f32.mrb[0].mxu0
      %2800 = vmatprep.mubr.f32.mxu0 0.0
      %2801 = vmatmul.mubr.f32.gmra.mrb[0].mxu0 %v2591
      %v2802 = vpop.f32.mrb[0].mxu0
      %v2803 = vadd.f32 0.0, %v2802
      %v2804 = vpop.f32.mrb[0].mxu0
      %2805 = vmatprep.mubr.f32.mxu0 0.0
      %2806 = vmatmul.mubr.f32.gmra.mrb[0].mxu0 %v2592
      %v2807 = vpop.f32.mrb[0].mxu0
      %v2808 = vadd.f32 0.0, %v2807
      %v2809 = vpop.f32.mrb[0].mxu0
      %2810 = vmatprep.mubr.f32.mxu0 0.0
      %2811 = vmatmul.mubr.f32.gmra.mrb[0].mxu0 %v2593
      %v2812 = vpop.f32.mrb[0].mxu0
      %v2813 = vadd.f32 0.0, %v2812
      %v2814 = vpop.f32.mrb[0].mxu0
      %2815 = vmatprep.mubr.f32.mxu0 0.0
      %2816 = vmatmul.mubr.f32.gmra.mrb[0].mxu0 %v2594
      %v2817 = vpop.f32.mrb[0].mxu0
      %v2818 = vadd.f32 0.0, %v2817
      %v2819 = vpop.f32.mrb[0].mxu0
      %2820 = vmatprep.mubr.f32.mxu0 0.0
      %2821 = vmatmul.mubr.f32.gmra.mrb[0].mxu0 %v2595
      %v2822 = vpop.f32.mrb[0].mxu0
      %v2823 = vadd.f32 0.0, %v2822
      %v2824 = vpop.f32.mrb[0].mxu0
      %2825 = vmatprep.mubr.f32.mxu0 0.0
      %2826 = vmatmul.mubr.f32.gmra.mrb[0].mxu0 %v2596
      %v2827 = vpop.f32.mrb[0].mxu0
      %v2828 = vadd.f32 0.0, %v2827
      %v2829 = vpop.f32.mrb[0].mxu0
      %2830 = vmatprep.mubr.f32.mxu0 0.0
      %2831 = vmatmul.mubr.f32.gmra.mrb[0].mxu0 %v2597
      %v2832 = vpop.f32.mrb[0].mxu0
      %v2833 = vadd.f32 0.0, %v2832
      %v2834 = vpop.f32.mrb[0].mxu0
      %2835 = vmatprep.mubr.f32.mxu0 0.0
      %2836 = vmatmul.mubr.f32.gmra.mrb[0].mxu0 %v2598
      %v2837 = vpop.f32.mrb[0].mxu0
      %v2838 = vadd.f32 0.0, %v2837
      %v2839 = vpop.f32.mrb[0].mxu0
      %2840 = vdwg.mxu0
      %v2841 = vadd.f32 %v2535, %v2683
      %v2842 = vadd.f32 %v2536, %v2688
      %v2843 = vadd.f32 %v2537, %v2693
      %v2844 = vadd.f32 %v2538, %v2698
      %v2845 = vadd.f32 %v2539, %v2703
      %v2846 = vadd.f32 %v2540, %v2708
      %v2847 = vadd.f32 %v2541, %v2713
      %v2848 = vadd.f32 %v2542, %v2718
      %v2849 = vadd.f32 %v2543, %v2723
      %v2850 = vadd.f32 %v2544, %v2728
      %v2851 = vadd.f32 %v2545, %v2733
      %v2852 = vadd.f32 %v2546, %v2738
      %v2853 = vadd.f32 %v2547, %v2743
      %v2854 = vadd.f32 %v2548, %v2748
      %v2855 = vadd.f32 %v2549, %v2753
      %v2856 = vadd.f32 %v2550, %v2758
      %v2857 = vadd.f32 %v2551, %v2763
      %v2858 = vadd.f32 %v2552, %v2768
      %v2859 = vadd.f32 %v2553, %v2773
      %v2860 = vadd.f32 %v2554, %v2778
      %v2861 = vadd.f32 %v2555, %v2783
      %v2862 = vadd.f32 %v2556, %v2788
      %v2863 = vadd.f32 %v2557, %v2793
      %v2864 = vadd.f32 %v2558, %v2798
      %v2865 = vadd.f32 %v2559, %v2803
      %v2866 = vadd.f32 %v2560, %v2808
      %v2867 = vadd.f32 %v2561, %v2813
      %v2868 = vadd.f32 %v2562, %v2818
      %v2869 = vadd.f32 %v2563, %v2823
      %v2870 = vadd.f32 %v2564, %v2828
      %v2871 = vadd.f32 %v2565, %v2833
      %v2872 = vadd.f32 %v2566, %v2838
      %2873 = vst [vmem:[%s177] sm:$0xff] %v2841
      %2874 = vst [vmem:[%s177 + $0x8] sm:$0xff] %v2842
      %2875 = vst [vmem:[%s177 + $0x10] sm:$0xff] %v2843
      %2876 = vst [vmem:[%s177 + $0x18] sm:$0xff] %v2844
      %2877 = vst [vmem:[%s177 + $0x20] sm:$0xff] %v2845
      %2878 = vst [vmem:[%s177 + $0x28] sm:$0xff] %v2846
      %2879 = vst [vmem:[%s177 + $0x30] sm:$0xff] %v2847
      %2880 = vst [vmem:[%s177 + $0x38] sm:$0xff] %v2848
      %2881 = vst [vmem:[%s177 + $0x40] sm:$0xff] %v2849
      %2882 = vst [vmem:[%s177 + $0x48] sm:$0xff] %v2850
      %2883 = vst [vmem:[%s177 + $0x50] sm:$0xff] %v2851
      %2884 = vst [vmem:[%s177 + $0x58] sm:$0xff] %v2852
      %2885 = vst [vmem:[%s177 + $0x60] sm:$0xff] %v2853
      %2886 = vst [vmem:[%s177 + $0x68] sm:$0xff] %v2854
      %2887 = vst [vmem:[%s177 + $0x70] sm:$0xff] %v2855
      %2888 = vst [vmem:[%s177 + $0x78] sm:$0xff] %v2856
      %2889 = vst [vmem:[%s177 + $0x80] sm:$0xff] %v2857
      %2890 = vst [vmem:[%s177 + $0x88] sm:$0xff] %v2858
      %2891 = vst [vmem:[%s177 + $0x90] sm:$0xff] %v2859
      %2892 = vst [vmem:[%s177 + $0x98] sm:$0xff] %v2860
      %2893 = vst [vmem:[%s177 + $0xa0] sm:$0xff] %v2861
      %2894 = vst [vmem:[%s177 + $0xa8] sm:$0xff] %v2862
      %2895 = vst [vmem:[%s177 + $0xb0] sm:$0xff] %v2863
      %2896 = vst [vmem:[%s177 + $0xb8] sm:$0xff] %v2864
      %2897 = vst [vmem:[%s177 + $0xc0] sm:$0xff] %v2865
      %2898 = vst [vmem:[%s177 + $0xc8] sm:$0xff] %v2866
      %2899 = vst [vmem:[%s177 + $0xd0] sm:$0xff] %v2867
      %2900 = vst [vmem:[%s177 + $0xd8] sm:$0xff] %v2868
      %2901 = vst [vmem:[%s177 + $0xe0] sm:$0xff] %v2869
      %2902 = vst [vmem:[%s177 + $0xe8] sm:$0xff] %v2870
      %2903 = vst [vmem:[%s177 + $0xf0] sm:$0xff] %v2871
      %2904 = vst [vmem:[%s177 + $0xf8] sm:$0xff] %v2872
      %v2905 = vadd.f32 %v2841, %v2842
      %v2906 = vadd.f32 %v2905, %v2843
      %v2907 = vadd.f32 %v2906, %v2844
      %v2908 = vadd.f32 %v2907, %v2845
      %v2909 = vadd.f32 %v2908, %v2846
      %v2910 = vadd.f32 %v2909, %v2847
      %v2911 = vadd.f32 %v2910, %v2848
      %v2912 = vadd.f32 %v2911, %v2849
      %v2913 = vadd.f32 %v2912, %v2850
      %v2914 = vadd.f32 %v2913, %v2851
      %v2915 = vadd.f32 %v2914, %v2852
      %v2916 = vadd.f32 %v2915, %v2853
      %v2917 = vadd.f32 %v2916, %v2854
      %v2918 = vadd.f32 %v2917, %v2855
      %v2919 = vadd.f32 %v2918, %v2856
      %v2920 = vadd.f32 %v2919, %v2857
      %v2921 = vadd.f32 %v2920, %v2858
      %v2922 = vadd.f32 %v2921, %v2859
      %v2923 = vadd.f32 %v2922, %v2860
      %v2924 = vadd.f32 %v2923, %v2861
      %v2925 = vadd.f32 %v2924, %v2862
      %v2926 = vadd.f32 %v2925, %v2863
      %v2927 = vadd.f32 %v2926, %v2864
      %v2928 = vadd.f32 %v2927, %v2865
      %v2929 = vadd.f32 %v2928, %v2866
      %v2930 = vadd.f32 %v2929, %v2867
      %v2931 = vadd.f32 %v2930, %v2868
      %v2932 = vadd.f32 %v2931, %v2869
      %v2933 = vadd.f32 %v2932, %v2870
      %v2934 = vadd.f32 %v2933, %v2871
      %v2935 = vadd.f32 %v2934, %v2872
      %v2936 = vrot.slane %v2935, 4
      %v2937 = vadd.f32 %v2935, %v2936
      %v2938 = vrot.slane %v2937, 2
      %v2939 = vadd.f32 %v2937, %v2938
      %v2940 = vrot.slane %v2939, 1
      %v2941 = vadd.f32 %v2939, %v2940
      %2942 = vst [vmem:[%s181] sm:$0x1] %v2941
      %v2943 = vmul.f32 %v2841, %v2841
      %v2944 = vmul.f32 %v2842, %v2842
      %v2945 = vmul.f32 %v2843, %v2843
      %v2946 = vmul.f32 %v2844, %v2844
      %v2947 = vmul.f32 %v2845, %v2845
      %v2948 = vmul.f32 %v2846, %v2846
      %v2949 = vmul.f32 %v2847, %v2847
      %v2950 = vmul.f32 %v2848, %v2848
      %v2951 = vmul.f32 %v2849, %v2849
      %v2952 = vmul.f32 %v2850, %v2850
      %v2953 = vmul.f32 %v2851, %v2851
      %v2954 = vmul.f32 %v2852, %v2852
      %v2955 = vmul.f32 %v2853, %v2853
      %v2956 = vmul.f32 %v2854, %v2854
      %v2957 = vmul.f32 %v2855, %v2855
      %v2958 = vmul.f32 %v2856, %v2856
      %v2959 = vmul.f32 %v2857, %v2857
      %v2960 = vmul.f32 %v2858, %v2858
      %v2961 = vmul.f32 %v2859, %v2859
      %v2962 = vmul.f32 %v2860, %v2860
      %v2963 = vmul.f32 %v2861, %v2861
      %v2964 = vmul.f32 %v2862, %v2862
      %v2965 = vmul.f32 %v2863, %v2863
      %v2966 = vmul.f32 %v2864, %v2864
      %v2967 = vmul.f32 %v2865, %v2865
      %v2968 = vmul.f32 %v2866, %v2866
      %v2969 = vmul.f32 %v2867, %v2867
      %v2970 = vmul.f32 %v2868, %v2868
      %v2971 = vmul.f32 %v2869, %v2869
      %v2972 = vmul.f32 %v2870, %v2870
      %v2973 = vmul.f32 %v2871, %v2871
      %v2974 = vmul.f32 %v2872, %v2872
      %v2975 = vadd.f32 %v2943, %v2944
      %v2976 = vadd.f32 %v2975, %v2945
      %v2977 = vadd.f32 %v2976, %v2946
      %v2978 = vadd.f32 %v2977, %v2947
      %v2979 = vadd.f32 %v2978, %v2948
      %v2980 = vadd.f32 %v2979, %v2949
      %v2981 = vadd.f32 %v2980, %v2950
      %v2982 = vadd.f32 %v2981, %v2951
      %v2983 = vadd.f32 %v2982, %v2952
      %v2984 = vadd.f32 %v2983, %v2953
      %v2985 = vadd.f32 %v2984, %v2954
      %v2986 = vadd.f32 %v2985, %v2955
      %v2987 = vadd.f32 %v2986, %v2956
      %v2988 = vadd.f32 %v2987, %v2957
      %v2989 = vadd.f32 %v2988, %v2958
      %v2990 = vadd.f32 %v2989, %v2959
      %v2991 = vadd.f32 %v2990, %v2960
      %v2992 = vadd.f32 %v2991, %v2961
      %v2993 = vadd.f32 %v2992, %v2962
      %v2994 = vadd.f32 %v2993, %v2963
      %v2995 = vadd.f32 %v2994, %v2964
      %v2996 = vadd.f32 %v2995, %v2965
      %v2997 = vadd.f32 %v2996, %v2966
      %v2998 = vadd.f32 %v2997, %v2967
      %v2999 = vadd.f32 %v2998, %v2968
      %v3000 = vadd.f32 %v2999, %v2969
      %v3001 = vadd.f32 %v3000, %v2970
      %v3002 = vadd.f32 %v3001, %v2971
      %v3003 = vadd.f32 %v3002, %v2972
      %v3004 = vadd.f32 %v3003, %v2973
      %v3005 = vadd.f32 %v3004, %v2974
      %v3006 = vrot.slane %v3005, 4
      %v3007 = vadd.f32 %v3005, %v3006
      %v3008 = vrot.slane %v3007, 2
      %v3009 = vadd.f32 %v3007, %v3008
      %v3010 = vrot.slane %v3009, 1
      %v3011 = vadd.f32 %v3009, %v3010
      %3012 = vst [vmem:[%s181 + $0x1] sm:$0x1] %v3011
      %p3013 = scmp.lt.s32.totalorder %s15, 1
      %s3014 = scalar_select %p3013, %s15, 1
      %s3015 = smul.addr %s3014, 32
      %s3016 = smul.addr %s3015, 8
      %s3017 = scalar_lea.vmem %s2, %s3016
      %p3018 = scmp.lt.s32.totalorder %s15, 1
      %s3019 = scalar_select %p3018, %s15, 1
      %s3020 = smul.addr %s3019, 2
      %s3021 = scalar_lea.vmem %s3, %s3020
      // Predicated region
      $region29: #{simple_block.3} parent=27 // pred_check
        %p3022 = pneg %p80
      $region30: #{simple_block.3} parent=27 // pred_check_branch
        %3024 = sbr.rel (%p3022) target = $region32
      $region31: #{simple_block.3} parent=27 // pred_region
        _
      $region32: #{simple_block.3} parent=27 // pred_fallthru
        _
      // Predicated region
      $region33: #{simple_block.3} parent=27 // pred_check
        %p3025 = pneg %p106
      $region34: #{simple_block.3} parent=27 // pred_check_branch
        %3027 = sbr.rel (%p3025) target = $region36
      $region35: #{simple_block.3} parent=27 // pred_region
        _
      $region36: #{simple_block.3} parent=27 // pred_fallthru
        _
    $region28: #{simple_block.3} parent=5 // pred_fallthru
      _
    %p3028 = scmp.le.s32.totalorder 2, %s10
    // Predicated region
    $region37: #{simple_block.3} parent=5 // pred_check
      %p3029 = pneg %p3028
    $region38: #{simple_block.3} parent=5 // pred_check_branch
      %3031 = sbr.rel (%p3029) target = $region40
    $region39: #{simple_block.3} parent=5 // pred_region
      %s3032 = ssub.s32 %s10, 2
      // Predicated region
      $region41: #{simple_block.3} parent=39 // pred_check
        %p3033 = pneg %p86
      $region42: #{simple_block.3} parent=39 // pred_check_branch
        %3035 = sbr.rel (%p3033) target = $region44
      $region43: #{simple_block.3} parent=39 // pred_region
        %p3036 = scmp.lt.s32.totalorder %s16, 1
        %s3037 = scalar_select %p3036, %s16, 1
        %s3038 = smul.addr %s3037, 32
        %s3039 = smul.addr %s3038, 8
        %s3040 = scalar_lea.vmem %s2, %s3039
      $region44: #{simple_block.3} parent=39 // pred_fallthru
        _
      // Predicated region
      $region45: #{simple_block.3} parent=39 // pred_check
        %p3041 = pneg %p112
      $region46: #{simple_block.3} parent=39 // pred_check_branch
        %3043 = sbr.rel (%p3041) target = $region48
      $region47: #{simple_block.3} parent=39 // pred_region
        %p3044 = scmp.lt.s32.totalorder %s16, 1
        %s3045 = scalar_select %p3044, %s16, 1
        %s3046 = smul.addr %s3045, 2
        %s3047 = scalar_lea.vmem %s3, %s3046
      $region48: #{simple_block.3} parent=39 // pred_fallthru
        _
    $region40: #{simple_block.3} parent=5 // pred_fallthru
      _
  $region6: #{simple_block.3} parent=0 // loop_footer
    %s14 = sadd.s32 1, %s10
  $region7: #{simple_block.3} parent=0 // loop_footer_branch
    %9 = sbr.rel target = $region3
  $region8: #{simple_block.3} parent=0 // loop_exit
    _

// kernel: simple_block.4
$region0: #{simple_block.4}
  #allocation0 [shape = 'u32[]', space=smem, size = 0x4, offset = 0x4, fixed_abs, tag = 'smem constant byte address 0x4 - core index']
  #allocation1 [shape = 'u32[144,128]{1,0:T(1,128)}', space=vmem, size = 0x12000, scoped, tag = 'internal scratch']
  #allocation2 [shape = 'f32[18,18,128]{2,1,0:T(8,128)}', space=vmem, size = 0x36000, scoped, tag = 'scratch operand']
  %s0 = inlined_call_operand.vmem [shape: f32[2,16,16,128], index: 0, kind: input, shape index: {}]
  %s1 = inlined_call_operand.vmem [shape: f32[1,128], index: 1, kind: input, shape index: {}]
  %s2 = inlined_call_operand.vmem [shape: f32[1,128], index: 2, kind: input, shape index: {}]
  %s3 = inlined_call_operand.vmem [shape: f32[3,3,128,128], index: 3, kind: input, shape index: {}]
  %s4 = inlined_call_operand.vmem [shape: f32[2,16,16,128], index: 4, kind: output, shape index: {0}]
  %s5 = inlined_call_operand.vmem [shape: f32[2,2,128], index: 5, kind: output, shape index: {1}]
  %6 = xla_tuple %s4, %s5
  %s7 = sld [smem:[#allocation0]]
  $region57: #{simple_block.4} parent=0
    _
  %s9 = ssub.s32 1, %s7
  %s10 = scalar_select 0, %s9, %s7
  loop: start=0, step=1, limit=4
  $region2: #{simple_block.4} parent=0 // loop_pre_header
    _
  $region3: #{simple_block.4} parent=0 // loop_header
    %s12 = sphi 0, %s16
    %p13 = scmp.ge.s32.totalorder %s12, 4
    %s22 = sphi 0, %s24
    %s25 = sphi 0, %s22
    %s26 = sphi 0, %s25
    %s42 = sphi 0, %s26
    %s46 = sphi 0, %s46
    %s48 = sphi 0, %s46
    %s49 = sphi 0, %s48
    %s63 = sphi 0, %s49
    %s67 = sphi 0, %s67
    %s69 = sphi 0, %s67
    %s70 = sphi 0, %s69
    %s84 = sphi 0, %s70
    %s88 = sphi 0, %s88
    %s90 = sphi 0, %s88
    %s91 = sphi 0, %s90
    %s105 = sphi 0, %s91
    %s111 = sphi 0, %s113
    %s114 = sphi 0, %s111
    %s115 = sphi 0, %s114
    %s131 = sphi 0, %s115
    %s137 = sphi 0, %s139
    %s140 = sphi 0, %s137
    %s141 = sphi 0, %s140
    %s157 = sphi 0, %s141
  $region4: #{simple_block.4} parent=0 // loop_header_branch
    %15 = sbr.rel (%p13) target = $region8
  $region5: #{simple_block.4} parent=0 // loop_body
    %s17 = ssub.s32 %s12, 1
    %s18 = ssub.s32 %s12, 2
    %s19 = sadd.s32 %s12, 1
    %s20 = ssub.s32 %s12, %s19
    %p21 = scmp.eq.s32.totalorder %s20, 0
    %s23 = sadd.s32 %s22, 1
    %s24 = scalar_select %p21, %s22, %s23
    %p27 = pneg %p21
    %p28 = scmp.eq.s32.totalorder %s12, 1
    %p29 = por %p27, %p28
    %p30 = scmp.ne.s32.totalorder %s22, %s25
    %p31 = scmp.eq.s32.totalorder %s12, 0
    %p32 = por %p30, %p31
    %p33 = scmp.ne.s32.totalorder %s22, %s25
    %p34 = scmp.eq.s32.totalorder %s17, 1
    %p35 = por %p33, %p34
    %p36 = scmp.ne.s32.totalorder %s25, %s26
    %p37 = scmp.eq.s32.totalorder %s17, 0
    %p38 = por %p36, %p37
    %p39 = scmp.ne.s32.totalorder %s25, %s26
    %p40 = scmp.eq.s32.totalorder %s18, 1
    %p41 = por %p39, %p40
    %p43 = scmp.ne.s32.totalorder %s26, %s42
    %p44 = scmp.eq.s32.totalorder %s18, 0
    %p45 = por %p43, %p44
    %s47 = sadd.s32 %s46, 1
    %p50 = scmp.eq.s32.totalorder %s12, 1
    %p51 = scmp.ne.s32.totalorder %s46, %s48
    %p52 = scmp.eq.s32.totalorder %s12, 0
    %p53 = por %p51, %p52
    %p54 = scmp.ne.s32.totalorder %s46, %s48
    %p55 = scmp.eq.s32.totalorder %s17, 1
    %p56 = por %p54, %p55
    %p57 = scmp.ne.s32.totalorder %s48, %s49
    %p58 = scmp.eq.s32.totalorder %s17, 0
    %p59 = por %p57, %p58
    %p60 = scmp.ne.s32.totalorder %s48, %s49
    %p61 = scmp.eq.s32.totalorder %s18, 1
    %p62 = por %p60, %p61
    %p64 = scmp.ne.s32.totalorder %s49, %s63
    %p65 = scmp.eq.s32.totalorder %s18, 0
    %p66 = por %p64, %p65
    %s68 = sadd.s32 %s67, 1
    %p71 = scmp.eq.s32.totalorder %s12, 1
    %p72 = scmp.ne.s32.totalorder %s67, %s69
    %p73 = scmp.eq.s32.totalorder %s12, 0
    %p74 = por %p72, %p73
    %p75 = scmp.ne.s32.totalorder %s67, %s69
    %p76 = scmp.eq.s32.totalorder %s17, 1
    %p77 = por %p75, %p76
    %p78 = scmp.ne.s32.totalorder %s69, %s70
    %p79 = scmp.eq.s32.totalorder %s17, 0
    %p80 = por %p78, %p79
    %p81 = scmp.ne.s32.totalorder %s69, %s70
    %p82 = scmp.eq.s32.totalorder %s18, 1
    %p83 = por %p81, %p82
    %p85 = scmp.ne.s32.totalorder %s70, %s84
    %p86 = scmp.eq.s32.totalorder %s18, 0
    %p87 = por %p85, %p86
    %s89 = sadd.s32 %s88, 1
    %p92 = scmp.eq.s32.totalorder %s12, 1
    %p93 = scmp.ne.s32.totalorder %s88, %s90
    %p94 = scmp.eq.s32.totalorder %s12, 0
    %p95 = por %p93, %p94
    %p96 = scmp.ne.s32.totalorder %s88, %s90
    %p97 = scmp.eq.s32.totalorder %s17, 1
    %p98 = por %p96, %p97
    %p99 = scmp.ne.s32.totalorder %s90, %s91
    %p100 = scmp.eq.s32.totalorder %s17, 0
    %p101 = por %p99, %p100
    %p102 = scmp.ne.s32.totalorder %s90, %s91
    %p103 = scmp.eq.s32.totalorder %s18, 1
    %p104 = por %p102, %p103
    %p106 = scmp.ne.s32.totalorder %s91, %s105
    %p107 = scmp.eq.s32.totalorder %s18, 0
    %p108 = por %p106, %p107
    %s109 = ssub.s32 %s12, %s19
    %p110 = scmp.eq.s32.totalorder %s109, 0
    %s112 = sadd.s32 %s111, 1
    %s113 = scalar_select %p110, %s111, %s112
    %p116 = pneg %p110
    %p117 = scmp.eq.s32.totalorder %s12, 1
    %p118 = por %p116, %p117
    %p119 = scmp.ne.s32.totalorder %s111, %s114
    %p120 = scmp.eq.s32.totalorder %s12, 0
    %p121 = por %p119, %p120
    %p122 = scmp.ne.s32.totalorder %s111, %s114
    %p123 = scmp.eq.s32.totalorder %s17, 1
    %p124 = por %p122, %p123
    %p125 = scmp.ne.s32.totalorder %s114, %s115
    %p126 = scmp.eq.s32.totalorder %s17, 0
    %p127 = por %p125, %p126
    %p128 = scmp.ne.s32.totalorder %s114, %s115
    %p129 = scmp.eq.s32.totalorder %s18, 1
    %p130 = por %p128, %p129
    %p132 = scmp.ne.s32.totalorder %s115, %s131
    %p133 = scmp.eq.s32.totalorder %s18, 0
    %p134 = por %p132, %p133
    %s135 = ssub.s32 %s12, %s19
    %p136 = scmp.eq.s32.totalorder %s135, 0
    %s138 = sadd.s32 %s137, 1
    %s139 = scalar_select %p136, %s137, %s138
    %p142 = pneg %p136
    %p143 = scmp.eq.s32.totalorder %s12, 1
    %p144 = por %p142, %p143
    %p145 = scmp.ne.s32.totalorder %s137, %s140
    %p146 = scmp.eq.s32.totalorder %s12, 0
    %p147 = por %p145, %p146
    %p148 = scmp.ne.s32.totalorder %s137, %s140
    %p149 = scmp.eq.s32.totalorder %s17, 1
    %p150 = por %p148, %p149
    %p151 = scmp.ne.s32.totalorder %s140, %s141
    %p152 = scmp.eq.s32.totalorder %s17, 0
    %p153 = por %p151, %p152
    %p154 = scmp.ne.s32.totalorder %s140, %s141
    %p155 = scmp.eq.s32.totalorder %s18, 1
    %p156 = por %p154, %p155
    %p158 = scmp.ne.s32.totalorder %s141, %s157
    %p159 = scmp.eq.s32.totalorder %s18, 0
    %p160 = por %p158, %p159
    %p161 = scmp.le.s32.totalorder 1, %s12
    %p162 = scmp.lt.s32.totalorder %s12, 3
    %p163 = pnand %p161, %p162
    %p164 = pneg %p163
    // Predicated region
    $region9: #{simple_block.4} parent=5 // pred_check
      _
    $region10: #{simple_block.4} parent=5 // pred_check_branch
      %166 = sbr.rel (%p163) target = $region12
    $region11: #{simple_block.4} parent=5 // pred_region
      %s167 = ssub.s32 %s12, 1
      // Predicated region
      $region13: #{simple_block.4} parent=11 // pred_check
        %p168 = pneg %p59
      $region14: #{simple_block.4} parent=11 // pred_check_branch
        %170 = sbr.rel (%p168) target = $region16
      $region15: #{simple_block.4} parent=11 // pred_region
        _
      $region16: #{simple_block.4} parent=11 // pred_fallthru
        _
      // Predicated region
      $region17: #{simple_block.4} parent=11 // pred_check
        %p171 = pneg %p80
      $region18: #{simple_block.4} parent=11 // pred_check_branch
        %173 = sbr.rel (%p171) target = $region20
      $region19: #{simple_block.4} parent=11 // pred_region
        _
      $region20: #{simple_block.4} parent=11 // pred_fallthru
        _
      // Predicated region
      $region21: #{simple_block.4} parent=11 // pred_check
        %p174 = pneg %p101
      $region22: #{simple_block.4} parent=11 // pred_check_branch
        %176 = sbr.rel (%p174) target = $region24
      $region23: #{simple_block.4} parent=11 // pred_region
        _
      $region24: #{simple_block.4} parent=11 // pred_fallthru
        _
    $region12: #{simple_block.4} parent=5 // pred_fallthru
      _
    %p177 = scmp.lt.s32.totalorder %s12, 2
    // Predicated region
    $region25: #{simple_block.4} parent=5 // pred_check
      %p178 = pneg %p177
    $region26: #{simple_block.4} parent=5 // pred_check_branch
      %180 = sbr.rel (%p178) target = $region28
    $region27: #{simple_block.4} parent=5 // pred_region
      // Predicated region
      $region29: #{simple_block.4} parent=27 // pred_check
        %p181 = pneg %p32
      $region30: #{simple_block.4} parent=27 // pred_check_branch
        %183 = sbr.rel (%p181) target = $region32
      $region31: #{simple_block.4} parent=27 // pred_region
        %p184 = scmp.lt.s32.totalorder %s12, 1
        %s185 = scalar_select %p184, %s12, 1
        %s186 = smul.addr %s185, 32
        %s187 = smul.addr %s186, 8
        %s188 = scalar_lea.vmem %s0, %s187
      $region32: #{simple_block.4} parent=27 // pred_fallthru
        _
    $region28: #{simple_block.4} parent=5 // pred_fallthru
      _
    %p189 = scmp.le.s32.totalorder 1, %s12
    %p190 = scmp.lt.s32.totalorder %s12, 3
    %p191 = pnand %p189, %p190
    %p192 = pneg %p191
    // Predicated region
    $region33: #{simple_block.4} parent=5 // pred_check
      _
    $region34: #{simple_block.4} parent=5 // pred_check_branch
      %194 = sbr.rel (%p191) target = $region36
    $region35: #{simple_block.4} parent=5 // pred_region
      %s195 = ssub.s32 %s12, 1
      %p196 = scmp.lt.s32.totalorder %s17, 1
      %s197 = scalar_select %p196, %s17, 1
      %s198 = smul.addr %s197, 32
      %s199 = smul.addr %s198, 8
      %s200 = scalar_lea.vmem %s0, %s199
      %p201 = pneg %p38
      %p202 = pneg %p35
      %p203 = pneg %p59
      %p204 = pneg %p56
      %p205 = pneg %p80
      %p206 = pneg %p77
      %p207 = pneg %p101
      %p208 = pneg %p98
      %p209 = pneg %p127
      %p210 = pneg %p124
      %p211 = scmp.lt.s32.totalorder %s17, 1
      %s212 = scalar_select %p211, %s17, 1
      %s213 = smul.addr %s212, 32
      %s214 = smul.addr %s213, 8
      %s215 = scalar_lea.vmem %s4, %s214
      %p216 = pneg %p153
      %p217 = pneg %p150
      %p218 = scmp.lt.s32.totalorder %s17, 1
      %s219 = scalar_select %p218, %s17, 1
      %s220 = smul.addr %s219, 2
      %s221 = scalar_lea.vmem %s5, %s220
      %p222 = scmp.lt.s32.totalorder %s17, 1
      %s223 = scalar_select %p222, %s17, 1
      %s224 = smul.addr %s223, 32
      %s225 = smul.addr %s224, 8
      %s226 = scalar_lea.vmem %s0, %s225
      %p227 = scmp.lt.s32.totalorder %s17, 1
      %s228 = scalar_select %p227, %s17, 1
      %s229 = smul.addr %s228, 32
      %s230 = smul.addr %s229, 8
      %s231 = scalar_lea.vmem %s4, %s230
      %p232 = scmp.lt.s32.totalorder %s17, 1
      %s233 = scalar_select %p232, %s17, 1
      %s234 = smul.addr %s233, 2
      %s235 = scalar_lea.vmem %s5, %s234
      %v236 = vld [vmem:[%s226] sm:$0xff]
      %v237 = vld [vmem:[%s226 + $0x8] sm:$0xff]
      %v238 = vld [vmem:[%s226 + $0x10] sm:$0xff]
      %v239 = vld [vmem:[%s226 + $0x18] sm:$0xff]
      %v240 = vld [vmem:[%s226 + $0x20] sm:$0xff]
      %v241 = vld [vmem:[%s226 + $0x28] sm:$0xff]
      %v242 = vld [vmem:[%s226 + $0x30] sm:$0xff]
      %v243 = vld [vmem:[%s226 + $0x38] sm:$0xff]
      %v244 = vld [vmem:[%s226 + $0x40] sm:$0xff]
      %v245 = vld [vmem:[%s226 + $0x48] sm:$0xff]
      %v246 = vld [vmem:[%s226 + $0x50] sm:$0xff]
      %v247 = vld [vmem:[%s226 + $0x58] sm:$0xff]
      %v248 = vld [vmem:[%s226 + $0x60] sm:$0xff]
      %v249 = vld [vmem:[%s226 + $0x68] sm:$0xff]
      %v250 = vld [vmem:[%s226 + $0x70] sm:$0xff]
      %v251 = vld [vmem:[%s226 + $0x78] sm:$0xff]
      %v252 = vld [vmem:[%s226 + $0x80] sm:$0xff]
      %v253 = vld [vmem:[%s226 + $0x88] sm:$0xff]
      %v254 = vld [vmem:[%s226 + $0x90] sm:$0xff]
      %v255 = vld [vmem:[%s226 + $0x98] sm:$0xff]
      %v256 = vld [vmem:[%s226 + $0xa0] sm:$0xff]
      %v257 = vld [vmem:[%s226 + $0xa8] sm:$0xff]
      %v258 = vld [vmem:[%s226 + $0xb0] sm:$0xff]
      %v259 = vld [vmem:[%s226 + $0xb8] sm:$0xff]
      %v260 = vld [vmem:[%s226 + $0xc0] sm:$0xff]
      %v261 = vld [vmem:[%s226 + $0xc8] sm:$0xff]
      %v262 = vld [vmem:[%s226 + $0xd0] sm:$0xff]
      %v263 = vld [vmem:[%s226 + $0xd8] sm:$0xff]
      %v264 = vld [vmem:[%s226 + $0xe0] sm:$0xff]
      %v265 = vld [vmem:[%s226 + $0xe8] sm:$0xff]
      %v266 = vld [vmem:[%s226 + $0xf0] sm:$0xff]
      %v267 = vld [vmem:[%s226 + $0xf8] sm:$0xff]
      %v268 = vld [vmem:[%s1] sm:$0x1]
      %v270 = vlaneseq
      %v271 = vshrl.u32 %v270, 7
      %v272 = vsub.s32 0, %v271
      %v273 = vrot.slane %v268, %v272
      %v275 = vmul.f32 %v236, %v273
      %v276 = vmul.f32 %v237, %v273
      %v277 = vmul.f32 %v238, %v273
      %v278 = vmul.f32 %v239, %v273
      %v279 = vmul.f32 %v240, %v273
      %v280 = vmul.f32 %v241, %v273
      %v281 = vmul.f32 %v242, %v273
      %v282 = vmul.f32 %v243, %v273
      %v283 = vmul.f32 %v244, %v273
      %v284 = vmul.f32 %v245, %v273
      %v285 = vmul.f32 %v246, %v273
      %v286 = vmul.f32 %v247, %v273
      %v287 = vmul.f32 %v248, %v273
      %v288 = vmul.f32 %v249, %v273
      %v289 = vmul.f32 %v250, %v273
      %v290 = vmul.f32 %v251, %v273
      %v291 = vmul.f32 %v252, %v273
      %v292 = vmul.f32 %v253, %v273
      %v293 = vmul.f32 %v254, %v273
      %v294 = vmul.f32 %v255, %v273
      %v295 = vmul.f32 %v256, %v273
      %v296 = vmul.f32 %v257, %v273
      %v297 = vmul.f32 %v258, %v273
      %v298 = vmul.f32 %v259, %v273
      %v299 = vmul.f32 %v260, %v273
      %v300 = vmul.f32 %v261, %v273
      %v301 = vmul.f32 %v262, %v273
      %v302 = vmul.f32 %v263, %v273
      %v303 = vmul.f32 %v264, %v273
      %v304 = vmul.f32 %v265, %v273
      %v305 = vmul.f32 %v266, %v273
      %v306 = vmul.f32 %v267, %v273
      %v307 = vld [vmem:[%s2] sm:$0x1]
      %v309 = vlaneseq
      %v310 = vshrl.u32 %v309, 7
      %v311 = vsub.s32 0, %v310
      %v312 = vrot.slane %v307, %v311
      %v314 = vadd.f32 %v275, %v312
      %v315 = vadd.f32 %v276, %v312
      %v316 = vadd.f32 %v277, %v312
      %v317 = vadd.f32 %v278, %v312
      %v318 = vadd.f32 %v279, %v312
      %v319 = vadd.f32 %v280, %v312
      %v320 = vadd.f32 %v281, %v312
      %v321 = vadd.f32 %v282, %v312
      %v322 = vadd.f32 %v283, %v312
      %v323 = vadd.f32 %v284, %v312
      %v324 = vadd.f32 %v285, %v312
      %v325 = vadd.f32 %v286, %v312
      %v326 = vadd.f32 %v287, %v312
      %v327 = vadd.f32 %v288, %v312
      %v328 = vadd.f32 %v289, %v312
      %v329 = vadd.f32 %v290, %v312
      %v330 = vadd.f32 %v291, %v312
      %v331 = vadd.f32 %v292, %v312
      %v332 = vadd.f32 %v293, %v312
      %v333 = vadd.f32 %v294, %v312
      %v334 = vadd.f32 %v295, %v312
      %v335 = vadd.f32 %v296, %v312
      %v336 = vadd.f32 %v297, %v312
      %v337 = vadd.f32 %v298, %v312
      %v338 = vadd.f32 %v299, %v312
      %v339 = vadd.f32 %v300, %v312
      %v340 = vadd.f32 %v301, %v312
      %v341 = vadd.f32 %v302, %v312
      %v342 = vadd.f32 %v303, %v312
      %v343 = vadd.f32 %v304, %v312
      %v344 = vadd.f32 %v305, %v312
      %v345 = vadd.f32 %v306, %v312
      %v346 = vmax.f32 %v314, 0.0
      %v347 = vmax.f32 %v315, 0.0
      %v348 = vmax.f32 %v316, 0.0
      %v349 = vmax.f32 %v317, 0.0
      %v350 = vmax.f32 %v318, 0.0
      %v351 = vmax.f32 %v319, 0.0
      %v352 = vmax.f32 %v320, 0.0
      %v353 = vmax.f32 %v321, 0.0
      %v354 = vmax.f32 %v322, 0.0
      %v355 = vmax.f32 %v323, 0.0
      %v356 = vmax.f32 %v324, 0.0
      %v357 = vmax.f32 %v325, 0.0
      %v358 = vmax.f32 %v326, 0.0
      %v359 = vmax.f32 %v327, 0.0
      %v360 = vmax.f32 %v328, 0.0
      %v361 = vmax.f32 %v329, 0.0
      %v362 = vmax.f32 %v330, 0.0
      %v363 = vmax.f32 %v331, 0.0
      %v364 = vmax.f32 %v332, 0.0
      %v365 = vmax.f32 %v333, 0.0
      %v366 = vmax.f32 %v334, 0.0
      %v367 = vmax.f32 %v335, 0.0
      %v368 = vmax.f32 %v336, 0.0
      %v369 = vmax.f32 %v337, 0.0
      %v370 = vmax.f32 %v338, 0.0
      %v371 = vmax.f32 %v339, 0.0
      %v372 = vmax.f32 %v340, 0.0
      %v373 = vmax.f32 %v341, 0.0
      %v374 = vmax.f32 %v342, 0.0
      %v375 = vmax.f32 %v343, 0.0
      %v376 = vmax.f32 %v344, 0.0
      %v377 = vmax.f32 %v345, 0.0
      %378 = vst [vmem:[#allocation2] sm:$0xff] 0.0
      %379 = vst [vmem:[#allocation2 + $0x8] sm:$0xff] 0.0
      %380 = vst [vmem:[#allocation2 + $0x10] sm:$0x3] 0.0
      %381 = vst [vmem:[#allocation2 + $0x18] sm:$0xff] 0.0
      %382 = vst [vmem:[#allocation2 + $0x20] sm:$0xff] 0.0
      %383 = vst [vmem:[#allocation2 + $0x28] sm:$0x3] 0.0
      %384 = vst [vmem:[#allocation2 + $0x30] sm:$0xff] 0.0
      %385 = vst [vmem:[#allocation2 + $0x38] sm:$0xff] 0.0
      %386 = vst [vmem:[#allocation2 + $0x40] sm:$0x3] 0.0
      %387 = vst [vmem:[#allocation2 + $0x48] sm:$0xff] 0.0
      %388 = vst [vmem:[#allocation2 + $0x50] sm:$0xff] 0.0
      %389 = vst [vmem:[#allocation2 + $0x58] sm:$0x3] 0.0
      %390 = vst [vmem:[#allocation2 + $0x60] sm:$0xff] 0.0
      %391 = vst [vmem:[#allocation2 + $0x68] sm:$0xff] 0.0
      %392 = vst [vmem:[#allocation2 + $0x70] sm:$0x3] 0.0
      %393 = vst [vmem:[#allocation2 + $0x78] sm:$0xff] 0.0
      %394 = vst [vmem:[#allocation2 + $0x80] sm:$0xff] 0.0
      %395 = vst [vmem:[#allocation2 + $0x88] sm:$0x3] 0.0
      %396 = vst [vmem:[#allocation2 + $0x90] sm:$0xff] 0.0
      %397 = vst [vmem:[#allocation2 + $0x98] sm:$0xff] 0.0
      %398 = vst [vmem:[#allocation2 + $0xa0] sm:$0x3] 0.0
      %399 = vst [vmem:[#allocation2 + $0xa8] sm:$0xff] 0.0
      %400 = vst [vmem:[#allocation2 + $0xb0] sm:$0xff] 0.0
      %401 = vst [vmem:[#allocation2 + $0xb8] sm:$0x3] 0.0
      %402 = vst [vmem:[#allocation2 + $0xc0] sm:$0xff] 0.0
      %403 = vst [vmem:[#allocation2 + $0xc8] sm:$0xff] 0.0
      %404 = vst [vmem:[#allocation2 + $0xd0] sm:$0x3] 0.0
      %405 = vst [vmem:[#allocation2 + $0xd8] sm:$0xff] 0.0
      %406 = vst [vmem:[#allocation2 + $0xe0] sm:$0xff] 0.0
      %407 = vst [vmem:[#allocation2 + $0xe8] sm:$0x3] 0.0
      %408 = vst [vmem:[#allocation2 + $0xf0] sm:$0xff] 0.0
      %409 = vst [vmem:[#allocation2 + $0xf8] sm:$0xff] 0.0
      %410 = vst [vmem:[#allocation2 + $0x100] sm:$0x3] 0.0
      %411 = vst [vmem:[#allocation2 + $0x108] sm:$0xff] 0.0
      %412 = vst [vmem:[#allocation2 + $0x110] sm:$0xff] 0.0
      %413 = vst [vmem:[#allocation2 + $0x118] sm:$0x3] 0.0
      %414 = vst [vmem:[#allocation2 + $0x120] sm:$0xff] 0.0
      %415 = vst [vmem:[#allocation2 + $0x128] sm:$0xff] 0.0
      %416 = vst [vmem:[#allocation2 + $0x130] sm:$0x3] 0.0
      %417 = vst [vmem:[#allocation2 + $0x138] sm:$0xff] 0.0
      %418 = vst [vmem:[#allocation2 + $0x140] sm:$0xff] 0.0
      %419 = vst [vmem:[#allocation2 + $0x148] sm:$0x3] 0.0
      %420 = vst [vmem:[#allocation2 + $0x150] sm:$0xff] 0.0
      %421 = vst [vmem:[#allocation2 + $0x158] sm:$0xff] 0.0
      %422 = vst [vmem:[#allocation2 + $0x160] sm:$0x3] 0.0
      %423 = vst [vmem:[#allocation2 + $0x168] sm:$0xff] 0.0
      %424 = vst [vmem:[#allocation2 + $0x170] sm:$0xff] 0.0
      %425 = vst [vmem:[#allocation2 + $0x178] sm:$0x3] 0.0
      %426 = vst [vmem:[#allocation2 + $0x180] sm:$0xff] 0.0
      %427 = vst [vmem:[#allocation2 + $0x188] sm:$0xff] 0.0
      %428 = vst [vmem:[#allocation2 + $0x190] sm:$0x3] 0.0
      %429 = vst [vmem:[#allocation2 + $0x198] sm:$0xff] 0.0
      %430 = vst [vmem:[#allocation2 + $0x1a0] sm:$0xff] 0.0
      %431 = vst [vmem:[#allocation2 + $0x1a8] sm:$0x3] 0.0
      %s432 = scalar_lea.vmem [#allocation2], 24
      %433 = vst [vmem:[%s432 + $0x1] sm:$0xff] %v346
      %434 = vst [vmem:[%s432 + $0x9] sm:$0xff] %v347
      %435 = vst [vmem:[%s432 + $0x19] sm:$0xff] %v348
      %436 = vst [vmem:[%s432 + $0x21] sm:$0xff] %v349
      %437 = vst [vmem:[%s432 + $0x31] sm:$0xff] %v350
      %438 = vst [vmem:[%s432 + $0x39] sm:$0xff] %v351
      %439 = vst [vmem:[%s432 + $0x49] sm:$0xff] %v352
      %440 = vst [vmem:[%s432 + $0x51] sm:$0xff] %v353
      %441 = vst [vmem:[%s432 + $0x61] sm:$0xff] %v354
      %442 = vst [vmem:[%s432 + $0x69] sm:$0xff] %v355
      %443 = vst [vmem:[%s432 + $0x79] sm:$0xff] %v356
      %444 = vst [vmem:[%s432 + $0x81] sm:$0xff] %v357
      %445 = vst [vmem:[%s432 + $0x91] sm:$0xff] %v358
      %446 = vst [vmem:[%s432 + $0x99] sm:$0xff] %v359
      %447 = vst [vmem:[%s432 + $0xa9] sm:$0xff] %v360
      %448 = vst [vmem:[%s432 + $0xb1] sm:$0xff] %v361
      %449 = vst [vmem:[%s432 + $0xc1] sm:$0xff] %v362
      %450 = vst [vmem:[%s432 + $0xc9] sm:$0xff] %v363
      %451 = vst [vmem:[%s432 + $0xd9] sm:$0xff] %v364
      %452 = vst [vmem:[%s432 + $0xe1] sm:$0xff] %v365
      %453 = vst [vmem:[%s432 + $0xf1] sm:$0xff] %v366
      %454 = vst [vmem:[%s432 + $0xf9] sm:$0xff] %v367
      %455 = vst [vmem:[%s432 + $0x109] sm:$0xff] %v368
      %456 = vst [vmem:[%s432 + $0x111] sm:$0xff] %v369
      %457 = vst [vmem:[%s432 + $0x121] sm:$0xff] %v370
      %458 = vst [vmem:[%s432 + $0x129] sm:$0xff] %v371
      %459 = vst [vmem:[%s432 + $0x139] sm:$0xff] %v372
      %460 = vst [vmem:[%s432 + $0x141] sm:$0xff] %v373
      %461 = vst [vmem:[%s432 + $0x151] sm:$0xff] %v374
      %462 = vst [vmem:[%s432 + $0x159] sm:$0xff] %v375
      %463 = vst [vmem:[%s432 + $0x169] sm:$0xff] %v376
      %464 = vst [vmem:[%s432 + $0x171] sm:$0xff] %v377
      %v465 = vld [vmem:[#allocation2] sm:$0xff]
      %v466 = vld [vmem:[#allocation2 + $0x8] sm:$0xff]
      %v467 = vld [vmem:[#allocation2 + $0x18] sm:$0xff]
      %v468 = vld [vmem:[#allocation2 + $0x20] sm:$0xff]
      %v469 = vld [vmem:[#allocation2 + $0x30] sm:$0xff]
      %v470 = vld [vmem:[#allocation2 + $0x38] sm:$0xff]
      %v471 = vld [vmem:[#allocation2 + $0x48] sm:$0xff]
      %v472 = vld [vmem:[#allocation2 + $0x50] sm:$0xff]
      %v473 = vld [vmem:[#allocation2 + $0x60] sm:$0xff]
      %v474 = vld [vmem:[#allocation2 + $0x68] sm:$0xff]
      %v475 = vld [vmem:[#allocation2 + $0x78] sm:$0xff]
      %v476 = vld [vmem:[#allocation2 + $0x80] sm:$0xff]
      %v477 = vld [vmem:[#allocation2 + $0x90] sm:$0xff]
      %v478 = vld [vmem:[#allocation2 + $0x98] sm:$0xff]
      %v479 = vld [vmem:[#allocation2 + $0xa8] sm:$0xff]
      %v480 = vld [vmem:[#allocation2 + $0xb0] sm:$0xff]
      %v481 = vld [vmem:[#allocation2 + $0xc0] sm:$0xff]
      %v482 = vld [vmem:[#allocation2 + $0xc8] sm:$0xff]
      %v483 = vld [vmem:[#allocation2 + $0xd8] sm:$0xff]
      %v484 = vld [vmem:[#allocation2 + $0xe0] sm:$0xff]
      %v485 = vld [vmem:[#allocation2 + $0xf0] sm:$0xff]
      %v486 = vld [vmem:[#allocation2 + $0xf8] sm:$0xff]
      %v487 = vld [vmem:[#allocation2 + $0x108] sm:$0xff]
      %v488 = vld [vmem:[#allocation2 + $0x110] sm:$0xff]
      %v489 = vld [vmem:[#allocation2 + $0x120] sm:$0xff]
      %v490 = vld [vmem:[#allocation2 + $0x128] sm:$0xff]
      %v491 = vld [vmem:[#allocation2 + $0x138] sm:$0xff]
      %v492 = vld [vmem:[#allocation2 + $0x140] sm:$0xff]
      %v493 = vld [vmem:[#allocation2 + $0x150] sm:$0xff]
      %v494 = vld [vmem:[#allocation2 + $0x158] sm:$0xff]
      %v495 = vld [vmem:[#allocation2 + $0x168] sm:$0xff]
      %v496 = vld [vmem:[#allocation2 + $0x170] sm:$0xff]
      %v497 = vld [vmem:[%s3] sm:$0xff]
      %v498 = vld [vmem:[%s3 + $0x8] sm:$0xff]
      %v499 = vld [vmem:[%s3 + $0x10] sm:$0xff]
      %v500 = vld [vmem:[%s3 + $0x18] sm:$0xff]
      %v501 = vld [vmem:[%s3 + $0x20] sm:$0xff]
      %v502 = vld [vmem:[%s3 + $0x28] sm:$0xff]
      %v503 = vld [vmem:[%s3 + $0x30] sm:$0xff]
      %v504 = vld [vmem:[%s3 + $0x38] sm:$0xff]
      %v505 = vld [vmem:[%s3 + $0x40] sm:$0xff]
      %v506 = vld [vmem:[%s3 + $0x48] sm:$0xff]
      %v507 = vld [vmem:[%s3 + $0x50] sm:$0xff]
      %v508 = vld [vmem:[%s3 + $0x58] sm:$0xff]
      %v509 = vld [vmem:[%s3 + $0x60] sm:$0xff]
      %v510 = vld [vmem:[%s3 + $0x68] sm:$0xff]
      %v511 = vld [vmem:[%s3 + $0x70] sm:$0xff]
      %v512 = vld [vmem:[%s3 + $0x78] sm:$0xff]
      %v513 = vld [vmem:[#allocation2 + $0x1] sm:$0xff]
      %v514 = vld [vmem:[#allocation2 + $0x9] sm:$0xff]
      %v515 = vld [vmem:[#allocation2 + $0x19] sm:$0xff]
      %v516 = vld [vmem:[#allocation2 + $0x21] sm:$0xff]
      %v517 = vld [vmem:[#allocation2 + $0x31] sm:$0xff]
      %v518 = vld [vmem:[#allocation2 + $0x39] sm:$0xff]
      %v519 = vld [vmem:[#allocation2 + $0x49] sm:$0xff]
      %v520 = vld [vmem:[#allocation2 + $0x51] sm:$0xff]
      %v521 = vld [vmem:[#allocation2 + $0x61] sm:$0xff]
      %v522 = vld [vmem:[#allocation2 + $0x69] sm:$0xff]
      %v523 = vld [vmem:[#allocation2 + $0x79] sm:$0xff]
      %v524 = vld [vmem:[#allocation2 + $0x81] sm:$0xff]
      %v525 = vld [vmem:[#allocation2 + $0x91] sm:$0xff]
      %v526 = vld [vmem:[#allocation2 + $0x99] sm:$0xff]
      %v527 = vld [vmem:[#allocation2 + $0xa9] sm:$0xff]
      %v528 = vld [vmem:[#allocation2 + $0xb1] sm:$0xff]
      %v529 = vld [vmem:[#allocation2 + $0xc1] sm:$0xff]
      %v530 = vld [vmem:[#allocation2 + $0xc9] sm:$0xff]
      %v531 = vld [vmem:[#allocation2 + $0xd9] sm:$0xff]
      %v532 = vld [vmem:[#allocation2 + $0xe1] sm:$0xff]
      %v533 = vld [vmem:[#allocation2 + $0xf1] sm:$0xff]
      %v534 = vld [vmem:[#allocation2 + $0xf9] sm:$0xff]
      %v535 = vld [vmem:[#allocation2 + $0x109] sm:$0xff]
      %v536 = vld [vmem:[#allocation2 + $0x111] sm:$0xff]
      %v537 = vld [vmem:[#allocation2 + $0x121] sm:$0xff]
      %v538 = vld [vmem:[#allocation2 + $0x129] sm:$0xff]
      %v539 = vld [vmem:[#allocation2 + $0x139] sm:$0xff]
      %v540 = vld [vmem:[#allocation2 + $0x141] sm:$0xff]
      %v541 = vld [vmem:[#allocation2 + $0x151] sm:$0xff]
      %v542 = vld [vmem:[#allocation2 + $0x159] sm:$0xff]
      %v543 = vld [vmem:[#allocation2 + $0x169] sm:$0xff]
      %v544 = vld [vmem:[#allocation2 + $0x171] sm:$0xff]
      %s545 = scalar_lea.vmem %s3, 128
      %v546 = vld [vmem:[%s545] sm:$0xff]
      %v547 = vld [vmem:[%s545 + $0x8] sm:$0xff]
      %v548 = vld [vmem:[%s545 + $0x10] sm:$0xff]
      %v549 = vld [vmem:[%s545 + $0x18] sm:$0xff]
      %v550 = vld [vmem:[%s545 + $0x20] sm:$0xff]
      %v551 = vld [vmem:[%s545 + $0x28] sm:$0xff]
      %v552 = vld [vmem:[%s545 + $0x30] sm:$0xff]
      %v553 = vld [vmem:[%s545 + $0x38] sm:$0xff]
      %v554 = vld [vmem:[%s545 + $0x40] sm:$0xff]
      %v555 = vld [vmem:[%s545 + $0x48] sm:$0xff]
      %v556 = vld [vmem:[%s545 + $0x50] sm:$0xff]
      %v557 = vld [vmem:[%s545 + $0x58] sm:$0xff]
      %v558 = vld [vmem:[%s545 + $0x60] sm:$0xff]
      %v559 = vld [vmem:[%s545 + $0x68] sm:$0xff]
      %v560 = vld [vmem:[%s545 + $0x70] sm:$0xff]
      %v561 = vld [vmem:[%s545 + $0x78] sm:$0xff]
      %562 = vmatprep.subr.mxu0 0.0
      %563 = vmatpush1.msra.mxu0 %v546
      %564 = vmatprep.subr.mxu0 0.0
      %565 = vmatpush1.msra.mxu0 %v547
      %566 = vmatprep.subr.mxu0 0.0
      %567 = vmatpush1.msra.mxu0 %v548
      %568 = vmatprep.subr.mxu0 0.0
      %569 = vmatpush1.msra.mxu0 %v549
      %570 = vmatprep.subr.mxu0 0.0
      %571 = vmatpush1.msra.mxu0 %v550
      %572 = vmatprep.subr.mxu0 0.0
      %573 = vmatpush1.msra.mxu0 %v551
      %574 = vmatprep.subr.mxu0 0.0
      %575 = vmatpush1.msra.mxu0 %v552
      %576 = vmatprep.subr.mxu0 0.0
      %577 = vmatpush1.msra.mxu0 %v553
      %578 = vmatprep.subr.mxu0 0.0
      %579 = vmatpush1.msra.mxu0 %v554
      %580 = vmatprep.subr.mxu0 0.0
      %581 = vmatpush1.msra.mxu0 %v555
      %582 = vmatprep.subr.mxu0 0.0
      %583 = vmatpush1.msra.mxu0 %v556
      %584 = vmatprep.subr.mxu0 0.0
      %585 = vmatpush1.msra.mxu0 %v557
      %586 = vmatprep.subr.mxu0 0.0
      %587 = vmatpush1.msra.mxu0 %v558
      %588 = vmatprep.subr.mxu0 0.0
      %589 = vmatpush1.msra.mxu0 %v559
      %590 = vmatprep.subr.mxu0 0.0
      %591 = vmatpush1.msra.mxu0 %v560
      %592 = vmatprep.subr.mxu0 0.0
      %593 = vmatpush1.msra.mxu0 %v561
      %594 = vmatprep.subr.mxu0 0.0
      %595 = vmatpush1.msra.mxu0 0.0
      %596 = vmatprep.subr.mxu0 0.0
      %597 = vmatpush1.msra.mxu0 0.0
      %598 = vmatprep.subr.mxu0 0.0
      %599 = vmatpush1.msra.mxu0 0.0
      %600 = vmatprep.subr.mxu0 0.0
      %601 = vmatpush1.msra.mxu0 0.0
      %602 = vmatprep.subr.mxu0 0.0
      %603 = vmatpush1.msra.mxu0 0.0
      %604 = vmatprep.subr.mxu0 0.0
      %605 = vmatpush1.msra.mxu0 0.0
      %606 = vmatprep.subr.mxu0 0.0
      %607 = vmatpush1.msra.mxu0 0.0
      %608 = vmatprep.subr.mxu0 0.0
      %609 = vmatpush1.msra.mxu0 0.0
      %610 = vmatprep.subr.mxu0 0.0
      %611 = vmatpush1.msra.mxu0 0.0
      %612 = vmatprep.subr.mxu0 0.0
      %613 = vmatpush1.msra.mxu0 0.0
      %614 = vmatprep.subr.mxu0 0.0
      %615 = vmatpush1.msra.mxu0 0.0
      %616 = vmatprep.subr.mxu0 0.0
      %617 = vmatpush1.msra.mxu0 0.0
      %618 = vmatprep.subr.mxu0 0.0
      %619 = vmatpush1.msra.mxu0 0.0
      %620 = vmatprep.subr.mxu0 0.0
      %621 = vmatpush1.msra.mxu0 0.0
      %622 = vmatprep.subr.mxu0 0.0
      %623 = vmatpush1.msra.mxu0 0.0
      %624 = vmatprep.subr.mxu0 0.0
      %625 = vmatpush1.msra.mxu0 0.0
      %626 = vmatprep.mubr.f32.mxu0 0.0
      %627 = vmatmul.mubr.f32.gmra.mrb[0].mxu0 %v513
      %v628 = vpop.f32.mrb[0].mxu0
      %v629 = vadd.f32 0.0, %v628
      %v630 = vpop.f32.mrb[0].mxu0
      %631 = vmatprep.mubr.f32.mxu0 0.0
      %632 = vmatmul.mubr.f32.gmra.mrb[0].mxu0 %v514
      %v633 = vpop.f32.mrb[0].mxu0
      %v634 = vadd.f32 0.0, %v633
      %v635 = vpop.f32.mrb[0].mxu0
      %636 = vmatprep.mubr.f32.mxu0 0.0
      %637 = vmatmul.mubr.f32.gmra.mrb[0].mxu0 %v515
      %v638 = vpop.f32.mrb[0].mxu0
      %v639 = vadd.f32 0.0, %v638
      %v640 = vpop.f32.mrb[0].mxu0
      %641 = vmatprep.mubr.f32.mxu0 0.0
      %642 = vmatmul.mubr.f32.gmra.mrb[0].mxu0 %v516
      %v643 = vpop.f32.mrb[0].mxu0
      %v644 = vadd.f32 0.0, %v643
      %v645 = vpop.f32.mrb[0].mxu0
      %646 = vmatprep.mubr.f32.mxu0 0.0
      %647 = vmatmul.mubr.f32.gmra.mrb[0].mxu0 %v517
      %v648 = vpop.f32.mrb[0].mxu0
      %v649 = vadd.f32 0.0, %v648
      %v650 = vpop.f32.mrb[0].mxu0
      %651 = vmatprep.mubr.f32.mxu0 0.0
      %652 = vmatmul.mubr.f32.gmra.mrb[0].mxu0 %v518
      %v653 = vpop.f32.mrb[0].mxu0
      %v654 = vadd.f32 0.0, %v653
      %v655 = vpop.f32.mrb[0].mxu0
      %656 = vmatprep.mubr.f32.mxu0 0.0
      %657 = vmatmul.mubr.f32.gmra.mrb[0].mxu0 %v519
      %v658 = vpop.f32.mrb[0].mxu0
      %v659 = vadd.f32 0.0, %v658
      %v660 = vpop.f32.mrb[0].mxu0
      %661 = vmatprep.mubr.f32.mxu0 0.0
      %662 = vmatmul.mubr.f32.gmra.mrb[0].mxu0 %v520
      %v663 = vpop.f32.mrb[0].mxu0
      %v664 = vadd.f32 0.0, %v663
      %v665 = vpop.f32.mrb[0].mxu0
      %666 = vmatprep.mubr.f32.mxu0 0.0
      %667 = vmatmul.mubr.f32.gmra.mrb[0].mxu0 %v521
      %v668 = vpop.f32.mrb[0].mxu0
      %v669 = vadd.f32 0.0, %v668
      %v670 = vpop.f32.mrb[0].mxu0
      %671 = vmatprep.mubr.f32.mxu0 0.0
      %672 = vmatmul.mubr.f32.gmra.mrb[0].mxu0 %v522
      %v673 = vpop.f32.mrb[0].mxu0
      %v674 = vadd.f32 0.0, %v673
      %v675 = vpop.f32.mrb[0].mxu0
      %676 = vmatprep.mubr.f32.mxu0 0.0
      %677 = vmatmul.mubr.f32.gmra.mrb[0].mxu0 %v523
      %v678 = vpop.f32.mrb[0].mxu0
      %v679 = vadd.f32 0.0, %v678
      %v680 = vpop.f32.mrb[0].mxu0
      %681 = vmatprep.mubr.f32.mxu0 0.0
      %682 = vmatmul.mubr.f32.gmra.mrb[0].mxu0 %v524
      %v683 = vpop.f32.mrb[0].mxu0
      %v684 = vadd.f32 0.0, %v683
      %v685 = vpop.f32.mrb[0].mxu0
      %686 = vmatprep.mubr.f32.mxu0 0.0
      %687 = vmatmul.mubr.f32.gmra.mrb[0].mxu0 %v525
      %v688 = vpop.f32.mrb[0].mxu0
      %v689 = vadd.f32 0.0, %v688
      %v690 = vpop.f32.mrb[0].mxu0
      %691 = vmatprep.mubr.f32.mxu0 0.0
      %692 = vmatmul.mubr.f32.gmra.mrb[0].mxu0 %v526
      %v693 = vpop.f32.mrb[0].mxu0
      %v694 = vadd.f32 0.0, %v693
      %v695 = vpop.f32.mrb[0].mxu0
      %696 = vmatprep.mubr.f32.mxu0 0.0
      %697 = vmatmul.mubr.f32.gmra.mrb[0].mxu0 %v527
      %v698 = vpop.f32.mrb[0].mxu0
      %v699 = vadd.f32 0.0, %v698
      %v700 = vpop.f32.mrb[0].mxu0
      %701 = vmatprep.mubr.f32.mxu0 0.0
      %702 = vmatmul.mubr.f32.gmra.mrb[0].mxu0 %v528
      %v703 = vpop.f32.mrb[0].mxu0
      %v704 = vadd.f32 0.0, %v703
      %v705 = vpop.f32.mrb[0].mxu0
      %706 = vmatprep.mubr.f32.mxu0 0.0
      %707 = vmatmul.mubr.f32.gmra.mrb[0].mxu0 %v529
      %v708 = vpop.f32.mrb[0].mxu0
      %v709 = vadd.f32 0.0, %v708
      %v710 = vpop.f32.mrb[0].mxu0
      %711 = vmatprep.mubr.f32.mxu0 0.0
      %712 = vmatmul.mubr.f32.gmra.mrb[0].mxu0 %v530
      %v713 = vpop.f32.mrb[0].mxu0
      %v714 = vadd.f32 0.0, %v713
      %v715 = vpop.f32.mrb[0].mxu0
      %716 = vmatprep.mubr.f32.mxu0 0.0
      %717 = vmatmul.mubr.f32.gmra.mrb[0].mxu0 %v531
      %v718 = vpop.f32.mrb[0].mxu0
      %v719 = vadd.f32 0.0, %v718
      %v720 = vpop.f32.mrb[0].mxu0
      %721 = vmatprep.mubr.f32.mxu0 0.0
      %722 = vmatmul.mubr.f32.gmra.mrb[0].mxu0 %v532
      %v723 = vpop.f32.mrb[0].mxu0
      %v724 = vadd.f32 0.0, %v723
      %v725 = vpop.f32.mrb[0].mxu0
      %726 = vmatprep.mubr.f32.mxu0 0.0
      %727 = vmatmul.mubr.f32.gmra.mrb[0].mxu0 %v533
      %v728 = vpop.f32.mrb[0].mxu0
      %v729 = vadd.f32 0.0, %v728
      %v730 = vpop.f32.mrb[0].mxu0
      %731 = vmatprep.mubr.f32.mxu0 0.0
      %732 = vmatmul.mubr.f32.gmra.mrb[0].mxu0 %v534
      %v733 = vpop.f32.mrb[0].mxu0
      %v734 = vadd.f32 0.0, %v733
      %v735 = vpop.f32.mrb[0].mxu0
      %736 = vmatprep.mubr.f32.mxu0 0.0
      %737 = vmatmul.mubr.f32.gmra.mrb[0].mxu0 %v535
      %v738 = vpop.f32.mrb[0].mxu0
      %v739 = vadd.f32 0.0, %v738
      %v740 = vpop.f32.mrb[0].mxu0
      %741 = vmatprep.mubr.f32.mxu0 0.0
      %742 = vmatmul.mubr.f32.gmra.mrb[0].mxu0 %v536
      %v743 = vpop.f32.mrb[0].mxu0
      %v744 = vadd.f32 0.0, %v743
      %v745 = vpop.f32.mrb[0].mxu0
      %746 = vmatprep.mubr.f32.mxu0 0.0
      %747 = vmatmul.mubr.f32.gmra.mrb[0].mxu0 %v537
      %v748 = vpop.f32.mrb[0].mxu0
      %v749 = vadd.f32 0.0, %v748
      %v750 = vpop.f32.mrb[0].mxu0
      %751 = vmatprep.mubr.f32.mxu0 0.0
      %752 = vmatmul.mubr.f32.gmra.mrb[0].mxu0 %v538
      %v753 = vpop.f32.mrb[0].mxu0
      %v754 = vadd.f32 0.0, %v753
      %v755 = vpop.f32.mrb[0].mxu0
      %756 = vmatprep.mubr.f32.mxu0 0.0
      %757 = vmatmul.mubr.f32.gmra.mrb[0].mxu0 %v539
      %v758 = vpop.f32.mrb[0].mxu0
      %v759 = vadd.f32 0.0, %v758
      %v760 = vpop.f32.mrb[0].mxu0
      %761 = vmatprep.mubr.f32.mxu0 0.0
      %762 = vmatmul.mubr.f32.gmra.mrb[0].mxu0 %v540
      %v763 = vpop.f32.mrb[0].mxu0
      %v764 = vadd.f32 0.0, %v763
      %v765 = vpop.f32.mrb[0].mxu0
      %766 = vmatprep.mubr.f32.mxu0 0.0
      %767 = vmatmul.mubr.f32.gmra.mrb[0].mxu0 %v541
      %v768 = vpop.f32.mrb[0].mxu0
      %v769 = vadd.f32 0.0, %v768
      %v770 = vpop.f32.mrb[0].mxu0
      %771 = vmatprep.mubr.f32.mxu0 0.0
      %772 = vmatmul.mubr.f32.gmra.mrb[0].mxu0 %v542
      %v773 = vpop.f32.mrb[0].mxu0
      %v774 = vadd.f32 0.0, %v773
      %v775 = vpop.f32.mrb[0].mxu0
      %776 = vmatprep.mubr.f32.mxu0 0.0
      %777 = vmatmul.mubr.f32.gmra.mrb[0].mxu0 %v543
      %v778 = vpop.f32.mrb[0].mxu0
      %v779 = vadd.f32 0.0, %v778
      %v780 = vpop.f32.mrb[0].mxu0
      %781 = vmatprep.mubr.f32.mxu0 0.0
      %782 = vmatmul.mubr.f32.gmra.mrb[0].mxu0 %v544
      %v783 = vpop.f32.mrb[0].mxu0
      %v784 = vadd.f32 0.0, %v783
      %v785 = vpop.f32.mrb[0].mxu0
      %786 = vdwg.mxu0
      %787 = vmatprep.subr.mxu0 0.0
      %788 = vmatpush1.msra.mxu0 %v497
      %789 = vmatprep.subr.mxu0 0.0
      %790 = vmatpush1.msra.mxu0 %v498
      %791 = vmatprep.subr.mxu0 0.0
      %792 = vmatpush1.msra.mxu0 %v499
      %793 = vmatprep.subr.mxu0 0.0
      %794 = vmatpush1.msra.mxu0 %v500
      %795 = vmatprep.subr.mxu0 0.0
      %796 = vmatpush1.msra.mxu0 %v501
      %797 = vmatprep.subr.mxu0 0.0
      %798 = vmatpush1.msra.mxu0 %v502
      %799 = vmatprep.subr.mxu0 0.0
      %800 = vmatpush1.msra.mxu0 %v503
      %801 = vmatprep.subr.mxu0 0.0
      %802 = vmatpush1.msra.mxu0 %v504
      %803 = vmatprep.subr.mxu0 0.0
      %804 = vmatpush1.msra.mxu0 %v505
      %805 = vmatprep.subr.mxu0 0.0
      %806 = vmatpush1.msra.mxu0 %v506
      %807 = vmatprep.subr.mxu0 0.0
      %808 = vmatpush1.msra.mxu0 %v507
      %809 = vmatprep.subr.mxu0 0.0
      %810 = vmatpush1.msra.mxu0 %v508
      %811 = vmatprep.subr.mxu0 0.0
      %812 = vmatpush1.msra.mxu0 %v509
      %813 = vmatprep.subr.mxu0 0.0
      %814 = vmatpush1.msra.mxu0 %v510
      %815 = vmatprep.subr.mxu0 0.0
      %816 = vmatpush1.msra.mxu0 %v511
      %817 = vmatprep.subr.mxu0 0.0
      %818 = vmatpush1.msra.mxu0 %v512
      %819 = vmatprep.subr.mxu0 0.0
      %820 = vmatpush1.msra.mxu0 0.0
      %821 = vmatprep.subr.mxu0 0.0
      %822 = vmatpush1.msra.mxu0 0.0
      %823 = vmatprep.subr.mxu0 0.0
      %824 = vmatpush1.msra.mxu0 0.0
      %825 = vmatprep.subr.mxu0 0.0
      %826 = vmatpush1.msra.mxu0 0.0
      %827 = vmatprep.subr.mxu0 0.0
      %828 = vmatpush1.msra.mxu0 0.0
      %829 = vmatprep.subr.mxu0 0.0
      %830 = vmatpush1.msra.mxu0 0.0
      %831 = vmatprep.subr.mxu0 0.0
      %832 = vmatpush1.msra.mxu0 0.0
      %833 = vmatprep.subr.mxu0 0.0
      %834 = vmatpush1.msra.mxu0 0.0
      %835 = vmatprep.subr.mxu0 0.0
      %836 = vmatpush1.msra.mxu0 0.0
      %837 = vmatprep.subr.mxu0 0.0
      %838 = vmatpush1.msra.mxu0 0.0
      %839 = vmatprep.subr.mxu0 0.0
      %840 = vmatpush1.msra.mxu0 0.0
      %841 = vmatprep.subr.mxu0 0.0
      %842 = vmatpush1.msra.mxu0 0.0
      %843 = vmatprep.subr.mxu0 0.0
      %844 = vmatpush1.msra.mxu0 0.0
      %845 = vmatprep.subr.mxu0 0.0
      %846 = vmatpush1.msra.mxu0 0.0
      %847 = vmatprep.subr.mxu0 0.0
      %848 = vmatpush1.msra.mxu0 0.0
      %849 = vmatprep.subr.mxu0 0.0
      %850 = vmatpush1.msra.mxu0 0.0
      %851 = vmatprep.mubr.f32.mxu0 0.0
      %852 = vmatmul.mubr.f32.gmra.mrb[0].mxu0 %v465
      %v853 = vpop.f32.mrb[0].mxu0
      %v854 = vadd.f32 %v629, %v853
      %v855 = vpop.f32.mrb[0].mxu0
      %856 = vmatprep.mubr.f32.mxu0 0.0
      %857 = vmatmul.mubr.f32.gmra.mrb[0].mxu0 %v466
      %v858 = vpop.f32.mrb[0].mxu0
      %v859 = vadd.f32 %v634, %v858
      %v860 = vpop.f32.mrb[0].mxu0
      %861 = vmatprep.mubr.f32.mxu0 0.0
      %862 = vmatmul.mubr.f32.gmra.mrb[0].mxu0 %v467
      %v863 = vpop.f32.mrb[0].mxu0
      %v864 = vadd.f32 %v639, %v863
      %v865 = vpop.f32.mrb[0].mxu0
      %866 = vmatprep.mubr.f32.mxu0 0.0
      %867 = vmatmul.mubr.f32.gmra.mrb[0].mxu0 %v468
      %v868 = vpop.f32.mrb[0].mxu0
      %v869 = vadd.f32 %v644, %v868
      %v870 = vpop.f32.mrb[0].mxu0
      %871 = vmatprep.mubr.f32.mxu0 0.0
      %872 = vmatmul.mubr.f32.gmra.mrb[0].mxu0 %v469
      %v873 = vpop.f32.mrb[0].mxu0
      %v874 = vadd.f32 %v649, %v873
      %v875 = vpop.f32.mrb[0].mxu0
      %876 = vmatprep.mubr.f32.mxu0 0.0
      %877 = vmatmul.mubr.f32.gmra.mrb[0].mxu0 %v470
      %v878 = vpop.f32.mrb[0].mxu0
      %v879 = vadd.f32 %v654, %v878
      %v880 = vpop.f32.mrb[0].mxu0
      %881 = vmatprep.mubr.f32.mxu0 0.0
      %882 = vmatmul.mubr.f32.gmra.mrb[0].mxu0 %v471
      %v883 = vpop.f32.mrb[0].mxu0
      %v884 = vadd.f32 %v659, %v883
      %v885 = vpop.f32.mrb[0].mxu0
      %886 = vmatprep.mubr.f32.mxu0 0.0
      %887 = vmatmul.mubr.f32.gmra.mrb[0].mxu0 %v472
      %v888 = vpop.f32.mrb[0].mxu0
      %v889 = vadd.f32 %v664, %v888
      %v890 = vpop.f32.mrb[0].mxu0
      %891 = vmatprep.mubr.f32.mxu0 0.0
      %892 = vmatmul.mubr.f32.gmra.mrb[0].mxu0 %v473
      %v893 = vpop.f32.mrb[0].mxu0
      %v894 = vadd.f32 %v669, %v893
      %v895 = vpop.f32.mrb[0].mxu0
      %896 = vmatprep.mubr.f32.mxu0 0.0
      %897 = vmatmul.mubr.f32.gmra.mrb[0].mxu0 %v474
      %v898 = vpop.f32.mrb[0].mxu0
      %v899 = vadd.f32 %v674, %v898
      %v900 = vpop.f32.mrb[0].mxu0
      %901 = vmatprep.mubr.f32.mxu0 0.0
      %902 = vmatmul.mubr.f32.gmra.mrb[0].mxu0 %v475
      %v903 = vpop.f32.mrb[0].mxu0
      %v904 = vadd.f32 %v679, %v903
      %v905 = vpop.f32.mrb[0].mxu0
      %906 = vmatprep.mubr.f32.mxu0 0.0
      %907 = vmatmul.mubr.f32.gmra.mrb[0].mxu0 %v476
      %v908 = vpop.f32.mrb[0].mxu0
      %v909 = vadd.f32 %v684, %v908
      %v910 = vpop.f32.mrb[0].mxu0
      %911 = vmatprep.mubr.f32.mxu0 0.0
      %912 = vmatmul.mubr.f32.gmra.mrb[0].mxu0 %v477
      %v913 = vpop.f32.mrb[0].mxu0
      %v914 = vadd.f32 %v689, %v913
      %v915 = vpop.f32.mrb[0].mxu0
      %916 = vmatprep.mubr.f32.mxu0 0.0
      %917 = vmatmul.mubr.f32.gmra.mrb[0].mxu0 %v478
      %v918 = vpop.f32.mrb[0].mxu0
      %v919 = vadd.f32 %v694, %v918
      %v920 = vpop.f32.mrb[0].mxu0
      %921 = vmatprep.mubr.f32.mxu0 0.0
      %922 = vmatmul.mubr.f32.gmra.mrb[0].mxu0 %v479
      %v923 = vpop.f32.mrb[0].mxu0
      %v924 = vadd.f32 %v699, %v923
      %v925 = vpop.f32.mrb[0].mxu0
      %926 = vmatprep.mubr.f32.mxu0 0.0
      %927 = vmatmul.mubr.f32.gmra.mrb[0].mxu0 %v480
      %v928 = vpop.f32.mrb[0].mxu0
      %v929 = vadd.f32 %v704, %v928
      %v930 = vpop.f32.mrb[0].mxu0
      %931 = vmatprep.mubr.f32.mxu0 0.0
      %932 = vmatmul.mubr.f32.gmra.mrb[0].mxu0 %v481
      %v933 = vpop.f32.mrb[0].mxu0
      %v934 = vadd.f32 %v709, %v933
      %v935 = vpop.f32.mrb[0].mxu0
      %936 = vmatprep.mubr.f32.mxu0 0.0
      %937 = vmatmul.mubr.f32.gmra.mrb[0].mxu0 %v482
      %v938 = vpop.f32.mrb[0].mxu0
      %v939 = vadd.f32 %v714, %v938
      %v940 = vpop.f32.mrb[0].mxu0
      %941 = vmatprep.mubr.f32.mxu0 0.0
      %942 = vmatmul.mubr.f32.gmra.mrb[0].mxu0 %v483
      %v943 = vpop.f32.mrb[0].mxu0
      %v944 = vadd.f32 %v719, %v943
      %v945 = vpop.f32.mrb[0].mxu0
      %946 = vmatprep.mubr.f32.mxu0 0.0
      %947 = vmatmul.mubr.f32.gmra.mrb[0].mxu0 %v484
      %v948 = vpop.f32.mrb[0].mxu0
      %v949 = vadd.f32 %v724, %v948
      %v950 = vpop.f32.mrb[0].mxu0
      %951 = vmatprep.mubr.f32.mxu0 0.0
      %952 = vmatmul.mubr.f32.gmra.mrb[0].mxu0 %v485
      %v953 = vpop.f32.mrb[0].mxu0
      %v954 = vadd.f32 %v729, %v953
      %v955 = vpop.f32.mrb[0].mxu0
      %956 = vmatprep.mubr.f32.mxu0 0.0
      %957 = vmatmul.mubr.f32.gmra.mrb[0].mxu0 %v486
      %v958 = vpop.f32.mrb[0].mxu0
      %v959 = vadd.f32 %v734, %v958
      %v960 = vpop.f32.mrb[0].mxu0
      %961 = vmatprep.mubr.f32.mxu0 0.0
      %962 = vmatmul.mubr.f32.gmra.mrb[0].mxu0 %v487
      %v963 = vpop.f32.mrb[0].mxu0
      %v964 = vadd.f32 %v739, %v963
      %v965 = vpop.f32.mrb[0].mxu0
      %966 = vmatprep.mubr.f32.mxu0 0.0
      %967 = vmatmul.mubr.f32.gmra.mrb[0].mxu0 %v488
      %v968 = vpop.f32.mrb[0].mxu0
      %v969 = vadd.f32 %v744, %v968
      %v970 = vpop.f32.mrb[0].mxu0
      %971 = vmatprep.mubr.f32.mxu0 0.0
      %972 = vmatmul.mubr.f32.gmra.mrb[0].mxu0 %v489
      %v973 = vpop.f32.mrb[0].mxu0
      %v974 = vadd.f32 %v749, %v973
      %v975 = vpop.f32.mrb[0].mxu0
      %976 = vmatprep.mubr.f32.mxu0 0.0
      %977 = vmatmul.mubr.f32.gmra.mrb[0].mxu0 %v490
      %v978 = vpop.f32.mrb[0].mxu0
      %v979 = vadd.f32 %v754, %v978
      %v980 = vpop.f32.mrb[0].mxu0
      %981 = vmatprep.mubr.f32.mxu0 0.0
      %982 = vmatmul.mubr.f32.gmra.mrb[0].mxu0 %v491
      %v983 = vpop.f32.mrb[0].mxu0
      %v984 = vadd.f32 %v759, %v983
      %v985 = vpop.f32.mrb[0].mxu0
      %986 = vmatprep.mubr.f32.mxu0 0.0
      %987 = vmatmul.mubr.f32.gmra.mrb[0].mxu0 %v492
      %v988 = vpop.f32.mrb[0].mxu0
      %v989 = vadd.f32 %v764, %v988
      %v990 = vpop.f32.mrb[0].mxu0
      %991 = vmatprep.mubr.f32.mxu0 0.0
      %992 = vmatmul.mubr.f32.gmra.mrb[0].mxu0 %v493
      %v993 = vpop.f32.mrb[0].mxu0
      %v994 = vadd.f32 %v769, %v993
      %v995 = vpop.f32.mrb[0].mxu0
      %996 = vmatprep.mubr.f32.mxu0 0.0
      %997 = vmatmul.mubr.f32.gmra.mrb[0].mxu0 %v494
      %v998 = vpop.f32.mrb[0].mxu0
      %v999 = vadd.f32 %v774, %v998
      %v1000 = vpop.f32.mrb[0].mxu0
      %1001 = vmatprep.mubr.f32.mxu0 0.0
      %1002 = vmatmul.mubr.f32.gmra.mrb[0].mxu0 %v495
      %v1003 = vpop.f32.mrb[0].mxu0
      %v1004 = vadd.f32 %v779, %v1003
      %v1005 = vpop.f32.mrb[0].mxu0
      %1006 = vmatprep.mubr.f32.mxu0 0.0
      %1007 = vmatmul.mubr.f32.gmra.mrb[0].mxu0 %v496
      %v1008 = vpop.f32.mrb[0].mxu0
      %v1009 = vadd.f32 %v784, %v1008
      %v1010 = vpop.f32.mrb[0].mxu0
      %1011 = vdwg.mxu0
      %v1012 = vld [vmem:[#allocation2 + $0x2] sm:$0xff]
      %v1013 = vld [vmem:[#allocation2 + $0xa] sm:$0xff]
      %v1014 = vld [vmem:[#allocation2 + $0x1a] sm:$0xff]
      %v1015 = vld [vmem:[#allocation2 + $0x22] sm:$0xff]
      %v1016 = vld [vmem:[#allocation2 + $0x32] sm:$0xff]
      %v1017 = vld [vmem:[#allocation2 + $0x3a] sm:$0xff]
      %v1018 = vld [vmem:[#allocation2 + $0x4a] sm:$0xff]
      %v1019 = vld [vmem:[#allocation2 + $0x52] sm:$0xff]
      %v1020 = vld [vmem:[#allocation2 + $0x62] sm:$0xff]
      %v1021 = vld [vmem:[#allocation2 + $0x6a] sm:$0xff]
      %v1022 = vld [vmem:[#allocation2 + $0x7a] sm:$0xff]
      %v1023 = vld [vmem:[#allocation2 + $0x82] sm:$0xff]
      %v1024 = vld [vmem:[#allocation2 + $0x92] sm:$0xff]
      %v1025 = vld [vmem:[#allocation2 + $0x9a] sm:$0xff]
      %v1026 = vld [vmem:[#allocation2 + $0xaa] sm:$0xff]
      %v1027 = vld [vmem:[#allocation2 + $0xb2] sm:$0xff]
      %v1028 = vld [vmem:[#allocation2 + $0xc2] sm:$0xff]
      %v1029 = vld [vmem:[#allocation2 + $0xca] sm:$0xff]
      %v1030 = vld [vmem:[#allocation2 + $0xda] sm:$0xff]
      %v1031 = vld [vmem:[#allocation2 + $0xe2] sm:$0xff]
      %v1032 = vld [vmem:[#allocation2 + $0xf2] sm:$0xff]
      %v1033 = vld [vmem:[#allocation2 + $0xfa] sm:$0xff]
      %v1034 = vld [vmem:[#allocation2 + $0x10a] sm:$0xff]
      %v1035 = vld [vmem:[#allocation2 + $0x112] sm:$0xff]
      %v1036 = vld [vmem:[#allocation2 + $0x122] sm:$0xff]
      %v1037 = vld [vmem:[#allocation2 + $0x12a] sm:$0xff]
      %v1038 = vld [vmem:[#allocation2 + $0x13a] sm:$0xff]
      %v1039 = vld [vmem:[#allocation2 + $0x142] sm:$0xff]
      %v1040 = vld [vmem:[#allocation2 + $0x152] sm:$0xff]
      %v1041 = vld [vmem:[#allocation2 + $0x15a] sm:$0xff]
      %v1042 = vld [vmem:[#allocation2 + $0x16a] sm:$0xff]
      %v1043 = vld [vmem:[#allocation2 + $0x172] sm:$0xff]
      %s1044 = scalar_lea.vmem %s3, 256
      %v1045 = vld [vmem:[%s1044] sm:$0xff]
      %v1046 = vld [vmem:[%s1044 + $0x8] sm:$0xff]
      %v1047 = vld [vmem:[%s1044 + $0x10] sm:$0xff]
      %v1048 = vld [vmem:[%s1044 + $0x18] sm:$0xff]
      %v1049 = vld [vmem:[%s1044 + $0x20] sm:$0xff]
      %v1050 = vld [vmem:[%s1044 + $0x28] sm:$0xff]
      %v1051 = vld [vmem:[%s1044 + $0x30] sm:$0xff]
      %v1052 = vld [vmem:[%s1044 + $0x38] sm:$0xff]
      %v1053 = vld [vmem:[%s1044 + $0x40] sm:$0xff]
      %v1054 = vld [vmem:[%s1044 + $0x48] sm:$0xff]
      %v1055 = vld [vmem:[%s1044 + $0x50] sm:$0xff]
      %v1056 = vld [vmem:[%s1044 + $0x58] sm:$0xff]
      %v1057 = vld [vmem:[%s1044 + $0x60] sm:$0xff]
      %v1058 = vld [vmem:[%s1044 + $0x68] sm:$0xff]
      %v1059 = vld [vmem:[%s1044 + $0x70] sm:$0xff]
      %v1060 = vld [vmem:[%s1044 + $0x78] sm:$0xff]
      %1061 = vmatprep.subr.mxu0 0.0
      %1062 = vmatpush1.msra.mxu0 %v1045
      %1063 = vmatprep.subr.mxu0 0.0
      %1064 = vmatpush1.msra.mxu0 %v1046
      %1065 = vmatprep.subr.mxu0 0.0
      %1066 = vmatpush1.msra.mxu0 %v1047
      %1067 = vmatprep.subr.mxu0 0.0
      %1068 = vmatpush1.msra.mxu0 %v1048
      %1069 = vmatprep.subr.mxu0 0.0
      %1070 = vmatpush1.msra.mxu0 %v1049
      %1071 = vmatprep.subr.mxu0 0.0
      %1072 = vmatpush1.msra.mxu0 %v1050
      %1073 = vmatprep.subr.mxu0 0.0
      %1074 = vmatpush1.msra.mxu0 %v1051
      %1075 = vmatprep.subr.mxu0 0.0
      %1076 = vmatpush1.msra.mxu0 %v1052
      %1077 = vmatprep.subr.mxu0 0.0
      %1078 = vmatpush1.msra.mxu0 %v1053
      %1079 = vmatprep.subr.mxu0 0.0
      %1080 = vmatpush1.msra.mxu0 %v1054
      %1081 = vmatprep.subr.mxu0 0.0
      %1082 = vmatpush1.msra.mxu0 %v1055
      %1083 = vmatprep.subr.mxu0 0.0
      %1084 = vmatpush1.msra.mxu0 %v1056
      %1085 = vmatprep.subr.mxu0 0.0
      %1086 = vmatpush1.msra.mxu0 %v1057
      %1087 = vmatprep.subr.mxu0 0.0
      %1088 = vmatpush1.msra.mxu0 %v1058
      %1089 = vmatprep.subr.mxu0 0.0
      %1090 = vmatpush1.msra.mxu0 %v1059
      %1091 = vmatprep.subr.mxu0 0.0
      %1092 = vmatpush1.msra.mxu0 %v1060
      %1093 = vmatprep.subr.mxu0 0.0
      %1094 = vmatpush1.msra.mxu0 0.0
      %1095 = vmatprep.subr.mxu0 0.0
      %1096 = vmatpush1.msra.mxu0 0.0
      %1097 = vmatprep.subr.mxu0 0.0
      %1098 = vmatpush1.msra.mxu0 0.0
      %1099 = vmatprep.subr.mxu0 0.0
      %1100 = vmatpush1.msra.mxu0 0.0
      %1101 = vmatprep.subr.mxu0 0.0
      %1102 = vmatpush1.msra.mxu0 0.0
      %1103 = vmatprep.subr.mxu0 0.0
      %1104 = vmatpush1.msra.mxu0 0.0
      %1105 = vmatprep.subr.mxu0 0.0
      %1106 = vmatpush1.msra.mxu0 0.0
      %1107 = vmatprep.subr.mxu0 0.0
      %1108 = vmatpush1.msra.mxu0 0.0
      %1109 = vmatprep.subr.mxu0 0.0
      %1110 = vmatpush1.msra.mxu0 0.0
      %1111 = vmatprep.subr.mxu0 0.0
      %1112 = vmatpush1.msra.mxu0 0.0
      %1113 = vmatprep.subr.mxu0 0.0
      %1114 = vmatpush1.msra.mxu0 0.0
      %1115 = vmatprep.subr.mxu0 0.0
      %1116 = vmatpush1.msra.mxu0 0.0
      %1117 = vmatprep.subr.mxu0 0.0
      %1118 = vmatpush1.msra.mxu0 0.0
      %1119 = vmatprep.subr.mxu0 0.0
      %1120 = vmatpush1.msra.mxu0 0.0
      %1121 = vmatprep.subr.mxu0 0.0
      %1122 = vmatpush1.msra.mxu0 0.0
      %1123 = vmatprep.subr.mxu0 0.0
      %1124 = vmatpush1.msra.mxu0 0.0
      %1125 = vmatprep.mubr.f32.mxu0 0.0
      %1126 = vmatmul.mubr.f32.gmra.mrb[0].mxu0 %v1012
      %v1127 = vpop.f32.mrb[0].mxu0
      %v1128 = vadd.f32 0.0, %v1127
      %v1129 = vpop.f32.mrb[0].mxu0
      %1130 = vmatprep.mubr.f32.mxu0 0.0
      %1131 = vmatmul.mubr.f32.gmra.mrb[0].mxu0 %v1013
      %v1132 = vpop.f32.mrb[0].mxu0
      %v1133 = vadd.f32 0.0, %v1132
      %v1134 = vpop.f32.mrb[0].mxu0
      %1135 = vmatprep.mubr.f32.mxu0 0.0
      %1136 = vmatmul.mubr.f32.gmra.mrb[0].mxu0 %v1014
      %v1137 = vpop.f32.mrb[0].mxu0
      %v1138 = vadd.f32 0.0, %v1137
      %v1139 = vpop.f32.mrb[0].mxu0
      %1140 = vmatprep.mubr.f32.mxu0 0.0
      %1141 = vmatmul.mubr.f32.gmra.mrb[0].mxu0 %v1015
      %v1142 = vpop.f32.mrb[0].mxu0
      %v1143 = vadd.f32 0.0, %v1142
      %v1144 = vpop.f32.mrb[0].mxu0
      %1145 = vmatprep.mubr.f32.mxu0 0.0
      %1146 = vmatmul.mubr.f32.gmra.mrb[0].mxu0 %v1016
      %v1147 = vpop.f32.mrb[0].mxu0
      %v1148 = vadd.f32 0.0, %v1147
      %v1149 = vpop.f32.mrb[0].mxu0
      %1150 = vmatprep.mubr.f32.mxu0 0.0
      %1151 = vmatmul.mubr.f32.gmra.mrb[0].mxu0 %v1017
      %v1152 = vpop.f32.mrb[0].mxu0
      %v1153 = vadd.f32 0.0, %v1152
      %v1154 = vpop.f32.mrb[0].mxu0
      %1155 = vmatprep.mubr.f32.mxu0 0.0
      %1156 = vmatmul.mubr.f32.gmra.mrb[0].mxu0 %v1018
      %v1157 = vpop.f32.mrb[0].mxu0
      %v1158 = vadd.f32 0.0, %v1157
      %v1159 = vpop.f32.mrb[0].mxu0
      %1160 = vmatprep.mubr.f32.mxu0 0.0
      %1161 = vmatmul.mubr.f32.gmra.mrb[0].mxu0 %v1019
      %v1162 = vpop.f32.mrb[0].mxu0
      %v1163 = vadd.f32 0.0, %v1162
      %v1164 = vpop.f32.mrb[0].mxu0
      %1165 = vmatprep.mubr.f32.mxu0 0.0
      %1166 = vmatmul.mubr.f32.gmra.mrb[0].mxu0 %v1020
      %v1167 = vpop.f32.mrb[0].mxu0
      %v1168 = vadd.f32 0.0, %v1167
      %v1169 = vpop.f32.mrb[0].mxu0
      %1170 = vmatprep.mubr.f32.mxu0 0.0
      %1171 = vmatmul.mubr.f32.gmra.mrb[0].mxu0 %v1021
      %v1172 = vpop.f32.mrb[0].mxu0
      %v1173 = vadd.f32 0.0, %v1172
      %v1174 = vpop.f32.mrb[0].mxu0
      %1175 = vmatprep.mubr.f32.mxu0 0.0
      %1176 = vmatmul.mubr.f32.gmra.mrb[0].mxu0 %v1022
      %v1177 = vpop.f32.mrb[0].mxu0
      %v1178 = vadd.f32 0.0, %v1177
      %v1179 = vpop.f32.mrb[0].mxu0
      %1180 = vmatprep.mubr.f32.mxu0 0.0
      %1181 = vmatmul.mubr.f32.gmra.mrb[0].mxu0 %v1023
      %v1182 = vpop.f32.mrb[0].mxu0
      %v1183 = vadd.f32 0.0, %v1182
      %v1184 = vpop.f32.mrb[0].mxu0
      %1185 = vmatprep.mubr.f32.mxu0 0.0
      %1186 = vmatmul.mubr.f32.gmra.mrb[0].mxu0 %v1024
      %v1187 = vpop.f32.mrb[0].mxu0
      %v1188 = vadd.f32 0.0, %v1187
      %v1189 = vpop.f32.mrb[0].mxu0
      %1190 = vmatprep.mubr.f32.mxu0 0.0
      %1191 = vmatmul.mubr.f32.gmra.mrb[0].mxu0 %v1025
      %v1192 = vpop.f32.mrb[0].mxu0
      %v1193 = vadd.f32 0.0, %v1192
      %v1194 = vpop.f32.mrb[0].mxu0
      %1195 = vmatprep.mubr.f32.mxu0 0.0
      %1196 = vmatmul.mubr.f32.gmra.mrb[0].mxu0 %v1026
      %v1197 = vpop.f32.mrb[0].mxu0
      %v1198 = vadd.f32 0.0, %v1197
      %v1199 = vpop.f32.mrb[0].mxu0
      %1200 = vmatprep.mubr.f32.mxu0 0.0
      %1201 = vmatmul.mubr.f32.gmra.mrb[0].mxu0 %v1027
      %v1202 = vpop.f32.mrb[0].mxu0
      %v1203 = vadd.f32 0.0, %v1202
      %v1204 = vpop.f32.mrb[0].mxu0
      %1205 = vmatprep.mubr.f32.mxu0 0.0
      %1206 = vmatmul.mubr.f32.gmra.mrb[0].mxu0 %v1028
      %v1207 = vpop.f32.mrb[0].mxu0
      %v1208 = vadd.f32 0.0, %v1207
      %v1209 = vpop.f32.mrb[0].mxu0
      %1210 = vmatprep.mubr.f32.mxu0 0.0
      %1211 = vmatmul.mubr.f32.gmra.mrb[0].mxu0 %v1029
      %v1212 = vpop.f32.mrb[0].mxu0
      %v1213 = vadd.f32 0.0, %v1212
      %v1214 = vpop.f32.mrb[0].mxu0
      %1215 = vmatprep.mubr.f32.mxu0 0.0
      %1216 = vmatmul.mubr.f32.gmra.mrb[0].mxu0 %v1030
      %v1217 = vpop.f32.mrb[0].mxu0
      %v1218 = vadd.f32 0.0, %v1217
      %v1219 = vpop.f32.mrb[0].mxu0
      %1220 = vmatprep.mubr.f32.mxu0 0.0
      %1221 = vmatmul.mubr.f32.gmra.mrb[0].mxu0 %v1031
      %v1222 = vpop.f32.mrb[0].mxu0
      %v1223 = vadd.f32 0.0, %v1222
      %v1224 = vpop.f32.mrb[0].mxu0
      %1225 = vmatprep.mubr.f32.mxu0 0.0
      %1226 = vmatmul.mubr.f32.gmra.mrb[0].mxu0 %v1032
      %v1227 = vpop.f32.mrb[0].mxu0
      %v1228 = vadd.f32 0.0, %v1227
      %v1229 = vpop.f32.mrb[0].mxu0
      %1230 = vmatprep.mubr.f32.mxu0 0.0
      %1231 = vmatmul.mubr.f32.gmra.mrb[0].mxu0 %v1033
      %v1232 = vpop.f32.mrb[0].mxu0
      %v1233 = vadd.f32 0.0, %v1232
      %v1234 = vpop.f32.mrb[0].mxu0
      %1235 = vmatprep.mubr.f32.mxu0 0.0
      %1236 = vmatmul.mubr.f32.gmra.mrb[0].mxu0 %v1034
      %v1237 = vpop.f32.mrb[0].mxu0
      %v1238 = vadd.f32 0.0, %v1237
      %v1239 = vpop.f32.mrb[0].mxu0
      %1240 = vmatprep.mubr.f32.mxu0 0.0
      %1241 = vmatmul.mubr.f32.gmra.mrb[0].mxu0 %v1035
      %v1242 = vpop.f32.mrb[0].mxu0
      %v1243 = vadd.f32 0.0, %v1242
      %v1244 = vpop.f32.mrb[0].mxu0
      %1245 = vmatprep.mubr.f32.mxu0 0.0
      %1246 = vmatmul.mubr.f32.gmra.mrb[0].mxu0 %v1036
      %v1247 = vpop.f32.mrb[0].mxu0
      %v1248 = vadd.f32 0.0, %v1247
      %v1249 = vpop.f32.mrb[0].mxu0
      %1250 = vmatprep.mubr.f32.mxu0 0.0
      %1251 = vmatmul.mubr.f32.gmra.mrb[0].mxu0 %v1037
      %v1252 = vpop.f32.mrb[0].mxu0
      %v1253 = vadd.f32 0.0, %v1252
      %v1254 = vpop.f32.mrb[0].mxu0
      %1255 = vmatprep.mubr.f32.mxu0 0.0
      %1256 = vmatmul.mubr.f32.gmra.mrb[0].mxu0 %v1038
      %v1257 = vpop.f32.mrb[0].mxu0
      %v1258 = vadd.f32 0.0, %v1257
      %v1259 = vpop.f32.mrb[0].mxu0
      %1260 = vmatprep.mubr.f32.mxu0 0.0
      %1261 = vmatmul.mubr.f32.gmra.mrb[0].mxu0 %v1039
      %v1262 = vpop.f32.mrb[0].mxu0
      %v1263 = vadd.f32 0.0, %v1262
      %v1264 = vpop.f32.mrb[0].mxu0
      %1265 = vmatprep.mubr.f32.mxu0 0.0
      %1266 = vmatmul.mubr.f32.gmra.mrb[0].mxu0 %v1040
      %v1267 = vpop.f32.mrb[0].mxu0
      %v1268 = vadd.f32 0.0, %v1267
      %v1269 = vpop.f32.mrb[0].mxu0
      %1270 = vmatprep.mubr.f32.mxu0 0.0
      %1271 = vmatmul.mubr.f32.gmra.mrb[0].mxu0 %v1041
      %v1272 = vpop.f32.mrb[0].mxu0
      %v1273 = vadd.f32 0.0, %v1272
      %v1274 = vpop.f32.mrb[0].mxu0
      %1275 = vmatprep.mubr.f32.mxu0 0.0
      %1276 = vmatmul.mubr.f32.gmra.mrb[0].mxu0 %v1042
      %v1277 = vpop.f32.mrb[0].mxu0
      %v1278 = vadd.f32 0.0, %v1277
      %v1279 = vpop.f32.mrb[0].mxu0
      %1280 = vmatprep.mubr.f32.mxu0 0.0
      %1281 = vmatmul.mubr.f32.gmra.mrb[0].mxu0 %v1043
      %v1282 = vpop.f32.mrb[0].mxu0
      %v1283 = vadd.f32 0.0, %v1282
      %v1284 = vpop.f32.mrb[0].mxu0
      %1285 = vdwg.mxu0
      %v1286 = vadd.f32 %v854, %v1128
      %v1287 = vadd.f32 %v859, %v1133
      %v1288 = vadd.f32 %v864, %v1138
      %v1289 = vadd.f32 %v869, %v1143
      %v1290 = vadd.f32 %v874, %v1148
      %v1291 = vadd.f32 %v879, %v1153
      %v1292 = vadd.f32 %v884, %v1158
      %v1293 = vadd.f32 %v889, %v1163
      %v1294 = vadd.f32 %v894, %v1168
      %v1295 = vadd.f32 %v899, %v1173
      %v1296 = vadd.f32 %v904, %v1178
      %v1297 = vadd.f32 %v909, %v1183
      %v1298 = vadd.f32 %v914, %v1188
      %v1299 = vadd.f32 %v919, %v1193
      %v1300 = vadd.f32 %v924, %v1198
      %v1301 = vadd.f32 %v929, %v1203
      %v1302 = vadd.f32 %v934, %v1208
      %v1303 = vadd.f32 %v939, %v1213
      %v1304 = vadd.f32 %v944, %v1218
      %v1305 = vadd.f32 %v949, %v1223
      %v1306 = vadd.f32 %v954, %v1228
      %v1307 = vadd.f32 %v959, %v1233
      %v1308 = vadd.f32 %v964, %v1238
      %v1309 = vadd.f32 %v969, %v1243
      %v1310 = vadd.f32 %v974, %v1248
      %v1311 = vadd.f32 %v979, %v1253
      %v1312 = vadd.f32 %v984, %v1258
      %v1313 = vadd.f32 %v989, %v1263
      %v1314 = vadd.f32 %v994, %v1268
      %v1315 = vadd.f32 %v999, %v1273
      %v1316 = vadd.f32 %v1004, %v1278
      %v1317 = vadd.f32 %v1009, %v1283
      %v1318 = vld [vmem:[%s432] sm:$0xff]
      %v1319 = vld [vmem:[%s432 + $0x8] sm:$0xff]
      %v1320 = vld [vmem:[%s432 + $0x18] sm:$0xff]
      %v1321 = vld [vmem:[%s432 + $0x20] sm:$0xff]
      %v1322 = vld [vmem:[%s432 + $0x30] sm:$0xff]
      %v1323 = vld [vmem:[%s432 + $0x38] sm:$0xff]
      %v1324 = vld [vmem:[%s432 + $0x48] sm:$0xff]
      %v1325 = vld [vmem:[%s432 + $0x50] sm:$0xff]
      %v1326 = vld [vmem:[%s432 + $0x60] sm:$0xff]
      %v1327 = vld [vmem:[%s432 + $0x68] sm:$0xff]
      %v1328 = vld [vmem:[%s432 + $0x78] sm:$0xff]
      %v1329 = vld [vmem:[%s432 + $0x80] sm:$0xff]
      %v1330 = vld [vmem:[%s432 + $0x90] sm:$0xff]
      %v1331 = vld [vmem:[%s432 + $0x98] sm:$0xff]
      %v1332 = vld [vmem:[%s432 + $0xa8] sm:$0xff]
      %v1333 = vld [vmem:[%s432 + $0xb0] sm:$0xff]
      %v1334 = vld [vmem:[%s432 + $0xc0] sm:$0xff]
      %v1335 = vld [vmem:[%s432 + $0xc8] sm:$0xff]
      %v1336 = vld [vmem:[%s432 + $0xd8] sm:$0xff]
      %v1337 = vld [vmem:[%s432 + $0xe0] sm:$0xff]
      %v1338 = vld [vmem:[%s432 + $0xf0] sm:$0xff]
      %v1339 = vld [vmem:[%s432 + $0xf8] sm:$0xff]
      %v1340 = vld [vmem:[%s432 + $0x108] sm:$0xff]
      %v1341 = vld [vmem:[%s432 + $0x110] sm:$0xff]
      %v1342 = vld [vmem:[%s432 + $0x120] sm:$0xff]
      %v1343 = vld [vmem:[%s432 + $0x128] sm:$0xff]
      %v1344 = vld [vmem:[%s432 + $0x138] sm:$0xff]
      %v1345 = vld [vmem:[%s432 + $0x140] sm:$0xff]
      %v1346 = vld [vmem:[%s432 + $0x150] sm:$0xff]
      %v1347 = vld [vmem:[%s432 + $0x158] sm:$0xff]
      %v1348 = vld [vmem:[%s432 + $0x168] sm:$0xff]
      %v1349 = vld [vmem:[%s432 + $0x170] sm:$0xff]
      %s1350 = scalar_lea.vmem %s3, 384
      %v1351 = vld [vmem:[%s1350] sm:$0xff]
      %v1352 = vld [vmem:[%s1350 + $0x8] sm:$0xff]
      %v1353 = vld [vmem:[%s1350 + $0x10] sm:$0xff]
      %v1354 = vld [vmem:[%s1350 + $0x18] sm:$0xff]
      %v1355 = vld [vmem:[%s1350 + $0x20] sm:$0xff]
      %v1356 = vld [vmem:[%s1350 + $0x28] sm:$0xff]
      %v1357 = vld [vmem:[%s1350 + $0x30] sm:$0xff]
      %v1358 = vld [vmem:[%s1350 + $0x38] sm:$0xff]
      %v1359 = vld [vmem:[%s1350 + $0x40] sm:$0xff]
      %v1360 = vld [vmem:[%s1350 + $0x48] sm:$0xff]
      %v1361 = vld [vmem:[%s1350 + $0x50] sm:$0xff]
      %v1362 = vld [vmem:[%s1350 + $0x58] sm:$0xff]
      %v1363 = vld [vmem:[%s1350 + $0x60] sm:$0xff]
      %v1364 = vld [vmem:[%s1350 + $0x68] sm:$0xff]
      %v1365 = vld [vmem:[%s1350 + $0x70] sm:$0xff]
      %v1366 = vld [vmem:[%s1350 + $0x78] sm:$0xff]
      %1367 = vmatprep.subr.mxu0 0.0
      %1368 = vmatpush1.msra.mxu0 %v1351
      %1369 = vmatprep.subr.mxu0 0.0
      %1370 = vmatpush1.msra.mxu0 %v1352
      %1371 = vmatprep.subr.mxu0 0.0
      %1372 = vmatpush1.msra.mxu0 %v1353
      %1373 = vmatprep.subr.mxu0 0.0
      %1374 = vmatpush1.msra.mxu0 %v1354
      %1375 = vmatprep.subr.mxu0 0.0
      %1376 = vmatpush1.msra.mxu0 %v1355
      %1377 = vmatprep.subr.mxu0 0.0
      %1378 = vmatpush1.msra.mxu0 %v1356
      %1379 = vmatprep.subr.mxu0 0.0
      %1380 = vmatpush1.msra.mxu0 %v1357
      %1381 = vmatprep.subr.mxu0 0.0
      %1382 = vmatpush1.msra.mxu0 %v1358
      %1383 = vmatprep.subr.mxu0 0.0
      %1384 = vmatpush1.msra.mxu0 %v1359
      %1385 = vmatprep.subr.mxu0 0.0
      %1386 = vmatpush1.msra.mxu0 %v1360
      %1387 = vmatprep.subr.mxu0 0.0
      %1388 = vmatpush1.msra.mxu0 %v1361
      %1389 = vmatprep.subr.mxu0 0.0
      %1390 = vmatpush1.msra.mxu0 %v1362
      %1391 = vmatprep.subr.mxu0 0.0
      %1392 = vmatpush1.msra.mxu0 %v1363
      %1393 = vmatprep.subr.mxu0 0.0
      %1394 = vmatpush1.msra.mxu0 %v1364
      %1395 = vmatprep.subr.mxu0 0.0
      %1396 = vmatpush1.msra.mxu0 %v1365
      %1397 = vmatprep.subr.mxu0 0.0
      %1398 = vmatpush1.msra.mxu0 %v1366
      %1399 = vmatprep.subr.mxu0 0.0
      %1400 = vmatpush1.msra.mxu0 0.0
      %1401 = vmatprep.subr.mxu0 0.0
      %1402 = vmatpush1.msra.mxu0 0.0
      %1403 = vmatprep.subr.mxu0 0.0
      %1404 = vmatpush1.msra.mxu0 0.0
      %1405 = vmatprep.subr.mxu0 0.0
      %1406 = vmatpush1.msra.mxu0 0.0
      %1407 = vmatprep.subr.mxu0 0.0
      %1408 = vmatpush1.msra.mxu0 0.0
      %1409 = vmatprep.subr.mxu0 0.0
      %1410 = vmatpush1.msra.mxu0 0.0
      %1411 = vmatprep.subr.mxu0 0.0
      %1412 = vmatpush1.msra.mxu0 0.0
      %1413 = vmatprep.subr.mxu0 0.0
      %1414 = vmatpush1.msra.mxu0 0.0
      %1415 = vmatprep.subr.mxu0 0.0
      %1416 = vmatpush1.msra.mxu0 0.0
      %1417 = vmatprep.subr.mxu0 0.0
      %1418 = vmatpush1.msra.mxu0 0.0
      %1419 = vmatprep.subr.mxu0 0.0
      %1420 = vmatpush1.msra.mxu0 0.0
      %1421 = vmatprep.subr.mxu0 0.0
      %1422 = vmatpush1.msra.mxu0 0.0
      %1423 = vmatprep.subr.mxu0 0.0
      %1424 = vmatpush1.msra.mxu0 0.0
      %1425 = vmatprep.subr.mxu0 0.0
      %1426 = vmatpush1.msra.mxu0 0.0
      %1427 = vmatprep.subr.mxu0 0.0
      %1428 = vmatpush1.msra.mxu0 0.0
      %1429 = vmatprep.subr.mxu0 0.0
      %1430 = vmatpush1.msra.mxu0 0.0
      %1431 = vmatprep.mubr.f32.mxu0 0.0
      %1432 = vmatmul.mubr.f32.gmra.mrb[0].mxu0 %v1318
      %v1433 = vpop.f32.mrb[0].mxu0
      %v1434 = vadd.f32 0.0, %v1433
      %v1435 = vpop.f32.mrb[0].mxu0
      %1436 = vmatprep.mubr.f32.mxu0 0.0
      %1437 = vmatmul.mubr.f32.gmra.mrb[0].mxu0 %v1319
      %v1438 = vpop.f32.mrb[0].mxu0
      %v1439 = vadd.f32 0.0, %v1438
      %v1440 = vpop.f32.mrb[0].mxu0
      %1441 = vmatprep.mubr.f32.mxu0 0.0
      %1442 = vmatmul.mubr.f32.gmra.mrb[0].mxu0 %v1320
      %v1443 = vpop.f32.mrb[0].mxu0
      %v1444 = vadd.f32 0.0, %v1443
      %v1445 = vpop.f32.mrb[0].mxu0
      %1446 = vmatprep.mubr.f32.mxu0 0.0
      %1447 = vmatmul.mubr.f32.gmra.mrb[0].mxu0 %v1321
      %v1448 = vpop.f32.mrb[0].mxu0
      %v1449 = vadd.f32 0.0, %v1448
      %v1450 = vpop.f32.mrb[0].mxu0
      %1451 = vmatprep.mubr.f32.mxu0 0.0
      %1452 = vmatmul.mubr.f32.gmra.mrb[0].mxu0 %v1322
      %v1453 = vpop.f32.mrb[0].mxu0
      %v1454 = vadd.f32 0.0, %v1453
      %v1455 = vpop.f32.mrb[0].mxu0
      %1456 = vmatprep.mubr.f32.mxu0 0.0
      %1457 = vmatmul.mubr.f32.gmra.mrb[0].mxu0 %v1323
      %v1458 = vpop.f32.mrb[0].mxu0
      %v1459 = vadd.f32 0.0, %v1458
      %v1460 = vpop.f32.mrb[0].mxu0
      %1461 = vmatprep.mubr.f32.mxu0 0.0
      %1462 = vmatmul.mubr.f32.gmra.mrb[0].mxu0 %v1324
      %v1463 = vpop.f32.mrb[0].mxu0
      %v1464 = vadd.f32 0.0, %v1463
      %v1465 = vpop.f32.mrb[0].mxu0
      %1466 = vmatprep.mubr.f32.mxu0 0.0
      %1467 = vmatmul.mubr.f32.gmra.mrb[0].mxu0 %v1325
      %v1468 = vpop.f32.mrb[0].mxu0
      %v1469 = vadd.f32 0.0, %v1468
      %v1470 = vpop.f32.mrb[0].mxu0
      %1471 = vmatprep.mubr.f32.mxu0 0.0
      %1472 = vmatmul.mubr.f32.gmra.mrb[0].mxu0 %v1326
      %v1473 = vpop.f32.mrb[0].mxu0
      %v1474 = vadd.f32 0.0, %v1473
      %v1475 = vpop.f32.mrb[0].mxu0
      %1476 = vmatprep.mubr.f32.mxu0 0.0
      %1477 = vmatmul.mubr.f32.gmra.mrb[0].mxu0 %v1327
      %v1478 = vpop.f32.mrb[0].mxu0
      %v1479 = vadd.f32 0.0, %v1478
      %v1480 = vpop.f32.mrb[0].mxu0
      %1481 = vmatprep.mubr.f32.mxu0 0.0
      %1482 = vmatmul.mubr.f32.gmra.mrb[0].mxu0 %v1328
      %v1483 = vpop.f32.mrb[0].mxu0
      %v1484 = vadd.f32 0.0, %v1483
      %v1485 = vpop.f32.mrb[0].mxu0
      %1486 = vmatprep.mubr.f32.mxu0 0.0
      %1487 = vmatmul.mubr.f32.gmra.mrb[0].mxu0 %v1329
      %v1488 = vpop.f32.mrb[0].mxu0
      %v1489 = vadd.f32 0.0, %v1488
      %v1490 = vpop.f32.mrb[0].mxu0
      %1491 = vmatprep.mubr.f32.mxu0 0.0
      %1492 = vmatmul.mubr.f32.gmra.mrb[0].mxu0 %v1330
      %v1493 = vpop.f32.mrb[0].mxu0
      %v1494 = vadd.f32 0.0, %v1493
      %v1495 = vpop.f32.mrb[0].mxu0
      %1496 = vmatprep.mubr.f32.mxu0 0.0
      %1497 = vmatmul.mubr.f32.gmra.mrb[0].mxu0 %v1331
      %v1498 = vpop.f32.mrb[0].mxu0
      %v1499 = vadd.f32 0.0, %v1498
      %v1500 = vpop.f32.mrb[0].mxu0
      %1501 = vmatprep.mubr.f32.mxu0 0.0
      %1502 = vmatmul.mubr.f32.gmra.mrb[0].mxu0 %v1332
      %v1503 = vpop.f32.mrb[0].mxu0
      %v1504 = vadd.f32 0.0, %v1503
      %v1505 = vpop.f32.mrb[0].mxu0
      %1506 = vmatprep.mubr.f32.mxu0 0.0
      %1507 = vmatmul.mubr.f32.gmra.mrb[0].mxu0 %v1333
      %v1508 = vpop.f32.mrb[0].mxu0
      %v1509 = vadd.f32 0.0, %v1508
      %v1510 = vpop.f32.mrb[0].mxu0
      %1511 = vmatprep.mubr.f32.mxu0 0.0
      %1512 = vmatmul.mubr.f32.gmra.mrb[0].mxu0 %v1334
      %v1513 = vpop.f32.mrb[0].mxu0
      %v1514 = vadd.f32 0.0, %v1513
      %v1515 = vpop.f32.mrb[0].mxu0
      %1516 = vmatprep.mubr.f32.mxu0 0.0
      %1517 = vmatmul.mubr.f32.gmra.mrb[0].mxu0 %v1335
      %v1518 = vpop.f32.mrb[0].mxu0
      %v1519 = vadd.f32 0.0, %v1518
      %v1520 = vpop.f32.mrb[0].mxu0
      %1521 = vmatprep.mubr.f32.mxu0 0.0
      %1522 = vmatmul.mubr.f32.gmra.mrb[0].mxu0 %v1336
      %v1523 = vpop.f32.mrb[0].mxu0
      %v1524 = vadd.f32 0.0, %v1523
      %v1525 = vpop.f32.mrb[0].mxu0
      %1526 = vmatprep.mubr.f32.mxu0 0.0
      %1527 = vmatmul.mubr.f32.gmra.mrb[0].mxu0 %v1337
      %v1528 = vpop.f32.mrb[0].mxu0
      %v1529 = vadd.f32 0.0, %v1528
      %v1530 = vpop.f32.mrb[0].mxu0
      %1531 = vmatprep.mubr.f32.mxu0 0.0
      %1532 = vmatmul.mubr.f32.gmra.mrb[0].mxu0 %v1338
      %v1533 = vpop.f32.mrb[0].mxu0
      %v1534 = vadd.f32 0.0, %v1533
      %v1535 = vpop.f32.mrb[0].mxu0
      %1536 = vmatprep.mubr.f32.mxu0 0.0
      %1537 = vmatmul.mubr.f32.gmra.mrb[0].mxu0 %v1339
      %v1538 = vpop.f32.mrb[0].mxu0
      %v1539 = vadd.f32 0.0, %v1538
      %v1540 = vpop.f32.mrb[0].mxu0
      %1541 = vmatprep.mubr.f32.mxu0 0.0
      %1542 = vmatmul.mubr.f32.gmra.mrb[0].mxu0 %v1340
      %v1543 = vpop.f32.mrb[0].mxu0
      %v1544 = vadd.f32 0.0, %v1543
      %v1545 = vpop.f32.mrb[0].mxu0
      %1546 = vmatprep.mubr.f32.mxu0 0.0
      %1547 = vmatmul.mubr.f32.gmra.mrb[0].mxu0 %v1341
      %v1548 = vpop.f32.mrb[0].mxu0
      %v1549 = vadd.f32 0.0, %v1548
      %v1550 = vpop.f32.mrb[0].mxu0
      %1551 = vmatprep.mubr.f32.mxu0 0.0
      %1552 = vmatmul.mubr.f32.gmra.mrb[0].mxu0 %v1342
      %v1553 = vpop.f32.mrb[0].mxu0
      %v1554 = vadd.f32 0.0, %v1553
      %v1555 = vpop.f32.mrb[0].mxu0
      %1556 = vmatprep.mubr.f32.mxu0 0.0
      %1557 = vmatmul.mubr.f32.gmra.mrb[0].mxu0 %v1343
      %v1558 = vpop.f32.mrb[0].mxu0
      %v1559 = vadd.f32 0.0, %v1558
      %v1560 = vpop.f32.mrb[0].mxu0
      %1561 = vmatprep.mubr.f32.mxu0 0.0
      %1562 = vmatmul.mubr.f32.gmra.mrb[0].mxu0 %v1344
      %v1563 = vpop.f32.mrb[0].mxu0
      %v1564 = vadd.f32 0.0, %v1563
      %v1565 = vpop.f32.mrb[0].mxu0
      %1566 = vmatprep.mubr.f32.mxu0 0.0
      %1567 = vmatmul.mubr.f32.gmra.mrb[0].mxu0 %v1345
      %v1568 = vpop.f32.mrb[0].mxu0
      %v1569 = vadd.f32 0.0, %v1568
      %v1570 = vpop.f32.mrb[0].mxu0
      %1571 = vmatprep.mubr.f32.mxu0 0.0
      %1572 = vmatmul.mubr.f32.gmra.mrb[0].mxu0 %v1346
      %v1573 = vpop.f32.mrb[0].mxu0
      %v1574 = vadd.f32 0.0, %v1573
      %v1575 = vpop.f32.mrb[0].mxu0
      %1576 = vmatprep.mubr.f32.mxu0 0.0
      %1577 = vmatmul.mubr.f32.gmra.mrb[0].mxu0 %v1347
      %v1578 = vpop.f32.mrb[0].mxu0
      %v1579 = vadd.f32 0.0, %v1578
      %v1580 = vpop.f32.mrb[0].mxu0
      %1581 = vmatprep.mubr.f32.mxu0 0.0
      %1582 = vmatmul.mubr.f32.gmra.mrb[0].mxu0 %v1348
      %v1583 = vpop.f32.mrb[0].mxu0
      %v1584 = vadd.f32 0.0, %v1583
      %v1585 = vpop.f32.mrb[0].mxu0
      %1586 = vmatprep.mubr.f32.mxu0 0.0
      %1587 = vmatmul.mubr.f32.gmra.mrb[0].mxu0 %v1349
      %v1588 = vpop.f32.mrb[0].mxu0
      %v1589 = vadd.f32 0.0, %v1588
      %v1590 = vpop.f32.mrb[0].mxu0
      %1591 = vdwg.mxu0
      %v1592 = vadd.f32 %v1286, %v1434
      %v1593 = vadd.f32 %v1287, %v1439
      %v1594 = vadd.f32 %v1288, %v1444
      %v1595 = vadd.f32 %v1289, %v1449
      %v1596 = vadd.f32 %v1290, %v1454
      %v1597 = vadd.f32 %v1291, %v1459
      %v1598 = vadd.f32 %v1292, %v1464
      %v1599 = vadd.f32 %v1293, %v1469
      %v1600 = vadd.f32 %v1294, %v1474
      %v1601 = vadd.f32 %v1295, %v1479
      %v1602 = vadd.f32 %v1296, %v1484
      %v1603 = vadd.f32 %v1297, %v1489
      %v1604 = vadd.f32 %v1298, %v1494
      %v1605 = vadd.f32 %v1299, %v1499
      %v1606 = vadd.f32 %v1300, %v1504
      %v1607 = vadd.f32 %v1301, %v1509
      %v1608 = vadd.f32 %v1302, %v1514
      %v1609 = vadd.f32 %v1303, %v1519
      %v1610 = vadd.f32 %v1304, %v1524
      %v1611 = vadd.f32 %v1305, %v1529
      %v1612 = vadd.f32 %v1306, %v1534
      %v1613 = vadd.f32 %v1307, %v1539
      %v1614 = vadd.f32 %v1308, %v1544
      %v1615 = vadd.f32 %v1309, %v1549
      %v1616 = vadd.f32 %v1310, %v1554
      %v1617 = vadd.f32 %v1311, %v1559
      %v1618 = vadd.f32 %v1312, %v1564
      %v1619 = vadd.f32 %v1313, %v1569
      %v1620 = vadd.f32 %v1314, %v1574
      %v1621 = vadd.f32 %v1315, %v1579
      %v1622 = vadd.f32 %v1316, %v1584
      %v1623 = vadd.f32 %v1317, %v1589
      %v1624 = vld [vmem:[%s432 + $0x1] sm:$0xff]
      %v1625 = vld [vmem:[%s432 + $0x9] sm:$0xff]
      %v1626 = vld [vmem:[%s432 + $0x19] sm:$0xff]
      %v1627 = vld [vmem:[%s432 + $0x21] sm:$0xff]
      %v1628 = vld [vmem:[%s432 + $0x31] sm:$0xff]
      %v1629 = vld [vmem:[%s432 + $0x39] sm:$0xff]
      %v1630 = vld [vmem:[%s432 + $0x49] sm:$0xff]
      %v1631 = vld [vmem:[%s432 + $0x51] sm:$0xff]
      %v1632 = vld [vmem:[%s432 + $0x61] sm:$0xff]
      %v1633 = vld [vmem:[%s432 + $0x69] sm:$0xff]
      %v1634 = vld [vmem:[%s432 + $0x79] sm:$0xff]
      %v1635 = vld [vmem:[%s432 + $0x81] sm:$0xff]
      %v1636 = vld [vmem:[%s432 + $0x91] sm:$0xff]
      %v1637 = vld [vmem:[%s432 + $0x99] sm:$0xff]
      %v1638 = vld [vmem:[%s432 + $0xa9] sm:$0xff]
      %v1639 = vld [vmem:[%s432 + $0xb1] sm:$0xff]
      %v1640 = vld [vmem:[%s432 + $0xc1] sm:$0xff]
      %v1641 = vld [vmem:[%s432 + $0xc9] sm:$0xff]
      %v1642 = vld [vmem:[%s432 + $0xd9] sm:$0xff]
      %v1643 = vld [vmem:[%s432 + $0xe1] sm:$0xff]
      %v1644 = vld [vmem:[%s432 + $0xf1] sm:$0xff]
      %v1645 = vld [vmem:[%s432 + $0xf9] sm:$0xff]
      %v1646 = vld [vmem:[%s432 + $0x109] sm:$0xff]
      %v1647 = vld [vmem:[%s432 + $0x111] sm:$0xff]
      %v1648 = vld [vmem:[%s432 + $0x121] sm:$0xff]
      %v1649 = vld [vmem:[%s432 + $0x129] sm:$0xff]
      %v1650 = vld [vmem:[%s432 + $0x139] sm:$0xff]
      %v1651 = vld [vmem:[%s432 + $0x141] sm:$0xff]
      %v1652 = vld [vmem:[%s432 + $0x151] sm:$0xff]
      %v1653 = vld [vmem:[%s432 + $0x159] sm:$0xff]
      %v1654 = vld [vmem:[%s432 + $0x169] sm:$0xff]
      %v1655 = vld [vmem:[%s432 + $0x171] sm:$0xff]
      %s1656 = scalar_lea.vmem %s3, 512
      %v1657 = vld [vmem:[%s1656] sm:$0xff]
      %v1658 = vld [vmem:[%s1656 + $0x8] sm:$0xff]
      %v1659 = vld [vmem:[%s1656 + $0x10] sm:$0xff]
      %v1660 = vld [vmem:[%s1656 + $0x18] sm:$0xff]
      %v1661 = vld [vmem:[%s1656 + $0x20] sm:$0xff]
      %v1662 = vld [vmem:[%s1656 + $0x28] sm:$0xff]
      %v1663 = vld [vmem:[%s1656 + $0x30] sm:$0xff]
      %v1664 = vld [vmem:[%s1656 + $0x38] sm:$0xff]
      %v1665 = vld [vmem:[%s1656 + $0x40] sm:$0xff]
      %v1666 = vld [vmem:[%s1656 + $0x48] sm:$0xff]
      %v1667 = vld [vmem:[%s1656 + $0x50] sm:$0xff]
      %v1668 = vld [vmem:[%s1656 + $0x58] sm:$0xff]
      %v1669 = vld [vmem:[%s1656 + $0x60] sm:$0xff]
      %v1670 = vld [vmem:[%s1656 + $0x68] sm:$0xff]
      %v1671 = vld [vmem:[%s1656 + $0x70] sm:$0xff]
      %v1672 = vld [vmem:[%s1656 + $0x78] sm:$0xff]
      %1673 = vmatprep.subr.mxu0 0.0
      %1674 = vmatpush1.msra.mxu0 %v1657
      %1675 = vmatprep.subr.mxu0 0.0
      %1676 = vmatpush1.msra.mxu0 %v1658
      %1677 = vmatprep.subr.mxu0 0.0
      %1678 = vmatpush1.msra.mxu0 %v1659
      %1679 = vmatprep.subr.mxu0 0.0
      %1680 = vmatpush1.msra.mxu0 %v1660
      %1681 = vmatprep.subr.mxu0 0.0
      %1682 = vmatpush1.msra.mxu0 %v1661
      %1683 = vmatprep.subr.mxu0 0.0
      %1684 = vmatpush1.msra.mxu0 %v1662
      %1685 = vmatprep.subr.mxu0 0.0
      %1686 = vmatpush1.msra.mxu0 %v1663
      %1687 = vmatprep.subr.mxu0 0.0
      %1688 = vmatpush1.msra.mxu0 %v1664
      %1689 = vmatprep.subr.mxu0 0.0
      %1690 = vmatpush1.msra.mxu0 %v1665
      %1691 = vmatprep.subr.mxu0 0.0
      %1692 = vmatpush1.msra.mxu0 %v1666
      %1693 = vmatprep.subr.mxu0 0.0
      %1694 = vmatpush1.msra.mxu0 %v1667
      %1695 = vmatprep.subr.mxu0 0.0
      %1696 = vmatpush1.msra.mxu0 %v1668
      %1697 = vmatprep.subr.mxu0 0.0
      %1698 = vmatpush1.msra.mxu0 %v1669
      %1699 = vmatprep.subr.mxu0 0.0
      %1700 = vmatpush1.msra.mxu0 %v1670
      %1701 = vmatprep.subr.mxu0 0.0
      %1702 = vmatpush1.msra.mxu0 %v1671
      %1703 = vmatprep.subr.mxu0 0.0
      %1704 = vmatpush1.msra.mxu0 %v1672
      %1705 = vmatprep.subr.mxu0 0.0
      %1706 = vmatpush1.msra.mxu0 0.0
      %1707 = vmatprep.subr.mxu0 0.0
      %1708 = vmatpush1.msra.mxu0 0.0
      %1709 = vmatprep.subr.mxu0 0.0
      %1710 = vmatpush1.msra.mxu0 0.0
      %1711 = vmatprep.subr.mxu0 0.0
      %1712 = vmatpush1.msra.mxu0 0.0
      %1713 = vmatprep.subr.mxu0 0.0
      %1714 = vmatpush1.msra.mxu0 0.0
      %1715 = vmatprep.subr.mxu0 0.0
      %1716 = vmatpush1.msra.mxu0 0.0
      %1717 = vmatprep.subr.mxu0 0.0
      %1718 = vmatpush1.msra.mxu0 0.0
      %1719 = vmatprep.subr.mxu0 0.0
      %1720 = vmatpush1.msra.mxu0 0.0
      %1721 = vmatprep.subr.mxu0 0.0
      %1722 = vmatpush1.msra.mxu0 0.0
      %1723 = vmatprep.subr.mxu0 0.0
      %1724 = vmatpush1.msra.mxu0 0.0
      %1725 = vmatprep.subr.mxu0 0.0
      %1726 = vmatpush1.msra.mxu0 0.0
      %1727 = vmatprep.subr.mxu0 0.0
      %1728 = vmatpush1.msra.mxu0 0.0
      %1729 = vmatprep.subr.mxu0 0.0
      %1730 = vmatpush1.msra.mxu0 0.0
      %1731 = vmatprep.subr.mxu0 0.0
      %1732 = vmatpush1.msra.mxu0 0.0
      %1733 = vmatprep.subr.mxu0 0.0
      %1734 = vmatpush1.msra.mxu0 0.0
      %1735 = vmatprep.subr.mxu0 0.0
      %1736 = vmatpush1.msra.mxu0 0.0
      %1737 = vmatprep.mubr.f32.mxu0 0.0
      %1738 = vmatmul.mubr.f32.gmra.mrb[0].mxu0 %v1624
      %v1739 = vpop.f32.mrb[0].mxu0
      %v1740 = vadd.f32 0.0, %v1739
      %v1741 = vpop.f32.mrb[0].mxu0
      %1742 = vmatprep.mubr.f32.mxu0 0.0
      %1743 = vmatmul.mubr.f32.gmra.mrb[0].mxu0 %v1625
      %v1744 = vpop.f32.mrb[0].mxu0
      %v1745 = vadd.f32 0.0, %v1744
      %v1746 = vpop.f32.mrb[0].mxu0
      %1747 = vmatprep.mubr.f32.mxu0 0.0
      %1748 = vmatmul.mubr.f32.gmra.mrb[0].mxu0 %v1626
      %v1749 = vpop.f32.mrb[0].mxu0
      %v1750 = vadd.f32 0.0, %v1749
      %v1751 = vpop.f32.mrb[0].mxu0
      %1752 = vmatprep.mubr.f32.mxu0 0.0
      %1753 = vmatmul.mubr.f32.gmra.mrb[0].mxu0 %v1627
      %v1754 = vpop.f32.mrb[0].mxu0
      %v1755 = vadd.f32 0.0, %v1754
      %v1756 = vpop.f32.mrb[0].mxu0
      %1757 = vmatprep.mubr.f32.mxu0 0.0
      %1758 = vmatmul.mubr.f32.gmra.mrb[0].mxu0 %v1628
      %v1759 = vpop.f32.mrb[0].mxu0
      %v1760 = vadd.f32 0.0, %v1759
      %v1761 = vpop.f32.mrb[0].mxu0
      %1762 = vmatprep.mubr.f32.mxu0 0.0
      %1763 = vmatmul.mubr.f32.gmra.mrb[0].mxu0 %v1629
      %v1764 = vpop.f32.mrb[0].mxu0
      %v1765 = vadd.f32 0.0, %v1764
      %v1766 = vpop.f32.mrb[0].mxu0
      %1767 = vmatprep.mubr.f32.mxu0 0.0
      %1768 = vmatmul.mubr.f32.gmra.mrb[0].mxu0 %v1630
      %v1769 = vpop.f32.mrb[0].mxu0
      %v1770 = vadd.f32 0.0, %v1769
      %v1771 = vpop.f32.mrb[0].mxu0
      %1772 = vmatprep.mubr.f32.mxu0 0.0
      %1773 = vmatmul.mubr.f32.gmra.mrb[0].mxu0 %v1631
      %v1774 = vpop.f32.mrb[0].mxu0
      %v1775 = vadd.f32 0.0, %v1774
      %v1776 = vpop.f32.mrb[0].mxu0
      %1777 = vmatprep.mubr.f32.mxu0 0.0
      %1778 = vmatmul.mubr.f32.gmra.mrb[0].mxu0 %v1632
      %v1779 = vpop.f32.mrb[0].mxu0
      %v1780 = vadd.f32 0.0, %v1779
      %v1781 = vpop.f32.mrb[0].mxu0
      %1782 = vmatprep.mubr.f32.mxu0 0.0
      %1783 = vmatmul.mubr.f32.gmra.mrb[0].mxu0 %v1633
      %v1784 = vpop.f32.mrb[0].mxu0
      %v1785 = vadd.f32 0.0, %v1784
      %v1786 = vpop.f32.mrb[0].mxu0
      %1787 = vmatprep.mubr.f32.mxu0 0.0
      %1788 = vmatmul.mubr.f32.gmra.mrb[0].mxu0 %v1634
      %v1789 = vpop.f32.mrb[0].mxu0
      %v1790 = vadd.f32 0.0, %v1789
      %v1791 = vpop.f32.mrb[0].mxu0
      %1792 = vmatprep.mubr.f32.mxu0 0.0
      %1793 = vmatmul.mubr.f32.gmra.mrb[0].mxu0 %v1635
      %v1794 = vpop.f32.mrb[0].mxu0
      %v1795 = vadd.f32 0.0, %v1794
      %v1796 = vpop.f32.mrb[0].mxu0
      %1797 = vmatprep.mubr.f32.mxu0 0.0
      %1798 = vmatmul.mubr.f32.gmra.mrb[0].mxu0 %v1636
      %v1799 = vpop.f32.mrb[0].mxu0
      %v1800 = vadd.f32 0.0, %v1799
      %v1801 = vpop.f32.mrb[0].mxu0
      %1802 = vmatprep.mubr.f32.mxu0 0.0
      %1803 = vmatmul.mubr.f32.gmra.mrb[0].mxu0 %v1637
      %v1804 = vpop.f32.mrb[0].mxu0
      %v1805 = vadd.f32 0.0, %v1804
      %v1806 = vpop.f32.mrb[0].mxu0
      %1807 = vmatprep.mubr.f32.mxu0 0.0
      %1808 = vmatmul.mubr.f32.gmra.mrb[0].mxu0 %v1638
      %v1809 = vpop.f32.mrb[0].mxu0
      %v1810 = vadd.f32 0.0, %v1809
      %v1811 = vpop.f32.mrb[0].mxu0
      %1812 = vmatprep.mubr.f32.mxu0 0.0
      %1813 = vmatmul.mubr.f32.gmra.mrb[0].mxu0 %v1639
      %v1814 = vpop.f32.mrb[0].mxu0
      %v1815 = vadd.f32 0.0, %v1814
      %v1816 = vpop.f32.mrb[0].mxu0
      %1817 = vmatprep.mubr.f32.mxu0 0.0
      %1818 = vmatmul.mubr.f32.gmra.mrb[0].mxu0 %v1640
      %v1819 = vpop.f32.mrb[0].mxu0
      %v1820 = vadd.f32 0.0, %v1819
      %v1821 = vpop.f32.mrb[0].mxu0
      %1822 = vmatprep.mubr.f32.mxu0 0.0
      %1823 = vmatmul.mubr.f32.gmra.mrb[0].mxu0 %v1641
      %v1824 = vpop.f32.mrb[0].mxu0
      %v1825 = vadd.f32 0.0, %v1824
      %v1826 = vpop.f32.mrb[0].mxu0
      %1827 = vmatprep.mubr.f32.mxu0 0.0
      %1828 = vmatmul.mubr.f32.gmra.mrb[0].mxu0 %v1642
      %v1829 = vpop.f32.mrb[0].mxu0
      %v1830 = vadd.f32 0.0, %v1829
      %v1831 = vpop.f32.mrb[0].mxu0
      %1832 = vmatprep.mubr.f32.mxu0 0.0
      %1833 = vmatmul.mubr.f32.gmra.mrb[0].mxu0 %v1643
      %v1834 = vpop.f32.mrb[0].mxu0
      %v1835 = vadd.f32 0.0, %v1834
      %v1836 = vpop.f32.mrb[0].mxu0
      %1837 = vmatprep.mubr.f32.mxu0 0.0
      %1838 = vmatmul.mubr.f32.gmra.mrb[0].mxu0 %v1644
      %v1839 = vpop.f32.mrb[0].mxu0
      %v1840 = vadd.f32 0.0, %v1839
      %v1841 = vpop.f32.mrb[0].mxu0
      %1842 = vmatprep.mubr.f32.mxu0 0.0
      %1843 = vmatmul.mubr.f32.gmra.mrb[0].mxu0 %v1645
      %v1844 = vpop.f32.mrb[0].mxu0
      %v1845 = vadd.f32 0.0, %v1844
      %v1846 = vpop.f32.mrb[0].mxu0
      %1847 = vmatprep.mubr.f32.mxu0 0.0
      %1848 = vmatmul.mubr.f32.gmra.mrb[0].mxu0 %v1646
      %v1849 = vpop.f32.mrb[0].mxu0
      %v1850 = vadd.f32 0.0, %v1849
      %v1851 = vpop.f32.mrb[0].mxu0
      %1852 = vmatprep.mubr.f32.mxu0 0.0
      %1853 = vmatmul.mubr.f32.gmra.mrb[0].mxu0 %v1647
      %v1854 = vpop.f32.mrb[0].mxu0
      %v1855 = vadd.f32 0.0, %v1854
      %v1856 = vpop.f32.mrb[0].mxu0
      %1857 = vmatprep.mubr.f32.mxu0 0.0
      %1858 = vmatmul.mubr.f32.gmra.mrb[0].mxu0 %v1648
      %v1859 = vpop.f32.mrb[0].mxu0
      %v1860 = vadd.f32 0.0, %v1859
      %v1861 = vpop.f32.mrb[0].mxu0
      %1862 = vmatprep.mubr.f32.mxu0 0.0
      %1863 = vmatmul.mubr.f32.gmra.mrb[0].mxu0 %v1649
      %v1864 = vpop.f32.mrb[0].mxu0
      %v1865 = vadd.f32 0.0, %v1864
      %v1866 = vpop.f32.mrb[0].mxu0
      %1867 = vmatprep.mubr.f32.mxu0 0.0
      %1868 = vmatmul.mubr.f32.gmra.mrb[0].mxu0 %v1650
      %v1869 = vpop.f32.mrb[0].mxu0
      %v1870 = vadd.f32 0.0, %v1869
      %v1871 = vpop.f32.mrb[0].mxu0
      %1872 = vmatprep.mubr.f32.mxu0 0.0
      %1873 = vmatmul.mubr.f32.gmra.mrb[0].mxu0 %v1651
      %v1874 = vpop.f32.mrb[0].mxu0
      %v1875 = vadd.f32 0.0, %v1874
      %v1876 = vpop.f32.mrb[0].mxu0
      %1877 = vmatprep.mubr.f32.mxu0 0.0
      %1878 = vmatmul.mubr.f32.gmra.mrb[0].mxu0 %v1652
      %v1879 = vpop.f32.mrb[0].mxu0
      %v1880 = vadd.f32 0.0, %v1879
      %v1881 = vpop.f32.mrb[0].mxu0
      %1882 = vmatprep.mubr.f32.mxu0 0.0
      %1883 = vmatmul.mubr.f32.gmra.mrb[0].mxu0 %v1653
      %v1884 = vpop.f32.mrb[0].mxu0
      %v1885 = vadd.f32 0.0, %v1884
      %v1886 = vpop.f32.mrb[0].mxu0
      %1887 = vmatprep.mubr.f32.mxu0 0.0
      %1888 = vmatmul.mubr.f32.gmra.mrb[0].mxu0 %v1654
      %v1889 = vpop.f32.mrb[0].mxu0
      %v1890 = vadd.f32 0.0, %v1889
      %v1891 = vpop.f32.mrb[0].mxu0
      %1892 = vmatprep.mubr.f32.mxu0 0.0
      %1893 = vmatmul.mubr.f32.gmra.mrb[0].mxu0 %v1655
      %v1894 = vpop.f32.mrb[0].mxu0
      %v1895 = vadd.f32 0.0, %v1894
      %v1896 = vpop.f32.mrb[0].mxu0
      %1897 = vdwg.mxu0
      %v1898 = vadd.f32 %v1592, %v1740
      %v1899 = vadd.f32 %v1593, %v1745
      %v1900 = vadd.f32 %v1594, %v1750
      %v1901 = vadd.f32 %v1595, %v1755
      %v1902 = vadd.f32 %v1596, %v1760
      %v1903 = vadd.f32 %v1597, %v1765
      %v1904 = vadd.f32 %v1598, %v1770
      %v1905 = vadd.f32 %v1599, %v1775
      %v1906 = vadd.f32 %v1600, %v1780
      %v1907 = vadd.f32 %v1601, %v1785
      %v1908 = vadd.f32 %v1602, %v1790
      %v1909 = vadd.f32 %v1603, %v1795
      %v1910 = vadd.f32 %v1604, %v1800
      %v1911 = vadd.f32 %v1605, %v1805
      %v1912 = vadd.f32 %v1606, %v1810
      %v1913 = vadd.f32 %v1607, %v1815
      %v1914 = vadd.f32 %v1608, %v1820
      %v1915 = vadd.f32 %v1609, %v1825
      %v1916 = vadd.f32 %v1610, %v1830
      %v1917 = vadd.f32 %v1611, %v1835
      %v1918 = vadd.f32 %v1612, %v1840
      %v1919 = vadd.f32 %v1613, %v1845
      %v1920 = vadd.f32 %v1614, %v1850
      %v1921 = vadd.f32 %v1615, %v1855
      %v1922 = vadd.f32 %v1616, %v1860
      %v1923 = vadd.f32 %v1617, %v1865
      %v1924 = vadd.f32 %v1618, %v1870
      %v1925 = vadd.f32 %v1619, %v1875
      %v1926 = vadd.f32 %v1620, %v1880
      %v1927 = vadd.f32 %v1621, %v1885
      %v1928 = vadd.f32 %v1622, %v1890
      %v1929 = vadd.f32 %v1623, %v1895
      %v1930 = vld [vmem:[%s432 + $0x2] sm:$0xff]
      %v1931 = vld [vmem:[%s432 + $0xa] sm:$0xff]
      %v1932 = vld [vmem:[%s432 + $0x1a] sm:$0xff]
      %v1933 = vld [vmem:[%s432 + $0x22] sm:$0xff]
      %v1934 = vld [vmem:[%s432 + $0x32] sm:$0xff]
      %v1935 = vld [vmem:[%s432 + $0x3a] sm:$0xff]
      %v1936 = vld [vmem:[%s432 + $0x4a] sm:$0xff]
      %v1937 = vld [vmem:[%s432 + $0x52] sm:$0xff]
      %v1938 = vld [vmem:[%s432 + $0x62] sm:$0xff]
      %v1939 = vld [vmem:[%s432 + $0x6a] sm:$0xff]
      %v1940 = vld [vmem:[%s432 + $0x7a] sm:$0xff]
      %v1941 = vld [vmem:[%s432 + $0x82] sm:$0xff]
      %v1942 = vld [vmem:[%s432 + $0x92] sm:$0xff]
      %v1943 = vld [vmem:[%s432 + $0x9a] sm:$0xff]
      %v1944 = vld [vmem:[%s432 + $0xaa] sm:$0xff]
      %v1945 = vld [vmem:[%s432 + $0xb2] sm:$0xff]
      %v1946 = vld [vmem:[%s432 + $0xc2] sm:$0xff]
      %v1947 = vld [vmem:[%s432 + $0xca] sm:$0xff]
      %v1948 = vld [vmem:[%s432 + $0xda] sm:$0xff]
      %v1949 = vld [vmem:[%s432 + $0xe2] sm:$0xff]
      %v1950 = vld [vmem:[%s432 + $0xf2] sm:$0xff]
      %v1951 = vld [vmem:[%s432 + $0xfa] sm:$0xff]
      %v1952 = vld [vmem:[%s432 + $0x10a] sm:$0xff]
      %v1953 = vld [vmem:[%s432 + $0x112] sm:$0xff]
      %v1954 = vld [vmem:[%s432 + $0x122] sm:$0xff]
      %v1955 = vld [vmem:[%s432 + $0x12a] sm:$0xff]
      %v1956 = vld [vmem:[%s432 + $0x13a] sm:$0xff]
      %v1957 = vld [vmem:[%s432 + $0x142] sm:$0xff]
      %v1958 = vld [vmem:[%s432 + $0x152] sm:$0xff]
      %v1959 = vld [vmem:[%s432 + $0x15a] sm:$0xff]
      %v1960 = vld [vmem:[%s432 + $0x16a] sm:$0xff]
      %v1961 = vld [vmem:[%s432 + $0x172] sm:$0xff]
      %s1962 = scalar_lea.vmem %s3, 640
      %v1963 = vld [vmem:[%s1962] sm:$0xff]
      %v1964 = vld [vmem:[%s1962 + $0x8] sm:$0xff]
      %v1965 = vld [vmem:[%s1962 + $0x10] sm:$0xff]
      %v1966 = vld [vmem:[%s1962 + $0x18] sm:$0xff]
      %v1967 = vld [vmem:[%s1962 + $0x20] sm:$0xff]
      %v1968 = vld [vmem:[%s1962 + $0x28] sm:$0xff]
      %v1969 = vld [vmem:[%s1962 + $0x30] sm:$0xff]
      %v1970 = vld [vmem:[%s1962 + $0x38] sm:$0xff]
      %v1971 = vld [vmem:[%s1962 + $0x40] sm:$0xff]
      %v1972 = vld [vmem:[%s1962 + $0x48] sm:$0xff]
      %v1973 = vld [vmem:[%s1962 + $0x50] sm:$0xff]
      %v1974 = vld [vmem:[%s1962 + $0x58] sm:$0xff]
      %v1975 = vld [vmem:[%s1962 + $0x60] sm:$0xff]
      %v1976 = vld [vmem:[%s1962 + $0x68] sm:$0xff]
      %v1977 = vld [vmem:[%s1962 + $0x70] sm:$0xff]
      %v1978 = vld [vmem:[%s1962 + $0x78] sm:$0xff]
      %1979 = vmatprep.subr.mxu0 0.0
      %1980 = vmatpush1.msra.mxu0 %v1963
      %1981 = vmatprep.subr.mxu0 0.0
      %1982 = vmatpush1.msra.mxu0 %v1964
      %1983 = vmatprep.subr.mxu0 0.0
      %1984 = vmatpush1.msra.mxu0 %v1965
      %1985 = vmatprep.subr.mxu0 0.0
      %1986 = vmatpush1.msra.mxu0 %v1966
      %1987 = vmatprep.subr.mxu0 0.0
      %1988 = vmatpush1.msra.mxu0 %v1967
      %1989 = vmatprep.subr.mxu0 0.0
      %1990 = vmatpush1.msra.mxu0 %v1968
      %1991 = vmatprep.subr.mxu0 0.0
      %1992 = vmatpush1.msra.mxu0 %v1969
      %1993 = vmatprep.subr.mxu0 0.0
      %1994 = vmatpush1.msra.mxu0 %v1970
      %1995 = vmatprep.subr.mxu0 0.0
      %1996 = vmatpush1.msra.mxu0 %v1971
      %1997 = vmatprep.subr.mxu0 0.0
      %1998 = vmatpush1.msra.mxu0 %v1972
      %1999 = vmatprep.subr.mxu0 0.0
      %2000 = vmatpush1.msra.mxu0 %v1973
      %2001 = vmatprep.subr.mxu0 0.0
      %2002 = vmatpush1.msra.mxu0 %v1974
      %2003 = vmatprep.subr.mxu0 0.0
      %2004 = vmatpush1.msra.mxu0 %v1975
      %2005 = vmatprep.subr.mxu0 0.0
      %2006 = vmatpush1.msra.mxu0 %v1976
      %2007 = vmatprep.subr.mxu0 0.0
      %2008 = vmatpush1.msra.mxu0 %v1977
      %2009 = vmatprep.subr.mxu0 0.0
      %2010 = vmatpush1.msra.mxu0 %v1978
      %2011 = vmatprep.subr.mxu0 0.0
      %2012 = vmatpush1.msra.mxu0 0.0
      %2013 = vmatprep.subr.mxu0 0.0
      %2014 = vmatpush1.msra.mxu0 0.0
      %2015 = vmatprep.subr.mxu0 0.0
      %2016 = vmatpush1.msra.mxu0 0.0
      %2017 = vmatprep.subr.mxu0 0.0
      %2018 = vmatpush1.msra.mxu0 0.0
      %2019 = vmatprep.subr.mxu0 0.0
      %2020 = vmatpush1.msra.mxu0 0.0
      %2021 = vmatprep.subr.mxu0 0.0
      %2022 = vmatpush1.msra.mxu0 0.0
      %2023 = vmatprep.subr.mxu0 0.0
      %2024 = vmatpush1.msra.mxu0 0.0
      %2025 = vmatprep.subr.mxu0 0.0
      %2026 = vmatpush1.msra.mxu0 0.0
      %2027 = vmatprep.subr.mxu0 0.0
      %2028 = vmatpush1.msra.mxu0 0.0
      %2029 = vmatprep.subr.mxu0 0.0
      %2030 = vmatpush1.msra.mxu0 0.0
      %2031 = vmatprep.subr.mxu0 0.0
      %2032 = vmatpush1.msra.mxu0 0.0
      %2033 = vmatprep.subr.mxu0 0.0
      %2034 = vmatpush1.msra.mxu0 0.0
      %2035 = vmatprep.subr.mxu0 0.0
      %2036 = vmatpush1.msra.mxu0 0.0
      %2037 = vmatprep.subr.mxu0 0.0
      %2038 = vmatpush1.msra.mxu0 0.0
      %2039 = vmatprep.subr.mxu0 0.0
      %2040 = vmatpush1.msra.mxu0 0.0
      %2041 = vmatprep.subr.mxu0 0.0
      %2042 = vmatpush1.msra.mxu0 0.0
      %2043 = vmatprep.mubr.f32.mxu0 0.0
      %2044 = vmatmul.mubr.f32.gmra.mrb[0].mxu0 %v1930
      %v2045 = vpop.f32.mrb[0].mxu0
      %v2046 = vadd.f32 0.0, %v2045
      %v2047 = vpop.f32.mrb[0].mxu0
      %2048 = vmatprep.mubr.f32.mxu0 0.0
      %2049 = vmatmul.mubr.f32.gmra.mrb[0].mxu0 %v1931
      %v2050 = vpop.f32.mrb[0].mxu0
      %v2051 = vadd.f32 0.0, %v2050
      %v2052 = vpop.f32.mrb[0].mxu0
      %2053 = vmatprep.mubr.f32.mxu0 0.0
      %2054 = vmatmul.mubr.f32.gmra.mrb[0].mxu0 %v1932
      %v2055 = vpop.f32.mrb[0].mxu0
      %v2056 = vadd.f32 0.0, %v2055
      %v2057 = vpop.f32.mrb[0].mxu0
      %2058 = vmatprep.mubr.f32.mxu0 0.0
      %2059 = vmatmul.mubr.f32.gmra.mrb[0].mxu0 %v1933
      %v2060 = vpop.f32.mrb[0].mxu0
      %v2061 = vadd.f32 0.0, %v2060
      %v2062 = vpop.f32.mrb[0].mxu0
      %2063 = vmatprep.mubr.f32.mxu0 0.0
      %2064 = vmatmul.mubr.f32.gmra.mrb[0].mxu0 %v1934
      %v2065 = vpop.f32.mrb[0].mxu0
      %v2066 = vadd.f32 0.0, %v2065
      %v2067 = vpop.f32.mrb[0].mxu0
      %2068 = vmatprep.mubr.f32.mxu0 0.0
      %2069 = vmatmul.mubr.f32.gmra.mrb[0].mxu0 %v1935
      %v2070 = vpop.f32.mrb[0].mxu0
      %v2071 = vadd.f32 0.0, %v2070
      %v2072 = vpop.f32.mrb[0].mxu0
      %2073 = vmatprep.mubr.f32.mxu0 0.0
      %2074 = vmatmul.mubr.f32.gmra.mrb[0].mxu0 %v1936
      %v2075 = vpop.f32.mrb[0].mxu0
      %v2076 = vadd.f32 0.0, %v2075
      %v2077 = vpop.f32.mrb[0].mxu0
      %2078 = vmatprep.mubr.f32.mxu0 0.0
      %2079 = vmatmul.mubr.f32.gmra.mrb[0].mxu0 %v1937
      %v2080 = vpop.f32.mrb[0].mxu0
      %v2081 = vadd.f32 0.0, %v2080
      %v2082 = vpop.f32.mrb[0].mxu0
      %2083 = vmatprep.mubr.f32.mxu0 0.0
      %2084 = vmatmul.mubr.f32.gmra.mrb[0].mxu0 %v1938
      %v2085 = vpop.f32.mrb[0].mxu0
      %v2086 = vadd.f32 0.0, %v2085
      %v2087 = vpop.f32.mrb[0].mxu0
      %2088 = vmatprep.mubr.f32.mxu0 0.0
      %2089 = vmatmul.mubr.f32.gmra.mrb[0].mxu0 %v1939
      %v2090 = vpop.f32.mrb[0].mxu0
      %v2091 = vadd.f32 0.0, %v2090
      %v2092 = vpop.f32.mrb[0].mxu0
      %2093 = vmatprep.mubr.f32.mxu0 0.0
      %2094 = vmatmul.mubr.f32.gmra.mrb[0].mxu0 %v1940
      %v2095 = vpop.f32.mrb[0].mxu0
      %v2096 = vadd.f32 0.0, %v2095
      %v2097 = vpop.f32.mrb[0].mxu0
      %2098 = vmatprep.mubr.f32.mxu0 0.0
      %2099 = vmatmul.mubr.f32.gmra.mrb[0].mxu0 %v1941
      %v2100 = vpop.f32.mrb[0].mxu0
      %v2101 = vadd.f32 0.0, %v2100
      %v2102 = vpop.f32.mrb[0].mxu0
      %2103 = vmatprep.mubr.f32.mxu0 0.0
      %2104 = vmatmul.mubr.f32.gmra.mrb[0].mxu0 %v1942
      %v2105 = vpop.f32.mrb[0].mxu0
      %v2106 = vadd.f32 0.0, %v2105
      %v2107 = vpop.f32.mrb[0].mxu0
      %2108 = vmatprep.mubr.f32.mxu0 0.0
      %2109 = vmatmul.mubr.f32.gmra.mrb[0].mxu0 %v1943
      %v2110 = vpop.f32.mrb[0].mxu0
      %v2111 = vadd.f32 0.0, %v2110
      %v2112 = vpop.f32.mrb[0].mxu0
      %2113 = vmatprep.mubr.f32.mxu0 0.0
      %2114 = vmatmul.mubr.f32.gmra.mrb[0].mxu0 %v1944
      %v2115 = vpop.f32.mrb[0].mxu0
      %v2116 = vadd.f32 0.0, %v2115
      %v2117 = vpop.f32.mrb[0].mxu0
      %2118 = vmatprep.mubr.f32.mxu0 0.0
      %2119 = vmatmul.mubr.f32.gmra.mrb[0].mxu0 %v1945
      %v2120 = vpop.f32.mrb[0].mxu0
      %v2121 = vadd.f32 0.0, %v2120
      %v2122 = vpop.f32.mrb[0].mxu0
      %2123 = vmatprep.mubr.f32.mxu0 0.0
      %2124 = vmatmul.mubr.f32.gmra.mrb[0].mxu0 %v1946
      %v2125 = vpop.f32.mrb[0].mxu0
      %v2126 = vadd.f32 0.0, %v2125
      %v2127 = vpop.f32.mrb[0].mxu0
      %2128 = vmatprep.mubr.f32.mxu0 0.0
      %2129 = vmatmul.mubr.f32.gmra.mrb[0].mxu0 %v1947
      %v2130 = vpop.f32.mrb[0].mxu0
      %v2131 = vadd.f32 0.0, %v2130
      %v2132 = vpop.f32.mrb[0].mxu0
      %2133 = vmatprep.mubr.f32.mxu0 0.0
      %2134 = vmatmul.mubr.f32.gmra.mrb[0].mxu0 %v1948
      %v2135 = vpop.f32.mrb[0].mxu0
      %v2136 = vadd.f32 0.0, %v2135
      %v2137 = vpop.f32.mrb[0].mxu0
      %2138 = vmatprep.mubr.f32.mxu0 0.0
      %2139 = vmatmul.mubr.f32.gmra.mrb[0].mxu0 %v1949
      %v2140 = vpop.f32.mrb[0].mxu0
      %v2141 = vadd.f32 0.0, %v2140
      %v2142 = vpop.f32.mrb[0].mxu0
      %2143 = vmatprep.mubr.f32.mxu0 0.0
      %2144 = vmatmul.mubr.f32.gmra.mrb[0].mxu0 %v1950
      %v2145 = vpop.f32.mrb[0].mxu0
      %v2146 = vadd.f32 0.0, %v2145
      %v2147 = vpop.f32.mrb[0].mxu0
      %2148 = vmatprep.mubr.f32.mxu0 0.0
      %2149 = vmatmul.mubr.f32.gmra.mrb[0].mxu0 %v1951
      %v2150 = vpop.f32.mrb[0].mxu0
      %v2151 = vadd.f32 0.0, %v2150
      %v2152 = vpop.f32.mrb[0].mxu0
      %2153 = vmatprep.mubr.f32.mxu0 0.0
      %2154 = vmatmul.mubr.f32.gmra.mrb[0].mxu0 %v1952
      %v2155 = vpop.f32.mrb[0].mxu0
      %v2156 = vadd.f32 0.0, %v2155
      %v2157 = vpop.f32.mrb[0].mxu0
      %2158 = vmatprep.mubr.f32.mxu0 0.0
      %2159 = vmatmul.mubr.f32.gmra.mrb[0].mxu0 %v1953
      %v2160 = vpop.f32.mrb[0].mxu0
      %v2161 = vadd.f32 0.0, %v2160
      %v2162 = vpop.f32.mrb[0].mxu0
      %2163 = vmatprep.mubr.f32.mxu0 0.0
      %2164 = vmatmul.mubr.f32.gmra.mrb[0].mxu0 %v1954
      %v2165 = vpop.f32.mrb[0].mxu0
      %v2166 = vadd.f32 0.0, %v2165
      %v2167 = vpop.f32.mrb[0].mxu0
      %2168 = vmatprep.mubr.f32.mxu0 0.0
      %2169 = vmatmul.mubr.f32.gmra.mrb[0].mxu0 %v1955
      %v2170 = vpop.f32.mrb[0].mxu0
      %v2171 = vadd.f32 0.0, %v2170
      %v2172 = vpop.f32.mrb[0].mxu0
      %2173 = vmatprep.mubr.f32.mxu0 0.0
      %2174 = vmatmul.mubr.f32.gmra.mrb[0].mxu0 %v1956
      %v2175 = vpop.f32.mrb[0].mxu0
      %v2176 = vadd.f32 0.0, %v2175
      %v2177 = vpop.f32.mrb[0].mxu0
      %2178 = vmatprep.mubr.f32.mxu0 0.0
      %2179 = vmatmul.mubr.f32.gmra.mrb[0].mxu0 %v1957
      %v2180 = vpop.f32.mrb[0].mxu0
      %v2181 = vadd.f32 0.0, %v2180
      %v2182 = vpop.f32.mrb[0].mxu0
      %2183 = vmatprep.mubr.f32.mxu0 0.0
      %2184 = vmatmul.mubr.f32.gmra.mrb[0].mxu0 %v1958
      %v2185 = vpop.f32.mrb[0].mxu0
      %v2186 = vadd.f32 0.0, %v2185
      %v2187 = vpop.f32.mrb[0].mxu0
      %2188 = vmatprep.mubr.f32.mxu0 0.0
      %2189 = vmatmul.mubr.f32.gmra.mrb[0].mxu0 %v1959
      %v2190 = vpop.f32.mrb[0].mxu0
      %v2191 = vadd.f32 0.0, %v2190
      %v2192 = vpop.f32.mrb[0].mxu0
      %2193 = vmatprep.mubr.f32.mxu0 0.0
      %2194 = vmatmul.mubr.f32.gmra.mrb[0].mxu0 %v1960
      %v2195 = vpop.f32.mrb[0].mxu0
      %v2196 = vadd.f32 0.0, %v2195
      %v2197 = vpop.f32.mrb[0].mxu0
      %2198 = vmatprep.mubr.f32.mxu0 0.0
      %2199 = vmatmul.mubr.f32.gmra.mrb[0].mxu0 %v1961
      %v2200 = vpop.f32.mrb[0].mxu0
      %v2201 = vadd.f32 0.0, %v2200
      %v2202 = vpop.f32.mrb[0].mxu0
      %2203 = vdwg.mxu0
      %v2204 = vadd.f32 %v1898, %v2046
      %v2205 = vadd.f32 %v1899, %v2051
      %v2206 = vadd.f32 %v1900, %v2056
      %v2207 = vadd.f32 %v1901, %v2061
      %v2208 = vadd.f32 %v1902, %v2066
      %v2209 = vadd.f32 %v1903, %v2071
      %v2210 = vadd.f32 %v1904, %v2076
      %v2211 = vadd.f32 %v1905, %v2081
      %v2212 = vadd.f32 %v1906, %v2086
      %v2213 = vadd.f32 %v1907, %v2091
      %v2214 = vadd.f32 %v1908, %v2096
      %v2215 = vadd.f32 %v1909, %v2101
      %v2216 = vadd.f32 %v1910, %v2106
      %v2217 = vadd.f32 %v1911, %v2111
      %v2218 = vadd.f32 %v1912, %v2116
      %v2219 = vadd.f32 %v1913, %v2121
      %v2220 = vadd.f32 %v1914, %v2126
      %v2221 = vadd.f32 %v1915, %v2131
      %v2222 = vadd.f32 %v1916, %v2136
      %v2223 = vadd.f32 %v1917, %v2141
      %v2224 = vadd.f32 %v1918, %v2146
      %v2225 = vadd.f32 %v1919, %v2151
      %v2226 = vadd.f32 %v1920, %v2156
      %v2227 = vadd.f32 %v1921, %v2161
      %v2228 = vadd.f32 %v1922, %v2166
      %v2229 = vadd.f32 %v1923, %v2171
      %v2230 = vadd.f32 %v1924, %v2176
      %v2231 = vadd.f32 %v1925, %v2181
      %v2232 = vadd.f32 %v1926, %v2186
      %v2233 = vadd.f32 %v1927, %v2191
      %v2234 = vadd.f32 %v1928, %v2196
      %v2235 = vadd.f32 %v1929, %v2201
      %s2236 = scalar_lea.vmem [#allocation2], 48
      %v2237 = vld [vmem:[%s2236] sm:$0xff]
      %v2238 = vld [vmem:[%s2236 + $0x8] sm:$0xff]
      %v2239 = vld [vmem:[%s2236 + $0x18] sm:$0xff]
      %v2240 = vld [vmem:[%s2236 + $0x20] sm:$0xff]
      %v2241 = vld [vmem:[%s2236 + $0x30] sm:$0xff]
      %v2242 = vld [vmem:[%s2236 + $0x38] sm:$0xff]
      %v2243 = vld [vmem:[%s2236 + $0x48] sm:$0xff]
      %v2244 = vld [vmem:[%s2236 + $0x50] sm:$0xff]
      %v2245 = vld [vmem:[%s2236 + $0x60] sm:$0xff]
      %v2246 = vld [vmem:[%s2236 + $0x68] sm:$0xff]
      %v2247 = vld [vmem:[%s2236 + $0x78] sm:$0xff]
      %v2248 = vld [vmem:[%s2236 + $0x80] sm:$0xff]
      %v2249 = vld [vmem:[%s2236 + $0x90] sm:$0xff]
      %v2250 = vld [vmem:[%s2236 + $0x98] sm:$0xff]
      %v2251 = vld [vmem:[%s2236 + $0xa8] sm:$0xff]
      %v2252 = vld [vmem:[%s2236 + $0xb0] sm:$0xff]
      %v2253 = vld [vmem:[%s2236 + $0xc0] sm:$0xff]
      %v2254 = vld [vmem:[%s2236 + $0xc8] sm:$0xff]
      %v2255 = vld [vmem:[%s2236 + $0xd8] sm:$0xff]
      %v2256 = vld [vmem:[%s2236 + $0xe0] sm:$0xff]
      %v2257 = vld [vmem:[%s2236 + $0xf0] sm:$0xff]
      %v2258 = vld [vmem:[%s2236 + $0xf8] sm:$0xff]
      %v2259 = vld [vmem:[%s2236 + $0x108] sm:$0xff]
      %v2260 = vld [vmem:[%s2236 + $0x110] sm:$0xff]
      %v2261 = vld [vmem:[%s2236 + $0x120] sm:$0xff]
      %v2262 = vld [vmem:[%s2236 + $0x128] sm:$0xff]
      %v2263 = vld [vmem:[%s2236 + $0x138] sm:$0xff]
      %v2264 = vld [vmem:[%s2236 + $0x140] sm:$0xff]
      %v2265 = vld [vmem:[%s2236 + $0x150] sm:$0xff]
      %v2266 = vld [vmem:[%s2236 + $0x158] sm:$0xff]
      %v2267 = vld [vmem:[%s2236 + $0x168] sm:$0xff]
      %v2268 = vld [vmem:[%s2236 + $0x170] sm:$0xff]
      %s2269 = scalar_lea.vmem %s3, 768
      %v2270 = vld [vmem:[%s2269] sm:$0xff]
      %v2271 = vld [vmem:[%s2269 + $0x8] sm:$0xff]
      %v2272 = vld [vmem:[%s2269 + $0x10] sm:$0xff]
      %v2273 = vld [vmem:[%s2269 + $0x18] sm:$0xff]
      %v2274 = vld [vmem:[%s2269 + $0x20] sm:$0xff]
      %v2275 = vld [vmem:[%s2269 + $0x28] sm:$0xff]
      %v2276 = vld [vmem:[%s2269 + $0x30] sm:$0xff]
      %v2277 = vld [vmem:[%s2269 + $0x38] sm:$0xff]
      %v2278 = vld [vmem:[%s2269 + $0x40] sm:$0xff]
      %v2279 = vld [vmem:[%s2269 + $0x48] sm:$0xff]
      %v2280 = vld [vmem:[%s2269 + $0x50] sm:$0xff]
      %v2281 = vld [vmem:[%s2269 + $0x58] sm:$0xff]
      %v2282 = vld [vmem:[%s2269 + $0x60] sm:$0xff]
      %v2283 = vld [vmem:[%s2269 + $0x68] sm:$0xff]
      %v2284 = vld [vmem:[%s2269 + $0x70] sm:$0xff]
      %v2285 = vld [vmem:[%s2269 + $0x78] sm:$0xff]
      %2286 = vmatprep.subr.mxu0 0.0
      %2287 = vmatpush1.msra.mxu0 %v2270
      %2288 = vmatprep.subr.mxu0 0.0
      %2289 = vmatpush1.msra.mxu0 %v2271
      %2290 = vmatprep.subr.mxu0 0.0
      %2291 = vmatpush1.msra.mxu0 %v2272
      %2292 = vmatprep.subr.mxu0 0.0
      %2293 = vmatpush1.msra.mxu0 %v2273
      %2294 = vmatprep.subr.mxu0 0.0
      %2295 = vmatpush1.msra.mxu0 %v2274
      %2296 = vmatprep.subr.mxu0 0.0
      %2297 = vmatpush1.msra.mxu0 %v2275
      %2298 = vmatprep.subr.mxu0 0.0
      %2299 = vmatpush1.msra.mxu0 %v2276
      %2300 = vmatprep.subr.mxu0 0.0
      %2301 = vmatpush1.msra.mxu0 %v2277
      %2302 = vmatprep.subr.mxu0 0.0
      %2303 = vmatpush1.msra.mxu0 %v2278
      %2304 = vmatprep.subr.mxu0 0.0
      %2305 = vmatpush1.msra.mxu0 %v2279
      %2306 = vmatprep.subr.mxu0 0.0
      %2307 = vmatpush1.msra.mxu0 %v2280
      %2308 = vmatprep.subr.mxu0 0.0
      %2309 = vmatpush1.msra.mxu0 %v2281
      %2310 = vmatprep.subr.mxu0 0.0
      %2311 = vmatpush1.msra.mxu0 %v2282
      %2312 = vmatprep.subr.mxu0 0.0
      %2313 = vmatpush1.msra.mxu0 %v2283
      %2314 = vmatprep.subr.mxu0 0.0
      %2315 = vmatpush1.msra.mxu0 %v2284
      %2316 = vmatprep.subr.mxu0 0.0
      %2317 = vmatpush1.msra.mxu0 %v2285
      %2318 = vmatprep.subr.mxu0 0.0
      %2319 = vmatpush1.msra.mxu0 0.0
      %2320 = vmatprep.subr.mxu0 0.0
      %2321 = vmatpush1.msra.mxu0 0.0
      %2322 = vmatprep.subr.mxu0 0.0
      %2323 = vmatpush1.msra.mxu0 0.0
      %2324 = vmatprep.subr.mxu0 0.0
      %2325 = vmatpush1.msra.mxu0 0.0
      %2326 = vmatprep.subr.mxu0 0.0
      %2327 = vmatpush1.msra.mxu0 0.0
      %2328 = vmatprep.subr.mxu0 0.0
      %2329 = vmatpush1.msra.mxu0 0.0
      %2330 = vmatprep.subr.mxu0 0.0
      %2331 = vmatpush1.msra.mxu0 0.0
      %2332 = vmatprep.subr.mxu0 0.0
      %2333 = vmatpush1.msra.mxu0 0.0
      %2334 = vmatprep.subr.mxu0 0.0
      %2335 = vmatpush1.msra.mxu0 0.0
      %2336 = vmatprep.subr.mxu0 0.0
      %2337 = vmatpush1.msra.mxu0 0.0
      %2338 = vmatprep.subr.mxu0 0.0
      %2339 = vmatpush1.msra.mxu0 0.0
      %2340 = vmatprep.subr.mxu0 0.0
      %2341 = vmatpush1.msra.mxu0 0.0
      %2342 = vmatprep.subr.mxu0 0.0
      %2343 = vmatpush1.msra.mxu0 0.0
      %2344 = vmatprep.subr.mxu0 0.0
      %2345 = vmatpush1.msra.mxu0 0.0
      %2346 = vmatprep.subr.mxu0 0.0
      %2347 = vmatpush1.msra.mxu0 0.0
      %2348 = vmatprep.subr.mxu0 0.0
      %2349 = vmatpush1.msra.mxu0 0.0
      %2350 = vmatprep.mubr.f32.mxu0 0.0
      %2351 = vmatmul.mubr.f32.gmra.mrb[0].mxu0 %v2237
      %v2352 = vpop.f32.mrb[0].mxu0
      %v2353 = vadd.f32 0.0, %v2352
      %v2354 = vpop.f32.mrb[0].mxu0
      %2355 = vmatprep.mubr.f32.mxu0 0.0
      %2356 = vmatmul.mubr.f32.gmra.mrb[0].mxu0 %v2238
      %v2357 = vpop.f32.mrb[0].mxu0
      %v2358 = vadd.f32 0.0, %v2357
      %v2359 = vpop.f32.mrb[0].mxu0
      %2360 = vmatprep.mubr.f32.mxu0 0.0
      %2361 = vmatmul.mubr.f32.gmra.mrb[0].mxu0 %v2239
      %v2362 = vpop.f32.mrb[0].mxu0
      %v2363 = vadd.f32 0.0, %v2362
      %v2364 = vpop.f32.mrb[0].mxu0
      %2365 = vmatprep.mubr.f32.mxu0 0.0
      %2366 = vmatmul.mubr.f32.gmra.mrb[0].mxu0 %v2240
      %v2367 = vpop.f32.mrb[0].mxu0
      %v2368 = vadd.f32 0.0, %v2367
      %v2369 = vpop.f32.mrb[0].mxu0
      %2370 = vmatprep.mubr.f32.mxu0 0.0
      %2371 = vmatmul.mubr.f32.gmra.mrb[0].mxu0 %v2241
      %v2372 = vpop.f32.mrb[0].mxu0
      %v2373 = vadd.f32 0.0, %v2372
      %v2374 = vpop.f32.mrb[0].mxu0
      %2375 = vmatprep.mubr.f32.mxu0 0.0
      %2376 = vmatmul.mubr.f32.gmra.mrb[0].mxu0 %v2242
      %v2377 = vpop.f32.mrb[0].mxu0
      %v2378 = vadd.f32 0.0, %v2377
      %v2379 = vpop.f32.mrb[0].mxu0
      %2380 = vmatprep.mubr.f32.mxu0 0.0
      %2381 = vmatmul.mubr.f32.gmra.mrb[0].mxu0 %v2243
      %v2382 = vpop.f32.mrb[0].mxu0
      %v2383 = vadd.f32 0.0, %v2382
      %v2384 = vpop.f32.mrb[0].mxu0
      %2385 = vmatprep.mubr.f32.mxu0 0.0
      %2386 = vmatmul.mubr.f32.gmra.mrb[0].mxu0 %v2244
      %v2387 = vpop.f32.mrb[0].mxu0
      %v2388 = vadd.f32 0.0, %v2387
      %v2389 = vpop.f32.mrb[0].mxu0
      %2390 = vmatprep.mubr.f32.mxu0 0.0
      %2391 = vmatmul.mubr.f32.gmra.mrb[0].mxu0 %v2245
      %v2392 = vpop.f32.mrb[0].mxu0
      %v2393 = vadd.f32 0.0, %v2392
      %v2394 = vpop.f32.mrb[0].mxu0
      %2395 = vmatprep.mubr.f32.mxu0 0.0
      %2396 = vmatmul.mubr.f32.gmra.mrb[0].mxu0 %v2246
      %v2397 = vpop.f32.mrb[0].mxu0
      %v2398 = vadd.f32 0.0, %v2397
      %v2399 = vpop.f32.mrb[0].mxu0
      %2400 = vmatprep.mubr.f32.mxu0 0.0
      %2401 = vmatmul.mubr.f32.gmra.mrb[0].mxu0 %v2247
      %v2402 = vpop.f32.mrb[0].mxu0
      %v2403 = vadd.f32 0.0, %v2402
      %v2404 = vpop.f32.mrb[0].mxu0
      %2405 = vmatprep.mubr.f32.mxu0 0.0
      %2406 = vmatmul.mubr.f32.gmra.mrb[0].mxu0 %v2248
      %v2407 = vpop.f32.mrb[0].mxu0
      %v2408 = vadd.f32 0.0, %v2407
      %v2409 = vpop.f32.mrb[0].mxu0
      %2410 = vmatprep.mubr.f32.mxu0 0.0
      %2411 = vmatmul.mubr.f32.gmra.mrb[0].mxu0 %v2249
      %v2412 = vpop.f32.mrb[0].mxu0
      %v2413 = vadd.f32 0.0, %v2412
      %v2414 = vpop.f32.mrb[0].mxu0
      %2415 = vmatprep.mubr.f32.mxu0 0.0
      %2416 = vmatmul.mubr.f32.gmra.mrb[0].mxu0 %v2250
      %v2417 = vpop.f32.mrb[0].mxu0
      %v2418 = vadd.f32 0.0, %v2417
      %v2419 = vpop.f32.mrb[0].mxu0
      %2420 = vmatprep.mubr.f32.mxu0 0.0
      %2421 = vmatmul.mubr.f32.gmra.mrb[0].mxu0 %v2251
      %v2422 = vpop.f32.mrb[0].mxu0
      %v2423 = vadd.f32 0.0, %v2422
      %v2424 = vpop.f32.mrb[0].mxu0
      %2425 = vmatprep.mubr.f32.mxu0 0.0
      %2426 = vmatmul.mubr.f32.gmra.mrb[0].mxu0 %v2252
      %v2427 = vpop.f32.mrb[0].mxu0
      %v2428 = vadd.f32 0.0, %v2427
      %v2429 = vpop.f32.mrb[0].mxu0
      %2430 = vmatprep.mubr.f32.mxu0 0.0
      %2431 = vmatmul.mubr.f32.gmra.mrb[0].mxu0 %v2253
      %v2432 = vpop.f32.mrb[0].mxu0
      %v2433 = vadd.f32 0.0, %v2432
      %v2434 = vpop.f32.mrb[0].mxu0
      %2435 = vmatprep.mubr.f32.mxu0 0.0
      %2436 = vmatmul.mubr.f32.gmra.mrb[0].mxu0 %v2254
      %v2437 = vpop.f32.mrb[0].mxu0
      %v2438 = vadd.f32 0.0, %v2437
      %v2439 = vpop.f32.mrb[0].mxu0
      %2440 = vmatprep.mubr.f32.mxu0 0.0
      %2441 = vmatmul.mubr.f32.gmra.mrb[0].mxu0 %v2255
      %v2442 = vpop.f32.mrb[0].mxu0
      %v2443 = vadd.f32 0.0, %v2442
      %v2444 = vpop.f32.mrb[0].mxu0
      %2445 = vmatprep.mubr.f32.mxu0 0.0
      %2446 = vmatmul.mubr.f32.gmra.mrb[0].mxu0 %v2256
      %v2447 = vpop.f32.mrb[0].mxu0
      %v2448 = vadd.f32 0.0, %v2447
      %v2449 = vpop.f32.mrb[0].mxu0
      %2450 = vmatprep.mubr.f32.mxu0 0.0
      %2451 = vmatmul.mubr.f32.gmra.mrb[0].mxu0 %v2257
      %v2452 = vpop.f32.mrb[0].mxu0
      %v2453 = vadd.f32 0.0, %v2452
      %v2454 = vpop.f32.mrb[0].mxu0
      %2455 = vmatprep.mubr.f32.mxu0 0.0
      %2456 = vmatmul.mubr.f32.gmra.mrb[0].mxu0 %v2258
      %v2457 = vpop.f32.mrb[0].mxu0
      %v2458 = vadd.f32 0.0, %v2457
      %v2459 = vpop.f32.mrb[0].mxu0
      %2460 = vmatprep.mubr.f32.mxu0 0.0
      %2461 = vmatmul.mubr.f32.gmra.mrb[0].mxu0 %v2259
      %v2462 = vpop.f32.mrb[0].mxu0
      %v2463 = vadd.f32 0.0, %v2462
      %v2464 = vpop.f32.mrb[0].mxu0
      %2465 = vmatprep.mubr.f32.mxu0 0.0
      %2466 = vmatmul.mubr.f32.gmra.mrb[0].mxu0 %v2260
      %v2467 = vpop.f32.mrb[0].mxu0
      %v2468 = vadd.f32 0.0, %v2467
      %v2469 = vpop.f32.mrb[0].mxu0
      %2470 = vmatprep.mubr.f32.mxu0 0.0
      %2471 = vmatmul.mubr.f32.gmra.mrb[0].mxu0 %v2261
      %v2472 = vpop.f32.mrb[0].mxu0
      %v2473 = vadd.f32 0.0, %v2472
      %v2474 = vpop.f32.mrb[0].mxu0
      %2475 = vmatprep.mubr.f32.mxu0 0.0
      %2476 = vmatmul.mubr.f32.gmra.mrb[0].mxu0 %v2262
      %v2477 = vpop.f32.mrb[0].mxu0
      %v2478 = vadd.f32 0.0, %v2477
      %v2479 = vpop.f32.mrb[0].mxu0
      %2480 = vmatprep.mubr.f32.mxu0 0.0
      %2481 = vmatmul.mubr.f32.gmra.mrb[0].mxu0 %v2263
      %v2482 = vpop.f32.mrb[0].mxu0
      %v2483 = vadd.f32 0.0, %v2482
      %v2484 = vpop.f32.mrb[0].mxu0
      %2485 = vmatprep.mubr.f32.mxu0 0.0
      %2486 = vmatmul.mubr.f32.gmra.mrb[0].mxu0 %v2264
      %v2487 = vpop.f32.mrb[0].mxu0
      %v2488 = vadd.f32 0.0, %v2487
      %v2489 = vpop.f32.mrb[0].mxu0
      %2490 = vmatprep.mubr.f32.mxu0 0.0
      %2491 = vmatmul.mubr.f32.gmra.mrb[0].mxu0 %v2265
      %v2492 = vpop.f32.mrb[0].mxu0
      %v2493 = vadd.f32 0.0, %v2492
      %v2494 = vpop.f32.mrb[0].mxu0
      %2495 = vmatprep.mubr.f32.mxu0 0.0
      %2496 = vmatmul.mubr.f32.gmra.mrb[0].mxu0 %v2266
      %v2497 = vpop.f32.mrb[0].mxu0
      %v2498 = vadd.f32 0.0, %v2497
      %v2499 = vpop.f32.mrb[0].mxu0
      %2500 = vmatprep.mubr.f32.mxu0 0.0
      %2501 = vmatmul.mubr.f32.gmra.mrb[0].mxu0 %v2267
      %v2502 = vpop.f32.mrb[0].mxu0
      %v2503 = vadd.f32 0.0, %v2502
      %v2504 = vpop.f32.mrb[0].mxu0
      %2505 = vmatprep.mubr.f32.mxu0 0.0
      %2506 = vmatmul.mubr.f32.gmra.mrb[0].mxu0 %v2268
      %v2507 = vpop.f32.mrb[0].mxu0
      %v2508 = vadd.f32 0.0, %v2507
      %v2509 = vpop.f32.mrb[0].mxu0
      %2510 = vdwg.mxu0
      %v2511 = vadd.f32 %v2204, %v2353
      %v2512 = vadd.f32 %v2205, %v2358
      %v2513 = vadd.f32 %v2206, %v2363
      %v2514 = vadd.f32 %v2207, %v2368
      %v2515 = vadd.f32 %v2208, %v2373
      %v2516 = vadd.f32 %v2209, %v2378
      %v2517 = vadd.f32 %v2210, %v2383
      %v2518 = vadd.f32 %v2211, %v2388
      %v2519 = vadd.f32 %v2212, %v2393
      %v2520 = vadd.f32 %v2213, %v2398
      %v2521 = vadd.f32 %v2214, %v2403
      %v2522 = vadd.f32 %v2215, %v2408
      %v2523 = vadd.f32 %v2216, %v2413
      %v2524 = vadd.f32 %v2217, %v2418
      %v2525 = vadd.f32 %v2218, %v2423
      %v2526 = vadd.f32 %v2219, %v2428
      %v2527 = vadd.f32 %v2220, %v2433
      %v2528 = vadd.f32 %v2221, %v2438
      %v2529 = vadd.f32 %v2222, %v2443
      %v2530 = vadd.f32 %v2223, %v2448
      %v2531 = vadd.f32 %v2224, %v2453
      %v2532 = vadd.f32 %v2225, %v2458
      %v2533 = vadd.f32 %v2226, %v2463
      %v2534 = vadd.f32 %v2227, %v2468
      %v2535 = vadd.f32 %v2228, %v2473
      %v2536 = vadd.f32 %v2229, %v2478
      %v2537 = vadd.f32 %v2230, %v2483
      %v2538 = vadd.f32 %v2231, %v2488
      %v2539 = vadd.f32 %v2232, %v2493
      %v2540 = vadd.f32 %v2233, %v2498
      %v2541 = vadd.f32 %v2234, %v2503
      %v2542 = vadd.f32 %v2235, %v2508
      %v2543 = vld [vmem:[%s2236 + $0x1] sm:$0xff]
      %v2544 = vld [vmem:[%s2236 + $0x9] sm:$0xff]
      %v2545 = vld [vmem:[%s2236 + $0x19] sm:$0xff]
      %v2546 = vld [vmem:[%s2236 + $0x21] sm:$0xff]
      %v2547 = vld [vmem:[%s2236 + $0x31] sm:$0xff]
      %v2548 = vld [vmem:[%s2236 + $0x39] sm:$0xff]
      %v2549 = vld [vmem:[%s2236 + $0x49] sm:$0xff]
      %v2550 = vld [vmem:[%s2236 + $0x51] sm:$0xff]
      %v2551 = vld [vmem:[%s2236 + $0x61] sm:$0xff]
      %v2552 = vld [vmem:[%s2236 + $0x69] sm:$0xff]
      %v2553 = vld [vmem:[%s2236 + $0x79] sm:$0xff]
      %v2554 = vld [vmem:[%s2236 + $0x81] sm:$0xff]
      %v2555 = vld [vmem:[%s2236 + $0x91] sm:$0xff]
      %v2556 = vld [vmem:[%s2236 + $0x99] sm:$0xff]
      %v2557 = vld [vmem:[%s2236 + $0xa9] sm:$0xff]
      %v2558 = vld [vmem:[%s2236 + $0xb1] sm:$0xff]
      %v2559 = vld [vmem:[%s2236 + $0xc1] sm:$0xff]
      %v2560 = vld [vmem:[%s2236 + $0xc9] sm:$0xff]
      %v2561 = vld [vmem:[%s2236 + $0xd9] sm:$0xff]
      %v2562 = vld [vmem:[%s2236 + $0xe1] sm:$0xff]
      %v2563 = vld [vmem:[%s2236 + $0xf1] sm:$0xff]
      %v2564 = vld [vmem:[%s2236 + $0xf9] sm:$0xff]
      %v2565 = vld [vmem:[%s2236 + $0x109] sm:$0xff]
      %v2566 = vld [vmem:[%s2236 + $0x111] sm:$0xff]
      %v2567 = vld [vmem:[%s2236 + $0x121] sm:$0xff]
      %v2568 = vld [vmem:[%s2236 + $0x129] sm:$0xff]
      %v2569 = vld [vmem:[%s2236 + $0x139] sm:$0xff]
      %v2570 = vld [vmem:[%s2236 + $0x141] sm:$0xff]
      %v2571 = vld [vmem:[%s2236 + $0x151] sm:$0xff]
      %v2572 = vld [vmem:[%s2236 + $0x159] sm:$0xff]
      %v2573 = vld [vmem:[%s2236 + $0x169] sm:$0xff]
      %v2574 = vld [vmem:[%s2236 + $0x171] sm:$0xff]
      %s2575 = scalar_lea.vmem %s3, 896
      %v2576 = vld [vmem:[%s2575] sm:$0xff]
      %v2577 = vld [vmem:[%s2575 + $0x8] sm:$0xff]
      %v2578 = vld [vmem:[%s2575 + $0x10] sm:$0xff]
      %v2579 = vld [vmem:[%s2575 + $0x18] sm:$0xff]
      %v2580 = vld [vmem:[%s2575 + $0x20] sm:$0xff]
      %v2581 = vld [vmem:[%s2575 + $0x28] sm:$0xff]
      %v2582 = vld [vmem:[%s2575 + $0x30] sm:$0xff]
      %v2583 = vld [vmem:[%s2575 + $0x38] sm:$0xff]
      %v2584 = vld [vmem:[%s2575 + $0x40] sm:$0xff]
      %v2585 = vld [vmem:[%s2575 + $0x48] sm:$0xff]
      %v2586 = vld [vmem:[%s2575 + $0x50] sm:$0xff]
      %v2587 = vld [vmem:[%s2575 + $0x58] sm:$0xff]
      %v2588 = vld [vmem:[%s2575 + $0x60] sm:$0xff]
      %v2589 = vld [vmem:[%s2575 + $0x68] sm:$0xff]
      %v2590 = vld [vmem:[%s2575 + $0x70] sm:$0xff]
      %v2591 = vld [vmem:[%s2575 + $0x78] sm:$0xff]
      %2592 = vmatprep.subr.mxu0 0.0
      %2593 = vmatpush1.msra.mxu0 %v2576
      %2594 = vmatprep.subr.mxu0 0.0
      %2595 = vmatpush1.msra.mxu0 %v2577
      %2596 = vmatprep.subr.mxu0 0.0
      %2597 = vmatpush1.msra.mxu0 %v2578
      %2598 = vmatprep.subr.mxu0 0.0
      %2599 = vmatpush1.msra.mxu0 %v2579
      %2600 = vmatprep.subr.mxu0 0.0
      %2601 = vmatpush1.msra.mxu0 %v2580
      %2602 = vmatprep.subr.mxu0 0.0
      %2603 = vmatpush1.msra.mxu0 %v2581
      %2604 = vmatprep.subr.mxu0 0.0
      %2605 = vmatpush1.msra.mxu0 %v2582
      %2606 = vmatprep.subr.mxu0 0.0
      %2607 = vmatpush1.msra.mxu0 %v2583
      %2608 = vmatprep.subr.mxu0 0.0
      %2609 = vmatpush1.msra.mxu0 %v2584
      %2610 = vmatprep.subr.mxu0 0.0
      %2611 = vmatpush1.msra.mxu0 %v2585
      %2612 = vmatprep.subr.mxu0 0.0
      %2613 = vmatpush1.msra.mxu0 %v2586
      %2614 = vmatprep.subr.mxu0 0.0
      %2615 = vmatpush1.msra.mxu0 %v2587
      %2616 = vmatprep.subr.mxu0 0.0
      %2617 = vmatpush1.msra.mxu0 %v2588
      %2618 = vmatprep.subr.mxu0 0.0
      %2619 = vmatpush1.msra.mxu0 %v2589
      %2620 = vmatprep.subr.mxu0 0.0
      %2621 = vmatpush1.msra.mxu0 %v2590
      %2622 = vmatprep.subr.mxu0 0.0
      %2623 = vmatpush1.msra.mxu0 %v2591
      %2624 = vmatprep.subr.mxu0 0.0
      %2625 = vmatpush1.msra.mxu0 0.0
      %2626 = vmatprep.subr.mxu0 0.0
      %2627 = vmatpush1.msra.mxu0 0.0
      %2628 = vmatprep.subr.mxu0 0.0
      %2629 = vmatpush1.msra.mxu0 0.0
      %2630 = vmatprep.subr.mxu0 0.0
      %2631 = vmatpush1.msra.mxu0 0.0
      %2632 = vmatprep.subr.mxu0 0.0
      %2633 = vmatpush1.msra.mxu0 0.0
      %2634 = vmatprep.subr.mxu0 0.0
      %2635 = vmatpush1.msra.mxu0 0.0
      %2636 = vmatprep.subr.mxu0 0.0
      %2637 = vmatpush1.msra.mxu0 0.0
      %2638 = vmatprep.subr.mxu0 0.0
      %2639 = vmatpush1.msra.mxu0 0.0
      %2640 = vmatprep.subr.mxu0 0.0
      %2641 = vmatpush1.msra.mxu0 0.0
      %2642 = vmatprep.subr.mxu0 0.0
      %2643 = vmatpush1.msra.mxu0 0.0
      %2644 = vmatprep.subr.mxu0 0.0
      %2645 = vmatpush1.msra.mxu0 0.0
      %2646 = vmatprep.subr.mxu0 0.0
      %2647 = vmatpush1.msra.mxu0 0.0
      %2648 = vmatprep.subr.mxu0 0.0
      %2649 = vmatpush1.msra.mxu0 0.0
      %2650 = vmatprep.subr.mxu0 0.0
      %2651 = vmatpush1.msra.mxu0 0.0
      %2652 = vmatprep.subr.mxu0 0.0
      %2653 = vmatpush1.msra.mxu0 0.0
      %2654 = vmatprep.subr.mxu0 0.0
      %2655 = vmatpush1.msra.mxu0 0.0
      %2656 = vmatprep.mubr.f32.mxu0 0.0
      %2657 = vmatmul.mubr.f32.gmra.mrb[0].mxu0 %v2543
      %v2658 = vpop.f32.mrb[0].mxu0
      %v2659 = vadd.f32 0.0, %v2658
      %v2660 = vpop.f32.mrb[0].mxu0
      %2661 = vmatprep.mubr.f32.mxu0 0.0
      %2662 = vmatmul.mubr.f32.gmra.mrb[0].mxu0 %v2544
      %v2663 = vpop.f32.mrb[0].mxu0
      %v2664 = vadd.f32 0.0, %v2663
      %v2665 = vpop.f32.mrb[0].mxu0
      %2666 = vmatprep.mubr.f32.mxu0 0.0
      %2667 = vmatmul.mubr.f32.gmra.mrb[0].mxu0 %v2545
      %v2668 = vpop.f32.mrb[0].mxu0
      %v2669 = vadd.f32 0.0, %v2668
      %v2670 = vpop.f32.mrb[0].mxu0
      %2671 = vmatprep.mubr.f32.mxu0 0.0
      %2672 = vmatmul.mubr.f32.gmra.mrb[0].mxu0 %v2546
      %v2673 = vpop.f32.mrb[0].mxu0
      %v2674 = vadd.f32 0.0, %v2673
      %v2675 = vpop.f32.mrb[0].mxu0
      %2676 = vmatprep.mubr.f32.mxu0 0.0
      %2677 = vmatmul.mubr.f32.gmra.mrb[0].mxu0 %v2547
      %v2678 = vpop.f32.mrb[0].mxu0
      %v2679 = vadd.f32 0.0, %v2678
      %v2680 = vpop.f32.mrb[0].mxu0
      %2681 = vmatprep.mubr.f32.mxu0 0.0
      %2682 = vmatmul.mubr.f32.gmra.mrb[0].mxu0 %v2548
      %v2683 = vpop.f32.mrb[0].mxu0
      %v2684 = vadd.f32 0.0, %v2683
      %v2685 = vpop.f32.mrb[0].mxu0
      %2686 = vmatprep.mubr.f32.mxu0 0.0
      %2687 = vmatmul.mubr.f32.gmra.mrb[0].mxu0 %v2549
      %v2688 = vpop.f32.mrb[0].mxu0
      %v2689 = vadd.f32 0.0, %v2688
      %v2690 = vpop.f32.mrb[0].mxu0
      %2691 = vmatprep.mubr.f32.mxu0 0.0
      %2692 = vmatmul.mubr.f32.gmra.mrb[0].mxu0 %v2550
      %v2693 = vpop.f32.mrb[0].mxu0
      %v2694 = vadd.f32 0.0, %v2693
      %v2695 = vpop.f32.mrb[0].mxu0
      %2696 = vmatprep.mubr.f32.mxu0 0.0
      %2697 = vmatmul.mubr.f32.gmra.mrb[0].mxu0 %v2551
      %v2698 = vpop.f32.mrb[0].mxu0
      %v2699 = vadd.f32 0.0, %v2698
      %v2700 = vpop.f32.mrb[0].mxu0
      %2701 = vmatprep.mubr.f32.mxu0 0.0
      %2702 = vmatmul.mubr.f32.gmra.mrb[0].mxu0 %v2552
      %v2703 = vpop.f32.mrb[0].mxu0
      %v2704 = vadd.f32 0.0, %v2703
      %v2705 = vpop.f32.mrb[0].mxu0
      %2706 = vmatprep.mubr.f32.mxu0 0.0
      %2707 = vmatmul.mubr.f32.gmra.mrb[0].mxu0 %v2553
      %v2708 = vpop.f32.mrb[0].mxu0
      %v2709 = vadd.f32 0.0, %v2708
      %v2710 = vpop.f32.mrb[0].mxu0
      %2711 = vmatprep.mubr.f32.mxu0 0.0
      %2712 = vmatmul.mubr.f32.gmra.mrb[0].mxu0 %v2554
      %v2713 = vpop.f32.mrb[0].mxu0
      %v2714 = vadd.f32 0.0, %v2713
      %v2715 = vpop.f32.mrb[0].mxu0
      %2716 = vmatprep.mubr.f32.mxu0 0.0
      %2717 = vmatmul.mubr.f32.gmra.mrb[0].mxu0 %v2555
      %v2718 = vpop.f32.mrb[0].mxu0
      %v2719 = vadd.f32 0.0, %v2718
      %v2720 = vpop.f32.mrb[0].mxu0
      %2721 = vmatprep.mubr.f32.mxu0 0.0
      %2722 = vmatmul.mubr.f32.gmra.mrb[0].mxu0 %v2556
      %v2723 = vpop.f32.mrb[0].mxu0
      %v2724 = vadd.f32 0.0, %v2723
      %v2725 = vpop.f32.mrb[0].mxu0
      %2726 = vmatprep.mubr.f32.mxu0 0.0
      %2727 = vmatmul.mubr.f32.gmra.mrb[0].mxu0 %v2557
      %v2728 = vpop.f32.mrb[0].mxu0
      %v2729 = vadd.f32 0.0, %v2728
      %v2730 = vpop.f32.mrb[0].mxu0
      %2731 = vmatprep.mubr.f32.mxu0 0.0
      %2732 = vmatmul.mubr.f32.gmra.mrb[0].mxu0 %v2558
      %v2733 = vpop.f32.mrb[0].mxu0
      %v2734 = vadd.f32 0.0, %v2733
      %v2735 = vpop.f32.mrb[0].mxu0
      %2736 = vmatprep.mubr.f32.mxu0 0.0
      %2737 = vmatmul.mubr.f32.gmra.mrb[0].mxu0 %v2559
      %v2738 = vpop.f32.mrb[0].mxu0
      %v2739 = vadd.f32 0.0, %v2738
      %v2740 = vpop.f32.mrb[0].mxu0
      %2741 = vmatprep.mubr.f32.mxu0 0.0
      %2742 = vmatmul.mubr.f32.gmra.mrb[0].mxu0 %v2560
      %v2743 = vpop.f32.mrb[0].mxu0
      %v2744 = vadd.f32 0.0, %v2743
      %v2745 = vpop.f32.mrb[0].mxu0
      %2746 = vmatprep.mubr.f32.mxu0 0.0
      %2747 = vmatmul.mubr.f32.gmra.mrb[0].mxu0 %v2561
      %v2748 = vpop.f32.mrb[0].mxu0
      %v2749 = vadd.f32 0.0, %v2748
      %v2750 = vpop.f32.mrb[0].mxu0
      %2751 = vmatprep.mubr.f32.mxu0 0.0
      %2752 = vmatmul.mubr.f32.gmra.mrb[0].mxu0 %v2562
      %v2753 = vpop.f32.mrb[0].mxu0
      %v2754 = vadd.f32 0.0, %v2753
      %v2755 = vpop.f32.mrb[0].mxu0
      %2756 = vmatprep.mubr.f32.mxu0 0.0
      %2757 = vmatmul.mubr.f32.gmra.mrb[0].mxu0 %v2563
      %v2758 = vpop.f32.mrb[0].mxu0
      %v2759 = vadd.f32 0.0, %v2758
      %v2760 = vpop.f32.mrb[0].mxu0
      %2761 = vmatprep.mubr.f32.mxu0 0.0
      %2762 = vmatmul.mubr.f32.gmra.mrb[0].mxu0 %v2564
      %v2763 = vpop.f32.mrb[0].mxu0
      %v2764 = vadd.f32 0.0, %v2763
      %v2765 = vpop.f32.mrb[0].mxu0
      %2766 = vmatprep.mubr.f32.mxu0 0.0
      %2767 = vmatmul.mubr.f32.gmra.mrb[0].mxu0 %v2565
      %v2768 = vpop.f32.mrb[0].mxu0
      %v2769 = vadd.f32 0.0, %v2768
      %v2770 = vpop.f32.mrb[0].mxu0
      %2771 = vmatprep.mubr.f32.mxu0 0.0
      %2772 = vmatmul.mubr.f32.gmra.mrb[0].mxu0 %v2566
      %v2773 = vpop.f32.mrb[0].mxu0
      %v2774 = vadd.f32 0.0, %v2773
      %v2775 = vpop.f32.mrb[0].mxu0
      %2776 = vmatprep.mubr.f32.mxu0 0.0
      %2777 = vmatmul.mubr.f32.gmra.mrb[0].mxu0 %v2567
      %v2778 = vpop.f32.mrb[0].mxu0
      %v2779 = vadd.f32 0.0, %v2778
      %v2780 = vpop.f32.mrb[0].mxu0
      %2781 = vmatprep.mubr.f32.mxu0 0.0
      %2782 = vmatmul.mubr.f32.gmra.mrb[0].mxu0 %v2568
      %v2783 = vpop.f32.mrb[0].mxu0
      %v2784 = vadd.f32 0.0, %v2783
      %v2785 = vpop.f32.mrb[0].mxu0
      %2786 = vmatprep.mubr.f32.mxu0 0.0
      %2787 = vmatmul.mubr.f32.gmra.mrb[0].mxu0 %v2569
      %v2788 = vpop.f32.mrb[0].mxu0
      %v2789 = vadd.f32 0.0, %v2788
      %v2790 = vpop.f32.mrb[0].mxu0
      %2791 = vmatprep.mubr.f32.mxu0 0.0
      %2792 = vmatmul.mubr.f32.gmra.mrb[0].mxu0 %v2570
      %v2793 = vpop.f32.mrb[0].mxu0
      %v2794 = vadd.f32 0.0, %v2793
      %v2795 = vpop.f32.mrb[0].mxu0
      %2796 = vmatprep.mubr.f32.mxu0 0.0
      %2797 = vmatmul.mubr.f32.gmra.mrb[0].mxu0 %v2571
      %v2798 = vpop.f32.mrb[0].mxu0
      %v2799 = vadd.f32 0.0, %v2798
      %v2800 = vpop.f32.mrb[0].mxu0
      %2801 = vmatprep.mubr.f32.mxu0 0.0
      %2802 = vmatmul.mubr.f32.gmra.mrb[0].mxu0 %v2572
      %v2803 = vpop.f32.mrb[0].mxu0
      %v2804 = vadd.f32 0.0, %v2803
      %v2805 = vpop.f32.mrb[0].mxu0
      %2806 = vmatprep.mubr.f32.mxu0 0.0
      %2807 = vmatmul.mubr.f32.gmra.mrb[0].mxu0 %v2573
      %v2808 = vpop.f32.mrb[0].mxu0
      %v2809 = vadd.f32 0.0, %v2808
      %v2810 = vpop.f32.mrb[0].mxu0
      %2811 = vmatprep.mubr.f32.mxu0 0.0
      %2812 = vmatmul.mubr.f32.gmra.mrb[0].mxu0 %v2574
      %v2813 = vpop.f32.mrb[0].mxu0
      %v2814 = vadd.f32 0.0, %v2813
      %v2815 = vpop.f32.mrb[0].mxu0
      %2816 = vdwg.mxu0
      %v2817 = vadd.f32 %v2511, %v2659
      %v2818 = vadd.f32 %v2512, %v2664
      %v2819 = vadd.f32 %v2513, %v2669
      %v2820 = vadd.f32 %v2514, %v2674
      %v2821 = vadd.f32 %v2515, %v2679
      %v2822 = vadd.f32 %v2516, %v2684
      %v2823 = vadd.f32 %v2517, %v2689
      %v2824 = vadd.f32 %v2518, %v2694
      %v2825 = vadd.f32 %v2519, %v2699
      %v2826 = vadd.f32 %v2520, %v2704
      %v2827 = vadd.f32 %v2521, %v2709
      %v2828 = vadd.f32 %v2522, %v2714
      %v2829 = vadd.f32 %v2523, %v2719
      %v2830 = vadd.f32 %v2524, %v2724
      %v2831 = vadd.f32 %v2525, %v2729
      %v2832 = vadd.f32 %v2526, %v2734
      %v2833 = vadd.f32 %v2527, %v2739
      %v2834 = vadd.f32 %v2528, %v2744
      %v2835 = vadd.f32 %v2529, %v2749
      %v2836 = vadd.f32 %v2530, %v2754
      %v2837 = vadd.f32 %v2531, %v2759
      %v2838 = vadd.f32 %v2532, %v2764
      %v2839 = vadd.f32 %v2533, %v2769
      %v2840 = vadd.f32 %v2534, %v2774
      %v2841 = vadd.f32 %v2535, %v2779
      %v2842 = vadd.f32 %v2536, %v2784
      %v2843 = vadd.f32 %v2537, %v2789
      %v2844 = vadd.f32 %v2538, %v2794
      %v2845 = vadd.f32 %v2539, %v2799
      %v2846 = vadd.f32 %v2540, %v2804
      %v2847 = vadd.f32 %v2541, %v2809
      %v2848 = vadd.f32 %v2542, %v2814
      %v2849 = vld [vmem:[%s2236 + $0x2] sm:$0xff]
      %v2850 = vld [vmem:[%s2236 + $0xa] sm:$0xff]
      %v2851 = vld [vmem:[%s2236 + $0x1a] sm:$0xff]
      %v2852 = vld [vmem:[%s2236 + $0x22] sm:$0xff]
      %v2853 = vld [vmem:[%s2236 + $0x32] sm:$0xff]
      %v2854 = vld [vmem:[%s2236 + $0x3a] sm:$0xff]
      %v2855 = vld [vmem:[%s2236 + $0x4a] sm:$0xff]
      %v2856 = vld [vmem:[%s2236 + $0x52] sm:$0xff]
      %v2857 = vld [vmem:[%s2236 + $0x62] sm:$0xff]
      %v2858 = vld [vmem:[%s2236 + $0x6a] sm:$0xff]
      %v2859 = vld [vmem:[%s2236 + $0x7a] sm:$0xff]
      %v2860 = vld [vmem:[%s2236 + $0x82] sm:$0xff]
      %v2861 = vld [vmem:[%s2236 + $0x92] sm:$0xff]
      %v2862 = vld [vmem:[%s2236 + $0x9a] sm:$0xff]
      %v2863 = vld [vmem:[%s2236 + $0xaa] sm:$0xff]
      %v2864 = vld [vmem:[%s2236 + $0xb2] sm:$0xff]
      %v2865 = vld [vmem:[%s2236 + $0xc2] sm:$0xff]
      %v2866 = vld [vmem:[%s2236 + $0xca] sm:$0xff]
      %v2867 = vld [vmem:[%s2236 + $0xda] sm:$0xff]
      %v2868 = vld [vmem:[%s2236 + $0xe2] sm:$0xff]
      %v2869 = vld [vmem:[%s2236 + $0xf2] sm:$0xff]
      %v2870 = vld [vmem:[%s2236 + $0xfa] sm:$0xff]
      %v2871 = vld [vmem:[%s2236 + $0x10a] sm:$0xff]
      %v2872 = vld [vmem:[%s2236 + $0x112] sm:$0xff]
      %v2873 = vld [vmem:[%s2236 + $0x122] sm:$0xff]
      %v2874 = vld [vmem:[%s2236 + $0x12a] sm:$0xff]
      %v2875 = vld [vmem:[%s2236 + $0x13a] sm:$0xff]
      %v2876 = vld [vmem:[%s2236 + $0x142] sm:$0xff]
      %v2877 = vld [vmem:[%s2236 + $0x152] sm:$0xff]
      %v2878 = vld [vmem:[%s2236 + $0x15a] sm:$0xff]
      %v2879 = vld [vmem:[%s2236 + $0x16a] sm:$0xff]
      %v2880 = vld [vmem:[%s2236 + $0x172] sm:$0xff]
      %s2881 = scalar_lea.vmem %s3, 1024
      %v2882 = vld [vmem:[%s2881] sm:$0xff]
      %v2883 = vld [vmem:[%s2881 + $0x8] sm:$0xff]
      %v2884 = vld [vmem:[%s2881 + $0x10] sm:$0xff]
      %v2885 = vld [vmem:[%s2881 + $0x18] sm:$0xff]
      %v2886 = vld [vmem:[%s2881 + $0x20] sm:$0xff]
      %v2887 = vld [vmem:[%s2881 + $0x28] sm:$0xff]
      %v2888 = vld [vmem:[%s2881 + $0x30] sm:$0xff]
      %v2889 = vld [vmem:[%s2881 + $0x38] sm:$0xff]
      %v2890 = vld [vmem:[%s2881 + $0x40] sm:$0xff]
      %v2891 = vld [vmem:[%s2881 + $0x48] sm:$0xff]
      %v2892 = vld [vmem:[%s2881 + $0x50] sm:$0xff]
      %v2893 = vld [vmem:[%s2881 + $0x58] sm:$0xff]
      %v2894 = vld [vmem:[%s2881 + $0x60] sm:$0xff]
      %v2895 = vld [vmem:[%s2881 + $0x68] sm:$0xff]
      %v2896 = vld [vmem:[%s2881 + $0x70] sm:$0xff]
      %v2897 = vld [vmem:[%s2881 + $0x78] sm:$0xff]
      %2898 = vmatprep.subr.mxu0 0.0
      %2899 = vmatpush1.msra.mxu0 %v2882
      %2900 = vmatprep.subr.mxu0 0.0
      %2901 = vmatpush1.msra.mxu0 %v2883
      %2902 = vmatprep.subr.mxu0 0.0
      %2903 = vmatpush1.msra.mxu0 %v2884
      %2904 = vmatprep.subr.mxu0 0.0
      %2905 = vmatpush1.msra.mxu0 %v2885
      %2906 = vmatprep.subr.mxu0 0.0
      %2907 = vmatpush1.msra.mxu0 %v2886
      %2908 = vmatprep.subr.mxu0 0.0
      %2909 = vmatpush1.msra.mxu0 %v2887
      %2910 = vmatprep.subr.mxu0 0.0
      %2911 = vmatpush1.msra.mxu0 %v2888
      %2912 = vmatprep.subr.mxu0 0.0
      %2913 = vmatpush1.msra.mxu0 %v2889
      %2914 = vmatprep.subr.mxu0 0.0
      %2915 = vmatpush1.msra.mxu0 %v2890
      %2916 = vmatprep.subr.mxu0 0.0
      %2917 = vmatpush1.msra.mxu0 %v2891
      %2918 = vmatprep.subr.mxu0 0.0
      %2919 = vmatpush1.msra.mxu0 %v2892
      %2920 = vmatprep.subr.mxu0 0.0
      %2921 = vmatpush1.msra.mxu0 %v2893
      %2922 = vmatprep.subr.mxu0 0.0
      %2923 = vmatpush1.msra.mxu0 %v2894
      %2924 = vmatprep.subr.mxu0 0.0
      %2925 = vmatpush1.msra.mxu0 %v2895
      %2926 = vmatprep.subr.mxu0 0.0
      %2927 = vmatpush1.msra.mxu0 %v2896
      %2928 = vmatprep.subr.mxu0 0.0
      %2929 = vmatpush1.msra.mxu0 %v2897
      %2930 = vmatprep.subr.mxu0 0.0
      %2931 = vmatpush1.msra.mxu0 0.0
      %2932 = vmatprep.subr.mxu0 0.0
      %2933 = vmatpush1.msra.mxu0 0.0
      %2934 = vmatprep.subr.mxu0 0.0
      %2935 = vmatpush1.msra.mxu0 0.0
      %2936 = vmatprep.subr.mxu0 0.0
      %2937 = vmatpush1.msra.mxu0 0.0
      %2938 = vmatprep.subr.mxu0 0.0
      %2939 = vmatpush1.msra.mxu0 0.0
      %2940 = vmatprep.subr.mxu0 0.0
      %2941 = vmatpush1.msra.mxu0 0.0
      %2942 = vmatprep.subr.mxu0 0.0
      %2943 = vmatpush1.msra.mxu0 0.0
      %2944 = vmatprep.subr.mxu0 0.0
      %2945 = vmatpush1.msra.mxu0 0.0
      %2946 = vmatprep.subr.mxu0 0.0
      %2947 = vmatpush1.msra.mxu0 0.0
      %2948 = vmatprep.subr.mxu0 0.0
      %2949 = vmatpush1.msra.mxu0 0.0
      %2950 = vmatprep.subr.mxu0 0.0
      %2951 = vmatpush1.msra.mxu0 0.0
      %2952 = vmatprep.subr.mxu0 0.0
      %2953 = vmatpush1.msra.mxu0 0.0
      %2954 = vmatprep.subr.mxu0 0.0
      %2955 = vmatpush1.msra.mxu0 0.0
      %2956 = vmatprep.subr.mxu0 0.0
      %2957 = vmatpush1.msra.mxu0 0.0
      %2958 = vmatprep.subr.mxu0 0.0
      %2959 = vmatpush1.msra.mxu0 0.0
      %2960 = vmatprep.subr.mxu0 0.0
      %2961 = vmatpush1.msra.mxu0 0.0
      %2962 = vmatprep.mubr.f32.mxu0 0.0
      %2963 = vmatmul.mubr.f32.gmra.mrb[0].mxu0 %v2849
      %v2964 = vpop.f32.mrb[0].mxu0
      %v2965 = vadd.f32 0.0, %v2964
      %v2966 = vpop.f32.mrb[0].mxu0
      %2967 = vmatprep.mubr.f32.mxu0 0.0
      %2968 = vmatmul.mubr.f32.gmra.mrb[0].mxu0 %v2850
      %v2969 = vpop.f32.mrb[0].mxu0
      %v2970 = vadd.f32 0.0, %v2969
      %v2971 = vpop.f32.mrb[0].mxu0
      %2972 = vmatprep.mubr.f32.mxu0 0.0
      %2973 = vmatmul.mubr.f32.gmra.mrb[0].mxu0 %v2851
      %v2974 = vpop.f32.mrb[0].mxu0
      %v2975 = vadd.f32 0.0, %v2974
      %v2976 = vpop.f32.mrb[0].mxu0
      %2977 = vmatprep.mubr.f32.mxu0 0.0
      %2978 = vmatmul.mubr.f32.gmra.mrb[0].mxu0 %v2852
      %v2979 = vpop.f32.mrb[0].mxu0
      %v2980 = vadd.f32 0.0, %v2979
      %v2981 = vpop.f32.mrb[0].mxu0
      %2982 = vmatprep.mubr.f32.mxu0 0.0
      %2983 = vmatmul.mubr.f32.gmra.mrb[0].mxu0 %v2853
      %v2984 = vpop.f32.mrb[0].mxu0
      %v2985 = vadd.f32 0.0, %v2984
      %v2986 = vpop.f32.mrb[0].mxu0
      %2987 = vmatprep.mubr.f32.mxu0 0.0
      %2988 = vmatmul.mubr.f32.gmra.mrb[0].mxu0 %v2854
      %v2989 = vpop.f32.mrb[0].mxu0
      %v2990 = vadd.f32 0.0, %v2989
      %v2991 = vpop.f32.mrb[0].mxu0
      %2992 = vmatprep.mubr.f32.mxu0 0.0
      %2993 = vmatmul.mubr.f32.gmra.mrb[0].mxu0 %v2855
      %v2994 = vpop.f32.mrb[0].mxu0
      %v2995 = vadd.f32 0.0, %v2994
      %v2996 = vpop.f32.mrb[0].mxu0
      %2997 = vmatprep.mubr.f32.mxu0 0.0
      %2998 = vmatmul.mubr.f32.gmra.mrb[0].mxu0 %v2856
      %v2999 = vpop.f32.mrb[0].mxu0
      %v3000 = vadd.f32 0.0, %v2999
      %v3001 = vpop.f32.mrb[0].mxu0
      %3002 = vmatprep.mubr.f32.mxu0 0.0
      %3003 = vmatmul.mubr.f32.gmra.mrb[0].mxu0 %v2857
      %v3004 = vpop.f32.mrb[0].mxu0
      %v3005 = vadd.f32 0.0, %v3004
      %v3006 = vpop.f32.mrb[0].mxu0
      %3007 = vmatprep.mubr.f32.mxu0 0.0
      %3008 = vmatmul.mubr.f32.gmra.mrb[0].mxu0 %v2858
      %v3009 = vpop.f32.mrb[0].mxu0
      %v3010 = vadd.f32 0.0, %v3009
      %v3011 = vpop.f32.mrb[0].mxu0
      %3012 = vmatprep.mubr.f32.mxu0 0.0
      %3013 = vmatmul.mubr.f32.gmra.mrb[0].mxu0 %v2859
      %v3014 = vpop.f32.mrb[0].mxu0
      %v3015 = vadd.f32 0.0, %v3014
      %v3016 = vpop.f32.mrb[0].mxu0
      %3017 = vmatprep.mubr.f32.mxu0 0.0
      %3018 = vmatmul.mubr.f32.gmra.mrb[0].mxu0 %v2860
      %v3019 = vpop.f32.mrb[0].mxu0
      %v3020 = vadd.f32 0.0, %v3019
      %v3021 = vpop.f32.mrb[0].mxu0
      %3022 = vmatprep.mubr.f32.mxu0 0.0
      %3023 = vmatmul.mubr.f32.gmra.mrb[0].mxu0 %v2861
      %v3024 = vpop.f32.mrb[0].mxu0
      %v3025 = vadd.f32 0.0, %v3024
      %v3026 = vpop.f32.mrb[0].mxu0
      %3027 = vmatprep.mubr.f32.mxu0 0.0
      %3028 = vmatmul.mubr.f32.gmra.mrb[0].mxu0 %v2862
      %v3029 = vpop.f32.mrb[0].mxu0
      %v3030 = vadd.f32 0.0, %v3029
      %v3031 = vpop.f32.mrb[0].mxu0
      %3032 = vmatprep.mubr.f32.mxu0 0.0
      %3033 = vmatmul.mubr.f32.gmra.mrb[0].mxu0 %v2863
      %v3034 = vpop.f32.mrb[0].mxu0
      %v3035 = vadd.f32 0.0, %v3034
      %v3036 = vpop.f32.mrb[0].mxu0
      %3037 = vmatprep.mubr.f32.mxu0 0.0
      %3038 = vmatmul.mubr.f32.gmra.mrb[0].mxu0 %v2864
      %v3039 = vpop.f32.mrb[0].mxu0
      %v3040 = vadd.f32 0.0, %v3039
      %v3041 = vpop.f32.mrb[0].mxu0
      %3042 = vmatprep.mubr.f32.mxu0 0.0
      %3043 = vmatmul.mubr.f32.gmra.mrb[0].mxu0 %v2865
      %v3044 = vpop.f32.mrb[0].mxu0
      %v3045 = vadd.f32 0.0, %v3044
      %v3046 = vpop.f32.mrb[0].mxu0
      %3047 = vmatprep.mubr.f32.mxu0 0.0
      %3048 = vmatmul.mubr.f32.gmra.mrb[0].mxu0 %v2866
      %v3049 = vpop.f32.mrb[0].mxu0
      %v3050 = vadd.f32 0.0, %v3049
      %v3051 = vpop.f32.mrb[0].mxu0
      %3052 = vmatprep.mubr.f32.mxu0 0.0
      %3053 = vmatmul.mubr.f32.gmra.mrb[0].mxu0 %v2867
      %v3054 = vpop.f32.mrb[0].mxu0
      %v3055 = vadd.f32 0.0, %v3054
      %v3056 = vpop.f32.mrb[0].mxu0
      %3057 = vmatprep.mubr.f32.mxu0 0.0
      %3058 = vmatmul.mubr.f32.gmra.mrb[0].mxu0 %v2868
      %v3059 = vpop.f32.mrb[0].mxu0
      %v3060 = vadd.f32 0.0, %v3059
      %v3061 = vpop.f32.mrb[0].mxu0
      %3062 = vmatprep.mubr.f32.mxu0 0.0
      %3063 = vmatmul.mubr.f32.gmra.mrb[0].mxu0 %v2869
      %v3064 = vpop.f32.mrb[0].mxu0
      %v3065 = vadd.f32 0.0, %v3064
      %v3066 = vpop.f32.mrb[0].mxu0
      %3067 = vmatprep.mubr.f32.mxu0 0.0
      %3068 = vmatmul.mubr.f32.gmra.mrb[0].mxu0 %v2870
      %v3069 = vpop.f32.mrb[0].mxu0
      %v3070 = vadd.f32 0.0, %v3069
      %v3071 = vpop.f32.mrb[0].mxu0
      %3072 = vmatprep.mubr.f32.mxu0 0.0
      %3073 = vmatmul.mubr.f32.gmra.mrb[0].mxu0 %v2871
      %v3074 = vpop.f32.mrb[0].mxu0
      %v3075 = vadd.f32 0.0, %v3074
      %v3076 = vpop.f32.mrb[0].mxu0
      %3077 = vmatprep.mubr.f32.mxu0 0.0
      %3078 = vmatmul.mubr.f32.gmra.mrb[0].mxu0 %v2872
      %v3079 = vpop.f32.mrb[0].mxu0
      %v3080 = vadd.f32 0.0, %v3079
      %v3081 = vpop.f32.mrb[0].mxu0
      %3082 = vmatprep.mubr.f32.mxu0 0.0
      %3083 = vmatmul.mubr.f32.gmra.mrb[0].mxu0 %v2873
      %v3084 = vpop.f32.mrb[0].mxu0
      %v3085 = vadd.f32 0.0, %v3084
      %v3086 = vpop.f32.mrb[0].mxu0
      %3087 = vmatprep.mubr.f32.mxu0 0.0
      %3088 = vmatmul.mubr.f32.gmra.mrb[0].mxu0 %v2874
      %v3089 = vpop.f32.mrb[0].mxu0
      %v3090 = vadd.f32 0.0, %v3089
      %v3091 = vpop.f32.mrb[0].mxu0
      %3092 = vmatprep.mubr.f32.mxu0 0.0
      %3093 = vmatmul.mubr.f32.gmra.mrb[0].mxu0 %v2875
      %v3094 = vpop.f32.mrb[0].mxu0
      %v3095 = vadd.f32 0.0, %v3094
      %v3096 = vpop.f32.mrb[0].mxu0
      %3097 = vmatprep.mubr.f32.mxu0 0.0
      %3098 = vmatmul.mubr.f32.gmra.mrb[0].mxu0 %v2876
      %v3099 = vpop.f32.mrb[0].mxu0
      %v3100 = vadd.f32 0.0, %v3099
      %v3101 = vpop.f32.mrb[0].mxu0
      %3102 = vmatprep.mubr.f32.mxu0 0.0
      %3103 = vmatmul.mubr.f32.gmra.mrb[0].mxu0 %v2877
      %v3104 = vpop.f32.mrb[0].mxu0
      %v3105 = vadd.f32 0.0, %v3104
      %v3106 = vpop.f32.mrb[0].mxu0
      %3107 = vmatprep.mubr.f32.mxu0 0.0
      %3108 = vmatmul.mubr.f32.gmra.mrb[0].mxu0 %v2878
      %v3109 = vpop.f32.mrb[0].mxu0
      %v3110 = vadd.f32 0.0, %v3109
      %v3111 = vpop.f32.mrb[0].mxu0
      %3112 = vmatprep.mubr.f32.mxu0 0.0
      %3113 = vmatmul.mubr.f32.gmra.mrb[0].mxu0 %v2879
      %v3114 = vpop.f32.mrb[0].mxu0
      %v3115 = vadd.f32 0.0, %v3114
      %v3116 = vpop.f32.mrb[0].mxu0
      %3117 = vmatprep.mubr.f32.mxu0 0.0
      %3118 = vmatmul.mubr.f32.gmra.mrb[0].mxu0 %v2880
      %v3119 = vpop.f32.mrb[0].mxu0
      %v3120 = vadd.f32 0.0, %v3119
      %v3121 = vpop.f32.mrb[0].mxu0
      %3122 = vdwg.mxu0
      %v3123 = vadd.f32 %v2817, %v2965
      %v3124 = vadd.f32 %v2818, %v2970
      %v3125 = vadd.f32 %v2819, %v2975
      %v3126 = vadd.f32 %v2820, %v2980
      %v3127 = vadd.f32 %v2821, %v2985
      %v3128 = vadd.f32 %v2822, %v2990
      %v3129 = vadd.f32 %v2823, %v2995
      %v3130 = vadd.f32 %v2824, %v3000
      %v3131 = vadd.f32 %v2825, %v3005
      %v3132 = vadd.f32 %v2826, %v3010
      %v3133 = vadd.f32 %v2827, %v3015
      %v3134 = vadd.f32 %v2828, %v3020
      %v3135 = vadd.f32 %v2829, %v3025
      %v3136 = vadd.f32 %v2830, %v3030
      %v3137 = vadd.f32 %v2831, %v3035
      %v3138 = vadd.f32 %v2832, %v3040
      %v3139 = vadd.f32 %v2833, %v3045
      %v3140 = vadd.f32 %v2834, %v3050
      %v3141 = vadd.f32 %v2835, %v3055
      %v3142 = vadd.f32 %v2836, %v3060
      %v3143 = vadd.f32 %v2837, %v3065
      %v3144 = vadd.f32 %v2838, %v3070
      %v3145 = vadd.f32 %v2839, %v3075
      %v3146 = vadd.f32 %v2840, %v3080
      %v3147 = vadd.f32 %v2841, %v3085
      %v3148 = vadd.f32 %v2842, %v3090
      %v3149 = vadd.f32 %v2843, %v3095
      %v3150 = vadd.f32 %v2844, %v3100
      %v3151 = vadd.f32 %v2845, %v3105
      %v3152 = vadd.f32 %v2846, %v3110
      %v3153 = vadd.f32 %v2847, %v3115
      %v3154 = vadd.f32 %v2848, %v3120
      %3155 = vst [vmem:[%s231] sm:$0xff] %v3123
      %3156 = vst [vmem:[%s231 + $0x8] sm:$0xff] %v3124
      %3157 = vst [vmem:[%s231 + $0x10] sm:$0xff] %v3125
      %3158 = vst [vmem:[%s231 + $0x18] sm:$0xff] %v3126
      %3159 = vst [vmem:[%s231 + $0x20] sm:$0xff] %v3127
      %3160 = vst [vmem:[%s231 + $0x28] sm:$0xff] %v3128
      %3161 = vst [vmem:[%s231 + $0x30] sm:$0xff] %v3129
      %3162 = vst [vmem:[%s231 + $0x38] sm:$0xff] %v3130
      %3163 = vst [vmem:[%s231 + $0x40] sm:$0xff] %v3131
      %3164 = vst [vmem:[%s231 + $0x48] sm:$0xff] %v3132
      %3165 = vst [vmem:[%s231 + $0x50] sm:$0xff] %v3133
      %3166 = vst [vmem:[%s231 + $0x58] sm:$0xff] %v3134
      %3167 = vst [vmem:[%s231 + $0x60] sm:$0xff] %v3135
      %3168 = vst [vmem:[%s231 + $0x68] sm:$0xff] %v3136
      %3169 = vst [vmem:[%s231 + $0x70] sm:$0xff] %v3137
      %3170 = vst [vmem:[%s231 + $0x78] sm:$0xff] %v3138
      %3171 = vst [vmem:[%s231 + $0x80] sm:$0xff] %v3139
      %3172 = vst [vmem:[%s231 + $0x88] sm:$0xff] %v3140
      %3173 = vst [vmem:[%s231 + $0x90] sm:$0xff] %v3141
      %3174 = vst [vmem:[%s231 + $0x98] sm:$0xff] %v3142
      %3175 = vst [vmem:[%s231 + $0xa0] sm:$0xff] %v3143
      %3176 = vst [vmem:[%s231 + $0xa8] sm:$0xff] %v3144
      %3177 = vst [vmem:[%s231 + $0xb0] sm:$0xff] %v3145
      %3178 = vst [vmem:[%s231 + $0xb8] sm:$0xff] %v3146
      %3179 = vst [vmem:[%s231 + $0xc0] sm:$0xff] %v3147
      %3180 = vst [vmem:[%s231 + $0xc8] sm:$0xff] %v3148
      %3181 = vst [vmem:[%s231 + $0xd0] sm:$0xff] %v3149
      %3182 = vst [vmem:[%s231 + $0xd8] sm:$0xff] %v3150
      %3183 = vst [vmem:[%s231 + $0xe0] sm:$0xff] %v3151
      %3184 = vst [vmem:[%s231 + $0xe8] sm:$0xff] %v3152
      %3185 = vst [vmem:[%s231 + $0xf0] sm:$0xff] %v3153
      %3186 = vst [vmem:[%s231 + $0xf8] sm:$0xff] %v3154
      %v3187 = vadd.f32 %v3123, %v3124
      %v3188 = vadd.f32 %v3187, %v3125
      %v3189 = vadd.f32 %v3188, %v3126
      %v3190 = vadd.f32 %v3189, %v3127
      %v3191 = vadd.f32 %v3190, %v3128
      %v3192 = vadd.f32 %v3191, %v3129
      %v3193 = vadd.f32 %v3192, %v3130
      %v3194 = vadd.f32 %v3193, %v3131
      %v3195 = vadd.f32 %v3194, %v3132
      %v3196 = vadd.f32 %v3195, %v3133
      %v3197 = vadd.f32 %v3196, %v3134
      %v3198 = vadd.f32 %v3197, %v3135
      %v3199 = vadd.f32 %v3198, %v3136
      %v3200 = vadd.f32 %v3199, %v3137
      %v3201 = vadd.f32 %v3200, %v3138
      %v3202 = vadd.f32 %v3201, %v3139
      %v3203 = vadd.f32 %v3202, %v3140
      %v3204 = vadd.f32 %v3203, %v3141
      %v3205 = vadd.f32 %v3204, %v3142
      %v3206 = vadd.f32 %v3205, %v3143
      %v3207 = vadd.f32 %v3206, %v3144
      %v3208 = vadd.f32 %v3207, %v3145
      %v3209 = vadd.f32 %v3208, %v3146
      %v3210 = vadd.f32 %v3209, %v3147
      %v3211 = vadd.f32 %v3210, %v3148
      %v3212 = vadd.f32 %v3211, %v3149
      %v3213 = vadd.f32 %v3212, %v3150
      %v3214 = vadd.f32 %v3213, %v3151
      %v3215 = vadd.f32 %v3214, %v3152
      %v3216 = vadd.f32 %v3215, %v3153
      %v3217 = vadd.f32 %v3216, %v3154
      %v3218 = vrot.slane %v3217, 4
      %v3219 = vadd.f32 %v3217, %v3218
      %v3220 = vrot.slane %v3219, 2
      %v3221 = vadd.f32 %v3219, %v3220
      %v3222 = vrot.slane %v3221, 1
      %v3223 = vadd.f32 %v3221, %v3222
      %3224 = vst [vmem:[%s235] sm:$0x1] %v3223
      %v3225 = vmul.f32 %v3123, %v3123
      %v3226 = vmul.f32 %v3124, %v3124
      %v3227 = vmul.f32 %v3125, %v3125
      %v3228 = vmul.f32 %v3126, %v3126
      %v3229 = vmul.f32 %v3127, %v3127
      %v3230 = vmul.f32 %v3128, %v3128
      %v3231 = vmul.f32 %v3129, %v3129
      %v3232 = vmul.f32 %v3130, %v3130
      %v3233 = vmul.f32 %v3131, %v3131
      %v3234 = vmul.f32 %v3132, %v3132
      %v3235 = vmul.f32 %v3133, %v3133
      %v3236 = vmul.f32 %v3134, %v3134
      %v3237 = vmul.f32 %v3135, %v3135
      %v3238 = vmul.f32 %v3136, %v3136
      %v3239 = vmul.f32 %v3137, %v3137
      %v3240 = vmul.f32 %v3138, %v3138
      %v3241 = vmul.f32 %v3139, %v3139
      %v3242 = vmul.f32 %v3140, %v3140
      %v3243 = vmul.f32 %v3141, %v3141
      %v3244 = vmul.f32 %v3142, %v3142
      %v3245 = vmul.f32 %v3143, %v3143
      %v3246 = vmul.f32 %v3144, %v3144
      %v3247 = vmul.f32 %v3145, %v3145
      %v3248 = vmul.f32 %v3146, %v3146
      %v3249 = vmul.f32 %v3147, %v3147
      %v3250 = vmul.f32 %v3148, %v3148
      %v3251 = vmul.f32 %v3149, %v3149
      %v3252 = vmul.f32 %v3150, %v3150
      %v3253 = vmul.f32 %v3151, %v3151
      %v3254 = vmul.f32 %v3152, %v3152
      %v3255 = vmul.f32 %v3153, %v3153
      %v3256 = vmul.f32 %v3154, %v3154
      %v3257 = vadd.f32 %v3225, %v3226
      %v3258 = vadd.f32 %v3257, %v3227
      %v3259 = vadd.f32 %v3258, %v3228
      %v3260 = vadd.f32 %v3259, %v3229
      %v3261 = vadd.f32 %v3260, %v3230
      %v3262 = vadd.f32 %v3261, %v3231
      %v3263 = vadd.f32 %v3262, %v3232
      %v3264 = vadd.f32 %v3263, %v3233
      %v3265 = vadd.f32 %v3264, %v3234
      %v3266 = vadd.f32 %v3265, %v3235
      %v3267 = vadd.f32 %v3266, %v3236
      %v3268 = vadd.f32 %v3267, %v3237
      %v3269 = vadd.f32 %v3268, %v3238
      %v3270 = vadd.f32 %v3269, %v3239
      %v3271 = vadd.f32 %v3270, %v3240
      %v3272 = vadd.f32 %v3271, %v3241
      %v3273 = vadd.f32 %v3272, %v3242
      %v3274 = vadd.f32 %v3273, %v3243
      %v3275 = vadd.f32 %v3274, %v3244
      %v3276 = vadd.f32 %v3275, %v3245
      %v3277 = vadd.f32 %v3276, %v3246
      %v3278 = vadd.f32 %v3277, %v3247
      %v3279 = vadd.f32 %v3278, %v3248
      %v3280 = vadd.f32 %v3279, %v3249
      %v3281 = vadd.f32 %v3280, %v3250
      %v3282 = vadd.f32 %v3281, %v3251
      %v3283 = vadd.f32 %v3282, %v3252
      %v3284 = vadd.f32 %v3283, %v3253
      %v3285 = vadd.f32 %v3284, %v3254
      %v3286 = vadd.f32 %v3285, %v3255
      %v3287 = vadd.f32 %v3286, %v3256
      %v3288 = vrot.slane %v3287, 4
      %v3289 = vadd.f32 %v3287, %v3288
      %v3290 = vrot.slane %v3289, 2
      %v3291 = vadd.f32 %v3289, %v3290
      %v3292 = vrot.slane %v3291, 1
      %v3293 = vadd.f32 %v3291, %v3292
      %3294 = vst [vmem:[%s235 + $0x1] sm:$0x1] %v3293
      %p3295 = scmp.lt.s32.totalorder %s17, 1
      %s3296 = scalar_select %p3295, %s17, 1
      %s3297 = smul.addr %s3296, 32
      %s3298 = smul.addr %s3297, 8
      %s3299 = scalar_lea.vmem %s4, %s3298
      %p3300 = scmp.lt.s32.totalorder %s17, 1
      %s3301 = scalar_select %p3300, %s17, 1
      %s3302 = smul.addr %s3301, 2
      %s3303 = scalar_lea.vmem %s5, %s3302
      // Predicated region
      $region37: #{simple_block.4} parent=35 // pred_check
        %p3304 = pneg %p124
      $region38: #{simple_block.4} parent=35 // pred_check_branch
        %3306 = sbr.rel (%p3304) target = $region40
      $region39: #{simple_block.4} parent=35 // pred_region
        _
      $region40: #{simple_block.4} parent=35 // pred_fallthru
        _
      // Predicated region
      $region41: #{simple_block.4} parent=35 // pred_check
        %p3307 = pneg %p150
      $region42: #{simple_block.4} parent=35 // pred_check_branch
        %3309 = sbr.rel (%p3307) target = $region44
      $region43: #{simple_block.4} parent=35 // pred_region
        _
      $region44: #{simple_block.4} parent=35 // pred_fallthru
        _
    $region36: #{simple_block.4} parent=5 // pred_fallthru
      _
    %p3310 = scmp.le.s32.totalorder 2, %s12
    // Predicated region
    $region45: #{simple_block.4} parent=5 // pred_check
      %p3311 = pneg %p3310
    $region46: #{simple_block.4} parent=5 // pred_check_branch
      %3313 = sbr.rel (%p3311) target = $region48
    $region47: #{simple_block.4} parent=5 // pred_region
      %s3314 = ssub.s32 %s12, 2
      // Predicated region
      $region49: #{simple_block.4} parent=47 // pred_check
        %p3315 = pneg %p130
      $region50: #{simple_block.4} parent=47 // pred_check_branch
        %3317 = sbr.rel (%p3315) target = $region52
      $region51: #{simple_block.4} parent=47 // pred_region
        %p3318 = scmp.lt.s32.totalorder %s18, 1
        %s3319 = scalar_select %p3318, %s18, 1
        %s3320 = smul.addr %s3319, 32
        %s3321 = smul.addr %s3320, 8
        %s3322 = scalar_lea.vmem %s4, %s3321
      $region52: #{simple_block.4} parent=47 // pred_fallthru
        _
      // Predicated region
      $region53: #{simple_block.4} parent=47 // pred_check
        %p3323 = pneg %p156
      $region54: #{simple_block.4} parent=47 // pred_check_branch
        %3325 = sbr.rel (%p3323) target = $region56
      $region55: #{simple_block.4} parent=47 // pred_region
        %p3326 = scmp.lt.s32.totalorder %s18, 1
        %s3327 = scalar_select %p3326, %s18, 1
        %s3328 = smul.addr %s3327, 2
        %s3329 = scalar_lea.vmem %s5, %s3328
      $region56: #{simple_block.4} parent=47 // pred_fallthru
        _
    $region48: #{simple_block.4} parent=5 // pred_fallthru
      _
  $region6: #{simple_block.4} parent=0 // loop_footer
    %s16 = sadd.s32 1, %s12
  $region7: #{simple_block.4} parent=0 // loop_footer_branch
    %11 = sbr.rel target = $region3
  $region8: #{simple_block.4} parent=0 // loop_exit
    _

</llo_original>
